<compile_context>
chip_gen: v5e
topology: v5e:2x2
jax: 0.10.0
libtpu: 0.0.40
codegen_flags: <defaults>
</compile_context>

<pallas_src>
import math

import jax
import jax.numpy as jnp
from jax import lax
from jax.experimental import pallas as pl
from jax.experimental.pallas import tpu as pltpu


# ----------------------- fused 1x1 conv + BN + SiLU --------------------------
def _matmul_shift_silu_kernel(x_ref, w_ref, shift_ref, o_ref):
    # x_ref:     (tm, Cin)   bf16 activations
    # w_ref:     (Cin, tn)   bf16 weight with BN scale pre-folded
    # shift_ref: (1,  tn)    f32 folded BN shift = beta - mean * scale
    # o_ref:     (tm, tn)
    acc = jnp.dot(x_ref[...], w_ref[...], preferred_element_type=jnp.float32)
    y = acc + shift_ref[...]
    o_ref[...] = (y * jax.nn.sigmoid(y)).astype(o_ref.dtype)   # SiLU


def _round_up(a, b):
    return ((a + b - 1) // b) * b


def conv1x1_bn_silu(x_nhwc, weight, gamma, beta, mean, var, *,
                    eps=1e-5, out_dtype=jnp.bfloat16, tm=512, tn=128):
    """Fused 1x1 Conv (no bias) + BatchNorm (eval stats) + SiLU, NHWC in/out."""
    N, H, W, C_in = x_nhwc.shape
    C_out = weight.shape[0]
    M = N * H * W

    x2 = x_nhwc.reshape(M, C_in).astype(jnp.bfloat16)

    # Fold BN (inference) into per-output-channel scale/shift; fold the scale
    # into the weight so the kernel epilogue is a single add.
    scale = gamma / jnp.sqrt(var.astype(jnp.float32) + eps)
    shift = beta - mean * scale
    w_mat = weight.reshape(C_out, C_in).astype(jnp.float32).T * scale[None, :]

    # Lane-dense output: pad Cout up to a multiple of 128.
    C_out_p = _round_up(C_out, tn)
    pad_c = C_out_p - C_out
    if pad_c:
        w_mat = jnp.pad(w_mat, ((0, 0), (0, pad_c)))
        shift = jnp.pad(shift, (0, pad_c))
    w_mat = w_mat.astype(jnp.bfloat16)
    shift = shift.reshape(1, C_out_p).astype(jnp.float32)

    tm = min(tm, _round_up(M, 8))
    grid = (pl.cdiv(M, tm), C_out_p // tn)

    out = pl.pallas_call(
        _matmul_shift_silu_kernel,
        out_shape=jax.ShapeDtypeStruct((M, C_out_p), out_dtype),
        grid_spec=pltpu.PrefetchScalarGridSpec(
            num_scalar_prefetch=0,
            grid=grid,
            in_specs=[
                pl.BlockSpec((tm, C_in), lambda i, j: (i, 0)),
                pl.BlockSpec((C_in, tn), lambda i, j: (0, j)),
                pl.BlockSpec((1, tn), lambda i, j: (0, j)),
            ],
            out_specs=pl.BlockSpec((tm, tn), lambda i, j: (i, j)),
        ),
        compiler_params=pltpu.CompilerParams(
            dimension_semantics=("parallel", "parallel")),
    )(x2, w_mat, shift)

    return out[:, :C_out].reshape(N, H, W, C_out)


# ----------------- fused (maxpool x3 + channel concat) kernel ----------------
def _make_pool_concat_kernel(H, W, C, ks, pmax):
    def kernel(xp_ref, o_ref):
        # xp_ref: (1, H+2*pmax, W+2*pmax, C), -inf padded; o_ref: (1, H, W, (len(ks)+1)*C)
        xp = xp_ref[0].astype(jnp.float32)
        branches = [xp[pmax:pmax + H, pmax:pmax + W, :]]          # identity branch
        for k in ks:
            pk = k // 2
            off = pmax - pk
            # separable max: first along W, then along H  (2*(k-1) maxima)
            cm = xp[:, off:off + W, :]
            for dw in range(1, k):
                cm = jnp.maximum(cm, xp[:, off + dw:off + dw + W, :])
            rm = cm[off:off + H, :, :]
            for dh in range(1, k):
                rm = jnp.maximum(rm, cm[off + dh:off + dh + H, :, :])
            branches.append(rm)
        o_ref[0] = jnp.concatenate(branches, axis=-1).astype(o_ref.dtype)
    return kernel


def pool_concat(y_nhwc, ks):
    """[y, maxpool_k(y) for k in ks] concatenated on channels; stride 1, 'same' pad."""
    N, H, W, C = y_nhwc.shape
    pmax = max(ks) // 2
    # Tiny -inf pad so all pool sizes share one padded buffer (PyTorch pools pad
    # with -inf implicitly).
    yp = jnp.pad(y_nhwc, ((0, 0), (pmax, pmax), (pmax, pmax), (0, 0)),
                 constant_values=-jnp.inf)
    Hp, Wp = H + 2 * pmax, W + 2 * pmax
    C_cat = (len(ks) + 1) * C

    return pl.pallas_call(
        _make_pool_concat_kernel(H, W, C, tuple(ks), pmax),
        out_shape=jax.ShapeDtypeStruct((N, H, W, C_cat), y_nhwc.dtype),
        grid_spec=pltpu.PrefetchScalarGridSpec(
            num_scalar_prefetch=0,
            grid=(N,),
            in_specs=[pl.BlockSpec((1, Hp, Wp, C), lambda b: (b, 0, 0, 0))],
            out_specs=pl.BlockSpec((1, H, W, C_cat), lambda b: (b, 0, 0, 0)),
        ),
        compiler_params=pltpu.CompilerParams(
            dimension_semantics=("parallel",)),
    )(yp)


# --------------------------------- SPP ---------------------------------------
def spp_forward(x_nchw, cv1, cv2, *, ks=(5, 9, 13)):
    """SPP forward (BatchNorm in eval mode, SiLU activations). NCHW in/out."""
    x_nhwc = jnp.transpose(x_nchw, (0, 2, 3, 1))
    y1 = conv1x1_bn_silu(x_nhwc, cv1["w"], cv1["gamma"], cv1["beta"],
                         cv1["mean"], cv1["var"], out_dtype=jnp.bfloat16)
    cat = pool_concat(y1, ks)                                   # bf16 intermediates
    y2 = conv1x1_bn_silu(cat, cv2["w"], cv2["gamma"], cv2["beta"],
                         cv2["mean"], cv2["var"], out_dtype=x_nchw.dtype)
    return jnp.transpose(y2, (0, 3, 1, 2))


# --------------------------- reference (plain JAX, f32) ----------------------
def _conv_bn_silu_ref(x, p, eps=1e-5):
    y = lax.conv_general_dilated(
        x, p["w"], (1, 1), [(0, 0), (0, 0)],
        dimension_numbers=("NCHW", "OIHW", "NCHW"),
        precision=lax.Precision.HIGHEST)
    scale = (p["gamma"] / jnp.sqrt(p["var"] + eps)).reshape(1, -1, 1, 1)
    shift = (p["beta"] - p["mean"] * p["gamma"] / jnp.sqrt(p["var"] + eps)).reshape(1, -1, 1, 1)
    y = y * scale + shift
    return y * jax.nn.sigmoid(y)


def _maxpool_ref(x, k):
    pad = k // 2
    return lax.reduce_window(x, jnp.array(-jnp.inf, x.dtype), lax.max,
                             (1, 1, k, k), (1, 1, 1, 1),
                             [(0, 0), (0, 0), (pad, pad), (pad, pad)])


def spp_reference(x, cv1, cv2, *, ks=(5, 9, 13)):
    y = _conv_bn_silu_ref(x, cv1)
    cat = jnp.concatenate([y] + [_maxpool_ref(y, k) for k in ks], axis=1)
    return _conv_bn_silu_ref(cat, cv2)


# ----------------------------------- main ------------------------------------
if __name__ == "__main__":
    key = jax.random.PRNGKey(0)
    N, C1, H, W = 2, 4, 16, 16          # SPP(c1=4, c2=8)
    C2 = 8
    ks = (5, 9, 13)
    c_ = C1 // 2

    keys = jax.random.split(key, 12)
    x = jax.random.normal(keys[0], (N, C1, H, W), dtype=jnp.float32)

    def conv_params(kw, kg, kb, km, kv, c_out, c_in):
        bound = 1.0 / math.sqrt(c_in)   # kaiming-uniform-like Conv2d init (k=1)
        return dict(
            w=jax.random.uniform(kw, (c_out, c_in, 1, 1), jnp.float32, -bound, bound),
            gamma=jax.random.uniform(kg, (c_out,), jnp.float32, 0.8, 1.2),
            beta=jax.random.normal(kb, (c_out,), jnp.float32) * 0.1,
            mean=jax.random.normal(km, (c_out,), jnp.float32) * 0.1,
            var=jax.random.uniform(kv, (c_out,), jnp.float32, 0.8, 1.2),
        )

    cv1 = conv_params(*keys[1:6], c_, C1)                       # 4 -> 2
    cv2 = conv_params(*keys[6:11], C2, c_ * (len(ks) + 1))      # 8 -> 8

    spp = jax.jit(lambda xx, p1, p2: spp_forward(xx, p1, p2, ks=ks))
    out = jax.block_until_ready(spp(x, cv1, cv2))

    ref = spp_reference(x, cv1, cv2, ks=ks)
    assert out.shape == (N, C2, H, W)
    # bf16 matmul inputs (f32 accumulation) vs a pure-f32 reference.
    assert jnp.allclose(out, ref, atol=5e-2, rtol=5e-2), "mismatch vs reference"

    print("KERNEL_OK")
</pallas_src>

<mosaic_0001>
module attributes {stable_mosaic.version = 11 : i64} {
  func.func @kernel(%arg0: i32, %arg1: memref<1x28x28x2xbf16, #tpu.memory_space<vmem>>, %arg2: memref<1x16x16x8xbf16, #tpu.memory_space<vmem>>) attributes {dimension_semantics = [#tpu.dimension_semantics<parallel>], iteration_bounds = array<i64: 2>, scalar_prefetch = 0 : i64, scratch_operands = 0 : i64, tpu.core_type = #tpu.core_type<tc>, window_params = [{transform_indices = @transform_0, window_bounds = array<i64: 1, 28, 28, 2>}, {transform_indices = @transform_1, window_bounds = array<i64: 1, 16, 16, 8>}]} {
    %c0 = arith.constant 0 : index
    %c0_0 = arith.constant 0 : index
    %c0_1 = arith.constant 0 : index
    %c0_2 = arith.constant 0 : index
    %0 = vector.load %arg1[%c0, %c0_0, %c0_1, %c0_2] : memref<1x28x28x2xbf16, #tpu.memory_space<vmem>>, vector<1x28x28x2xbf16>
    %1 = vector.shape_cast %0 : vector<1x28x28x2xbf16> to vector<28x28x2xbf16>
    %2 = arith.extf %1 : vector<28x28x2xbf16> to vector<28x28x2xf32>
    %3 = vector.extract_strided_slice %2 {offsets = [6, 6, 0], sizes = [16, 16, 2], strides = [1, 1, 1]} : vector<28x28x2xf32> to vector<16x16x2xf32>
    %4 = vector.extract_strided_slice %2 {offsets = [0, 4, 0], sizes = [28, 16, 2], strides = [1, 1, 1]} : vector<28x28x2xf32> to vector<28x16x2xf32>
    %5 = vector.extract_strided_slice %2 {offsets = [0, 5, 0], sizes = [28, 16, 2], strides = [1, 1, 1]} : vector<28x28x2xf32> to vector<28x16x2xf32>
    %6 = arith.maximumf %4, %5 : vector<28x16x2xf32>
    %7 = vector.extract_strided_slice %2 {offsets = [0, 6, 0], sizes = [28, 16, 2], strides = [1, 1, 1]} : vector<28x28x2xf32> to vector<28x16x2xf32>
    %8 = arith.maximumf %6, %7 : vector<28x16x2xf32>
    %9 = vector.extract_strided_slice %2 {offsets = [0, 7, 0], sizes = [28, 16, 2], strides = [1, 1, 1]} : vector<28x28x2xf32> to vector<28x16x2xf32>
    %10 = arith.maximumf %8, %9 : vector<28x16x2xf32>
    %11 = vector.extract_strided_slice %2 {offsets = [0, 8, 0], sizes = [28, 16, 2], strides = [1, 1, 1]} : vector<28x28x2xf32> to vector<28x16x2xf32>
    %12 = arith.maximumf %10, %11 : vector<28x16x2xf32>
    %13 = vector.extract_strided_slice %12 {offsets = [4, 0, 0], sizes = [16, 16, 2], strides = [1, 1, 1]} : vector<28x16x2xf32> to vector<16x16x2xf32>
    %14 = vector.extract_strided_slice %12 {offsets = [5, 0, 0], sizes = [16, 16, 2], strides = [1, 1, 1]} : vector<28x16x2xf32> to vector<16x16x2xf32>
    %15 = arith.maximumf %13, %14 : vector<16x16x2xf32>
    %16 = vector.extract_strided_slice %12 {offsets = [6, 0, 0], sizes = [16, 16, 2], strides = [1, 1, 1]} : vector<28x16x2xf32> to vector<16x16x2xf32>
    %17 = arith.maximumf %15, %16 : vector<16x16x2xf32>
    %18 = vector.extract_strided_slice %12 {offsets = [7, 0, 0], sizes = [16, 16, 2], strides = [1, 1, 1]} : vector<28x16x2xf32> to vector<16x16x2xf32>
    %19 = arith.maximumf %17, %18 : vector<16x16x2xf32>
    %20 = vector.extract_strided_slice %12 {offsets = [8, 0, 0], sizes = [16, 16, 2], strides = [1, 1, 1]} : vector<28x16x2xf32> to vector<16x16x2xf32>
    %21 = arith.maximumf %19, %20 : vector<16x16x2xf32>
    %22 = vector.extract_strided_slice %2 {offsets = [0, 2, 0], sizes = [28, 16, 2], strides = [1, 1, 1]} : vector<28x28x2xf32> to vector<28x16x2xf32>
    %23 = vector.extract_strided_slice %2 {offsets = [0, 3, 0], sizes = [28, 16, 2], strides = [1, 1, 1]} : vector<28x28x2xf32> to vector<28x16x2xf32>
    %24 = arith.maximumf %22, %23 : vector<28x16x2xf32>
    %25 = vector.extract_strided_slice %2 {offsets = [0, 4, 0], sizes = [28, 16, 2], strides = [1, 1, 1]} : vector<28x28x2xf32> to vector<28x16x2xf32>
    %26 = arith.maximumf %24, %25 : vector<28x16x2xf32>
    %27 = vector.extract_strided_slice %2 {offsets = [0, 5, 0], sizes = [28, 16, 2], strides = [1, 1, 1]} : vector<28x28x2xf32> to vector<28x16x2xf32>
    %28 = arith.maximumf %26, %27 : vector<28x16x2xf32>
    %29 = vector.extract_strided_slice %2 {offsets = [0, 6, 0], sizes = [28, 16, 2], strides = [1, 1, 1]} : vector<28x28x2xf32> to vector<28x16x2xf32>
    %30 = arith.maximumf %28, %29 : vector<28x16x2xf32>
    %31 = vector.extract_strided_slice %2 {offsets = [0, 7, 0], sizes = [28, 16, 2], strides = [1, 1, 1]} : vector<28x28x2xf32> to vector<28x16x2xf32>
    %32 = arith.maximumf %30, %31 : vector<28x16x2xf32>
    %33 = vector.extract_strided_slice %2 {offsets = [0, 8, 0], sizes = [28, 16, 2], strides = [1, 1, 1]} : vector<28x28x2xf32> to vector<28x16x2xf32>
    %34 = arith.maximumf %32, %33 : vector<28x16x2xf32>
    %35 = vector.extract_strided_slice %2 {offsets = [0, 9, 0], sizes = [28, 16, 2], strides = [1, 1, 1]} : vector<28x28x2xf32> to vector<28x16x2xf32>
    %36 = arith.maximumf %34, %35 : vector<28x16x2xf32>
    %37 = vector.extract_strided_slice %2 {offsets = [0, 10, 0], sizes = [28, 16, 2], strides = [1, 1, 1]} : vector<28x28x2xf32> to vector<28x16x2xf32>
    %38 = arith.maximumf %36, %37 : vector<28x16x2xf32>
    %39 = vector.extract_strided_slice %38 {offsets = [2, 0, 0], sizes = [16, 16, 2], strides = [1, 1, 1]} : vector<28x16x2xf32> to vector<16x16x2xf32>
    %40 = vector.extract_strided_slice %38 {offsets = [3, 0, 0], sizes = [16, 16, 2], strides = [1, 1, 1]} : vector<28x16x2xf32> to vector<16x16x2xf32>
    %41 = arith.maximumf %39, %40 : vector<16x16x2xf32>
    %42 = vector.extract_strided_slice %38 {offsets = [4, 0, 0], sizes = [16, 16, 2], strides = [1, 1, 1]} : vector<28x16x2xf32> to vector<16x16x2xf32>
    %43 = arith.maximumf %41, %42 : vector<16x16x2xf32>
    %44 = vector.extract_strided_slice %38 {offsets = [5, 0, 0], sizes = [16, 16, 2], strides = [1, 1, 1]} : vector<28x16x2xf32> to vector<16x16x2xf32>
    %45 = arith.maximumf %43, %44 : vector<16x16x2xf32>
    %46 = vector.extract_strided_slice %38 {offsets = [6, 0, 0], sizes = [16, 16, 2], strides = [1, 1, 1]} : vector<28x16x2xf32> to vector<16x16x2xf32>
    %47 = arith.maximumf %45, %46 : vector<16x16x2xf32>
    %48 = vector.extract_strided_slice %38 {offsets = [7, 0, 0], sizes = [16, 16, 2], strides = [1, 1, 1]} : vector<28x16x2xf32> to vector<16x16x2xf32>
    %49 = arith.maximumf %47, %48 : vector<16x16x2xf32>
    %50 = vector.extract_strided_slice %38 {offsets = [8, 0, 0], sizes = [16, 16, 2], strides = [1, 1, 1]} : vector<28x16x2xf32> to vector<16x16x2xf32>
    %51 = arith.maximumf %49, %50 : vector<16x16x2xf32>
    %52 = vector.extract_strided_slice %38 {offsets = [9, 0, 0], sizes = [16, 16, 2], strides = [1, 1, 1]} : vector<28x16x2xf32> to vector<16x16x2xf32>
    %53 = arith.maximumf %51, %52 : vector<16x16x2xf32>
    %54 = vector.extract_strided_slice %38 {offsets = [10, 0, 0], sizes = [16, 16, 2], strides = [1, 1, 1]} : vector<28x16x2xf32> to vector<16x16x2xf32>
    %55 = arith.maximumf %53, %54 : vector<16x16x2xf32>
    %56 = vector.extract_strided_slice %2 {offsets = [0, 0, 0], sizes = [28, 16, 2], strides = [1, 1, 1]} : vector<28x28x2xf32> to vector<28x16x2xf32>
    %57 = vector.extract_strided_slice %2 {offsets = [0, 1, 0], sizes = [28, 16, 2], strides = [1, 1, 1]} : vector<28x28x2xf32> to vector<28x16x2xf32>
    %58 = arith.maximumf %56, %57 : vector<28x16x2xf32>
    %59 = vector.extract_strided_slice %2 {offsets = [0, 2, 0], sizes = [28, 16, 2], strides = [1, 1, 1]} : vector<28x28x2xf32> to vector<28x16x2xf32>
    %60 = arith.maximumf %58, %59 : vector<28x16x2xf32>
    %61 = vector.extract_strided_slice %2 {offsets = [0, 3, 0], sizes = [28, 16, 2], strides = [1, 1, 1]} : vector<28x28x2xf32> to vector<28x16x2xf32>
    %62 = arith.maximumf %60, %61 : vector<28x16x2xf32>
    %63 = vector.extract_strided_slice %2 {offsets = [0, 4, 0], sizes = [28, 16, 2], strides = [1, 1, 1]} : vector<28x28x2xf32> to vector<28x16x2xf32>
    %64 = arith.maximumf %62, %63 : vector<28x16x2xf32>
    %65 = vector.extract_strided_slice %2 {offsets = [0, 5, 0], sizes = [28, 16, 2], strides = [1, 1, 1]} : vector<28x28x2xf32> to vector<28x16x2xf32>
    %66 = arith.maximumf %64, %65 : vector<28x16x2xf32>
    %67 = vector.extract_strided_slice %2 {offsets = [0, 6, 0], sizes = [28, 16, 2], strides = [1, 1, 1]} : vector<28x28x2xf32> to vector<28x16x2xf32>
    %68 = arith.maximumf %66, %67 : vector<28x16x2xf32>
    %69 = vector.extract_strided_slice %2 {offsets = [0, 7, 0], sizes = [28, 16, 2], strides = [1, 1, 1]} : vector<28x28x2xf32> to vector<28x16x2xf32>
    %70 = arith.maximumf %68, %69 : vector<28x16x2xf32>
    %71 = vector.extract_strided_slice %2 {offsets = [0, 8, 0], sizes = [28, 16, 2], strides = [1, 1, 1]} : vector<28x28x2xf32> to vector<28x16x2xf32>
    %72 = arith.maximumf %70, %71 : vector<28x16x2xf32>
    %73 = vector.extract_strided_slice %2 {offsets = [0, 9, 0], sizes = [28, 16, 2], strides = [1, 1, 1]} : vector<28x28x2xf32> to vector<28x16x2xf32>
    %74 = arith.maximumf %72, %73 : vector<28x16x2xf32>
    %75 = vector.extract_strided_slice %2 {offsets = [0, 10, 0], sizes = [28, 16, 2], strides = [1, 1, 1]} : vector<28x28x2xf32> to vector<28x16x2xf32>
    %76 = arith.maximumf %74, %75 : vector<28x16x2xf32>
    %77 = vector.extract_strided_slice %2 {offsets = [0, 11, 0], sizes = [28, 16, 2], strides = [1, 1, 1]} : vector<28x28x2xf32> to vector<28x16x2xf32>
    %78 = arith.maximumf %76, %77 : vector<28x16x2xf32>
    %79 = vector.extract_strided_slice %2 {offsets = [0, 12, 0], sizes = [28, 16, 2], strides = [1, 1, 1]} : vector<28x28x2xf32> to vector<28x16x2xf32>
    %80 = arith.maximumf %78, %79 : vector<28x16x2xf32>
    %81 = vector.extract_strided_slice %80 {offsets = [0, 0, 0], sizes = [16, 16, 2], strides = [1, 1, 1]} : vector<28x16x2xf32> to vector<16x16x2xf32>
    %82 = vector.extract_strided_slice %80 {offsets = [1, 0, 0], sizes = [16, 16, 2], strides = [1, 1, 1]} : vector<28x16x2xf32> to vector<16x16x2xf32>
    %83 = arith.maximumf %81, %82 : vector<16x16x2xf32>
    %84 = vector.extract_strided_slice %80 {offsets = [2, 0, 0], sizes = [16, 16, 2], strides = [1, 1, 1]} : vector<28x16x2xf32> to vector<16x16x2xf32>
    %85 = arith.maximumf %83, %84 : vector<16x16x2xf32>
    %86 = vector.extract_strided_slice %80 {offsets = [3, 0, 0], sizes = [16, 16, 2], strides = [1, 1, 1]} : vector<28x16x2xf32> to vector<16x16x2xf32>
    %87 = arith.maximumf %85, %86 : vector<16x16x2xf32>
    %88 = vector.extract_strided_slice %80 {offsets = [4, 0, 0], sizes = [16, 16, 2], strides = [1, 1, 1]} : vector<28x16x2xf32> to vector<16x16x2xf32>
    %89 = arith.maximumf %87, %88 : vector<16x16x2xf32>
    %90 = vector.extract_strided_slice %80 {offsets = [5, 0, 0], sizes = [16, 16, 2], strides = [1, 1, 1]} : vector<28x16x2xf32> to vector<16x16x2xf32>
    %91 = arith.maximumf %89, %90 : vector<16x16x2xf32>
    %92 = vector.extract_strided_slice %80 {offsets = [6, 0, 0], sizes = [16, 16, 2], strides = [1, 1, 1]} : vector<28x16x2xf32> to vector<16x16x2xf32>
    %93 = arith.maximumf %91, %92 : vector<16x16x2xf32>
    %94 = vector.extract_strided_slice %80 {offsets = [7, 0, 0], sizes = [16, 16, 2], strides = [1, 1, 1]} : vector<28x16x2xf32> to vector<16x16x2xf32>
    %95 = arith.maximumf %93, %94 : vector<16x16x2xf32>
    %96 = vector.extract_strided_slice %80 {offsets = [8, 0, 0], sizes = [16, 16, 2], strides = [1, 1, 1]} : vector<28x16x2xf32> to vector<16x16x2xf32>
    %97 = arith.maximumf %95, %96 : vector<16x16x2xf32>
    %98 = vector.extract_strided_slice %80 {offsets = [9, 0, 0], sizes = [16, 16, 2], strides = [1, 1, 1]} : vector<28x16x2xf32> to vector<16x16x2xf32>
    %99 = arith.maximumf %97, %98 : vector<16x16x2xf32>
    %100 = vector.extract_strided_slice %80 {offsets = [10, 0, 0], sizes = [16, 16, 2], strides = [1, 1, 1]} : vector<28x16x2xf32> to vector<16x16x2xf32>
    %101 = arith.maximumf %99, %100 : vector<16x16x2xf32>
    %102 = vector.extract_strided_slice %80 {offsets = [11, 0, 0], sizes = [16, 16, 2], strides = [1, 1, 1]} : vector<28x16x2xf32> to vector<16x16x2xf32>
    %103 = arith.maximumf %101, %102 : vector<16x16x2xf32>
    %104 = vector.extract_strided_slice %80 {offsets = [12, 0, 0], sizes = [16, 16, 2], strides = [1, 1, 1]} : vector<28x16x2xf32> to vector<16x16x2xf32>
    %105 = arith.maximumf %103, %104 : vector<16x16x2xf32>
    %106 = tpu.concatenate %3, %21, %55, %105 in 2 : vector<16x16x2xf32>, vector<16x16x2xf32>, vector<16x16x2xf32>, vector<16x16x2xf32> -> vector<16x16x8xf32>
    %107 = arith.truncf %106 : vector<16x16x8xf32> to vector<16x16x8xbf16>
    %c0_3 = arith.constant 0 : index
    %c0_4 = arith.constant 0 : index
    %c0_5 = arith.constant 0 : index
    %c0_6 = arith.constant 0 : index
    %108 = vector.load %arg2[%c0_3, %c0_4, %c0_5, %c0_6] : memref<1x16x16x8xbf16, #tpu.memory_space<vmem>>, vector<1x16x16x8xbf16>
    %109 = vector.shape_cast %108 : vector<1x16x16x8xbf16> to vector<16x16x8xbf16>
    %110 = vector.shape_cast %107 : vector<16x16x8xbf16> to vector<1x16x16x8xbf16>
    tpu.vector_store %arg2[%c0_3, %c0_4, %c0_5, %c0_6], %110 {strides = array<i32>} : memref<1x16x16x8xbf16, #tpu.memory_space<vmem>>, vector<1x16x16x8xbf16>,
    return
  }
  func.func @transform_0(%arg0: i32) -> (i32, i32, i32, i32) {
    %c0_i32 = arith.constant 0 : i32
    %c0_i32_0 = arith.constant 0 : i32
    %c0_i32_1 = arith.constant 0 : i32
    %c0_i32_2 = arith.constant 0 : i32
    return %arg0, %c0_i32, %c0_i32_0, %c0_i32_1 : i32, i32, i32, i32
  }
  func.func @transform_1(%arg0: i32) -> (i32, i32, i32, i32) {
    %c0_i32 = arith.constant 0 : i32
    %c0_i32_0 = arith.constant 0 : i32
    %c0_i32_1 = arith.constant 0 : i32
    %c0_i32_2 = arith.constant 0 : i32
    return %arg0, %c0_i32, %c0_i32_0, %c0_i32_1 : i32, i32, i32, i32
  }
}

module attributes {stable_mosaic.version = 11 : i64} {
  func.func @_matmul_shift_silu_kernel(%arg0: i32, %arg1: i32, %arg2: memref<512x4xbf16, #tpu.memory_space<vmem>>, %arg3: memref<4x128xbf16, #tpu.memory_space<vmem>>, %arg4: memref<1x128xf32, #tpu.memory_space<vmem>>, %arg5: memref<512x128xbf16, #tpu.memory_space<vmem>>) attributes {dimension_semantics = [#tpu.dimension_semantics<parallel>, #tpu.dimension_semantics<parallel>], iteration_bounds = array<i64: 1, 1>, scalar_prefetch = 0 : i64, scratch_operands = 0 : i64, tpu.core_type = #tpu.core_type<tc>, window_params = [{transform_indices = @transform_0, window_bounds = array<i64: 512, 4>}, {transform_indices = @transform_1, window_bounds = array<i64: 4, 128>}, {transform_indices = @transform_2, window_bounds = array<i64: 1, 128>}, {transform_indices = @transform_3, window_bounds = array<i64: 512, 128>}]} {
    %c0 = arith.constant 0 : index
    %c0_0 = arith.constant 0 : index
    %0 = vector.load %arg2[%c0, %c0_0] : memref<512x4xbf16, #tpu.memory_space<vmem>>, vector<512x4xbf16>
    %c0_1 = arith.constant 0 : index
    %c0_2 = arith.constant 0 : index
    %1 = vector.load %arg3[%c0_1, %c0_2] : memref<4x128xbf16, #tpu.memory_space<vmem>>, vector<4x128xbf16>
    %cst = arith.constant dense<0.000000e+00> : vector<512x128xf32>
    %2 = tpu.matmul %0, %1, %cst {dimension_numbers = #tpu.dot_dimension_numbers<[1], [0], [0], [1], [0, 0, 1, 1], [], []>} : vector<512x4xbf16>, vector<4x128xbf16>, vector<512x128xf32> -> vector<512x128xf32>
    %c0_3 = arith.constant 0 : index
    %c0_4 = arith.constant 0 : index
    %3 = vector.load %arg4[%c0_3, %c0_4] : memref<1x128xf32, #tpu.memory_space<vmem>>, vector<1x128xf32>
    %4 = vector.broadcast %3 : vector<1x128xf32> to vector<512x128xf32>
    %5 = arith.addf %2, %4 : vector<512x128xf32>
    %6 = arith.negf %5 : vector<512x128xf32>
    %7 = math.exp %6 : vector<512x128xf32>
    %cst_5 = arith.constant 1.000000e+00 : f32
    %8 = vector.broadcast %cst_5 : f32 to vector<512x128xf32>
    %9 = arith.addf %8, %7 : vector<512x128xf32>
    %10 = arith.divf %8, %9 : vector<512x128xf32>
    %11 = arith.mulf %5, %10 : vector<512x128xf32>
    %12 = arith.truncf %11 : vector<512x128xf32> to vector<512x128xbf16>
    %c0_6 = arith.constant 0 : index
    %c0_7 = arith.constant 0 : index
    %13 = vector.load %arg5[%c0_6, %c0_7] : memref<512x128xbf16, #tpu.memory_space<vmem>>, vector<512x128xbf16>
    tpu.vector_store %arg5[%c0_6, %c0_7], %12 {strides = array<i32>} : memref<512x128xbf16, #tpu.memory_space<vmem>>, vector<512x128xbf16>,
    return
  }
  func.func @transform_0(%arg0: i32, %arg1: i32) -> (i32, i32) {
    %c0_i32 = arith.constant 0 : i32
    %c0_i32_0 = arith.constant 0 : i32
    return %arg0, %c0_i32 : i32, i32
  }
  func.func @transform_1(%arg0: i32, %arg1: i32) -> (i32, i32) {
    %c0_i32 = arith.constant 0 : i32
    %c0_i32_0 = arith.constant 0 : i32
    return %c0_i32, %arg1 : i32, i32
  }
  func.func @transform_2(%arg0: i32, %arg1: i32) -> (i32, i32) {
    %c0_i32 = arith.constant 0 : i32
    %c0_i32_0 = arith.constant 0 : i32
    return %c0_i32, %arg1 : i32, i32
  }
  func.func @transform_3(%arg0: i32, %arg1: i32) -> (i32, i32) {
    %c0_i32 = arith.constant 0 : i32
    return %arg0, %arg1 : i32, i32
  }
}

module attributes {stable_mosaic.version = 11 : i64} {
  func.func @_matmul_shift_silu_kernel(%arg0: i32, %arg1: i32, %arg2: memref<512x8xbf16, #tpu.memory_space<vmem>>, %arg3: memref<8x128xbf16, #tpu.memory_space<vmem>>, %arg4: memref<1x128xf32, #tpu.memory_space<vmem>>, %arg5: memref<512x128xf32, #tpu.memory_space<vmem>>) attributes {dimension_semantics = [#tpu.dimension_semantics<parallel>, #tpu.dimension_semantics<parallel>], iteration_bounds = array<i64: 1, 1>, scalar_prefetch = 0 : i64, scratch_operands = 0 : i64, tpu.core_type = #tpu.core_type<tc>, window_params = [{transform_indices = @transform_0, window_bounds = array<i64: 512, 8>}, {transform_indices = @transform_1, window_bounds = array<i64: 8, 128>}, {transform_indices = @transform_2, window_bounds = array<i64: 1, 128>}, {transform_indices = @transform_3, window_bounds = array<i64: 512, 128>}]} {
    %c0 = arith.constant 0 : index
    %c0_0 = arith.constant 0 : index
    %0 = vector.load %arg2[%c0, %c0_0] : memref<512x8xbf16, #tpu.memory_space<vmem>>, vector<512x8xbf16>
    %c0_1 = arith.constant 0 : index
    %c0_2 = arith.constant 0 : index
    %1 = vector.load %arg3[%c0_1, %c0_2] : memref<8x128xbf16, #tpu.memory_space<vmem>>, vector<8x128xbf16>
    %cst = arith.constant dense<0.000000e+00> : vector<512x128xf32>
    %2 = tpu.matmul %0, %1, %cst {dimension_numbers = #tpu.dot_dimension_numbers<[1], [0], [0], [1], [0, 0, 1, 1], [], []>} : vector<512x8xbf16>, vector<8x128xbf16>, vector<512x128xf32> -> vector<512x128xf32>
    %c0_3 = arith.constant 0 : index
    %c0_4 = arith.constant 0 : index
    %3 = vector.load %arg4[%c0_3, %c0_4] : memref<1x128xf32, #tpu.memory_space<vmem>>, vector<1x128xf32>
    %4 = vector.broadcast %3 : vector<1x128xf32> to vector<512x128xf32>
    %5 = arith.addf %2, %4 : vector<512x128xf32>
    %6 = arith.negf %5 : vector<512x128xf32>
    %7 = math.exp %6 : vector<512x128xf32>
    %cst_5 = arith.constant 1.000000e+00 : f32
    %8 = vector.broadcast %cst_5 : f32 to vector<512x128xf32>
    %9 = arith.addf %8, %7 : vector<512x128xf32>
    %10 = arith.divf %8, %9 : vector<512x128xf32>
    %11 = arith.mulf %5, %10 : vector<512x128xf32>
    %c0_6 = arith.constant 0 : index
    %c0_7 = arith.constant 0 : index
    %12 = vector.load %arg5[%c0_6, %c0_7] : memref<512x128xf32, #tpu.memory_space<vmem>>, vector<512x128xf32>
    tpu.vector_store %arg5[%c0_6, %c0_7], %11 {strides = array<i32>} : memref<512x128xf32, #tpu.memory_space<vmem>>, vector<512x128xf32>,
    return
  }
  func.func @transform_0(%arg0: i32, %arg1: i32) -> (i32, i32) {
    %c0_i32 = arith.constant 0 : i32
    %c0_i32_0 = arith.constant 0 : i32
    return %arg0, %c0_i32 : i32, i32
  }
  func.func @transform_1(%arg0: i32, %arg1: i32) -> (i32, i32) {
    %c0_i32 = arith.constant 0 : i32
    %c0_i32_0 = arith.constant 0 : i32
    return %c0_i32, %arg1 : i32, i32
  }
  func.func @transform_2(%arg0: i32, %arg1: i32) -> (i32, i32) {
    %c0_i32 = arith.constant 0 : i32
    %c0_i32_0 = arith.constant 0 : i32
    return %c0_i32, %arg1 : i32, i32
  }
  func.func @transform_3(%arg0: i32, %arg1: i32) -> (i32, i32) {
    %c0_i32 = arith.constant 0 : i32
    return %arg0, %arg1 : i32, i32
  }
}

</mosaic_0001>

<llo_original>
// kernel: _lambda_.3
$region0: #{_lambda_.3}
  #allocation0 [shape = 'u32[]', space=smem, size = 0x4, offset = 0x4, fixed_abs, tag = 'smem constant byte address 0x4 - core index']
  #allocation1 [shape = 'u32[72,128]{1,0:T(1,128)}', space=vmem, size = 0x9000, scoped, tag = 'internal scratch']
  %s0 = inlined_call_operand.vmem [shape: bf16[512,4], index: 0, kind: input, shape index: {}]
  %s1 = inlined_call_operand.vmem [shape: bf16[4,128], index: 1, kind: input, shape index: {}]
  %s2 = inlined_call_operand.vmem [shape: f32[1,128], index: 2, kind: input, shape index: {}]
  %s3 = inlined_call_operand.vmem [shape: bf16[512,128], index: 3, kind: output, shape index: {}]
  %s4 = sld [smem:[#allocation0]]
  $region22: #{_lambda_.3} parent=0
    _
  %s6 = ssub.s32 1, %s4
  %s7 = scalar_select 0, %s6, %s4
  // Predicated region
  $region2: #{_lambda_.3} parent=0 // pred_check
    _
  $region3: #{_lambda_.3} parent=0 // pred_check_branch
    %9 = sbr.rel (0) target = $region5
  $region4: #{_lambda_.3} parent=0 // pred_region
    _
  $region5: #{_lambda_.3} parent=0 // pred_fallthru
    _
  // Predicated region
  $region6: #{_lambda_.3} parent=0 // pred_check
    _
  $region7: #{_lambda_.3} parent=0 // pred_check_branch
    %11 = sbr.rel (0) target = $region9
  $region8: #{_lambda_.3} parent=0 // pred_region
    _
  $region9: #{_lambda_.3} parent=0 // pred_fallthru
    _
  // Predicated region
  $region10: #{_lambda_.3} parent=0 // pred_check
    _
  $region11: #{_lambda_.3} parent=0 // pred_check_branch
    %13 = sbr.rel (0) target = $region13
  $region12: #{_lambda_.3} parent=0 // pred_region
    _
  $region13: #{_lambda_.3} parent=0 // pred_fallthru
    _
  %v15 = vld [vmem:[%s0] sm:$0xf]
  %v16 = vld [vmem:[%s0 + $0x4] sm:$0xf]
  %v17 = vld [vmem:[%s0 + $0x8] sm:$0xf]
  %v18 = vld [vmem:[%s0 + $0xc] sm:$0xf]
  %v19 = vld [vmem:[%s0 + $0x10] sm:$0xf]
  %v20 = vld [vmem:[%s0 + $0x14] sm:$0xf]
  %v21 = vld [vmem:[%s0 + $0x18] sm:$0xf]
  %v22 = vld [vmem:[%s0 + $0x1c] sm:$0xf]
  %v23 = vld [vmem:[%s0 + $0x20] sm:$0xf]
  %v24 = vld [vmem:[%s0 + $0x24] sm:$0xf]
  %v25 = vld [vmem:[%s0 + $0x28] sm:$0xf]
  %v26 = vld [vmem:[%s0 + $0x2c] sm:$0xf]
  %v27 = vld [vmem:[%s0 + $0x30] sm:$0xf]
  %v28 = vld [vmem:[%s0 + $0x34] sm:$0xf]
  %v29 = vld [vmem:[%s0 + $0x38] sm:$0xf]
  %v30 = vld [vmem:[%s0 + $0x3c] sm:$0xf]
  %v31 = vld [vmem:[%s0 + $0x40] sm:$0xf]
  %v32 = vld [vmem:[%s0 + $0x44] sm:$0xf]
  %v33 = vld [vmem:[%s0 + $0x48] sm:$0xf]
  %v34 = vld [vmem:[%s0 + $0x4c] sm:$0xf]
  %v35 = vld [vmem:[%s0 + $0x50] sm:$0xf]
  %v36 = vld [vmem:[%s0 + $0x54] sm:$0xf]
  %v37 = vld [vmem:[%s0 + $0x58] sm:$0xf]
  %v38 = vld [vmem:[%s0 + $0x5c] sm:$0xf]
  %v39 = vld [vmem:[%s0 + $0x60] sm:$0xf]
  %v40 = vld [vmem:[%s0 + $0x64] sm:$0xf]
  %v41 = vld [vmem:[%s0 + $0x68] sm:$0xf]
  %v42 = vld [vmem:[%s0 + $0x6c] sm:$0xf]
  %v43 = vld [vmem:[%s0 + $0x70] sm:$0xf]
  %v44 = vld [vmem:[%s0 + $0x74] sm:$0xf]
  %v45 = vld [vmem:[%s0 + $0x78] sm:$0xf]
  %v46 = vld [vmem:[%s0 + $0x7c] sm:$0xf]
  %v47 = vld [vmem:[%s0 + $0x80] sm:$0xf]
  %v48 = vld [vmem:[%s0 + $0x84] sm:$0xf]
  %v49 = vld [vmem:[%s0 + $0x88] sm:$0xf]
  %v50 = vld [vmem:[%s0 + $0x8c] sm:$0xf]
  %v51 = vld [vmem:[%s0 + $0x90] sm:$0xf]
  %v52 = vld [vmem:[%s0 + $0x94] sm:$0xf]
  %v53 = vld [vmem:[%s0 + $0x98] sm:$0xf]
  %v54 = vld [vmem:[%s0 + $0x9c] sm:$0xf]
  %v55 = vld [vmem:[%s0 + $0xa0] sm:$0xf]
  %v56 = vld [vmem:[%s0 + $0xa4] sm:$0xf]
  %v57 = vld [vmem:[%s0 + $0xa8] sm:$0xf]
  %v58 = vld [vmem:[%s0 + $0xac] sm:$0xf]
  %v59 = vld [vmem:[%s0 + $0xb0] sm:$0xf]
  %v60 = vld [vmem:[%s0 + $0xb4] sm:$0xf]
  %v61 = vld [vmem:[%s0 + $0xb8] sm:$0xf]
  %v62 = vld [vmem:[%s0 + $0xbc] sm:$0xf]
  %v63 = vld [vmem:[%s0 + $0xc0] sm:$0xf]
  %v64 = vld [vmem:[%s0 + $0xc4] sm:$0xf]
  %v65 = vld [vmem:[%s0 + $0xc8] sm:$0xf]
  %v66 = vld [vmem:[%s0 + $0xcc] sm:$0xf]
  %v67 = vld [vmem:[%s0 + $0xd0] sm:$0xf]
  %v68 = vld [vmem:[%s0 + $0xd4] sm:$0xf]
  %v69 = vld [vmem:[%s0 + $0xd8] sm:$0xf]
  %v70 = vld [vmem:[%s0 + $0xdc] sm:$0xf]
  %v71 = vld [vmem:[%s0 + $0xe0] sm:$0xf]
  %v72 = vld [vmem:[%s0 + $0xe4] sm:$0xf]
  %v73 = vld [vmem:[%s0 + $0xe8] sm:$0xf]
  %v74 = vld [vmem:[%s0 + $0xec] sm:$0xf]
  %v75 = vld [vmem:[%s0 + $0xf0] sm:$0xf]
  %v76 = vld [vmem:[%s0 + $0xf4] sm:$0xf]
  %v77 = vld [vmem:[%s0 + $0xf8] sm:$0xf]
  %v78 = vld [vmem:[%s0 + $0xfc] sm:$0xf]
  %v79 = vld [vmem:[%s1] sm:$0x3]
  %v80 = vld [vmem:[%s2] sm:$0x1]
  %v82 = vperm.slane %v80, 0
  %v148 = vunpack.c.l.b16 %v15
  %v149 = vunpack.c.l.b16 %v16
  %v150 = vunpack.c.l.b16 %v17
  %v151 = vunpack.c.l.b16 %v18
  %v152 = vunpack.c.l.b16 %v19
  %v153 = vunpack.c.l.b16 %v20
  %v154 = vunpack.c.l.b16 %v21
  %v155 = vunpack.c.l.b16 %v22
  %v156 = vunpack.c.l.b16 %v23
  %v157 = vunpack.c.l.b16 %v24
  %v158 = vunpack.c.l.b16 %v25
  %v159 = vunpack.c.l.b16 %v26
  %v160 = vunpack.c.l.b16 %v27
  %v161 = vunpack.c.l.b16 %v28
  %v162 = vunpack.c.l.b16 %v29
  %v163 = vunpack.c.l.b16 %v30
  %v164 = vunpack.c.l.b16 %v31
  %v165 = vunpack.c.l.b16 %v32
  %v166 = vunpack.c.l.b16 %v33
  %v167 = vunpack.c.l.b16 %v34
  %v168 = vunpack.c.l.b16 %v35
  %v169 = vunpack.c.l.b16 %v36
  %v170 = vunpack.c.l.b16 %v37
  %v171 = vunpack.c.l.b16 %v38
  %v172 = vunpack.c.l.b16 %v39
  %v173 = vunpack.c.l.b16 %v40
  %v174 = vunpack.c.l.b16 %v41
  %v175 = vunpack.c.l.b16 %v42
  %v176 = vunpack.c.l.b16 %v43
  %v177 = vunpack.c.l.b16 %v44
  %v178 = vunpack.c.l.b16 %v45
  %v179 = vunpack.c.l.b16 %v46
  %v180 = vunpack.c.l.b16 %v47
  %v181 = vunpack.c.l.b16 %v48
  %v182 = vunpack.c.l.b16 %v49
  %v183 = vunpack.c.l.b16 %v50
  %v184 = vunpack.c.l.b16 %v51
  %v185 = vunpack.c.l.b16 %v52
  %v186 = vunpack.c.l.b16 %v53
  %v187 = vunpack.c.l.b16 %v54
  %v188 = vunpack.c.l.b16 %v55
  %v189 = vunpack.c.l.b16 %v56
  %v190 = vunpack.c.l.b16 %v57
  %v191 = vunpack.c.l.b16 %v58
  %v192 = vunpack.c.l.b16 %v59
  %v193 = vunpack.c.l.b16 %v60
  %v194 = vunpack.c.l.b16 %v61
  %v195 = vunpack.c.l.b16 %v62
  %v196 = vunpack.c.l.b16 %v63
  %v197 = vunpack.c.l.b16 %v64
  %v198 = vunpack.c.l.b16 %v65
  %v199 = vunpack.c.l.b16 %v66
  %v200 = vunpack.c.l.b16 %v67
  %v201 = vunpack.c.l.b16 %v68
  %v202 = vunpack.c.l.b16 %v69
  %v203 = vunpack.c.l.b16 %v70
  %v204 = vunpack.c.l.b16 %v71
  %v205 = vunpack.c.l.b16 %v72
  %v206 = vunpack.c.l.b16 %v73
  %v207 = vunpack.c.l.b16 %v74
  %v208 = vunpack.c.l.b16 %v75
  %v209 = vunpack.c.l.b16 %v76
  %v210 = vunpack.c.l.b16 %v77
  %v211 = vunpack.c.l.b16 %v78
  %v212 = vpack.c.b16 %v149, %v148
  %v213 = vpack.c.b16 %v151, %v150
  %v214 = vpack.c.b16 %v153, %v152
  %v215 = vpack.c.b16 %v155, %v154
  %v216 = vpack.c.b16 %v157, %v156
  %v217 = vpack.c.b16 %v159, %v158
  %v218 = vpack.c.b16 %v161, %v160
  %v219 = vpack.c.b16 %v163, %v162
  %v220 = vpack.c.b16 %v165, %v164
  %v221 = vpack.c.b16 %v167, %v166
  %v222 = vpack.c.b16 %v169, %v168
  %v223 = vpack.c.b16 %v171, %v170
  %v224 = vpack.c.b16 %v173, %v172
  %v225 = vpack.c.b16 %v175, %v174
  %v226 = vpack.c.b16 %v177, %v176
  %v227 = vpack.c.b16 %v179, %v178
  %v228 = vpack.c.b16 %v181, %v180
  %v229 = vpack.c.b16 %v183, %v182
  %v230 = vpack.c.b16 %v185, %v184
  %v231 = vpack.c.b16 %v187, %v186
  %v232 = vpack.c.b16 %v189, %v188
  %v233 = vpack.c.b16 %v191, %v190
  %v234 = vpack.c.b16 %v193, %v192
  %v235 = vpack.c.b16 %v195, %v194
  %v236 = vpack.c.b16 %v197, %v196
  %v237 = vpack.c.b16 %v199, %v198
  %v238 = vpack.c.b16 %v201, %v200
  %v239 = vpack.c.b16 %v203, %v202
  %v240 = vpack.c.b16 %v205, %v204
  %v241 = vpack.c.b16 %v207, %v206
  %v242 = vpack.c.b16 %v209, %v208
  %v243 = vpack.c.b16 %v211, %v210
  %vm244 = vcmask 31744
  %v246 = vsel %vm244, %v212, 0
  %v249 = vsel %vm244, %v213, 0
  %v252 = vsel %vm244, %v214, 0
  %v255 = vsel %vm244, %v215, 0
  %v258 = vsel %vm244, %v216, 0
  %v261 = vsel %vm244, %v217, 0
  %v264 = vsel %vm244, %v218, 0
  %v267 = vsel %vm244, %v219, 0
  %v270 = vsel %vm244, %v220, 0
  %v273 = vsel %vm244, %v221, 0
  %v276 = vsel %vm244, %v222, 0
  %v279 = vsel %vm244, %v223, 0
  %v282 = vsel %vm244, %v224, 0
  %v285 = vsel %vm244, %v225, 0
  %v288 = vsel %vm244, %v226, 0
  %v291 = vsel %vm244, %v227, 0
  %v294 = vsel %vm244, %v228, 0
  %v297 = vsel %vm244, %v229, 0
  %v300 = vsel %vm244, %v230, 0
  %v303 = vsel %vm244, %v231, 0
  %v306 = vsel %vm244, %v232, 0
  %v309 = vsel %vm244, %v233, 0
  %v312 = vsel %vm244, %v234, 0
  %v315 = vsel %vm244, %v235, 0
  %v318 = vsel %vm244, %v236, 0
  %v321 = vsel %vm244, %v237, 0
  %v324 = vsel %vm244, %v238, 0
  %v327 = vsel %vm244, %v239, 0
  %v330 = vsel %vm244, %v240, 0
  %v333 = vsel %vm244, %v241, 0
  %v336 = vsel %vm244, %v242, 0
  %v339 = vsel %vm244, %v243, 0
  %vm341 = vcmask 1041408
  %v343 = vsel %vm341, %v79, 0
  %345 = vmatpush.bf16.msra.mxu0 0
  %346 = vmatpush.bf16.msra.mxu0 0
  %347 = vmatpush.bf16.msra.mxu0 0
  %348 = vmatpush.bf16.msra.mxu0 0
  %349 = vmatpush.bf16.msra.mxu0 0
  %350 = vmatpush.bf16.msra.mxu0 0
  %351 = vmatpush.bf16.msra.mxu0 0
  %352 = vmatpush.bf16.msra.mxu0 %v343
  %353 = vmatmul.bf16.gmra.mxu0 %v246
  %v354 = vpop.f32.mrf.mxu0
  %v355 = vadd.f32 %v82, %v354
  %v356 = vpop.f32.mrf.mxu0
  %v357 = vadd.f32 %v82, %v356
  %358 = vmatmul.bf16.gmra.mxu0 %v249
  %v359 = vpop.f32.mrf.mxu0
  %v360 = vadd.f32 %v82, %v359
  %v361 = vpop.f32.mrf.mxu0
  %v362 = vadd.f32 %v82, %v361
  %363 = vmatmul.bf16.gmra.mxu0 %v252
  %v364 = vpop.f32.mrf.mxu0
  %v365 = vadd.f32 %v82, %v364
  %v366 = vpop.f32.mrf.mxu0
  %v367 = vadd.f32 %v82, %v366
  %368 = vmatmul.bf16.gmra.mxu0 %v255
  %v369 = vpop.f32.mrf.mxu0
  %v370 = vadd.f32 %v82, %v369
  %v371 = vpop.f32.mrf.mxu0
  %v372 = vadd.f32 %v82, %v371
  %373 = vmatmul.bf16.gmra.mxu0 %v258
  %v374 = vpop.f32.mrf.mxu0
  %v375 = vadd.f32 %v82, %v374
  %v376 = vpop.f32.mrf.mxu0
  %v377 = vadd.f32 %v82, %v376
  %378 = vmatmul.bf16.gmra.mxu0 %v261
  %v379 = vpop.f32.mrf.mxu0
  %v380 = vadd.f32 %v82, %v379
  %v381 = vpop.f32.mrf.mxu0
  %v382 = vadd.f32 %v82, %v381
  %383 = vmatmul.bf16.gmra.mxu0 %v264
  %v384 = vpop.f32.mrf.mxu0
  %v385 = vadd.f32 %v82, %v384
  %v386 = vpop.f32.mrf.mxu0
  %v387 = vadd.f32 %v82, %v386
  %388 = vmatmul.bf16.gmra.mxu0 %v267
  %v389 = vpop.f32.mrf.mxu0
  %v390 = vadd.f32 %v82, %v389
  %v391 = vpop.f32.mrf.mxu0
  %v392 = vadd.f32 %v82, %v391
  %393 = vmatmul.bf16.gmra.mxu0 %v270
  %v394 = vpop.f32.mrf.mxu0
  %v395 = vadd.f32 %v82, %v394
  %v396 = vpop.f32.mrf.mxu0
  %v397 = vadd.f32 %v82, %v396
  %398 = vmatmul.bf16.gmra.mxu0 %v273
  %v399 = vpop.f32.mrf.mxu0
  %v400 = vadd.f32 %v82, %v399
  %v401 = vpop.f32.mrf.mxu0
  %v402 = vadd.f32 %v82, %v401
  %403 = vmatmul.bf16.gmra.mxu0 %v276
  %v404 = vpop.f32.mrf.mxu0
  %v405 = vadd.f32 %v82, %v404
  %v406 = vpop.f32.mrf.mxu0
  %v407 = vadd.f32 %v82, %v406
  %408 = vmatmul.bf16.gmra.mxu0 %v279
  %v409 = vpop.f32.mrf.mxu0
  %v410 = vadd.f32 %v82, %v409
  %v411 = vpop.f32.mrf.mxu0
  %v412 = vadd.f32 %v82, %v411
  %413 = vmatmul.bf16.gmra.mxu0 %v282
  %v414 = vpop.f32.mrf.mxu0
  %v415 = vadd.f32 %v82, %v414
  %v416 = vpop.f32.mrf.mxu0
  %v417 = vadd.f32 %v82, %v416
  %418 = vmatmul.bf16.gmra.mxu0 %v285
  %v419 = vpop.f32.mrf.mxu0
  %v420 = vadd.f32 %v82, %v419
  %v421 = vpop.f32.mrf.mxu0
  %v422 = vadd.f32 %v82, %v421
  %423 = vmatmul.bf16.gmra.mxu0 %v288
  %v424 = vpop.f32.mrf.mxu0
  %v425 = vadd.f32 %v82, %v424
  %v426 = vpop.f32.mrf.mxu0
  %v427 = vadd.f32 %v82, %v426
  %428 = vmatmul.bf16.gmra.mxu0 %v291
  %v429 = vpop.f32.mrf.mxu0
  %v430 = vadd.f32 %v82, %v429
  %v431 = vpop.f32.mrf.mxu0
  %v432 = vadd.f32 %v82, %v431
  %433 = vmatmul.bf16.gmra.mxu0 %v294
  %v434 = vpop.f32.mrf.mxu0
  %v435 = vadd.f32 %v82, %v434
  %v436 = vpop.f32.mrf.mxu0
  %v437 = vadd.f32 %v82, %v436
  %438 = vmatmul.bf16.gmra.mxu0 %v297
  %v439 = vpop.f32.mrf.mxu0
  %v440 = vadd.f32 %v82, %v439
  %v441 = vpop.f32.mrf.mxu0
  %v442 = vadd.f32 %v82, %v441
  %443 = vmatmul.bf16.gmra.mxu0 %v300
  %v444 = vpop.f32.mrf.mxu0
  %v445 = vadd.f32 %v82, %v444
  %v446 = vpop.f32.mrf.mxu0
  %v447 = vadd.f32 %v82, %v446
  %448 = vmatmul.bf16.gmra.mxu0 %v303
  %v449 = vpop.f32.mrf.mxu0
  %v450 = vadd.f32 %v82, %v449
  %v451 = vpop.f32.mrf.mxu0
  %v452 = vadd.f32 %v82, %v451
  %453 = vmatmul.bf16.gmra.mxu0 %v306
  %v454 = vpop.f32.mrf.mxu0
  %v455 = vadd.f32 %v82, %v454
  %v456 = vpop.f32.mrf.mxu0
  %v457 = vadd.f32 %v82, %v456
  %458 = vmatmul.bf16.gmra.mxu0 %v309
  %v459 = vpop.f32.mrf.mxu0
  %v460 = vadd.f32 %v82, %v459
  %v461 = vpop.f32.mrf.mxu0
  %v462 = vadd.f32 %v82, %v461
  %463 = vmatmul.bf16.gmra.mxu0 %v312
  %v464 = vpop.f32.mrf.mxu0
  %v465 = vadd.f32 %v82, %v464
  %v466 = vpop.f32.mrf.mxu0
  %v467 = vadd.f32 %v82, %v466
  %468 = vmatmul.bf16.gmra.mxu0 %v315
  %v469 = vpop.f32.mrf.mxu0
  %v470 = vadd.f32 %v82, %v469
  %v471 = vpop.f32.mrf.mxu0
  %v472 = vadd.f32 %v82, %v471
  %473 = vmatmul.bf16.gmra.mxu0 %v318
  %v474 = vpop.f32.mrf.mxu0
  %v475 = vadd.f32 %v82, %v474
  %v476 = vpop.f32.mrf.mxu0
  %v477 = vadd.f32 %v82, %v476
  %478 = vmatmul.bf16.gmra.mxu0 %v321
  %v479 = vpop.f32.mrf.mxu0
  %v480 = vadd.f32 %v82, %v479
  %v481 = vpop.f32.mrf.mxu0
  %v482 = vadd.f32 %v82, %v481
  %483 = vmatmul.bf16.gmra.mxu0 %v324
  %v484 = vpop.f32.mrf.mxu0
  %v485 = vadd.f32 %v82, %v484
  %v486 = vpop.f32.mrf.mxu0
  %v487 = vadd.f32 %v82, %v486
  %488 = vmatmul.bf16.gmra.mxu0 %v327
  %v489 = vpop.f32.mrf.mxu0
  %v490 = vadd.f32 %v82, %v489
  %v491 = vpop.f32.mrf.mxu0
  %v492 = vadd.f32 %v82, %v491
  %493 = vmatmul.bf16.gmra.mxu0 %v330
  %v494 = vpop.f32.mrf.mxu0
  %v495 = vadd.f32 %v82, %v494
  %v496 = vpop.f32.mrf.mxu0
  %v497 = vadd.f32 %v82, %v496
  %498 = vmatmul.bf16.gmra.mxu0 %v333
  %v499 = vpop.f32.mrf.mxu0
  %v500 = vadd.f32 %v82, %v499
  %v501 = vpop.f32.mrf.mxu0
  %v502 = vadd.f32 %v82, %v501
  %503 = vmatmul.bf16.gmra.mxu0 %v336
  %v504 = vpop.f32.mrf.mxu0
  %v505 = vadd.f32 %v82, %v504
  %v506 = vpop.f32.mrf.mxu0
  %v507 = vadd.f32 %v82, %v506
  %508 = vmatmul.bf16.gmra.mxu0 %v339
  %v509 = vpop.f32.mrf.mxu0
  %v510 = vadd.f32 %v82, %v509
  %v511 = vpop.f32.mrf.mxu0
  %v512 = vadd.f32 %v82, %v511
  %513 = vdwg.mxu0
  %v514 = vxor.u32 %v355, 2147483648
  %v515 = vxor.u32 %v357, 2147483648
  %v516 = vxor.u32 %v360, 2147483648
  %v517 = vxor.u32 %v362, 2147483648
  %v518 = vxor.u32 %v365, 2147483648
  %v519 = vxor.u32 %v367, 2147483648
  %v520 = vxor.u32 %v370, 2147483648
  %v521 = vxor.u32 %v372, 2147483648
  %v522 = vxor.u32 %v375, 2147483648
  %v523 = vxor.u32 %v377, 2147483648
  %v524 = vxor.u32 %v380, 2147483648
  %v525 = vxor.u32 %v382, 2147483648
  %v526 = vxor.u32 %v385, 2147483648
  %v527 = vxor.u32 %v387, 2147483648
  %v528 = vxor.u32 %v390, 2147483648
  %v529 = vxor.u32 %v392, 2147483648
  %v530 = vxor.u32 %v395, 2147483648
  %v531 = vxor.u32 %v397, 2147483648
  %v532 = vxor.u32 %v400, 2147483648
  %v533 = vxor.u32 %v402, 2147483648
  %v534 = vxor.u32 %v405, 2147483648
  %v535 = vxor.u32 %v407, 2147483648
  %v536 = vxor.u32 %v410, 2147483648
  %v537 = vxor.u32 %v412, 2147483648
  %v538 = vxor.u32 %v415, 2147483648
  %v539 = vxor.u32 %v417, 2147483648
  %v540 = vxor.u32 %v420, 2147483648
  %v541 = vxor.u32 %v422, 2147483648
  %v542 = vxor.u32 %v425, 2147483648
  %v543 = vxor.u32 %v427, 2147483648
  %v544 = vxor.u32 %v430, 2147483648
  %v545 = vxor.u32 %v432, 2147483648
  %v546 = vxor.u32 %v435, 2147483648
  %v547 = vxor.u32 %v437, 2147483648
  %v548 = vxor.u32 %v440, 2147483648
  %v549 = vxor.u32 %v442, 2147483648
  %v550 = vxor.u32 %v445, 2147483648
  %v551 = vxor.u32 %v447, 2147483648
  %v552 = vxor.u32 %v450, 2147483648
  %v553 = vxor.u32 %v452, 2147483648
  %v554 = vxor.u32 %v455, 2147483648
  %v555 = vxor.u32 %v457, 2147483648
  %v556 = vxor.u32 %v460, 2147483648
  %v557 = vxor.u32 %v462, 2147483648
  %v558 = vxor.u32 %v465, 2147483648
  %v559 = vxor.u32 %v467, 2147483648
  %v560 = vxor.u32 %v470, 2147483648
  %v561 = vxor.u32 %v472, 2147483648
  %v562 = vxor.u32 %v475, 2147483648
  %v563 = vxor.u32 %v477, 2147483648
  %v564 = vxor.u32 %v480, 2147483648
  %v565 = vxor.u32 %v482, 2147483648
  %v566 = vxor.u32 %v485, 2147483648
  %v567 = vxor.u32 %v487, 2147483648
  %v568 = vxor.u32 %v490, 2147483648
  %v569 = vxor.u32 %v492, 2147483648
  %v570 = vxor.u32 %v495, 2147483648
  %v571 = vxor.u32 %v497, 2147483648
  %v572 = vxor.u32 %v500, 2147483648
  %v573 = vxor.u32 %v502, 2147483648
  %v574 = vxor.u32 %v505, 2147483648
  %v575 = vxor.u32 %v507, 2147483648
  %v576 = vxor.u32 %v510, 2147483648
  %v577 = vxor.u32 %v512, 2147483648
  %v578 = vmul.f32 %v514, 1.442695
  %v579 = vpow.pop %v578
  %v580 = vmul.f32 %v515, 1.442695
  %v581 = vpow.pop %v580
  %v582 = vmul.f32 %v516, 1.442695
  %v583 = vpow.pop %v582
  %v584 = vmul.f32 %v517, 1.442695
  %v585 = vpow.pop %v584
  %v586 = vmul.f32 %v518, 1.442695
  %v587 = vpow.pop %v586
  %v588 = vmul.f32 %v519, 1.442695
  %v589 = vpow.pop %v588
  %v590 = vmul.f32 %v520, 1.442695
  %v591 = vpow.pop %v590
  %v592 = vmul.f32 %v521, 1.442695
  %v593 = vpow.pop %v592
  %v594 = vmul.f32 %v522, 1.442695
  %v595 = vpow.pop %v594
  %v596 = vmul.f32 %v523, 1.442695
  %v597 = vpow.pop %v596
  %v598 = vmul.f32 %v524, 1.442695
  %v599 = vpow.pop %v598
  %v600 = vmul.f32 %v525, 1.442695
  %v601 = vpow.pop %v600
  %v602 = vmul.f32 %v526, 1.442695
  %v603 = vpow.pop %v602
  %v604 = vmul.f32 %v527, 1.442695
  %v605 = vpow.pop %v604
  %v606 = vmul.f32 %v528, 1.442695
  %v607 = vpow.pop %v606
  %v608 = vmul.f32 %v529, 1.442695
  %v609 = vpow.pop %v608
  %v610 = vmul.f32 %v530, 1.442695
  %v611 = vpow.pop %v610
  %v612 = vmul.f32 %v531, 1.442695
  %v613 = vpow.pop %v612
  %v614 = vmul.f32 %v532, 1.442695
  %v615 = vpow.pop %v614
  %v616 = vmul.f32 %v533, 1.442695
  %v617 = vpow.pop %v616
  %v618 = vmul.f32 %v534, 1.442695
  %v619 = vpow.pop %v618
  %v620 = vmul.f32 %v535, 1.442695
  %v621 = vpow.pop %v620
  %v622 = vmul.f32 %v536, 1.442695
  %v623 = vpow.pop %v622
  %v624 = vmul.f32 %v537, 1.442695
  %v625 = vpow.pop %v624
  %v626 = vmul.f32 %v538, 1.442695
  %v627 = vpow.pop %v626
  %v628 = vmul.f32 %v539, 1.442695
  %v629 = vpow.pop %v628
  %v630 = vmul.f32 %v540, 1.442695
  %v631 = vpow.pop %v630
  %v632 = vmul.f32 %v541, 1.442695
  %v633 = vpow.pop %v632
  %v634 = vmul.f32 %v542, 1.442695
  %v635 = vpow.pop %v634
  %v636 = vmul.f32 %v543, 1.442695
  %v637 = vpow.pop %v636
  %v638 = vmul.f32 %v544, 1.442695
  %v639 = vpow.pop %v638
  %v640 = vmul.f32 %v545, 1.442695
  %v641 = vpow.pop %v640
  %v642 = vmul.f32 %v546, 1.442695
  %v643 = vpow.pop %v642
  %v644 = vmul.f32 %v547, 1.442695
  %v645 = vpow.pop %v644
  %v646 = vmul.f32 %v548, 1.442695
  %v647 = vpow.pop %v646
  %v648 = vmul.f32 %v549, 1.442695
  %v649 = vpow.pop %v648
  %v650 = vmul.f32 %v550, 1.442695
  %v651 = vpow.pop %v650
  %v652 = vmul.f32 %v551, 1.442695
  %v653 = vpow.pop %v652
  %v654 = vmul.f32 %v552, 1.442695
  %v655 = vpow.pop %v654
  %v656 = vmul.f32 %v553, 1.442695
  %v657 = vpow.pop %v656
  %v658 = vmul.f32 %v554, 1.442695
  %v659 = vpow.pop %v658
  %v660 = vmul.f32 %v555, 1.442695
  %v661 = vpow.pop %v660
  %v662 = vmul.f32 %v556, 1.442695
  %v663 = vpow.pop %v662
  %v664 = vmul.f32 %v557, 1.442695
  %v665 = vpow.pop %v664
  %v666 = vmul.f32 %v558, 1.442695
  %v667 = vpow.pop %v666
  %v668 = vmul.f32 %v559, 1.442695
  %v669 = vpow.pop %v668
  %v670 = vmul.f32 %v560, 1.442695
  %v671 = vpow.pop %v670
  %v672 = vmul.f32 %v561, 1.442695
  %v673 = vpow.pop %v672
  %v674 = vmul.f32 %v562, 1.442695
  %v675 = vpow.pop %v674
  %v676 = vmul.f32 %v563, 1.442695
  %v677 = vpow.pop %v676
  %v678 = vmul.f32 %v564, 1.442695
  %v679 = vpow.pop %v678
  %v680 = vmul.f32 %v565, 1.442695
  %v681 = vpow.pop %v680
  %v682 = vmul.f32 %v566, 1.442695
  %v683 = vpow.pop %v682
  %v684 = vmul.f32 %v567, 1.442695
  %v685 = vpow.pop %v684
  %v686 = vmul.f32 %v568, 1.442695
  %v687 = vpow.pop %v686
  %v688 = vmul.f32 %v569, 1.442695
  %v689 = vpow.pop %v688
  %v690 = vmul.f32 %v570, 1.442695
  %v691 = vpow.pop %v690
  %v692 = vmul.f32 %v571, 1.442695
  %v693 = vpow.pop %v692
  %v694 = vmul.f32 %v572, 1.442695
  %v695 = vpow.pop %v694
  %v696 = vmul.f32 %v573, 1.442695
  %v697 = vpow.pop %v696
  %v698 = vmul.f32 %v574, 1.442695
  %v699 = vpow.pop %v698
  %v700 = vmul.f32 %v575, 1.442695
  %v701 = vpow.pop %v700
  %v702 = vmul.f32 %v576, 1.442695
  %v703 = vpow.pop %v702
  %v704 = vmul.f32 %v577, 1.442695
  %v705 = vpow.pop %v704
  %v706 = vadd.f32 %v579, 1.0
  %v707 = vadd.f32 %v581, 1.0
  %v708 = vadd.f32 %v583, 1.0
  %v709 = vadd.f32 %v585, 1.0
  %v710 = vadd.f32 %v587, 1.0
  %v711 = vadd.f32 %v589, 1.0
  %v712 = vadd.f32 %v591, 1.0
  %v713 = vadd.f32 %v593, 1.0
  %v714 = vadd.f32 %v595, 1.0
  %v715 = vadd.f32 %v597, 1.0
  %v716 = vadd.f32 %v599, 1.0
  %v717 = vadd.f32 %v601, 1.0
  %v718 = vadd.f32 %v603, 1.0
  %v719 = vadd.f32 %v605, 1.0
  %v720 = vadd.f32 %v607, 1.0
  %v721 = vadd.f32 %v609, 1.0
  %v722 = vadd.f32 %v611, 1.0
  %v723 = vadd.f32 %v613, 1.0
  %v724 = vadd.f32 %v615, 1.0
  %v725 = vadd.f32 %v617, 1.0
  %v726 = vadd.f32 %v619, 1.0
  %v727 = vadd.f32 %v621, 1.0
  %v728 = vadd.f32 %v623, 1.0
  %v729 = vadd.f32 %v625, 1.0
  %v730 = vadd.f32 %v627, 1.0
  %v731 = vadd.f32 %v629, 1.0
  %v732 = vadd.f32 %v631, 1.0
  %v733 = vadd.f32 %v633, 1.0
  %v734 = vadd.f32 %v635, 1.0
  %v735 = vadd.f32 %v637, 1.0
  %v736 = vadd.f32 %v639, 1.0
  %v737 = vadd.f32 %v641, 1.0
  %v738 = vadd.f32 %v643, 1.0
  %v739 = vadd.f32 %v645, 1.0
  %v740 = vadd.f32 %v647, 1.0
  %v741 = vadd.f32 %v649, 1.0
  %v742 = vadd.f32 %v651, 1.0
  %v743 = vadd.f32 %v653, 1.0
  %v744 = vadd.f32 %v655, 1.0
  %v745 = vadd.f32 %v657, 1.0
  %v746 = vadd.f32 %v659, 1.0
  %v747 = vadd.f32 %v661, 1.0
  %v748 = vadd.f32 %v663, 1.0
  %v749 = vadd.f32 %v665, 1.0
  %v750 = vadd.f32 %v667, 1.0
  %v751 = vadd.f32 %v669, 1.0
  %v752 = vadd.f32 %v671, 1.0
  %v753 = vadd.f32 %v673, 1.0
  %v754 = vadd.f32 %v675, 1.0
  %v755 = vadd.f32 %v677, 1.0
  %v756 = vadd.f32 %v679, 1.0
  %v757 = vadd.f32 %v681, 1.0
  %v758 = vadd.f32 %v683, 1.0
  %v759 = vadd.f32 %v685, 1.0
  %v760 = vadd.f32 %v687, 1.0
  %v761 = vadd.f32 %v689, 1.0
  %v762 = vadd.f32 %v691, 1.0
  %v763 = vadd.f32 %v693, 1.0
  %v764 = vadd.f32 %v695, 1.0
  %v765 = vadd.f32 %v697, 1.0
  %v766 = vadd.f32 %v699, 1.0
  %v767 = vadd.f32 %v701, 1.0
  %v768 = vadd.f32 %v703, 1.0
  %v769 = vadd.f32 %v705, 1.0
  %v770 = vrcp.pop %v706
  %v771 = vmul.f32 %v706, %v770
  %v772 = vsub.f32 1.0, %v771
  %v773 = vmul.f32 %v770, %v772
  %v774 = vadd.f32 %v770, %v773
  %vm775 = vweird.f32 %v706
  %vm776 = vweird.f32 %v770
  %vm777 = vmor %vm775, %vm776
  %v778 = vsel %vm777, %v770, %v774
  %v779 = vand.u32 2147483647, %v706
  %vm780 = vcmp.eq.f32.partialorder %v779, 8.507059e+37
  %v781 = vand.u32 %v706, 2147483648
  %v782 = vor.u32 1.1754944e-38, %v781
  %v783 = vsel %vm780, %v782, %v778
  %v784 = vmul.f32 1.0, %v783
  %v785 = vrcp.pop %v707
  %v786 = vmul.f32 %v707, %v785
  %v787 = vsub.f32 1.0, %v786
  %v788 = vmul.f32 %v785, %v787
  %v789 = vadd.f32 %v785, %v788
  %vm790 = vweird.f32 %v707
  %vm791 = vweird.f32 %v785
  %vm792 = vmor %vm790, %vm791
  %v793 = vsel %vm792, %v785, %v789
  %v794 = vand.u32 2147483647, %v707
  %vm795 = vcmp.eq.f32.partialorder %v794, 8.507059e+37
  %v796 = vand.u32 %v707, 2147483648
  %v797 = vor.u32 1.1754944e-38, %v796
  %v798 = vsel %vm795, %v797, %v793
  %v799 = vmul.f32 1.0, %v798
  %v800 = vrcp.pop %v708
  %v801 = vmul.f32 %v708, %v800
  %v802 = vsub.f32 1.0, %v801
  %v803 = vmul.f32 %v800, %v802
  %v804 = vadd.f32 %v800, %v803
  %vm805 = vweird.f32 %v708
  %vm806 = vweird.f32 %v800
  %vm807 = vmor %vm805, %vm806
  %v808 = vsel %vm807, %v800, %v804
  %v809 = vand.u32 2147483647, %v708
  %vm810 = vcmp.eq.f32.partialorder %v809, 8.507059e+37
  %v811 = vand.u32 %v708, 2147483648
  %v812 = vor.u32 1.1754944e-38, %v811
  %v813 = vsel %vm810, %v812, %v808
  %v814 = vmul.f32 1.0, %v813
  %v815 = vrcp.pop %v709
  %v816 = vmul.f32 %v709, %v815
  %v817 = vsub.f32 1.0, %v816
  %v818 = vmul.f32 %v815, %v817
  %v819 = vadd.f32 %v815, %v818
  %vm820 = vweird.f32 %v709
  %vm821 = vweird.f32 %v815
  %vm822 = vmor %vm820, %vm821
  %v823 = vsel %vm822, %v815, %v819
  %v824 = vand.u32 2147483647, %v709
  %vm825 = vcmp.eq.f32.partialorder %v824, 8.507059e+37
  %v826 = vand.u32 %v709, 2147483648
  %v827 = vor.u32 1.1754944e-38, %v826
  %v828 = vsel %vm825, %v827, %v823
  %v829 = vmul.f32 1.0, %v828
  %v830 = vrcp.pop %v710
  %v831 = vmul.f32 %v710, %v830
  %v832 = vsub.f32 1.0, %v831
  %v833 = vmul.f32 %v830, %v832
  %v834 = vadd.f32 %v830, %v833
  %vm835 = vweird.f32 %v710
  %vm836 = vweird.f32 %v830
  %vm837 = vmor %vm835, %vm836
  %v838 = vsel %vm837, %v830, %v834
  %v839 = vand.u32 2147483647, %v710
  %vm840 = vcmp.eq.f32.partialorder %v839, 8.507059e+37
  %v841 = vand.u32 %v710, 2147483648
  %v842 = vor.u32 1.1754944e-38, %v841
  %v843 = vsel %vm840, %v842, %v838
  %v844 = vmul.f32 1.0, %v843
  %v845 = vrcp.pop %v711
  %v846 = vmul.f32 %v711, %v845
  %v847 = vsub.f32 1.0, %v846
  %v848 = vmul.f32 %v845, %v847
  %v849 = vadd.f32 %v845, %v848
  %vm850 = vweird.f32 %v711
  %vm851 = vweird.f32 %v845
  %vm852 = vmor %vm850, %vm851
  %v853 = vsel %vm852, %v845, %v849
  %v854 = vand.u32 2147483647, %v711
  %vm855 = vcmp.eq.f32.partialorder %v854, 8.507059e+37
  %v856 = vand.u32 %v711, 2147483648
  %v857 = vor.u32 1.1754944e-38, %v856
  %v858 = vsel %vm855, %v857, %v853
  %v859 = vmul.f32 1.0, %v858
  %v860 = vrcp.pop %v712
  %v861 = vmul.f32 %v712, %v860
  %v862 = vsub.f32 1.0, %v861
  %v863 = vmul.f32 %v860, %v862
  %v864 = vadd.f32 %v860, %v863
  %vm865 = vweird.f32 %v712
  %vm866 = vweird.f32 %v860
  %vm867 = vmor %vm865, %vm866
  %v868 = vsel %vm867, %v860, %v864
  %v869 = vand.u32 2147483647, %v712
  %vm870 = vcmp.eq.f32.partialorder %v869, 8.507059e+37
  %v871 = vand.u32 %v712, 2147483648
  %v872 = vor.u32 1.1754944e-38, %v871
  %v873 = vsel %vm870, %v872, %v868
  %v874 = vmul.f32 1.0, %v873
  %v875 = vrcp.pop %v713
  %v876 = vmul.f32 %v713, %v875
  %v877 = vsub.f32 1.0, %v876
  %v878 = vmul.f32 %v875, %v877
  %v879 = vadd.f32 %v875, %v878
  %vm880 = vweird.f32 %v713
  %vm881 = vweird.f32 %v875
  %vm882 = vmor %vm880, %vm881
  %v883 = vsel %vm882, %v875, %v879
  %v884 = vand.u32 2147483647, %v713
  %vm885 = vcmp.eq.f32.partialorder %v884, 8.507059e+37
  %v886 = vand.u32 %v713, 2147483648
  %v887 = vor.u32 1.1754944e-38, %v886
  %v888 = vsel %vm885, %v887, %v883
  %v889 = vmul.f32 1.0, %v888
  %v890 = vrcp.pop %v714
  %v891 = vmul.f32 %v714, %v890
  %v892 = vsub.f32 1.0, %v891
  %v893 = vmul.f32 %v890, %v892
  %v894 = vadd.f32 %v890, %v893
  %vm895 = vweird.f32 %v714
  %vm896 = vweird.f32 %v890
  %vm897 = vmor %vm895, %vm896
  %v898 = vsel %vm897, %v890, %v894
  %v899 = vand.u32 2147483647, %v714
  %vm900 = vcmp.eq.f32.partialorder %v899, 8.507059e+37
  %v901 = vand.u32 %v714, 2147483648
  %v902 = vor.u32 1.1754944e-38, %v901
  %v903 = vsel %vm900, %v902, %v898
  %v904 = vmul.f32 1.0, %v903
  %v905 = vrcp.pop %v715
  %v906 = vmul.f32 %v715, %v905
  %v907 = vsub.f32 1.0, %v906
  %v908 = vmul.f32 %v905, %v907
  %v909 = vadd.f32 %v905, %v908
  %vm910 = vweird.f32 %v715
  %vm911 = vweird.f32 %v905
  %vm912 = vmor %vm910, %vm911
  %v913 = vsel %vm912, %v905, %v909
  %v914 = vand.u32 2147483647, %v715
  %vm915 = vcmp.eq.f32.partialorder %v914, 8.507059e+37
  %v916 = vand.u32 %v715, 2147483648
  %v917 = vor.u32 1.1754944e-38, %v916
  %v918 = vsel %vm915, %v917, %v913
  %v919 = vmul.f32 1.0, %v918
  %v920 = vrcp.pop %v716
  %v921 = vmul.f32 %v716, %v920
  %v922 = vsub.f32 1.0, %v921
  %v923 = vmul.f32 %v920, %v922
  %v924 = vadd.f32 %v920, %v923
  %vm925 = vweird.f32 %v716
  %vm926 = vweird.f32 %v920
  %vm927 = vmor %vm925, %vm926
  %v928 = vsel %vm927, %v920, %v924
  %v929 = vand.u32 2147483647, %v716
  %vm930 = vcmp.eq.f32.partialorder %v929, 8.507059e+37
  %v931 = vand.u32 %v716, 2147483648
  %v932 = vor.u32 1.1754944e-38, %v931
  %v933 = vsel %vm930, %v932, %v928
  %v934 = vmul.f32 1.0, %v933
  %v935 = vrcp.pop %v717
  %v936 = vmul.f32 %v717, %v935
  %v937 = vsub.f32 1.0, %v936
  %v938 = vmul.f32 %v935, %v937
  %v939 = vadd.f32 %v935, %v938
  %vm940 = vweird.f32 %v717
  %vm941 = vweird.f32 %v935
  %vm942 = vmor %vm940, %vm941
  %v943 = vsel %vm942, %v935, %v939
  %v944 = vand.u32 2147483647, %v717
  %vm945 = vcmp.eq.f32.partialorder %v944, 8.507059e+37
  %v946 = vand.u32 %v717, 2147483648
  %v947 = vor.u32 1.1754944e-38, %v946
  %v948 = vsel %vm945, %v947, %v943
  %v949 = vmul.f32 1.0, %v948
  %v950 = vrcp.pop %v718
  %v951 = vmul.f32 %v718, %v950
  %v952 = vsub.f32 1.0, %v951
  %v953 = vmul.f32 %v950, %v952
  %v954 = vadd.f32 %v950, %v953
  %vm955 = vweird.f32 %v718
  %vm956 = vweird.f32 %v950
  %vm957 = vmor %vm955, %vm956
  %v958 = vsel %vm957, %v950, %v954
  %v959 = vand.u32 2147483647, %v718
  %vm960 = vcmp.eq.f32.partialorder %v959, 8.507059e+37
  %v961 = vand.u32 %v718, 2147483648
  %v962 = vor.u32 1.1754944e-38, %v961
  %v963 = vsel %vm960, %v962, %v958
  %v964 = vmul.f32 1.0, %v963
  %v965 = vrcp.pop %v719
  %v966 = vmul.f32 %v719, %v965
  %v967 = vsub.f32 1.0, %v966
  %v968 = vmul.f32 %v965, %v967
  %v969 = vadd.f32 %v965, %v968
  %vm970 = vweird.f32 %v719
  %vm971 = vweird.f32 %v965
  %vm972 = vmor %vm970, %vm971
  %v973 = vsel %vm972, %v965, %v969
  %v974 = vand.u32 2147483647, %v719
  %vm975 = vcmp.eq.f32.partialorder %v974, 8.507059e+37
  %v976 = vand.u32 %v719, 2147483648
  %v977 = vor.u32 1.1754944e-38, %v976
  %v978 = vsel %vm975, %v977, %v973
  %v979 = vmul.f32 1.0, %v978
  %v980 = vrcp.pop %v720
  %v981 = vmul.f32 %v720, %v980
  %v982 = vsub.f32 1.0, %v981
  %v983 = vmul.f32 %v980, %v982
  %v984 = vadd.f32 %v980, %v983
  %vm985 = vweird.f32 %v720
  %vm986 = vweird.f32 %v980
  %vm987 = vmor %vm985, %vm986
  %v988 = vsel %vm987, %v980, %v984
  %v989 = vand.u32 2147483647, %v720
  %vm990 = vcmp.eq.f32.partialorder %v989, 8.507059e+37
  %v991 = vand.u32 %v720, 2147483648
  %v992 = vor.u32 1.1754944e-38, %v991
  %v993 = vsel %vm990, %v992, %v988
  %v994 = vmul.f32 1.0, %v993
  %v995 = vrcp.pop %v721
  %v996 = vmul.f32 %v721, %v995
  %v997 = vsub.f32 1.0, %v996
  %v998 = vmul.f32 %v995, %v997
  %v999 = vadd.f32 %v995, %v998
  %vm1000 = vweird.f32 %v721
  %vm1001 = vweird.f32 %v995
  %vm1002 = vmor %vm1000, %vm1001
  %v1003 = vsel %vm1002, %v995, %v999
  %v1004 = vand.u32 2147483647, %v721
  %vm1005 = vcmp.eq.f32.partialorder %v1004, 8.507059e+37
  %v1006 = vand.u32 %v721, 2147483648
  %v1007 = vor.u32 1.1754944e-38, %v1006
  %v1008 = vsel %vm1005, %v1007, %v1003
  %v1009 = vmul.f32 1.0, %v1008
  %v1010 = vrcp.pop %v722
  %v1011 = vmul.f32 %v722, %v1010
  %v1012 = vsub.f32 1.0, %v1011
  %v1013 = vmul.f32 %v1010, %v1012
  %v1014 = vadd.f32 %v1010, %v1013
  %vm1015 = vweird.f32 %v722
  %vm1016 = vweird.f32 %v1010
  %vm1017 = vmor %vm1015, %vm1016
  %v1018 = vsel %vm1017, %v1010, %v1014
  %v1019 = vand.u32 2147483647, %v722
  %vm1020 = vcmp.eq.f32.partialorder %v1019, 8.507059e+37
  %v1021 = vand.u32 %v722, 2147483648
  %v1022 = vor.u32 1.1754944e-38, %v1021
  %v1023 = vsel %vm1020, %v1022, %v1018
  %v1024 = vmul.f32 1.0, %v1023
  %v1025 = vrcp.pop %v723
  %v1026 = vmul.f32 %v723, %v1025
  %v1027 = vsub.f32 1.0, %v1026
  %v1028 = vmul.f32 %v1025, %v1027
  %v1029 = vadd.f32 %v1025, %v1028
  %vm1030 = vweird.f32 %v723
  %vm1031 = vweird.f32 %v1025
  %vm1032 = vmor %vm1030, %vm1031
  %v1033 = vsel %vm1032, %v1025, %v1029
  %v1034 = vand.u32 2147483647, %v723
  %vm1035 = vcmp.eq.f32.partialorder %v1034, 8.507059e+37
  %v1036 = vand.u32 %v723, 2147483648
  %v1037 = vor.u32 1.1754944e-38, %v1036
  %v1038 = vsel %vm1035, %v1037, %v1033
  %v1039 = vmul.f32 1.0, %v1038
  %v1040 = vrcp.pop %v724
  %v1041 = vmul.f32 %v724, %v1040
  %v1042 = vsub.f32 1.0, %v1041
  %v1043 = vmul.f32 %v1040, %v1042
  %v1044 = vadd.f32 %v1040, %v1043
  %vm1045 = vweird.f32 %v724
  %vm1046 = vweird.f32 %v1040
  %vm1047 = vmor %vm1045, %vm1046
  %v1048 = vsel %vm1047, %v1040, %v1044
  %v1049 = vand.u32 2147483647, %v724
  %vm1050 = vcmp.eq.f32.partialorder %v1049, 8.507059e+37
  %v1051 = vand.u32 %v724, 2147483648
  %v1052 = vor.u32 1.1754944e-38, %v1051
  %v1053 = vsel %vm1050, %v1052, %v1048
  %v1054 = vmul.f32 1.0, %v1053
  %v1055 = vrcp.pop %v725
  %v1056 = vmul.f32 %v725, %v1055
  %v1057 = vsub.f32 1.0, %v1056
  %v1058 = vmul.f32 %v1055, %v1057
  %v1059 = vadd.f32 %v1055, %v1058
  %vm1060 = vweird.f32 %v725
  %vm1061 = vweird.f32 %v1055
  %vm1062 = vmor %vm1060, %vm1061
  %v1063 = vsel %vm1062, %v1055, %v1059
  %v1064 = vand.u32 2147483647, %v725
  %vm1065 = vcmp.eq.f32.partialorder %v1064, 8.507059e+37
  %v1066 = vand.u32 %v725, 2147483648
  %v1067 = vor.u32 1.1754944e-38, %v1066
  %v1068 = vsel %vm1065, %v1067, %v1063
  %v1069 = vmul.f32 1.0, %v1068
  %v1070 = vrcp.pop %v726
  %v1071 = vmul.f32 %v726, %v1070
  %v1072 = vsub.f32 1.0, %v1071
  %v1073 = vmul.f32 %v1070, %v1072
  %v1074 = vadd.f32 %v1070, %v1073
  %vm1075 = vweird.f32 %v726
  %vm1076 = vweird.f32 %v1070
  %vm1077 = vmor %vm1075, %vm1076
  %v1078 = vsel %vm1077, %v1070, %v1074
  %v1079 = vand.u32 2147483647, %v726
  %vm1080 = vcmp.eq.f32.partialorder %v1079, 8.507059e+37
  %v1081 = vand.u32 %v726, 2147483648
  %v1082 = vor.u32 1.1754944e-38, %v1081
  %v1083 = vsel %vm1080, %v1082, %v1078
  %v1084 = vmul.f32 1.0, %v1083
  %v1085 = vrcp.pop %v727
  %v1086 = vmul.f32 %v727, %v1085
  %v1087 = vsub.f32 1.0, %v1086
  %v1088 = vmul.f32 %v1085, %v1087
  %v1089 = vadd.f32 %v1085, %v1088
  %vm1090 = vweird.f32 %v727
  %vm1091 = vweird.f32 %v1085
  %vm1092 = vmor %vm1090, %vm1091
  %v1093 = vsel %vm1092, %v1085, %v1089
  %v1094 = vand.u32 2147483647, %v727
  %vm1095 = vcmp.eq.f32.partialorder %v1094, 8.507059e+37
  %v1096 = vand.u32 %v727, 2147483648
  %v1097 = vor.u32 1.1754944e-38, %v1096
  %v1098 = vsel %vm1095, %v1097, %v1093
  %v1099 = vmul.f32 1.0, %v1098
  %v1100 = vrcp.pop %v728
  %v1101 = vmul.f32 %v728, %v1100
  %v1102 = vsub.f32 1.0, %v1101
  %v1103 = vmul.f32 %v1100, %v1102
  %v1104 = vadd.f32 %v1100, %v1103
  %vm1105 = vweird.f32 %v728
  %vm1106 = vweird.f32 %v1100
  %vm1107 = vmor %vm1105, %vm1106
  %v1108 = vsel %vm1107, %v1100, %v1104
  %v1109 = vand.u32 2147483647, %v728
  %vm1110 = vcmp.eq.f32.partialorder %v1109, 8.507059e+37
  %v1111 = vand.u32 %v728, 2147483648
  %v1112 = vor.u32 1.1754944e-38, %v1111
  %v1113 = vsel %vm1110, %v1112, %v1108
  %v1114 = vmul.f32 1.0, %v1113
  %v1115 = vrcp.pop %v729
  %v1116 = vmul.f32 %v729, %v1115
  %v1117 = vsub.f32 1.0, %v1116
  %v1118 = vmul.f32 %v1115, %v1117
  %v1119 = vadd.f32 %v1115, %v1118
  %vm1120 = vweird.f32 %v729
  %vm1121 = vweird.f32 %v1115
  %vm1122 = vmor %vm1120, %vm1121
  %v1123 = vsel %vm1122, %v1115, %v1119
  %v1124 = vand.u32 2147483647, %v729
  %vm1125 = vcmp.eq.f32.partialorder %v1124, 8.507059e+37
  %v1126 = vand.u32 %v729, 2147483648
  %v1127 = vor.u32 1.1754944e-38, %v1126
  %v1128 = vsel %vm1125, %v1127, %v1123
  %v1129 = vmul.f32 1.0, %v1128
  %v1130 = vrcp.pop %v730
  %v1131 = vmul.f32 %v730, %v1130
  %v1132 = vsub.f32 1.0, %v1131
  %v1133 = vmul.f32 %v1130, %v1132
  %v1134 = vadd.f32 %v1130, %v1133
  %vm1135 = vweird.f32 %v730
  %vm1136 = vweird.f32 %v1130
  %vm1137 = vmor %vm1135, %vm1136
  %v1138 = vsel %vm1137, %v1130, %v1134
  %v1139 = vand.u32 2147483647, %v730
  %vm1140 = vcmp.eq.f32.partialorder %v1139, 8.507059e+37
  %v1141 = vand.u32 %v730, 2147483648
  %v1142 = vor.u32 1.1754944e-38, %v1141
  %v1143 = vsel %vm1140, %v1142, %v1138
  %v1144 = vmul.f32 1.0, %v1143
  %v1145 = vrcp.pop %v731
  %v1146 = vmul.f32 %v731, %v1145
  %v1147 = vsub.f32 1.0, %v1146
  %v1148 = vmul.f32 %v1145, %v1147
  %v1149 = vadd.f32 %v1145, %v1148
  %vm1150 = vweird.f32 %v731
  %vm1151 = vweird.f32 %v1145
  %vm1152 = vmor %vm1150, %vm1151
  %v1153 = vsel %vm1152, %v1145, %v1149
  %v1154 = vand.u32 2147483647, %v731
  %vm1155 = vcmp.eq.f32.partialorder %v1154, 8.507059e+37
  %v1156 = vand.u32 %v731, 2147483648
  %v1157 = vor.u32 1.1754944e-38, %v1156
  %v1158 = vsel %vm1155, %v1157, %v1153
  %v1159 = vmul.f32 1.0, %v1158
  %v1160 = vrcp.pop %v732
  %v1161 = vmul.f32 %v732, %v1160
  %v1162 = vsub.f32 1.0, %v1161
  %v1163 = vmul.f32 %v1160, %v1162
  %v1164 = vadd.f32 %v1160, %v1163
  %vm1165 = vweird.f32 %v732
  %vm1166 = vweird.f32 %v1160
  %vm1167 = vmor %vm1165, %vm1166
  %v1168 = vsel %vm1167, %v1160, %v1164
  %v1169 = vand.u32 2147483647, %v732
  %vm1170 = vcmp.eq.f32.partialorder %v1169, 8.507059e+37
  %v1171 = vand.u32 %v732, 2147483648
  %v1172 = vor.u32 1.1754944e-38, %v1171
  %v1173 = vsel %vm1170, %v1172, %v1168
  %v1174 = vmul.f32 1.0, %v1173
  %v1175 = vrcp.pop %v733
  %v1176 = vmul.f32 %v733, %v1175
  %v1177 = vsub.f32 1.0, %v1176
  %v1178 = vmul.f32 %v1175, %v1177
  %v1179 = vadd.f32 %v1175, %v1178
  %vm1180 = vweird.f32 %v733
  %vm1181 = vweird.f32 %v1175
  %vm1182 = vmor %vm1180, %vm1181
  %v1183 = vsel %vm1182, %v1175, %v1179
  %v1184 = vand.u32 2147483647, %v733
  %vm1185 = vcmp.eq.f32.partialorder %v1184, 8.507059e+37
  %v1186 = vand.u32 %v733, 2147483648
  %v1187 = vor.u32 1.1754944e-38, %v1186
  %v1188 = vsel %vm1185, %v1187, %v1183
  %v1189 = vmul.f32 1.0, %v1188
  %v1190 = vrcp.pop %v734
  %v1191 = vmul.f32 %v734, %v1190
  %v1192 = vsub.f32 1.0, %v1191
  %v1193 = vmul.f32 %v1190, %v1192
  %v1194 = vadd.f32 %v1190, %v1193
  %vm1195 = vweird.f32 %v734
  %vm1196 = vweird.f32 %v1190
  %vm1197 = vmor %vm1195, %vm1196
  %v1198 = vsel %vm1197, %v1190, %v1194
  %v1199 = vand.u32 2147483647, %v734
  %vm1200 = vcmp.eq.f32.partialorder %v1199, 8.507059e+37
  %v1201 = vand.u32 %v734, 2147483648
  %v1202 = vor.u32 1.1754944e-38, %v1201
  %v1203 = vsel %vm1200, %v1202, %v1198
  %v1204 = vmul.f32 1.0, %v1203
  %v1205 = vrcp.pop %v735
  %v1206 = vmul.f32 %v735, %v1205
  %v1207 = vsub.f32 1.0, %v1206
  %v1208 = vmul.f32 %v1205, %v1207
  %v1209 = vadd.f32 %v1205, %v1208
  %vm1210 = vweird.f32 %v735
  %vm1211 = vweird.f32 %v1205
  %vm1212 = vmor %vm1210, %vm1211
  %v1213 = vsel %vm1212, %v1205, %v1209
  %v1214 = vand.u32 2147483647, %v735
  %vm1215 = vcmp.eq.f32.partialorder %v1214, 8.507059e+37
  %v1216 = vand.u32 %v735, 2147483648
  %v1217 = vor.u32 1.1754944e-38, %v1216
  %v1218 = vsel %vm1215, %v1217, %v1213
  %v1219 = vmul.f32 1.0, %v1218
  %v1220 = vrcp.pop %v736
  %v1221 = vmul.f32 %v736, %v1220
  %v1222 = vsub.f32 1.0, %v1221
  %v1223 = vmul.f32 %v1220, %v1222
  %v1224 = vadd.f32 %v1220, %v1223
  %vm1225 = vweird.f32 %v736
  %vm1226 = vweird.f32 %v1220
  %vm1227 = vmor %vm1225, %vm1226
  %v1228 = vsel %vm1227, %v1220, %v1224
  %v1229 = vand.u32 2147483647, %v736
  %vm1230 = vcmp.eq.f32.partialorder %v1229, 8.507059e+37
  %v1231 = vand.u32 %v736, 2147483648
  %v1232 = vor.u32 1.1754944e-38, %v1231
  %v1233 = vsel %vm1230, %v1232, %v1228
  %v1234 = vmul.f32 1.0, %v1233
  %v1235 = vrcp.pop %v737
  %v1236 = vmul.f32 %v737, %v1235
  %v1237 = vsub.f32 1.0, %v1236
  %v1238 = vmul.f32 %v1235, %v1237
  %v1239 = vadd.f32 %v1235, %v1238
  %vm1240 = vweird.f32 %v737
  %vm1241 = vweird.f32 %v1235
  %vm1242 = vmor %vm1240, %vm1241
  %v1243 = vsel %vm1242, %v1235, %v1239
  %v1244 = vand.u32 2147483647, %v737
  %vm1245 = vcmp.eq.f32.partialorder %v1244, 8.507059e+37
  %v1246 = vand.u32 %v737, 2147483648
  %v1247 = vor.u32 1.1754944e-38, %v1246
  %v1248 = vsel %vm1245, %v1247, %v1243
  %v1249 = vmul.f32 1.0, %v1248
  %v1250 = vrcp.pop %v738
  %v1251 = vmul.f32 %v738, %v1250
  %v1252 = vsub.f32 1.0, %v1251
  %v1253 = vmul.f32 %v1250, %v1252
  %v1254 = vadd.f32 %v1250, %v1253
  %vm1255 = vweird.f32 %v738
  %vm1256 = vweird.f32 %v1250
  %vm1257 = vmor %vm1255, %vm1256
  %v1258 = vsel %vm1257, %v1250, %v1254
  %v1259 = vand.u32 2147483647, %v738
  %vm1260 = vcmp.eq.f32.partialorder %v1259, 8.507059e+37
  %v1261 = vand.u32 %v738, 2147483648
  %v1262 = vor.u32 1.1754944e-38, %v1261
  %v1263 = vsel %vm1260, %v1262, %v1258
  %v1264 = vmul.f32 1.0, %v1263
  %v1265 = vrcp.pop %v739
  %v1266 = vmul.f32 %v739, %v1265
  %v1267 = vsub.f32 1.0, %v1266
  %v1268 = vmul.f32 %v1265, %v1267
  %v1269 = vadd.f32 %v1265, %v1268
  %vm1270 = vweird.f32 %v739
  %vm1271 = vweird.f32 %v1265
  %vm1272 = vmor %vm1270, %vm1271
  %v1273 = vsel %vm1272, %v1265, %v1269
  %v1274 = vand.u32 2147483647, %v739
  %vm1275 = vcmp.eq.f32.partialorder %v1274, 8.507059e+37
  %v1276 = vand.u32 %v739, 2147483648
  %v1277 = vor.u32 1.1754944e-38, %v1276
  %v1278 = vsel %vm1275, %v1277, %v1273
  %v1279 = vmul.f32 1.0, %v1278
  %v1280 = vrcp.pop %v740
  %v1281 = vmul.f32 %v740, %v1280
  %v1282 = vsub.f32 1.0, %v1281
  %v1283 = vmul.f32 %v1280, %v1282
  %v1284 = vadd.f32 %v1280, %v1283
  %vm1285 = vweird.f32 %v740
  %vm1286 = vweird.f32 %v1280
  %vm1287 = vmor %vm1285, %vm1286
  %v1288 = vsel %vm1287, %v1280, %v1284
  %v1289 = vand.u32 2147483647, %v740
  %vm1290 = vcmp.eq.f32.partialorder %v1289, 8.507059e+37
  %v1291 = vand.u32 %v740, 2147483648
  %v1292 = vor.u32 1.1754944e-38, %v1291
  %v1293 = vsel %vm1290, %v1292, %v1288
  %v1294 = vmul.f32 1.0, %v1293
  %v1295 = vrcp.pop %v741
  %v1296 = vmul.f32 %v741, %v1295
  %v1297 = vsub.f32 1.0, %v1296
  %v1298 = vmul.f32 %v1295, %v1297
  %v1299 = vadd.f32 %v1295, %v1298
  %vm1300 = vweird.f32 %v741
  %vm1301 = vweird.f32 %v1295
  %vm1302 = vmor %vm1300, %vm1301
  %v1303 = vsel %vm1302, %v1295, %v1299
  %v1304 = vand.u32 2147483647, %v741
  %vm1305 = vcmp.eq.f32.partialorder %v1304, 8.507059e+37
  %v1306 = vand.u32 %v741, 2147483648
  %v1307 = vor.u32 1.1754944e-38, %v1306
  %v1308 = vsel %vm1305, %v1307, %v1303
  %v1309 = vmul.f32 1.0, %v1308
  %v1310 = vrcp.pop %v742
  %v1311 = vmul.f32 %v742, %v1310
  %v1312 = vsub.f32 1.0, %v1311
  %v1313 = vmul.f32 %v1310, %v1312
  %v1314 = vadd.f32 %v1310, %v1313
  %vm1315 = vweird.f32 %v742
  %vm1316 = vweird.f32 %v1310
  %vm1317 = vmor %vm1315, %vm1316
  %v1318 = vsel %vm1317, %v1310, %v1314
  %v1319 = vand.u32 2147483647, %v742
  %vm1320 = vcmp.eq.f32.partialorder %v1319, 8.507059e+37
  %v1321 = vand.u32 %v742, 2147483648
  %v1322 = vor.u32 1.1754944e-38, %v1321
  %v1323 = vsel %vm1320, %v1322, %v1318
  %v1324 = vmul.f32 1.0, %v1323
  %v1325 = vrcp.pop %v743
  %v1326 = vmul.f32 %v743, %v1325
  %v1327 = vsub.f32 1.0, %v1326
  %v1328 = vmul.f32 %v1325, %v1327
  %v1329 = vadd.f32 %v1325, %v1328
  %vm1330 = vweird.f32 %v743
  %vm1331 = vweird.f32 %v1325
  %vm1332 = vmor %vm1330, %vm1331
  %v1333 = vsel %vm1332, %v1325, %v1329
  %v1334 = vand.u32 2147483647, %v743
  %vm1335 = vcmp.eq.f32.partialorder %v1334, 8.507059e+37
  %v1336 = vand.u32 %v743, 2147483648
  %v1337 = vor.u32 1.1754944e-38, %v1336
  %v1338 = vsel %vm1335, %v1337, %v1333
  %v1339 = vmul.f32 1.0, %v1338
  %v1340 = vrcp.pop %v744
  %v1341 = vmul.f32 %v744, %v1340
  %v1342 = vsub.f32 1.0, %v1341
  %v1343 = vmul.f32 %v1340, %v1342
  %v1344 = vadd.f32 %v1340, %v1343
  %vm1345 = vweird.f32 %v744
  %vm1346 = vweird.f32 %v1340
  %vm1347 = vmor %vm1345, %vm1346
  %v1348 = vsel %vm1347, %v1340, %v1344
  %v1349 = vand.u32 2147483647, %v744
  %vm1350 = vcmp.eq.f32.partialorder %v1349, 8.507059e+37
  %v1351 = vand.u32 %v744, 2147483648
  %v1352 = vor.u32 1.1754944e-38, %v1351
  %v1353 = vsel %vm1350, %v1352, %v1348
  %v1354 = vmul.f32 1.0, %v1353
  %v1355 = vrcp.pop %v745
  %v1356 = vmul.f32 %v745, %v1355
  %v1357 = vsub.f32 1.0, %v1356
  %v1358 = vmul.f32 %v1355, %v1357
  %v1359 = vadd.f32 %v1355, %v1358
  %vm1360 = vweird.f32 %v745
  %vm1361 = vweird.f32 %v1355
  %vm1362 = vmor %vm1360, %vm1361
  %v1363 = vsel %vm1362, %v1355, %v1359
  %v1364 = vand.u32 2147483647, %v745
  %vm1365 = vcmp.eq.f32.partialorder %v1364, 8.507059e+37
  %v1366 = vand.u32 %v745, 2147483648
  %v1367 = vor.u32 1.1754944e-38, %v1366
  %v1368 = vsel %vm1365, %v1367, %v1363
  %v1369 = vmul.f32 1.0, %v1368
  %v1370 = vrcp.pop %v746
  %v1371 = vmul.f32 %v746, %v1370
  %v1372 = vsub.f32 1.0, %v1371
  %v1373 = vmul.f32 %v1370, %v1372
  %v1374 = vadd.f32 %v1370, %v1373
  %vm1375 = vweird.f32 %v746
  %vm1376 = vweird.f32 %v1370
  %vm1377 = vmor %vm1375, %vm1376
  %v1378 = vsel %vm1377, %v1370, %v1374
  %v1379 = vand.u32 2147483647, %v746
  %vm1380 = vcmp.eq.f32.partialorder %v1379, 8.507059e+37
  %v1381 = vand.u32 %v746, 2147483648
  %v1382 = vor.u32 1.1754944e-38, %v1381
  %v1383 = vsel %vm1380, %v1382, %v1378
  %v1384 = vmul.f32 1.0, %v1383
  %v1385 = vrcp.pop %v747
  %v1386 = vmul.f32 %v747, %v1385
  %v1387 = vsub.f32 1.0, %v1386
  %v1388 = vmul.f32 %v1385, %v1387
  %v1389 = vadd.f32 %v1385, %v1388
  %vm1390 = vweird.f32 %v747
  %vm1391 = vweird.f32 %v1385
  %vm1392 = vmor %vm1390, %vm1391
  %v1393 = vsel %vm1392, %v1385, %v1389
  %v1394 = vand.u32 2147483647, %v747
  %vm1395 = vcmp.eq.f32.partialorder %v1394, 8.507059e+37
  %v1396 = vand.u32 %v747, 2147483648
  %v1397 = vor.u32 1.1754944e-38, %v1396
  %v1398 = vsel %vm1395, %v1397, %v1393
  %v1399 = vmul.f32 1.0, %v1398
  %v1400 = vrcp.pop %v748
  %v1401 = vmul.f32 %v748, %v1400
  %v1402 = vsub.f32 1.0, %v1401
  %v1403 = vmul.f32 %v1400, %v1402
  %v1404 = vadd.f32 %v1400, %v1403
  %vm1405 = vweird.f32 %v748
  %vm1406 = vweird.f32 %v1400
  %vm1407 = vmor %vm1405, %vm1406
  %v1408 = vsel %vm1407, %v1400, %v1404
  %v1409 = vand.u32 2147483647, %v748
  %vm1410 = vcmp.eq.f32.partialorder %v1409, 8.507059e+37
  %v1411 = vand.u32 %v748, 2147483648
  %v1412 = vor.u32 1.1754944e-38, %v1411
  %v1413 = vsel %vm1410, %v1412, %v1408
  %v1414 = vmul.f32 1.0, %v1413
  %v1415 = vrcp.pop %v749
  %v1416 = vmul.f32 %v749, %v1415
  %v1417 = vsub.f32 1.0, %v1416
  %v1418 = vmul.f32 %v1415, %v1417
  %v1419 = vadd.f32 %v1415, %v1418
  %vm1420 = vweird.f32 %v749
  %vm1421 = vweird.f32 %v1415
  %vm1422 = vmor %vm1420, %vm1421
  %v1423 = vsel %vm1422, %v1415, %v1419
  %v1424 = vand.u32 2147483647, %v749
  %vm1425 = vcmp.eq.f32.partialorder %v1424, 8.507059e+37
  %v1426 = vand.u32 %v749, 2147483648
  %v1427 = vor.u32 1.1754944e-38, %v1426
  %v1428 = vsel %vm1425, %v1427, %v1423
  %v1429 = vmul.f32 1.0, %v1428
  %v1430 = vrcp.pop %v750
  %v1431 = vmul.f32 %v750, %v1430
  %v1432 = vsub.f32 1.0, %v1431
  %v1433 = vmul.f32 %v1430, %v1432
  %v1434 = vadd.f32 %v1430, %v1433
  %vm1435 = vweird.f32 %v750
  %vm1436 = vweird.f32 %v1430
  %vm1437 = vmor %vm1435, %vm1436
  %v1438 = vsel %vm1437, %v1430, %v1434
  %v1439 = vand.u32 2147483647, %v750
  %vm1440 = vcmp.eq.f32.partialorder %v1439, 8.507059e+37
  %v1441 = vand.u32 %v750, 2147483648
  %v1442 = vor.u32 1.1754944e-38, %v1441
  %v1443 = vsel %vm1440, %v1442, %v1438
  %v1444 = vmul.f32 1.0, %v1443
  %v1445 = vrcp.pop %v751
  %v1446 = vmul.f32 %v751, %v1445
  %v1447 = vsub.f32 1.0, %v1446
  %v1448 = vmul.f32 %v1445, %v1447
  %v1449 = vadd.f32 %v1445, %v1448
  %vm1450 = vweird.f32 %v751
  %vm1451 = vweird.f32 %v1445
  %vm1452 = vmor %vm1450, %vm1451
  %v1453 = vsel %vm1452, %v1445, %v1449
  %v1454 = vand.u32 2147483647, %v751
  %vm1455 = vcmp.eq.f32.partialorder %v1454, 8.507059e+37
  %v1456 = vand.u32 %v751, 2147483648
  %v1457 = vor.u32 1.1754944e-38, %v1456
  %v1458 = vsel %vm1455, %v1457, %v1453
  %v1459 = vmul.f32 1.0, %v1458
  %v1460 = vrcp.pop %v752
  %v1461 = vmul.f32 %v752, %v1460
  %v1462 = vsub.f32 1.0, %v1461
  %v1463 = vmul.f32 %v1460, %v1462
  %v1464 = vadd.f32 %v1460, %v1463
  %vm1465 = vweird.f32 %v752
  %vm1466 = vweird.f32 %v1460
  %vm1467 = vmor %vm1465, %vm1466
  %v1468 = vsel %vm1467, %v1460, %v1464
  %v1469 = vand.u32 2147483647, %v752
  %vm1470 = vcmp.eq.f32.partialorder %v1469, 8.507059e+37
  %v1471 = vand.u32 %v752, 2147483648
  %v1472 = vor.u32 1.1754944e-38, %v1471
  %v1473 = vsel %vm1470, %v1472, %v1468
  %v1474 = vmul.f32 1.0, %v1473
  %v1475 = vrcp.pop %v753
  %v1476 = vmul.f32 %v753, %v1475
  %v1477 = vsub.f32 1.0, %v1476
  %v1478 = vmul.f32 %v1475, %v1477
  %v1479 = vadd.f32 %v1475, %v1478
  %vm1480 = vweird.f32 %v753
  %vm1481 = vweird.f32 %v1475
  %vm1482 = vmor %vm1480, %vm1481
  %v1483 = vsel %vm1482, %v1475, %v1479
  %v1484 = vand.u32 2147483647, %v753
  %vm1485 = vcmp.eq.f32.partialorder %v1484, 8.507059e+37
  %v1486 = vand.u32 %v753, 2147483648
  %v1487 = vor.u32 1.1754944e-38, %v1486
  %v1488 = vsel %vm1485, %v1487, %v1483
  %v1489 = vmul.f32 1.0, %v1488
  %v1490 = vrcp.pop %v754
  %v1491 = vmul.f32 %v754, %v1490
  %v1492 = vsub.f32 1.0, %v1491
  %v1493 = vmul.f32 %v1490, %v1492
  %v1494 = vadd.f32 %v1490, %v1493
  %vm1495 = vweird.f32 %v754
  %vm1496 = vweird.f32 %v1490
  %vm1497 = vmor %vm1495, %vm1496
  %v1498 = vsel %vm1497, %v1490, %v1494
  %v1499 = vand.u32 2147483647, %v754
  %vm1500 = vcmp.eq.f32.partialorder %v1499, 8.507059e+37
  %v1501 = vand.u32 %v754, 2147483648
  %v1502 = vor.u32 1.1754944e-38, %v1501
  %v1503 = vsel %vm1500, %v1502, %v1498
  %v1504 = vmul.f32 1.0, %v1503
  %v1505 = vrcp.pop %v755
  %v1506 = vmul.f32 %v755, %v1505
  %v1507 = vsub.f32 1.0, %v1506
  %v1508 = vmul.f32 %v1505, %v1507
  %v1509 = vadd.f32 %v1505, %v1508
  %vm1510 = vweird.f32 %v755
  %vm1511 = vweird.f32 %v1505
  %vm1512 = vmor %vm1510, %vm1511
  %v1513 = vsel %vm1512, %v1505, %v1509
  %v1514 = vand.u32 2147483647, %v755
  %vm1515 = vcmp.eq.f32.partialorder %v1514, 8.507059e+37
  %v1516 = vand.u32 %v755, 2147483648
  %v1517 = vor.u32 1.1754944e-38, %v1516
  %v1518 = vsel %vm1515, %v1517, %v1513
  %v1519 = vmul.f32 1.0, %v1518
  %v1520 = vrcp.pop %v756
  %v1521 = vmul.f32 %v756, %v1520
  %v1522 = vsub.f32 1.0, %v1521
  %v1523 = vmul.f32 %v1520, %v1522
  %v1524 = vadd.f32 %v1520, %v1523
  %vm1525 = vweird.f32 %v756
  %vm1526 = vweird.f32 %v1520
  %vm1527 = vmor %vm1525, %vm1526
  %v1528 = vsel %vm1527, %v1520, %v1524
  %v1529 = vand.u32 2147483647, %v756
  %vm1530 = vcmp.eq.f32.partialorder %v1529, 8.507059e+37
  %v1531 = vand.u32 %v756, 2147483648
  %v1532 = vor.u32 1.1754944e-38, %v1531
  %v1533 = vsel %vm1530, %v1532, %v1528
  %v1534 = vmul.f32 1.0, %v1533
  %v1535 = vrcp.pop %v757
  %v1536 = vmul.f32 %v757, %v1535
  %v1537 = vsub.f32 1.0, %v1536
  %v1538 = vmul.f32 %v1535, %v1537
  %v1539 = vadd.f32 %v1535, %v1538
  %vm1540 = vweird.f32 %v757
  %vm1541 = vweird.f32 %v1535
  %vm1542 = vmor %vm1540, %vm1541
  %v1543 = vsel %vm1542, %v1535, %v1539
  %v1544 = vand.u32 2147483647, %v757
  %vm1545 = vcmp.eq.f32.partialorder %v1544, 8.507059e+37
  %v1546 = vand.u32 %v757, 2147483648
  %v1547 = vor.u32 1.1754944e-38, %v1546
  %v1548 = vsel %vm1545, %v1547, %v1543
  %v1549 = vmul.f32 1.0, %v1548
  %v1550 = vrcp.pop %v758
  %v1551 = vmul.f32 %v758, %v1550
  %v1552 = vsub.f32 1.0, %v1551
  %v1553 = vmul.f32 %v1550, %v1552
  %v1554 = vadd.f32 %v1550, %v1553
  %vm1555 = vweird.f32 %v758
  %vm1556 = vweird.f32 %v1550
  %vm1557 = vmor %vm1555, %vm1556
  %v1558 = vsel %vm1557, %v1550, %v1554
  %v1559 = vand.u32 2147483647, %v758
  %vm1560 = vcmp.eq.f32.partialorder %v1559, 8.507059e+37
  %v1561 = vand.u32 %v758, 2147483648
  %v1562 = vor.u32 1.1754944e-38, %v1561
  %v1563 = vsel %vm1560, %v1562, %v1558
  %v1564 = vmul.f32 1.0, %v1563
  %v1565 = vrcp.pop %v759
  %v1566 = vmul.f32 %v759, %v1565
  %v1567 = vsub.f32 1.0, %v1566
  %v1568 = vmul.f32 %v1565, %v1567
  %v1569 = vadd.f32 %v1565, %v1568
  %vm1570 = vweird.f32 %v759
  %vm1571 = vweird.f32 %v1565
  %vm1572 = vmor %vm1570, %vm1571
  %v1573 = vsel %vm1572, %v1565, %v1569
  %v1574 = vand.u32 2147483647, %v759
  %vm1575 = vcmp.eq.f32.partialorder %v1574, 8.507059e+37
  %v1576 = vand.u32 %v759, 2147483648
  %v1577 = vor.u32 1.1754944e-38, %v1576
  %v1578 = vsel %vm1575, %v1577, %v1573
  %v1579 = vmul.f32 1.0, %v1578
  %v1580 = vrcp.pop %v760
  %v1581 = vmul.f32 %v760, %v1580
  %v1582 = vsub.f32 1.0, %v1581
  %v1583 = vmul.f32 %v1580, %v1582
  %v1584 = vadd.f32 %v1580, %v1583
  %vm1585 = vweird.f32 %v760
  %vm1586 = vweird.f32 %v1580
  %vm1587 = vmor %vm1585, %vm1586
  %v1588 = vsel %vm1587, %v1580, %v1584
  %v1589 = vand.u32 2147483647, %v760
  %vm1590 = vcmp.eq.f32.partialorder %v1589, 8.507059e+37
  %v1591 = vand.u32 %v760, 2147483648
  %v1592 = vor.u32 1.1754944e-38, %v1591
  %v1593 = vsel %vm1590, %v1592, %v1588
  %v1594 = vmul.f32 1.0, %v1593
  %v1595 = vrcp.pop %v761
  %v1596 = vmul.f32 %v761, %v1595
  %v1597 = vsub.f32 1.0, %v1596
  %v1598 = vmul.f32 %v1595, %v1597
  %v1599 = vadd.f32 %v1595, %v1598
  %vm1600 = vweird.f32 %v761
  %vm1601 = vweird.f32 %v1595
  %vm1602 = vmor %vm1600, %vm1601
  %v1603 = vsel %vm1602, %v1595, %v1599
  %v1604 = vand.u32 2147483647, %v761
  %vm1605 = vcmp.eq.f32.partialorder %v1604, 8.507059e+37
  %v1606 = vand.u32 %v761, 2147483648
  %v1607 = vor.u32 1.1754944e-38, %v1606
  %v1608 = vsel %vm1605, %v1607, %v1603
  %v1609 = vmul.f32 1.0, %v1608
  %v1610 = vrcp.pop %v762
  %v1611 = vmul.f32 %v762, %v1610
  %v1612 = vsub.f32 1.0, %v1611
  %v1613 = vmul.f32 %v1610, %v1612
  %v1614 = vadd.f32 %v1610, %v1613
  %vm1615 = vweird.f32 %v762
  %vm1616 = vweird.f32 %v1610
  %vm1617 = vmor %vm1615, %vm1616
  %v1618 = vsel %vm1617, %v1610, %v1614
  %v1619 = vand.u32 2147483647, %v762
  %vm1620 = vcmp.eq.f32.partialorder %v1619, 8.507059e+37
  %v1621 = vand.u32 %v762, 2147483648
  %v1622 = vor.u32 1.1754944e-38, %v1621
  %v1623 = vsel %vm1620, %v1622, %v1618
  %v1624 = vmul.f32 1.0, %v1623
  %v1625 = vrcp.pop %v763
  %v1626 = vmul.f32 %v763, %v1625
  %v1627 = vsub.f32 1.0, %v1626
  %v1628 = vmul.f32 %v1625, %v1627
  %v1629 = vadd.f32 %v1625, %v1628
  %vm1630 = vweird.f32 %v763
  %vm1631 = vweird.f32 %v1625
  %vm1632 = vmor %vm1630, %vm1631
  %v1633 = vsel %vm1632, %v1625, %v1629
  %v1634 = vand.u32 2147483647, %v763
  %vm1635 = vcmp.eq.f32.partialorder %v1634, 8.507059e+37
  %v1636 = vand.u32 %v763, 2147483648
  %v1637 = vor.u32 1.1754944e-38, %v1636
  %v1638 = vsel %vm1635, %v1637, %v1633
  %v1639 = vmul.f32 1.0, %v1638
  %v1640 = vrcp.pop %v764
  %v1641 = vmul.f32 %v764, %v1640
  %v1642 = vsub.f32 1.0, %v1641
  %v1643 = vmul.f32 %v1640, %v1642
  %v1644 = vadd.f32 %v1640, %v1643
  %vm1645 = vweird.f32 %v764
  %vm1646 = vweird.f32 %v1640
  %vm1647 = vmor %vm1645, %vm1646
  %v1648 = vsel %vm1647, %v1640, %v1644
  %v1649 = vand.u32 2147483647, %v764
  %vm1650 = vcmp.eq.f32.partialorder %v1649, 8.507059e+37
  %v1651 = vand.u32 %v764, 2147483648
  %v1652 = vor.u32 1.1754944e-38, %v1651
  %v1653 = vsel %vm1650, %v1652, %v1648
  %v1654 = vmul.f32 1.0, %v1653
  %v1655 = vrcp.pop %v765
  %v1656 = vmul.f32 %v765, %v1655
  %v1657 = vsub.f32 1.0, %v1656
  %v1658 = vmul.f32 %v1655, %v1657
  %v1659 = vadd.f32 %v1655, %v1658
  %vm1660 = vweird.f32 %v765
  %vm1661 = vweird.f32 %v1655
  %vm1662 = vmor %vm1660, %vm1661
  %v1663 = vsel %vm1662, %v1655, %v1659
  %v1664 = vand.u32 2147483647, %v765
  %vm1665 = vcmp.eq.f32.partialorder %v1664, 8.507059e+37
  %v1666 = vand.u32 %v765, 2147483648
  %v1667 = vor.u32 1.1754944e-38, %v1666
  %v1668 = vsel %vm1665, %v1667, %v1663
  %v1669 = vmul.f32 1.0, %v1668
  %v1670 = vrcp.pop %v766
  %v1671 = vmul.f32 %v766, %v1670
  %v1672 = vsub.f32 1.0, %v1671
  %v1673 = vmul.f32 %v1670, %v1672
  %v1674 = vadd.f32 %v1670, %v1673
  %vm1675 = vweird.f32 %v766
  %vm1676 = vweird.f32 %v1670
  %vm1677 = vmor %vm1675, %vm1676
  %v1678 = vsel %vm1677, %v1670, %v1674
  %v1679 = vand.u32 2147483647, %v766
  %vm1680 = vcmp.eq.f32.partialorder %v1679, 8.507059e+37
  %v1681 = vand.u32 %v766, 2147483648
  %v1682 = vor.u32 1.1754944e-38, %v1681
  %v1683 = vsel %vm1680, %v1682, %v1678
  %v1684 = vmul.f32 1.0, %v1683
  %v1685 = vrcp.pop %v767
  %v1686 = vmul.f32 %v767, %v1685
  %v1687 = vsub.f32 1.0, %v1686
  %v1688 = vmul.f32 %v1685, %v1687
  %v1689 = vadd.f32 %v1685, %v1688
  %vm1690 = vweird.f32 %v767
  %vm1691 = vweird.f32 %v1685
  %vm1692 = vmor %vm1690, %vm1691
  %v1693 = vsel %vm1692, %v1685, %v1689
  %v1694 = vand.u32 2147483647, %v767
  %vm1695 = vcmp.eq.f32.partialorder %v1694, 8.507059e+37
  %v1696 = vand.u32 %v767, 2147483648
  %v1697 = vor.u32 1.1754944e-38, %v1696
  %v1698 = vsel %vm1695, %v1697, %v1693
  %v1699 = vmul.f32 1.0, %v1698
  %v1700 = vrcp.pop %v768
  %v1701 = vmul.f32 %v768, %v1700
  %v1702 = vsub.f32 1.0, %v1701
  %v1703 = vmul.f32 %v1700, %v1702
  %v1704 = vadd.f32 %v1700, %v1703
  %vm1705 = vweird.f32 %v768
  %vm1706 = vweird.f32 %v1700
  %vm1707 = vmor %vm1705, %vm1706
  %v1708 = vsel %vm1707, %v1700, %v1704
  %v1709 = vand.u32 2147483647, %v768
  %vm1710 = vcmp.eq.f32.partialorder %v1709, 8.507059e+37
  %v1711 = vand.u32 %v768, 2147483648
  %v1712 = vor.u32 1.1754944e-38, %v1711
  %v1713 = vsel %vm1710, %v1712, %v1708
  %v1714 = vmul.f32 1.0, %v1713
  %v1715 = vrcp.pop %v769
  %v1716 = vmul.f32 %v769, %v1715
  %v1717 = vsub.f32 1.0, %v1716
  %v1718 = vmul.f32 %v1715, %v1717
  %v1719 = vadd.f32 %v1715, %v1718
  %vm1720 = vweird.f32 %v769
  %vm1721 = vweird.f32 %v1715
  %vm1722 = vmor %vm1720, %vm1721
  %v1723 = vsel %vm1722, %v1715, %v1719
  %v1724 = vand.u32 2147483647, %v769
  %vm1725 = vcmp.eq.f32.partialorder %v1724, 8.507059e+37
  %v1726 = vand.u32 %v769, 2147483648
  %v1727 = vor.u32 1.1754944e-38, %v1726
  %v1728 = vsel %vm1725, %v1727, %v1723
  %v1729 = vmul.f32 1.0, %v1728
  %v1730 = vmul.f32 %v355, %v784
  %v1731 = vmul.f32 %v357, %v799
  %v1732 = vmul.f32 %v360, %v814
  %v1733 = vmul.f32 %v362, %v829
  %v1734 = vmul.f32 %v365, %v844
  %v1735 = vmul.f32 %v367, %v859
  %v1736 = vmul.f32 %v370, %v874
  %v1737 = vmul.f32 %v372, %v889
  %v1738 = vmul.f32 %v375, %v904
  %v1739 = vmul.f32 %v377, %v919
  %v1740 = vmul.f32 %v380, %v934
  %v1741 = vmul.f32 %v382, %v949
  %v1742 = vmul.f32 %v385, %v964
  %v1743 = vmul.f32 %v387, %v979
  %v1744 = vmul.f32 %v390, %v994
  %v1745 = vmul.f32 %v392, %v1009
  %v1746 = vmul.f32 %v395, %v1024
  %v1747 = vmul.f32 %v397, %v1039
  %v1748 = vmul.f32 %v400, %v1054
  %v1749 = vmul.f32 %v402, %v1069
  %v1750 = vmul.f32 %v405, %v1084
  %v1751 = vmul.f32 %v407, %v1099
  %v1752 = vmul.f32 %v410, %v1114
  %v1753 = vmul.f32 %v412, %v1129
  %v1754 = vmul.f32 %v415, %v1144
  %v1755 = vmul.f32 %v417, %v1159
  %v1756 = vmul.f32 %v420, %v1174
  %v1757 = vmul.f32 %v422, %v1189
  %v1758 = vmul.f32 %v425, %v1204
  %v1759 = vmul.f32 %v427, %v1219
  %v1760 = vmul.f32 %v430, %v1234
  %v1761 = vmul.f32 %v432, %v1249
  %v1762 = vmul.f32 %v435, %v1264
  %v1763 = vmul.f32 %v437, %v1279
  %v1764 = vmul.f32 %v440, %v1294
  %v1765 = vmul.f32 %v442, %v1309
  %v1766 = vmul.f32 %v445, %v1324
  %v1767 = vmul.f32 %v447, %v1339
  %v1768 = vmul.f32 %v450, %v1354
  %v1769 = vmul.f32 %v452, %v1369
  %v1770 = vmul.f32 %v455, %v1384
  %v1771 = vmul.f32 %v457, %v1399
  %v1772 = vmul.f32 %v460, %v1414
  %v1773 = vmul.f32 %v462, %v1429
  %v1774 = vmul.f32 %v465, %v1444
  %v1775 = vmul.f32 %v467, %v1459
  %v1776 = vmul.f32 %v470, %v1474
  %v1777 = vmul.f32 %v472, %v1489
  %v1778 = vmul.f32 %v475, %v1504
  %v1779 = vmul.f32 %v477, %v1519
  %v1780 = vmul.f32 %v480, %v1534
  %v1781 = vmul.f32 %v482, %v1549
  %v1782 = vmul.f32 %v485, %v1564
  %v1783 = vmul.f32 %v487, %v1579
  %v1784 = vmul.f32 %v490, %v1594
  %v1785 = vmul.f32 %v492, %v1609
  %v1786 = vmul.f32 %v495, %v1624
  %v1787 = vmul.f32 %v497, %v1639
  %v1788 = vmul.f32 %v500, %v1654
  %v1789 = vmul.f32 %v502, %v1669
  %v1790 = vmul.f32 %v505, %v1684
  %v1791 = vmul.f32 %v507, %v1699
  %v1792 = vmul.f32 %v510, %v1714
  %v1793 = vmul.f32 %v512, %v1729
  %v1794 = vpack.c.bf16 %v1730, %v1730
  %v1795 = vpack.c.bf16 %v1731, %v1731
  %v1796 = vpack.c.bf16 %v1732, %v1732
  %v1797 = vpack.c.bf16 %v1733, %v1733
  %v1798 = vpack.c.bf16 %v1734, %v1734
  %v1799 = vpack.c.bf16 %v1735, %v1735
  %v1800 = vpack.c.bf16 %v1736, %v1736
  %v1801 = vpack.c.bf16 %v1737, %v1737
  %v1802 = vpack.c.bf16 %v1738, %v1738
  %v1803 = vpack.c.bf16 %v1739, %v1739
  %v1804 = vpack.c.bf16 %v1740, %v1740
  %v1805 = vpack.c.bf16 %v1741, %v1741
  %v1806 = vpack.c.bf16 %v1742, %v1742
  %v1807 = vpack.c.bf16 %v1743, %v1743
  %v1808 = vpack.c.bf16 %v1744, %v1744
  %v1809 = vpack.c.bf16 %v1745, %v1745
  %v1810 = vpack.c.bf16 %v1746, %v1746
  %v1811 = vpack.c.bf16 %v1747, %v1747
  %v1812 = vpack.c.bf16 %v1748, %v1748
  %v1813 = vpack.c.bf16 %v1749, %v1749
  %v1814 = vpack.c.bf16 %v1750, %v1750
  %v1815 = vpack.c.bf16 %v1751, %v1751
  %v1816 = vpack.c.bf16 %v1752, %v1752
  %v1817 = vpack.c.bf16 %v1753, %v1753
  %v1818 = vpack.c.bf16 %v1754, %v1754
  %v1819 = vpack.c.bf16 %v1755, %v1755
  %v1820 = vpack.c.bf16 %v1756, %v1756
  %v1821 = vpack.c.bf16 %v1757, %v1757
  %v1822 = vpack.c.bf16 %v1758, %v1758
  %v1823 = vpack.c.bf16 %v1759, %v1759
  %v1824 = vpack.c.bf16 %v1760, %v1760
  %v1825 = vpack.c.bf16 %v1761, %v1761
  %v1826 = vpack.c.bf16 %v1762, %v1762
  %v1827 = vpack.c.bf16 %v1763, %v1763
  %v1828 = vpack.c.bf16 %v1764, %v1764
  %v1829 = vpack.c.bf16 %v1765, %v1765
  %v1830 = vpack.c.bf16 %v1766, %v1766
  %v1831 = vpack.c.bf16 %v1767, %v1767
  %v1832 = vpack.c.bf16 %v1768, %v1768
  %v1833 = vpack.c.bf16 %v1769, %v1769
  %v1834 = vpack.c.bf16 %v1770, %v1770
  %v1835 = vpack.c.bf16 %v1771, %v1771
  %v1836 = vpack.c.bf16 %v1772, %v1772
  %v1837 = vpack.c.bf16 %v1773, %v1773
  %v1838 = vpack.c.bf16 %v1774, %v1774
  %v1839 = vpack.c.bf16 %v1775, %v1775
  %v1840 = vpack.c.bf16 %v1776, %v1776
  %v1841 = vpack.c.bf16 %v1777, %v1777
  %v1842 = vpack.c.bf16 %v1778, %v1778
  %v1843 = vpack.c.bf16 %v1779, %v1779
  %v1844 = vpack.c.bf16 %v1780, %v1780
  %v1845 = vpack.c.bf16 %v1781, %v1781
  %v1846 = vpack.c.bf16 %v1782, %v1782
  %v1847 = vpack.c.bf16 %v1783, %v1783
  %v1848 = vpack.c.bf16 %v1784, %v1784
  %v1849 = vpack.c.bf16 %v1785, %v1785
  %v1850 = vpack.c.bf16 %v1786, %v1786
  %v1851 = vpack.c.bf16 %v1787, %v1787
  %v1852 = vpack.c.bf16 %v1788, %v1788
  %v1853 = vpack.c.bf16 %v1789, %v1789
  %v1854 = vpack.c.bf16 %v1790, %v1790
  %v1855 = vpack.c.bf16 %v1791, %v1791
  %v1856 = vpack.c.bf16 %v1792, %v1792
  %v1857 = vpack.c.bf16 %v1793, %v1793
  %1858 = vst [vmem:[%s3] sm:$0xf] %v1794
  %1859 = vst [vmem:[%s3 + $0x4] sm:$0xf] %v1795
  %1860 = vst [vmem:[%s3 + $0x8] sm:$0xf] %v1796
  %1861 = vst [vmem:[%s3 + $0xc] sm:$0xf] %v1797
  %1862 = vst [vmem:[%s3 + $0x10] sm:$0xf] %v1798
  %1863 = vst [vmem:[%s3 + $0x14] sm:$0xf] %v1799
  %1864 = vst [vmem:[%s3 + $0x18] sm:$0xf] %v1800
  %1865 = vst [vmem:[%s3 + $0x1c] sm:$0xf] %v1801
  %1866 = vst [vmem:[%s3 + $0x20] sm:$0xf] %v1802
  %1867 = vst [vmem:[%s3 + $0x24] sm:$0xf] %v1803
  %1868 = vst [vmem:[%s3 + $0x28] sm:$0xf] %v1804
  %1869 = vst [vmem:[%s3 + $0x2c] sm:$0xf] %v1805
  %1870 = vst [vmem:[%s3 + $0x30] sm:$0xf] %v1806
  %1871 = vst [vmem:[%s3 + $0x34] sm:$0xf] %v1807
  %1872 = vst [vmem:[%s3 + $0x38] sm:$0xf] %v1808
  %1873 = vst [vmem:[%s3 + $0x3c] sm:$0xf] %v1809
  %1874 = vst [vmem:[%s3 + $0x40] sm:$0xf] %v1810
  %1875 = vst [vmem:[%s3 + $0x44] sm:$0xf] %v1811
  %1876 = vst [vmem:[%s3 + $0x48] sm:$0xf] %v1812
  %1877 = vst [vmem:[%s3 + $0x4c] sm:$0xf] %v1813
  %1878 = vst [vmem:[%s3 + $0x50] sm:$0xf] %v1814
  %1879 = vst [vmem:[%s3 + $0x54] sm:$0xf] %v1815
  %1880 = vst [vmem:[%s3 + $0x58] sm:$0xf] %v1816
  %1881 = vst [vmem:[%s3 + $0x5c] sm:$0xf] %v1817
  %1882 = vst [vmem:[%s3 + $0x60] sm:$0xf] %v1818
  %1883 = vst [vmem:[%s3 + $0x64] sm:$0xf] %v1819
  %1884 = vst [vmem:[%s3 + $0x68] sm:$0xf] %v1820
  %1885 = vst [vmem:[%s3 + $0x6c] sm:$0xf] %v1821
  %1886 = vst [vmem:[%s3 + $0x70] sm:$0xf] %v1822
  %1887 = vst [vmem:[%s3 + $0x74] sm:$0xf] %v1823
  %1888 = vst [vmem:[%s3 + $0x78] sm:$0xf] %v1824
  %1889 = vst [vmem:[%s3 + $0x7c] sm:$0xf] %v1825
  %1890 = vst [vmem:[%s3 + $0x80] sm:$0xf] %v1826
  %1891 = vst [vmem:[%s3 + $0x84] sm:$0xf] %v1827
  %1892 = vst [vmem:[%s3 + $0x88] sm:$0xf] %v1828
  %1893 = vst [vmem:[%s3 + $0x8c] sm:$0xf] %v1829
  %1894 = vst [vmem:[%s3 + $0x90] sm:$0xf] %v1830
  %1895 = vst [vmem:[%s3 + $0x94] sm:$0xf] %v1831
  %1896 = vst [vmem:[%s3 + $0x98] sm:$0xf] %v1832
  %1897 = vst [vmem:[%s3 + $0x9c] sm:$0xf] %v1833
  %1898 = vst [vmem:[%s3 + $0xa0] sm:$0xf] %v1834
  %1899 = vst [vmem:[%s3 + $0xa4] sm:$0xf] %v1835
  %1900 = vst [vmem:[%s3 + $0xa8] sm:$0xf] %v1836
  %1901 = vst [vmem:[%s3 + $0xac] sm:$0xf] %v1837
  %1902 = vst [vmem:[%s3 + $0xb0] sm:$0xf] %v1838
  %1903 = vst [vmem:[%s3 + $0xb4] sm:$0xf] %v1839
  %1904 = vst [vmem:[%s3 + $0xb8] sm:$0xf] %v1840
  %1905 = vst [vmem:[%s3 + $0xbc] sm:$0xf] %v1841
  %1906 = vst [vmem:[%s3 + $0xc0] sm:$0xf] %v1842
  %1907 = vst [vmem:[%s3 + $0xc4] sm:$0xf] %v1843
  %1908 = vst [vmem:[%s3 + $0xc8] sm:$0xf] %v1844
  %1909 = vst [vmem:[%s3 + $0xcc] sm:$0xf] %v1845
  %1910 = vst [vmem:[%s3 + $0xd0] sm:$0xf] %v1846
  %1911 = vst [vmem:[%s3 + $0xd4] sm:$0xf] %v1847
  %1912 = vst [vmem:[%s3 + $0xd8] sm:$0xf] %v1848
  %1913 = vst [vmem:[%s3 + $0xdc] sm:$0xf] %v1849
  %1914 = vst [vmem:[%s3 + $0xe0] sm:$0xf] %v1850
  %1915 = vst [vmem:[%s3 + $0xe4] sm:$0xf] %v1851
  %1916 = vst [vmem:[%s3 + $0xe8] sm:$0xf] %v1852
  %1917 = vst [vmem:[%s3 + $0xec] sm:$0xf] %v1853
  %1918 = vst [vmem:[%s3 + $0xf0] sm:$0xf] %v1854
  %1919 = vst [vmem:[%s3 + $0xf4] sm:$0xf] %v1855
  %1920 = vst [vmem:[%s3 + $0xf8] sm:$0xf] %v1856
  %1921 = vst [vmem:[%s3 + $0xfc] sm:$0xf] %v1857
  // Predicated region
  $region14: #{_lambda_.3} parent=0 // pred_check
    _
  $region15: #{_lambda_.3} parent=0 // pred_check_branch
    %1923 = sbr.rel (0) target = $region17
  $region16: #{_lambda_.3} parent=0 // pred_region
    _
  $region17: #{_lambda_.3} parent=0 // pred_fallthru
    _
  // Predicated region
  $region18: #{_lambda_.3} parent=0 // pred_check
    _
  $region19: #{_lambda_.3} parent=0 // pred_check_branch
    %1925 = sbr.rel (0) target = $region21
  $region20: #{_lambda_.3} parent=0 // pred_region
    _
  $region21: #{_lambda_.3} parent=0 // pred_fallthru
    _

// kernel: _lambda_.5
$region0: #{_lambda_.5}
  #allocation0 [shape = 'u32[]', space=smem, size = 0x4, offset = 0x4, fixed_abs, tag = 'smem constant byte address 0x4 - core index']
  #allocation1 [shape = 'u32[72,128]{1,0:T(1,128)}', space=vmem, size = 0x9000, scoped, tag = 'internal scratch']
  %s0 = inlined_call_operand.vmem [shape: bf16[512,8], index: 0, kind: input, shape index: {}]
  %s1 = inlined_call_operand.vmem [shape: bf16[8,128], index: 1, kind: input, shape index: {}]
  %s2 = inlined_call_operand.vmem [shape: f32[1,128], index: 2, kind: input, shape index: {}]
  %s3 = inlined_call_operand.vmem [shape: f32[512,128], index: 3, kind: output, shape index: {}]
  %s4 = sld [smem:[#allocation0]]
  $region22: #{_lambda_.5} parent=0
    _
  %s6 = ssub.s32 1, %s4
  %s7 = scalar_select 0, %s6, %s4
  // Predicated region
  $region2: #{_lambda_.5} parent=0 // pred_check
    _
  $region3: #{_lambda_.5} parent=0 // pred_check_branch
    %9 = sbr.rel (0) target = $region5
  $region4: #{_lambda_.5} parent=0 // pred_region
    _
  $region5: #{_lambda_.5} parent=0 // pred_fallthru
    _
  // Predicated region
  $region6: #{_lambda_.5} parent=0 // pred_check
    _
  $region7: #{_lambda_.5} parent=0 // pred_check_branch
    %11 = sbr.rel (0) target = $region9
  $region8: #{_lambda_.5} parent=0 // pred_region
    _
  $region9: #{_lambda_.5} parent=0 // pred_fallthru
    _
  // Predicated region
  $region10: #{_lambda_.5} parent=0 // pred_check
    _
  $region11: #{_lambda_.5} parent=0 // pred_check_branch
    %13 = sbr.rel (0) target = $region13
  $region12: #{_lambda_.5} parent=0 // pred_region
    _
  $region13: #{_lambda_.5} parent=0 // pred_fallthru
    _
  %v15 = vld [vmem:[%s0] sm:$0xf]
  %v16 = vld [vmem:[%s0 + $0x4] sm:$0xf]
  %v17 = vld [vmem:[%s0 + $0x8] sm:$0xf]
  %v18 = vld [vmem:[%s0 + $0xc] sm:$0xf]
  %v19 = vld [vmem:[%s0 + $0x10] sm:$0xf]
  %v20 = vld [vmem:[%s0 + $0x14] sm:$0xf]
  %v21 = vld [vmem:[%s0 + $0x18] sm:$0xf]
  %v22 = vld [vmem:[%s0 + $0x1c] sm:$0xf]
  %v23 = vld [vmem:[%s0 + $0x20] sm:$0xf]
  %v24 = vld [vmem:[%s0 + $0x24] sm:$0xf]
  %v25 = vld [vmem:[%s0 + $0x28] sm:$0xf]
  %v26 = vld [vmem:[%s0 + $0x2c] sm:$0xf]
  %v27 = vld [vmem:[%s0 + $0x30] sm:$0xf]
  %v28 = vld [vmem:[%s0 + $0x34] sm:$0xf]
  %v29 = vld [vmem:[%s0 + $0x38] sm:$0xf]
  %v30 = vld [vmem:[%s0 + $0x3c] sm:$0xf]
  %v31 = vld [vmem:[%s0 + $0x40] sm:$0xf]
  %v32 = vld [vmem:[%s0 + $0x44] sm:$0xf]
  %v33 = vld [vmem:[%s0 + $0x48] sm:$0xf]
  %v34 = vld [vmem:[%s0 + $0x4c] sm:$0xf]
  %v35 = vld [vmem:[%s0 + $0x50] sm:$0xf]
  %v36 = vld [vmem:[%s0 + $0x54] sm:$0xf]
  %v37 = vld [vmem:[%s0 + $0x58] sm:$0xf]
  %v38 = vld [vmem:[%s0 + $0x5c] sm:$0xf]
  %v39 = vld [vmem:[%s0 + $0x60] sm:$0xf]
  %v40 = vld [vmem:[%s0 + $0x64] sm:$0xf]
  %v41 = vld [vmem:[%s0 + $0x68] sm:$0xf]
  %v42 = vld [vmem:[%s0 + $0x6c] sm:$0xf]
  %v43 = vld [vmem:[%s0 + $0x70] sm:$0xf]
  %v44 = vld [vmem:[%s0 + $0x74] sm:$0xf]
  %v45 = vld [vmem:[%s0 + $0x78] sm:$0xf]
  %v46 = vld [vmem:[%s0 + $0x7c] sm:$0xf]
  %v47 = vld [vmem:[%s0 + $0x80] sm:$0xf]
  %v48 = vld [vmem:[%s0 + $0x84] sm:$0xf]
  %v49 = vld [vmem:[%s0 + $0x88] sm:$0xf]
  %v50 = vld [vmem:[%s0 + $0x8c] sm:$0xf]
  %v51 = vld [vmem:[%s0 + $0x90] sm:$0xf]
  %v52 = vld [vmem:[%s0 + $0x94] sm:$0xf]
  %v53 = vld [vmem:[%s0 + $0x98] sm:$0xf]
  %v54 = vld [vmem:[%s0 + $0x9c] sm:$0xf]
  %v55 = vld [vmem:[%s0 + $0xa0] sm:$0xf]
  %v56 = vld [vmem:[%s0 + $0xa4] sm:$0xf]
  %v57 = vld [vmem:[%s0 + $0xa8] sm:$0xf]
  %v58 = vld [vmem:[%s0 + $0xac] sm:$0xf]
  %v59 = vld [vmem:[%s0 + $0xb0] sm:$0xf]
  %v60 = vld [vmem:[%s0 + $0xb4] sm:$0xf]
  %v61 = vld [vmem:[%s0 + $0xb8] sm:$0xf]
  %v62 = vld [vmem:[%s0 + $0xbc] sm:$0xf]
  %v63 = vld [vmem:[%s0 + $0xc0] sm:$0xf]
  %v64 = vld [vmem:[%s0 + $0xc4] sm:$0xf]
  %v65 = vld [vmem:[%s0 + $0xc8] sm:$0xf]
  %v66 = vld [vmem:[%s0 + $0xcc] sm:$0xf]
  %v67 = vld [vmem:[%s0 + $0xd0] sm:$0xf]
  %v68 = vld [vmem:[%s0 + $0xd4] sm:$0xf]
  %v69 = vld [vmem:[%s0 + $0xd8] sm:$0xf]
  %v70 = vld [vmem:[%s0 + $0xdc] sm:$0xf]
  %v71 = vld [vmem:[%s0 + $0xe0] sm:$0xf]
  %v72 = vld [vmem:[%s0 + $0xe4] sm:$0xf]
  %v73 = vld [vmem:[%s0 + $0xe8] sm:$0xf]
  %v74 = vld [vmem:[%s0 + $0xec] sm:$0xf]
  %v75 = vld [vmem:[%s0 + $0xf0] sm:$0xf]
  %v76 = vld [vmem:[%s0 + $0xf4] sm:$0xf]
  %v77 = vld [vmem:[%s0 + $0xf8] sm:$0xf]
  %v78 = vld [vmem:[%s0 + $0xfc] sm:$0xf]
  %v79 = vld [vmem:[%s1] sm:$0xf]
  %v80 = vld [vmem:[%s2] sm:$0x1]
  %v82 = vperm.slane %v80, 0
  %v148 = vunpack.c.l.b16 %v15
  %v149 = vunpack.c.l.b16 %v16
  %v150 = vunpack.c.l.b16 %v17
  %v151 = vunpack.c.l.b16 %v18
  %v152 = vunpack.c.l.b16 %v19
  %v153 = vunpack.c.l.b16 %v20
  %v154 = vunpack.c.l.b16 %v21
  %v155 = vunpack.c.l.b16 %v22
  %v156 = vunpack.c.l.b16 %v23
  %v157 = vunpack.c.l.b16 %v24
  %v158 = vunpack.c.l.b16 %v25
  %v159 = vunpack.c.l.b16 %v26
  %v160 = vunpack.c.l.b16 %v27
  %v161 = vunpack.c.l.b16 %v28
  %v162 = vunpack.c.l.b16 %v29
  %v163 = vunpack.c.l.b16 %v30
  %v164 = vunpack.c.l.b16 %v31
  %v165 = vunpack.c.l.b16 %v32
  %v166 = vunpack.c.l.b16 %v33
  %v167 = vunpack.c.l.b16 %v34
  %v168 = vunpack.c.l.b16 %v35
  %v169 = vunpack.c.l.b16 %v36
  %v170 = vunpack.c.l.b16 %v37
  %v171 = vunpack.c.l.b16 %v38
  %v172 = vunpack.c.l.b16 %v39
  %v173 = vunpack.c.l.b16 %v40
  %v174 = vunpack.c.l.b16 %v41
  %v175 = vunpack.c.l.b16 %v42
  %v176 = vunpack.c.l.b16 %v43
  %v177 = vunpack.c.l.b16 %v44
  %v178 = vunpack.c.l.b16 %v45
  %v179 = vunpack.c.l.b16 %v46
  %v180 = vunpack.c.l.b16 %v47
  %v181 = vunpack.c.l.b16 %v48
  %v182 = vunpack.c.l.b16 %v49
  %v183 = vunpack.c.l.b16 %v50
  %v184 = vunpack.c.l.b16 %v51
  %v185 = vunpack.c.l.b16 %v52
  %v186 = vunpack.c.l.b16 %v53
  %v187 = vunpack.c.l.b16 %v54
  %v188 = vunpack.c.l.b16 %v55
  %v189 = vunpack.c.l.b16 %v56
  %v190 = vunpack.c.l.b16 %v57
  %v191 = vunpack.c.l.b16 %v58
  %v192 = vunpack.c.l.b16 %v59
  %v193 = vunpack.c.l.b16 %v60
  %v194 = vunpack.c.l.b16 %v61
  %v195 = vunpack.c.l.b16 %v62
  %v196 = vunpack.c.l.b16 %v63
  %v197 = vunpack.c.l.b16 %v64
  %v198 = vunpack.c.l.b16 %v65
  %v199 = vunpack.c.l.b16 %v66
  %v200 = vunpack.c.l.b16 %v67
  %v201 = vunpack.c.l.b16 %v68
  %v202 = vunpack.c.l.b16 %v69
  %v203 = vunpack.c.l.b16 %v70
  %v204 = vunpack.c.l.b16 %v71
  %v205 = vunpack.c.l.b16 %v72
  %v206 = vunpack.c.l.b16 %v73
  %v207 = vunpack.c.l.b16 %v74
  %v208 = vunpack.c.l.b16 %v75
  %v209 = vunpack.c.l.b16 %v76
  %v210 = vunpack.c.l.b16 %v77
  %v211 = vunpack.c.l.b16 %v78
  %v212 = vpack.c.b16 %v149, %v148
  %v213 = vpack.c.b16 %v151, %v150
  %v214 = vpack.c.b16 %v153, %v152
  %v215 = vpack.c.b16 %v155, %v154
  %v216 = vpack.c.b16 %v157, %v156
  %v217 = vpack.c.b16 %v159, %v158
  %v218 = vpack.c.b16 %v161, %v160
  %v219 = vpack.c.b16 %v163, %v162
  %v220 = vpack.c.b16 %v165, %v164
  %v221 = vpack.c.b16 %v167, %v166
  %v222 = vpack.c.b16 %v169, %v168
  %v223 = vpack.c.b16 %v171, %v170
  %v224 = vpack.c.b16 %v173, %v172
  %v225 = vpack.c.b16 %v175, %v174
  %v226 = vpack.c.b16 %v177, %v176
  %v227 = vpack.c.b16 %v179, %v178
  %v228 = vpack.c.b16 %v181, %v180
  %v229 = vpack.c.b16 %v183, %v182
  %v230 = vpack.c.b16 %v185, %v184
  %v231 = vpack.c.b16 %v187, %v186
  %v232 = vpack.c.b16 %v189, %v188
  %v233 = vpack.c.b16 %v191, %v190
  %v234 = vpack.c.b16 %v193, %v192
  %v235 = vpack.c.b16 %v195, %v194
  %v236 = vpack.c.b16 %v197, %v196
  %v237 = vpack.c.b16 %v199, %v198
  %v238 = vpack.c.b16 %v201, %v200
  %v239 = vpack.c.b16 %v203, %v202
  %v240 = vpack.c.b16 %v205, %v204
  %v241 = vpack.c.b16 %v207, %v206
  %v242 = vpack.c.b16 %v209, %v208
  %v243 = vpack.c.b16 %v211, %v210
  %vm244 = vcmask 64512
  %v246 = vsel %vm244, %v212, 0
  %v249 = vsel %vm244, %v213, 0
  %v252 = vsel %vm244, %v214, 0
  %v255 = vsel %vm244, %v215, 0
  %v258 = vsel %vm244, %v216, 0
  %v261 = vsel %vm244, %v217, 0
  %v264 = vsel %vm244, %v218, 0
  %v267 = vsel %vm244, %v219, 0
  %v270 = vsel %vm244, %v220, 0
  %v273 = vsel %vm244, %v221, 0
  %v276 = vsel %vm244, %v222, 0
  %v279 = vsel %vm244, %v223, 0
  %v282 = vsel %vm244, %v224, 0
  %v285 = vsel %vm244, %v225, 0
  %v288 = vsel %vm244, %v226, 0
  %v291 = vsel %vm244, %v227, 0
  %v294 = vsel %vm244, %v228, 0
  %v297 = vsel %vm244, %v229, 0
  %v300 = vsel %vm244, %v230, 0
  %v303 = vsel %vm244, %v231, 0
  %v306 = vsel %vm244, %v232, 0
  %v309 = vsel %vm244, %v233, 0
  %v312 = vsel %vm244, %v234, 0
  %v315 = vsel %vm244, %v235, 0
  %v318 = vsel %vm244, %v236, 0
  %v321 = vsel %vm244, %v237, 0
  %v324 = vsel %vm244, %v238, 0
  %v327 = vsel %vm244, %v239, 0
  %v330 = vsel %vm244, %v240, 0
  %v333 = vsel %vm244, %v241, 0
  %v336 = vsel %vm244, %v242, 0
  %v339 = vsel %vm244, %v243, 0
  %vm341 = vcmask 1043456
  %v343 = vsel %vm341, %v79, 0
  %345 = vmatpush.bf16.msra.mxu0 0
  %346 = vmatpush.bf16.msra.mxu0 0
  %347 = vmatpush.bf16.msra.mxu0 0
  %348 = vmatpush.bf16.msra.mxu0 0
  %349 = vmatpush.bf16.msra.mxu0 0
  %350 = vmatpush.bf16.msra.mxu0 0
  %351 = vmatpush.bf16.msra.mxu0 0
  %352 = vmatpush.bf16.msra.mxu0 %v343
  %353 = vmatmul.bf16.gmra.mxu0 %v246
  %v354 = vpop.f32.mrf.mxu0
  %v355 = vadd.f32 %v82, %v354
  %v356 = vpop.f32.mrf.mxu0
  %v357 = vadd.f32 %v82, %v356
  %358 = vmatmul.bf16.gmra.mxu0 %v249
  %v359 = vpop.f32.mrf.mxu0
  %v360 = vadd.f32 %v82, %v359
  %v361 = vpop.f32.mrf.mxu0
  %v362 = vadd.f32 %v82, %v361
  %363 = vmatmul.bf16.gmra.mxu0 %v252
  %v364 = vpop.f32.mrf.mxu0
  %v365 = vadd.f32 %v82, %v364
  %v366 = vpop.f32.mrf.mxu0
  %v367 = vadd.f32 %v82, %v366
  %368 = vmatmul.bf16.gmra.mxu0 %v255
  %v369 = vpop.f32.mrf.mxu0
  %v370 = vadd.f32 %v82, %v369
  %v371 = vpop.f32.mrf.mxu0
  %v372 = vadd.f32 %v82, %v371
  %373 = vmatmul.bf16.gmra.mxu0 %v258
  %v374 = vpop.f32.mrf.mxu0
  %v375 = vadd.f32 %v82, %v374
  %v376 = vpop.f32.mrf.mxu0
  %v377 = vadd.f32 %v82, %v376
  %378 = vmatmul.bf16.gmra.mxu0 %v261
  %v379 = vpop.f32.mrf.mxu0
  %v380 = vadd.f32 %v82, %v379
  %v381 = vpop.f32.mrf.mxu0
  %v382 = vadd.f32 %v82, %v381
  %383 = vmatmul.bf16.gmra.mxu0 %v264
  %v384 = vpop.f32.mrf.mxu0
  %v385 = vadd.f32 %v82, %v384
  %v386 = vpop.f32.mrf.mxu0
  %v387 = vadd.f32 %v82, %v386
  %388 = vmatmul.bf16.gmra.mxu0 %v267
  %v389 = vpop.f32.mrf.mxu0
  %v390 = vadd.f32 %v82, %v389
  %v391 = vpop.f32.mrf.mxu0
  %v392 = vadd.f32 %v82, %v391
  %393 = vmatmul.bf16.gmra.mxu0 %v270
  %v394 = vpop.f32.mrf.mxu0
  %v395 = vadd.f32 %v82, %v394
  %v396 = vpop.f32.mrf.mxu0
  %v397 = vadd.f32 %v82, %v396
  %398 = vmatmul.bf16.gmra.mxu0 %v273
  %v399 = vpop.f32.mrf.mxu0
  %v400 = vadd.f32 %v82, %v399
  %v401 = vpop.f32.mrf.mxu0
  %v402 = vadd.f32 %v82, %v401
  %403 = vmatmul.bf16.gmra.mxu0 %v276
  %v404 = vpop.f32.mrf.mxu0
  %v405 = vadd.f32 %v82, %v404
  %v406 = vpop.f32.mrf.mxu0
  %v407 = vadd.f32 %v82, %v406
  %408 = vmatmul.bf16.gmra.mxu0 %v279
  %v409 = vpop.f32.mrf.mxu0
  %v410 = vadd.f32 %v82, %v409
  %v411 = vpop.f32.mrf.mxu0
  %v412 = vadd.f32 %v82, %v411
  %413 = vmatmul.bf16.gmra.mxu0 %v282
  %v414 = vpop.f32.mrf.mxu0
  %v415 = vadd.f32 %v82, %v414
  %v416 = vpop.f32.mrf.mxu0
  %v417 = vadd.f32 %v82, %v416
  %418 = vmatmul.bf16.gmra.mxu0 %v285
  %v419 = vpop.f32.mrf.mxu0
  %v420 = vadd.f32 %v82, %v419
  %v421 = vpop.f32.mrf.mxu0
  %v422 = vadd.f32 %v82, %v421
  %423 = vmatmul.bf16.gmra.mxu0 %v288
  %v424 = vpop.f32.mrf.mxu0
  %v425 = vadd.f32 %v82, %v424
  %v426 = vpop.f32.mrf.mxu0
  %v427 = vadd.f32 %v82, %v426
  %428 = vmatmul.bf16.gmra.mxu0 %v291
  %v429 = vpop.f32.mrf.mxu0
  %v430 = vadd.f32 %v82, %v429
  %v431 = vpop.f32.mrf.mxu0
  %v432 = vadd.f32 %v82, %v431
  %433 = vmatmul.bf16.gmra.mxu0 %v294
  %v434 = vpop.f32.mrf.mxu0
  %v435 = vadd.f32 %v82, %v434
  %v436 = vpop.f32.mrf.mxu0
  %v437 = vadd.f32 %v82, %v436
  %438 = vmatmul.bf16.gmra.mxu0 %v297
  %v439 = vpop.f32.mrf.mxu0
  %v440 = vadd.f32 %v82, %v439
  %v441 = vpop.f32.mrf.mxu0
  %v442 = vadd.f32 %v82, %v441
  %443 = vmatmul.bf16.gmra.mxu0 %v300
  %v444 = vpop.f32.mrf.mxu0
  %v445 = vadd.f32 %v82, %v444
  %v446 = vpop.f32.mrf.mxu0
  %v447 = vadd.f32 %v82, %v446
  %448 = vmatmul.bf16.gmra.mxu0 %v303
  %v449 = vpop.f32.mrf.mxu0
  %v450 = vadd.f32 %v82, %v449
  %v451 = vpop.f32.mrf.mxu0
  %v452 = vadd.f32 %v82, %v451
  %453 = vmatmul.bf16.gmra.mxu0 %v306
  %v454 = vpop.f32.mrf.mxu0
  %v455 = vadd.f32 %v82, %v454
  %v456 = vpop.f32.mrf.mxu0
  %v457 = vadd.f32 %v82, %v456
  %458 = vmatmul.bf16.gmra.mxu0 %v309
  %v459 = vpop.f32.mrf.mxu0
  %v460 = vadd.f32 %v82, %v459
  %v461 = vpop.f32.mrf.mxu0
  %v462 = vadd.f32 %v82, %v461
  %463 = vmatmul.bf16.gmra.mxu0 %v312
  %v464 = vpop.f32.mrf.mxu0
  %v465 = vadd.f32 %v82, %v464
  %v466 = vpop.f32.mrf.mxu0
  %v467 = vadd.f32 %v82, %v466
  %468 = vmatmul.bf16.gmra.mxu0 %v315
  %v469 = vpop.f32.mrf.mxu0
  %v470 = vadd.f32 %v82, %v469
  %v471 = vpop.f32.mrf.mxu0
  %v472 = vadd.f32 %v82, %v471
  %473 = vmatmul.bf16.gmra.mxu0 %v318
  %v474 = vpop.f32.mrf.mxu0
  %v475 = vadd.f32 %v82, %v474
  %v476 = vpop.f32.mrf.mxu0
  %v477 = vadd.f32 %v82, %v476
  %478 = vmatmul.bf16.gmra.mxu0 %v321
  %v479 = vpop.f32.mrf.mxu0
  %v480 = vadd.f32 %v82, %v479
  %v481 = vpop.f32.mrf.mxu0
  %v482 = vadd.f32 %v82, %v481
  %483 = vmatmul.bf16.gmra.mxu0 %v324
  %v484 = vpop.f32.mrf.mxu0
  %v485 = vadd.f32 %v82, %v484
  %v486 = vpop.f32.mrf.mxu0
  %v487 = vadd.f32 %v82, %v486
  %488 = vmatmul.bf16.gmra.mxu0 %v327
  %v489 = vpop.f32.mrf.mxu0
  %v490 = vadd.f32 %v82, %v489
  %v491 = vpop.f32.mrf.mxu0
  %v492 = vadd.f32 %v82, %v491
  %493 = vmatmul.bf16.gmra.mxu0 %v330
  %v494 = vpop.f32.mrf.mxu0
  %v495 = vadd.f32 %v82, %v494
  %v496 = vpop.f32.mrf.mxu0
  %v497 = vadd.f32 %v82, %v496
  %498 = vmatmul.bf16.gmra.mxu0 %v333
  %v499 = vpop.f32.mrf.mxu0
  %v500 = vadd.f32 %v82, %v499
  %v501 = vpop.f32.mrf.mxu0
  %v502 = vadd.f32 %v82, %v501
  %503 = vmatmul.bf16.gmra.mxu0 %v336
  %v504 = vpop.f32.mrf.mxu0
  %v505 = vadd.f32 %v82, %v504
  %v506 = vpop.f32.mrf.mxu0
  %v507 = vadd.f32 %v82, %v506
  %508 = vmatmul.bf16.gmra.mxu0 %v339
  %v509 = vpop.f32.mrf.mxu0
  %v510 = vadd.f32 %v82, %v509
  %v511 = vpop.f32.mrf.mxu0
  %v512 = vadd.f32 %v82, %v511
  %513 = vdwg.mxu0
  %v514 = vxor.u32 %v355, 2147483648
  %v515 = vxor.u32 %v357, 2147483648
  %v516 = vxor.u32 %v360, 2147483648
  %v517 = vxor.u32 %v362, 2147483648
  %v518 = vxor.u32 %v365, 2147483648
  %v519 = vxor.u32 %v367, 2147483648
  %v520 = vxor.u32 %v370, 2147483648
  %v521 = vxor.u32 %v372, 2147483648
  %v522 = vxor.u32 %v375, 2147483648
  %v523 = vxor.u32 %v377, 2147483648
  %v524 = vxor.u32 %v380, 2147483648
  %v525 = vxor.u32 %v382, 2147483648
  %v526 = vxor.u32 %v385, 2147483648
  %v527 = vxor.u32 %v387, 2147483648
  %v528 = vxor.u32 %v390, 2147483648
  %v529 = vxor.u32 %v392, 2147483648
  %v530 = vxor.u32 %v395, 2147483648
  %v531 = vxor.u32 %v397, 2147483648
  %v532 = vxor.u32 %v400, 2147483648
  %v533 = vxor.u32 %v402, 2147483648
  %v534 = vxor.u32 %v405, 2147483648
  %v535 = vxor.u32 %v407, 2147483648
  %v536 = vxor.u32 %v410, 2147483648
  %v537 = vxor.u32 %v412, 2147483648
  %v538 = vxor.u32 %v415, 2147483648
  %v539 = vxor.u32 %v417, 2147483648
  %v540 = vxor.u32 %v420, 2147483648
  %v541 = vxor.u32 %v422, 2147483648
  %v542 = vxor.u32 %v425, 2147483648
  %v543 = vxor.u32 %v427, 2147483648
  %v544 = vxor.u32 %v430, 2147483648
  %v545 = vxor.u32 %v432, 2147483648
  %v546 = vxor.u32 %v435, 2147483648
  %v547 = vxor.u32 %v437, 2147483648
  %v548 = vxor.u32 %v440, 2147483648
  %v549 = vxor.u32 %v442, 2147483648
  %v550 = vxor.u32 %v445, 2147483648
  %v551 = vxor.u32 %v447, 2147483648
  %v552 = vxor.u32 %v450, 2147483648
  %v553 = vxor.u32 %v452, 2147483648
  %v554 = vxor.u32 %v455, 2147483648
  %v555 = vxor.u32 %v457, 2147483648
  %v556 = vxor.u32 %v460, 2147483648
  %v557 = vxor.u32 %v462, 2147483648
  %v558 = vxor.u32 %v465, 2147483648
  %v559 = vxor.u32 %v467, 2147483648
  %v560 = vxor.u32 %v470, 2147483648
  %v561 = vxor.u32 %v472, 2147483648
  %v562 = vxor.u32 %v475, 2147483648
  %v563 = vxor.u32 %v477, 2147483648
  %v564 = vxor.u32 %v480, 2147483648
  %v565 = vxor.u32 %v482, 2147483648
  %v566 = vxor.u32 %v485, 2147483648
  %v567 = vxor.u32 %v487, 2147483648
  %v568 = vxor.u32 %v490, 2147483648
  %v569 = vxor.u32 %v492, 2147483648
  %v570 = vxor.u32 %v495, 2147483648
  %v571 = vxor.u32 %v497, 2147483648
  %v572 = vxor.u32 %v500, 2147483648
  %v573 = vxor.u32 %v502, 2147483648
  %v574 = vxor.u32 %v505, 2147483648
  %v575 = vxor.u32 %v507, 2147483648
  %v576 = vxor.u32 %v510, 2147483648
  %v577 = vxor.u32 %v512, 2147483648
  %v578 = vmul.f32 %v514, 1.442695
  %v579 = vpow.pop %v578
  %v580 = vmul.f32 %v515, 1.442695
  %v581 = vpow.pop %v580
  %v582 = vmul.f32 %v516, 1.442695
  %v583 = vpow.pop %v582
  %v584 = vmul.f32 %v517, 1.442695
  %v585 = vpow.pop %v584
  %v586 = vmul.f32 %v518, 1.442695
  %v587 = vpow.pop %v586
  %v588 = vmul.f32 %v519, 1.442695
  %v589 = vpow.pop %v588
  %v590 = vmul.f32 %v520, 1.442695
  %v591 = vpow.pop %v590
  %v592 = vmul.f32 %v521, 1.442695
  %v593 = vpow.pop %v592
  %v594 = vmul.f32 %v522, 1.442695
  %v595 = vpow.pop %v594
  %v596 = vmul.f32 %v523, 1.442695
  %v597 = vpow.pop %v596
  %v598 = vmul.f32 %v524, 1.442695
  %v599 = vpow.pop %v598
  %v600 = vmul.f32 %v525, 1.442695
  %v601 = vpow.pop %v600
  %v602 = vmul.f32 %v526, 1.442695
  %v603 = vpow.pop %v602
  %v604 = vmul.f32 %v527, 1.442695
  %v605 = vpow.pop %v604
  %v606 = vmul.f32 %v528, 1.442695
  %v607 = vpow.pop %v606
  %v608 = vmul.f32 %v529, 1.442695
  %v609 = vpow.pop %v608
  %v610 = vmul.f32 %v530, 1.442695
  %v611 = vpow.pop %v610
  %v612 = vmul.f32 %v531, 1.442695
  %v613 = vpow.pop %v612
  %v614 = vmul.f32 %v532, 1.442695
  %v615 = vpow.pop %v614
  %v616 = vmul.f32 %v533, 1.442695
  %v617 = vpow.pop %v616
  %v618 = vmul.f32 %v534, 1.442695
  %v619 = vpow.pop %v618
  %v620 = vmul.f32 %v535, 1.442695
  %v621 = vpow.pop %v620
  %v622 = vmul.f32 %v536, 1.442695
  %v623 = vpow.pop %v622
  %v624 = vmul.f32 %v537, 1.442695
  %v625 = vpow.pop %v624
  %v626 = vmul.f32 %v538, 1.442695
  %v627 = vpow.pop %v626
  %v628 = vmul.f32 %v539, 1.442695
  %v629 = vpow.pop %v628
  %v630 = vmul.f32 %v540, 1.442695
  %v631 = vpow.pop %v630
  %v632 = vmul.f32 %v541, 1.442695
  %v633 = vpow.pop %v632
  %v634 = vmul.f32 %v542, 1.442695
  %v635 = vpow.pop %v634
  %v636 = vmul.f32 %v543, 1.442695
  %v637 = vpow.pop %v636
  %v638 = vmul.f32 %v544, 1.442695
  %v639 = vpow.pop %v638
  %v640 = vmul.f32 %v545, 1.442695
  %v641 = vpow.pop %v640
  %v642 = vmul.f32 %v546, 1.442695
  %v643 = vpow.pop %v642
  %v644 = vmul.f32 %v547, 1.442695
  %v645 = vpow.pop %v644
  %v646 = vmul.f32 %v548, 1.442695
  %v647 = vpow.pop %v646
  %v648 = vmul.f32 %v549, 1.442695
  %v649 = vpow.pop %v648
  %v650 = vmul.f32 %v550, 1.442695
  %v651 = vpow.pop %v650
  %v652 = vmul.f32 %v551, 1.442695
  %v653 = vpow.pop %v652
  %v654 = vmul.f32 %v552, 1.442695
  %v655 = vpow.pop %v654
  %v656 = vmul.f32 %v553, 1.442695
  %v657 = vpow.pop %v656
  %v658 = vmul.f32 %v554, 1.442695
  %v659 = vpow.pop %v658
  %v660 = vmul.f32 %v555, 1.442695
  %v661 = vpow.pop %v660
  %v662 = vmul.f32 %v556, 1.442695
  %v663 = vpow.pop %v662
  %v664 = vmul.f32 %v557, 1.442695
  %v665 = vpow.pop %v664
  %v666 = vmul.f32 %v558, 1.442695
  %v667 = vpow.pop %v666
  %v668 = vmul.f32 %v559, 1.442695
  %v669 = vpow.pop %v668
  %v670 = vmul.f32 %v560, 1.442695
  %v671 = vpow.pop %v670
  %v672 = vmul.f32 %v561, 1.442695
  %v673 = vpow.pop %v672
  %v674 = vmul.f32 %v562, 1.442695
  %v675 = vpow.pop %v674
  %v676 = vmul.f32 %v563, 1.442695
  %v677 = vpow.pop %v676
  %v678 = vmul.f32 %v564, 1.442695
  %v679 = vpow.pop %v678
  %v680 = vmul.f32 %v565, 1.442695
  %v681 = vpow.pop %v680
  %v682 = vmul.f32 %v566, 1.442695
  %v683 = vpow.pop %v682
  %v684 = vmul.f32 %v567, 1.442695
  %v685 = vpow.pop %v684
  %v686 = vmul.f32 %v568, 1.442695
  %v687 = vpow.pop %v686
  %v688 = vmul.f32 %v569, 1.442695
  %v689 = vpow.pop %v688
  %v690 = vmul.f32 %v570, 1.442695
  %v691 = vpow.pop %v690
  %v692 = vmul.f32 %v571, 1.442695
  %v693 = vpow.pop %v692
  %v694 = vmul.f32 %v572, 1.442695
  %v695 = vpow.pop %v694
  %v696 = vmul.f32 %v573, 1.442695
  %v697 = vpow.pop %v696
  %v698 = vmul.f32 %v574, 1.442695
  %v699 = vpow.pop %v698
  %v700 = vmul.f32 %v575, 1.442695
  %v701 = vpow.pop %v700
  %v702 = vmul.f32 %v576, 1.442695
  %v703 = vpow.pop %v702
  %v704 = vmul.f32 %v577, 1.442695
  %v705 = vpow.pop %v704
  %v706 = vadd.f32 %v579, 1.0
  %v707 = vadd.f32 %v581, 1.0
  %v708 = vadd.f32 %v583, 1.0
  %v709 = vadd.f32 %v585, 1.0
  %v710 = vadd.f32 %v587, 1.0
  %v711 = vadd.f32 %v589, 1.0
  %v712 = vadd.f32 %v591, 1.0
  %v713 = vadd.f32 %v593, 1.0
  %v714 = vadd.f32 %v595, 1.0
  %v715 = vadd.f32 %v597, 1.0
  %v716 = vadd.f32 %v599, 1.0
  %v717 = vadd.f32 %v601, 1.0
  %v718 = vadd.f32 %v603, 1.0
  %v719 = vadd.f32 %v605, 1.0
  %v720 = vadd.f32 %v607, 1.0
  %v721 = vadd.f32 %v609, 1.0
  %v722 = vadd.f32 %v611, 1.0
  %v723 = vadd.f32 %v613, 1.0
  %v724 = vadd.f32 %v615, 1.0
  %v725 = vadd.f32 %v617, 1.0
  %v726 = vadd.f32 %v619, 1.0
  %v727 = vadd.f32 %v621, 1.0
  %v728 = vadd.f32 %v623, 1.0
  %v729 = vadd.f32 %v625, 1.0
  %v730 = vadd.f32 %v627, 1.0
  %v731 = vadd.f32 %v629, 1.0
  %v732 = vadd.f32 %v631, 1.0
  %v733 = vadd.f32 %v633, 1.0
  %v734 = vadd.f32 %v635, 1.0
  %v735 = vadd.f32 %v637, 1.0
  %v736 = vadd.f32 %v639, 1.0
  %v737 = vadd.f32 %v641, 1.0
  %v738 = vadd.f32 %v643, 1.0
  %v739 = vadd.f32 %v645, 1.0
  %v740 = vadd.f32 %v647, 1.0
  %v741 = vadd.f32 %v649, 1.0
  %v742 = vadd.f32 %v651, 1.0
  %v743 = vadd.f32 %v653, 1.0
  %v744 = vadd.f32 %v655, 1.0
  %v745 = vadd.f32 %v657, 1.0
  %v746 = vadd.f32 %v659, 1.0
  %v747 = vadd.f32 %v661, 1.0
  %v748 = vadd.f32 %v663, 1.0
  %v749 = vadd.f32 %v665, 1.0
  %v750 = vadd.f32 %v667, 1.0
  %v751 = vadd.f32 %v669, 1.0
  %v752 = vadd.f32 %v671, 1.0
  %v753 = vadd.f32 %v673, 1.0
  %v754 = vadd.f32 %v675, 1.0
  %v755 = vadd.f32 %v677, 1.0
  %v756 = vadd.f32 %v679, 1.0
  %v757 = vadd.f32 %v681, 1.0
  %v758 = vadd.f32 %v683, 1.0
  %v759 = vadd.f32 %v685, 1.0
  %v760 = vadd.f32 %v687, 1.0
  %v761 = vadd.f32 %v689, 1.0
  %v762 = vadd.f32 %v691, 1.0
  %v763 = vadd.f32 %v693, 1.0
  %v764 = vadd.f32 %v695, 1.0
  %v765 = vadd.f32 %v697, 1.0
  %v766 = vadd.f32 %v699, 1.0
  %v767 = vadd.f32 %v701, 1.0
  %v768 = vadd.f32 %v703, 1.0
  %v769 = vadd.f32 %v705, 1.0
  %v770 = vrcp.pop %v706
  %v771 = vmul.f32 %v706, %v770
  %v772 = vsub.f32 1.0, %v771
  %v773 = vmul.f32 %v770, %v772
  %v774 = vadd.f32 %v770, %v773
  %vm775 = vweird.f32 %v706
  %vm776 = vweird.f32 %v770
  %vm777 = vmor %vm775, %vm776
  %v778 = vsel %vm777, %v770, %v774
  %v779 = vand.u32 2147483647, %v706
  %vm780 = vcmp.eq.f32.partialorder %v779, 8.507059e+37
  %v781 = vand.u32 %v706, 2147483648
  %v782 = vor.u32 1.1754944e-38, %v781
  %v783 = vsel %vm780, %v782, %v778
  %v784 = vmul.f32 1.0, %v783
  %v785 = vrcp.pop %v707
  %v786 = vmul.f32 %v707, %v785
  %v787 = vsub.f32 1.0, %v786
  %v788 = vmul.f32 %v785, %v787
  %v789 = vadd.f32 %v785, %v788
  %vm790 = vweird.f32 %v707
  %vm791 = vweird.f32 %v785
  %vm792 = vmor %vm790, %vm791
  %v793 = vsel %vm792, %v785, %v789
  %v794 = vand.u32 2147483647, %v707
  %vm795 = vcmp.eq.f32.partialorder %v794, 8.507059e+37
  %v796 = vand.u32 %v707, 2147483648
  %v797 = vor.u32 1.1754944e-38, %v796
  %v798 = vsel %vm795, %v797, %v793
  %v799 = vmul.f32 1.0, %v798
  %v800 = vrcp.pop %v708
  %v801 = vmul.f32 %v708, %v800
  %v802 = vsub.f32 1.0, %v801
  %v803 = vmul.f32 %v800, %v802
  %v804 = vadd.f32 %v800, %v803
  %vm805 = vweird.f32 %v708
  %vm806 = vweird.f32 %v800
  %vm807 = vmor %vm805, %vm806
  %v808 = vsel %vm807, %v800, %v804
  %v809 = vand.u32 2147483647, %v708
  %vm810 = vcmp.eq.f32.partialorder %v809, 8.507059e+37
  %v811 = vand.u32 %v708, 2147483648
  %v812 = vor.u32 1.1754944e-38, %v811
  %v813 = vsel %vm810, %v812, %v808
  %v814 = vmul.f32 1.0, %v813
  %v815 = vrcp.pop %v709
  %v816 = vmul.f32 %v709, %v815
  %v817 = vsub.f32 1.0, %v816
  %v818 = vmul.f32 %v815, %v817
  %v819 = vadd.f32 %v815, %v818
  %vm820 = vweird.f32 %v709
  %vm821 = vweird.f32 %v815
  %vm822 = vmor %vm820, %vm821
  %v823 = vsel %vm822, %v815, %v819
  %v824 = vand.u32 2147483647, %v709
  %vm825 = vcmp.eq.f32.partialorder %v824, 8.507059e+37
  %v826 = vand.u32 %v709, 2147483648
  %v827 = vor.u32 1.1754944e-38, %v826
  %v828 = vsel %vm825, %v827, %v823
  %v829 = vmul.f32 1.0, %v828
  %v830 = vrcp.pop %v710
  %v831 = vmul.f32 %v710, %v830
  %v832 = vsub.f32 1.0, %v831
  %v833 = vmul.f32 %v830, %v832
  %v834 = vadd.f32 %v830, %v833
  %vm835 = vweird.f32 %v710
  %vm836 = vweird.f32 %v830
  %vm837 = vmor %vm835, %vm836
  %v838 = vsel %vm837, %v830, %v834
  %v839 = vand.u32 2147483647, %v710
  %vm840 = vcmp.eq.f32.partialorder %v839, 8.507059e+37
  %v841 = vand.u32 %v710, 2147483648
  %v842 = vor.u32 1.1754944e-38, %v841
  %v843 = vsel %vm840, %v842, %v838
  %v844 = vmul.f32 1.0, %v843
  %v845 = vrcp.pop %v711
  %v846 = vmul.f32 %v711, %v845
  %v847 = vsub.f32 1.0, %v846
  %v848 = vmul.f32 %v845, %v847
  %v849 = vadd.f32 %v845, %v848
  %vm850 = vweird.f32 %v711
  %vm851 = vweird.f32 %v845
  %vm852 = vmor %vm850, %vm851
  %v853 = vsel %vm852, %v845, %v849
  %v854 = vand.u32 2147483647, %v711
  %vm855 = vcmp.eq.f32.partialorder %v854, 8.507059e+37
  %v856 = vand.u32 %v711, 2147483648
  %v857 = vor.u32 1.1754944e-38, %v856
  %v858 = vsel %vm855, %v857, %v853
  %v859 = vmul.f32 1.0, %v858
  %v860 = vrcp.pop %v712
  %v861 = vmul.f32 %v712, %v860
  %v862 = vsub.f32 1.0, %v861
  %v863 = vmul.f32 %v860, %v862
  %v864 = vadd.f32 %v860, %v863
  %vm865 = vweird.f32 %v712
  %vm866 = vweird.f32 %v860
  %vm867 = vmor %vm865, %vm866
  %v868 = vsel %vm867, %v860, %v864
  %v869 = vand.u32 2147483647, %v712
  %vm870 = vcmp.eq.f32.partialorder %v869, 8.507059e+37
  %v871 = vand.u32 %v712, 2147483648
  %v872 = vor.u32 1.1754944e-38, %v871
  %v873 = vsel %vm870, %v872, %v868
  %v874 = vmul.f32 1.0, %v873
  %v875 = vrcp.pop %v713
  %v876 = vmul.f32 %v713, %v875
  %v877 = vsub.f32 1.0, %v876
  %v878 = vmul.f32 %v875, %v877
  %v879 = vadd.f32 %v875, %v878
  %vm880 = vweird.f32 %v713
  %vm881 = vweird.f32 %v875
  %vm882 = vmor %vm880, %vm881
  %v883 = vsel %vm882, %v875, %v879
  %v884 = vand.u32 2147483647, %v713
  %vm885 = vcmp.eq.f32.partialorder %v884, 8.507059e+37
  %v886 = vand.u32 %v713, 2147483648
  %v887 = vor.u32 1.1754944e-38, %v886
  %v888 = vsel %vm885, %v887, %v883
  %v889 = vmul.f32 1.0, %v888
  %v890 = vrcp.pop %v714
  %v891 = vmul.f32 %v714, %v890
  %v892 = vsub.f32 1.0, %v891
  %v893 = vmul.f32 %v890, %v892
  %v894 = vadd.f32 %v890, %v893
  %vm895 = vweird.f32 %v714
  %vm896 = vweird.f32 %v890
  %vm897 = vmor %vm895, %vm896
  %v898 = vsel %vm897, %v890, %v894
  %v899 = vand.u32 2147483647, %v714
  %vm900 = vcmp.eq.f32.partialorder %v899, 8.507059e+37
  %v901 = vand.u32 %v714, 2147483648
  %v902 = vor.u32 1.1754944e-38, %v901
  %v903 = vsel %vm900, %v902, %v898
  %v904 = vmul.f32 1.0, %v903
  %v905 = vrcp.pop %v715
  %v906 = vmul.f32 %v715, %v905
  %v907 = vsub.f32 1.0, %v906
  %v908 = vmul.f32 %v905, %v907
  %v909 = vadd.f32 %v905, %v908
  %vm910 = vweird.f32 %v715
  %vm911 = vweird.f32 %v905
  %vm912 = vmor %vm910, %vm911
  %v913 = vsel %vm912, %v905, %v909
  %v914 = vand.u32 2147483647, %v715
  %vm915 = vcmp.eq.f32.partialorder %v914, 8.507059e+37
  %v916 = vand.u32 %v715, 2147483648
  %v917 = vor.u32 1.1754944e-38, %v916
  %v918 = vsel %vm915, %v917, %v913
  %v919 = vmul.f32 1.0, %v918
  %v920 = vrcp.pop %v716
  %v921 = vmul.f32 %v716, %v920
  %v922 = vsub.f32 1.0, %v921
  %v923 = vmul.f32 %v920, %v922
  %v924 = vadd.f32 %v920, %v923
  %vm925 = vweird.f32 %v716
  %vm926 = vweird.f32 %v920
  %vm927 = vmor %vm925, %vm926
  %v928 = vsel %vm927, %v920, %v924
  %v929 = vand.u32 2147483647, %v716
  %vm930 = vcmp.eq.f32.partialorder %v929, 8.507059e+37
  %v931 = vand.u32 %v716, 2147483648
  %v932 = vor.u32 1.1754944e-38, %v931
  %v933 = vsel %vm930, %v932, %v928
  %v934 = vmul.f32 1.0, %v933
  %v935 = vrcp.pop %v717
  %v936 = vmul.f32 %v717, %v935
  %v937 = vsub.f32 1.0, %v936
  %v938 = vmul.f32 %v935, %v937
  %v939 = vadd.f32 %v935, %v938
  %vm940 = vweird.f32 %v717
  %vm941 = vweird.f32 %v935
  %vm942 = vmor %vm940, %vm941
  %v943 = vsel %vm942, %v935, %v939
  %v944 = vand.u32 2147483647, %v717
  %vm945 = vcmp.eq.f32.partialorder %v944, 8.507059e+37
  %v946 = vand.u32 %v717, 2147483648
  %v947 = vor.u32 1.1754944e-38, %v946
  %v948 = vsel %vm945, %v947, %v943
  %v949 = vmul.f32 1.0, %v948
  %v950 = vrcp.pop %v718
  %v951 = vmul.f32 %v718, %v950
  %v952 = vsub.f32 1.0, %v951
  %v953 = vmul.f32 %v950, %v952
  %v954 = vadd.f32 %v950, %v953
  %vm955 = vweird.f32 %v718
  %vm956 = vweird.f32 %v950
  %vm957 = vmor %vm955, %vm956
  %v958 = vsel %vm957, %v950, %v954
  %v959 = vand.u32 2147483647, %v718
  %vm960 = vcmp.eq.f32.partialorder %v959, 8.507059e+37
  %v961 = vand.u32 %v718, 2147483648
  %v962 = vor.u32 1.1754944e-38, %v961
  %v963 = vsel %vm960, %v962, %v958
  %v964 = vmul.f32 1.0, %v963
  %v965 = vrcp.pop %v719
  %v966 = vmul.f32 %v719, %v965
  %v967 = vsub.f32 1.0, %v966
  %v968 = vmul.f32 %v965, %v967
  %v969 = vadd.f32 %v965, %v968
  %vm970 = vweird.f32 %v719
  %vm971 = vweird.f32 %v965
  %vm972 = vmor %vm970, %vm971
  %v973 = vsel %vm972, %v965, %v969
  %v974 = vand.u32 2147483647, %v719
  %vm975 = vcmp.eq.f32.partialorder %v974, 8.507059e+37
  %v976 = vand.u32 %v719, 2147483648
  %v977 = vor.u32 1.1754944e-38, %v976
  %v978 = vsel %vm975, %v977, %v973
  %v979 = vmul.f32 1.0, %v978
  %v980 = vrcp.pop %v720
  %v981 = vmul.f32 %v720, %v980
  %v982 = vsub.f32 1.0, %v981
  %v983 = vmul.f32 %v980, %v982
  %v984 = vadd.f32 %v980, %v983
  %vm985 = vweird.f32 %v720
  %vm986 = vweird.f32 %v980
  %vm987 = vmor %vm985, %vm986
  %v988 = vsel %vm987, %v980, %v984
  %v989 = vand.u32 2147483647, %v720
  %vm990 = vcmp.eq.f32.partialorder %v989, 8.507059e+37
  %v991 = vand.u32 %v720, 2147483648
  %v992 = vor.u32 1.1754944e-38, %v991
  %v993 = vsel %vm990, %v992, %v988
  %v994 = vmul.f32 1.0, %v993
  %v995 = vrcp.pop %v721
  %v996 = vmul.f32 %v721, %v995
  %v997 = vsub.f32 1.0, %v996
  %v998 = vmul.f32 %v995, %v997
  %v999 = vadd.f32 %v995, %v998
  %vm1000 = vweird.f32 %v721
  %vm1001 = vweird.f32 %v995
  %vm1002 = vmor %vm1000, %vm1001
  %v1003 = vsel %vm1002, %v995, %v999
  %v1004 = vand.u32 2147483647, %v721
  %vm1005 = vcmp.eq.f32.partialorder %v1004, 8.507059e+37
  %v1006 = vand.u32 %v721, 2147483648
  %v1007 = vor.u32 1.1754944e-38, %v1006
  %v1008 = vsel %vm1005, %v1007, %v1003
  %v1009 = vmul.f32 1.0, %v1008
  %v1010 = vrcp.pop %v722
  %v1011 = vmul.f32 %v722, %v1010
  %v1012 = vsub.f32 1.0, %v1011
  %v1013 = vmul.f32 %v1010, %v1012
  %v1014 = vadd.f32 %v1010, %v1013
  %vm1015 = vweird.f32 %v722
  %vm1016 = vweird.f32 %v1010
  %vm1017 = vmor %vm1015, %vm1016
  %v1018 = vsel %vm1017, %v1010, %v1014
  %v1019 = vand.u32 2147483647, %v722
  %vm1020 = vcmp.eq.f32.partialorder %v1019, 8.507059e+37
  %v1021 = vand.u32 %v722, 2147483648
  %v1022 = vor.u32 1.1754944e-38, %v1021
  %v1023 = vsel %vm1020, %v1022, %v1018
  %v1024 = vmul.f32 1.0, %v1023
  %v1025 = vrcp.pop %v723
  %v1026 = vmul.f32 %v723, %v1025
  %v1027 = vsub.f32 1.0, %v1026
  %v1028 = vmul.f32 %v1025, %v1027
  %v1029 = vadd.f32 %v1025, %v1028
  %vm1030 = vweird.f32 %v723
  %vm1031 = vweird.f32 %v1025
  %vm1032 = vmor %vm1030, %vm1031
  %v1033 = vsel %vm1032, %v1025, %v1029
  %v1034 = vand.u32 2147483647, %v723
  %vm1035 = vcmp.eq.f32.partialorder %v1034, 8.507059e+37
  %v1036 = vand.u32 %v723, 2147483648
  %v1037 = vor.u32 1.1754944e-38, %v1036
  %v1038 = vsel %vm1035, %v1037, %v1033
  %v1039 = vmul.f32 1.0, %v1038
  %v1040 = vrcp.pop %v724
  %v1041 = vmul.f32 %v724, %v1040
  %v1042 = vsub.f32 1.0, %v1041
  %v1043 = vmul.f32 %v1040, %v1042
  %v1044 = vadd.f32 %v1040, %v1043
  %vm1045 = vweird.f32 %v724
  %vm1046 = vweird.f32 %v1040
  %vm1047 = vmor %vm1045, %vm1046
  %v1048 = vsel %vm1047, %v1040, %v1044
  %v1049 = vand.u32 2147483647, %v724
  %vm1050 = vcmp.eq.f32.partialorder %v1049, 8.507059e+37
  %v1051 = vand.u32 %v724, 2147483648
  %v1052 = vor.u32 1.1754944e-38, %v1051
  %v1053 = vsel %vm1050, %v1052, %v1048
  %v1054 = vmul.f32 1.0, %v1053
  %v1055 = vrcp.pop %v725
  %v1056 = vmul.f32 %v725, %v1055
  %v1057 = vsub.f32 1.0, %v1056
  %v1058 = vmul.f32 %v1055, %v1057
  %v1059 = vadd.f32 %v1055, %v1058
  %vm1060 = vweird.f32 %v725
  %vm1061 = vweird.f32 %v1055
  %vm1062 = vmor %vm1060, %vm1061
  %v1063 = vsel %vm1062, %v1055, %v1059
  %v1064 = vand.u32 2147483647, %v725
  %vm1065 = vcmp.eq.f32.partialorder %v1064, 8.507059e+37
  %v1066 = vand.u32 %v725, 2147483648
  %v1067 = vor.u32 1.1754944e-38, %v1066
  %v1068 = vsel %vm1065, %v1067, %v1063
  %v1069 = vmul.f32 1.0, %v1068
  %v1070 = vrcp.pop %v726
  %v1071 = vmul.f32 %v726, %v1070
  %v1072 = vsub.f32 1.0, %v1071
  %v1073 = vmul.f32 %v1070, %v1072
  %v1074 = vadd.f32 %v1070, %v1073
  %vm1075 = vweird.f32 %v726
  %vm1076 = vweird.f32 %v1070
  %vm1077 = vmor %vm1075, %vm1076
  %v1078 = vsel %vm1077, %v1070, %v1074
  %v1079 = vand.u32 2147483647, %v726
  %vm1080 = vcmp.eq.f32.partialorder %v1079, 8.507059e+37
  %v1081 = vand.u32 %v726, 2147483648
  %v1082 = vor.u32 1.1754944e-38, %v1081
  %v1083 = vsel %vm1080, %v1082, %v1078
  %v1084 = vmul.f32 1.0, %v1083
  %v1085 = vrcp.pop %v727
  %v1086 = vmul.f32 %v727, %v1085
  %v1087 = vsub.f32 1.0, %v1086
  %v1088 = vmul.f32 %v1085, %v1087
  %v1089 = vadd.f32 %v1085, %v1088
  %vm1090 = vweird.f32 %v727
  %vm1091 = vweird.f32 %v1085
  %vm1092 = vmor %vm1090, %vm1091
  %v1093 = vsel %vm1092, %v1085, %v1089
  %v1094 = vand.u32 2147483647, %v727
  %vm1095 = vcmp.eq.f32.partialorder %v1094, 8.507059e+37
  %v1096 = vand.u32 %v727, 2147483648
  %v1097 = vor.u32 1.1754944e-38, %v1096
  %v1098 = vsel %vm1095, %v1097, %v1093
  %v1099 = vmul.f32 1.0, %v1098
  %v1100 = vrcp.pop %v728
  %v1101 = vmul.f32 %v728, %v1100
  %v1102 = vsub.f32 1.0, %v1101
  %v1103 = vmul.f32 %v1100, %v1102
  %v1104 = vadd.f32 %v1100, %v1103
  %vm1105 = vweird.f32 %v728
  %vm1106 = vweird.f32 %v1100
  %vm1107 = vmor %vm1105, %vm1106
  %v1108 = vsel %vm1107, %v1100, %v1104
  %v1109 = vand.u32 2147483647, %v728
  %vm1110 = vcmp.eq.f32.partialorder %v1109, 8.507059e+37
  %v1111 = vand.u32 %v728, 2147483648
  %v1112 = vor.u32 1.1754944e-38, %v1111
  %v1113 = vsel %vm1110, %v1112, %v1108
  %v1114 = vmul.f32 1.0, %v1113
  %v1115 = vrcp.pop %v729
  %v1116 = vmul.f32 %v729, %v1115
  %v1117 = vsub.f32 1.0, %v1116
  %v1118 = vmul.f32 %v1115, %v1117
  %v1119 = vadd.f32 %v1115, %v1118
  %vm1120 = vweird.f32 %v729
  %vm1121 = vweird.f32 %v1115
  %vm1122 = vmor %vm1120, %vm1121
  %v1123 = vsel %vm1122, %v1115, %v1119
  %v1124 = vand.u32 2147483647, %v729
  %vm1125 = vcmp.eq.f32.partialorder %v1124, 8.507059e+37
  %v1126 = vand.u32 %v729, 2147483648
  %v1127 = vor.u32 1.1754944e-38, %v1126
  %v1128 = vsel %vm1125, %v1127, %v1123
  %v1129 = vmul.f32 1.0, %v1128
  %v1130 = vrcp.pop %v730
  %v1131 = vmul.f32 %v730, %v1130
  %v1132 = vsub.f32 1.0, %v1131
  %v1133 = vmul.f32 %v1130, %v1132
  %v1134 = vadd.f32 %v1130, %v1133
  %vm1135 = vweird.f32 %v730
  %vm1136 = vweird.f32 %v1130
  %vm1137 = vmor %vm1135, %vm1136
  %v1138 = vsel %vm1137, %v1130, %v1134
  %v1139 = vand.u32 2147483647, %v730
  %vm1140 = vcmp.eq.f32.partialorder %v1139, 8.507059e+37
  %v1141 = vand.u32 %v730, 2147483648
  %v1142 = vor.u32 1.1754944e-38, %v1141
  %v1143 = vsel %vm1140, %v1142, %v1138
  %v1144 = vmul.f32 1.0, %v1143
  %v1145 = vrcp.pop %v731
  %v1146 = vmul.f32 %v731, %v1145
  %v1147 = vsub.f32 1.0, %v1146
  %v1148 = vmul.f32 %v1145, %v1147
  %v1149 = vadd.f32 %v1145, %v1148
  %vm1150 = vweird.f32 %v731
  %vm1151 = vweird.f32 %v1145
  %vm1152 = vmor %vm1150, %vm1151
  %v1153 = vsel %vm1152, %v1145, %v1149
  %v1154 = vand.u32 2147483647, %v731
  %vm1155 = vcmp.eq.f32.partialorder %v1154, 8.507059e+37
  %v1156 = vand.u32 %v731, 2147483648
  %v1157 = vor.u32 1.1754944e-38, %v1156
  %v1158 = vsel %vm1155, %v1157, %v1153
  %v1159 = vmul.f32 1.0, %v1158
  %v1160 = vrcp.pop %v732
  %v1161 = vmul.f32 %v732, %v1160
  %v1162 = vsub.f32 1.0, %v1161
  %v1163 = vmul.f32 %v1160, %v1162
  %v1164 = vadd.f32 %v1160, %v1163
  %vm1165 = vweird.f32 %v732
  %vm1166 = vweird.f32 %v1160
  %vm1167 = vmor %vm1165, %vm1166
  %v1168 = vsel %vm1167, %v1160, %v1164
  %v1169 = vand.u32 2147483647, %v732
  %vm1170 = vcmp.eq.f32.partialorder %v1169, 8.507059e+37
  %v1171 = vand.u32 %v732, 2147483648
  %v1172 = vor.u32 1.1754944e-38, %v1171
  %v1173 = vsel %vm1170, %v1172, %v1168
  %v1174 = vmul.f32 1.0, %v1173
  %v1175 = vrcp.pop %v733
  %v1176 = vmul.f32 %v733, %v1175
  %v1177 = vsub.f32 1.0, %v1176
  %v1178 = vmul.f32 %v1175, %v1177
  %v1179 = vadd.f32 %v1175, %v1178
  %vm1180 = vweird.f32 %v733
  %vm1181 = vweird.f32 %v1175
  %vm1182 = vmor %vm1180, %vm1181
  %v1183 = vsel %vm1182, %v1175, %v1179
  %v1184 = vand.u32 2147483647, %v733
  %vm1185 = vcmp.eq.f32.partialorder %v1184, 8.507059e+37
  %v1186 = vand.u32 %v733, 2147483648
  %v1187 = vor.u32 1.1754944e-38, %v1186
  %v1188 = vsel %vm1185, %v1187, %v1183
  %v1189 = vmul.f32 1.0, %v1188
  %v1190 = vrcp.pop %v734
  %v1191 = vmul.f32 %v734, %v1190
  %v1192 = vsub.f32 1.0, %v1191
  %v1193 = vmul.f32 %v1190, %v1192
  %v1194 = vadd.f32 %v1190, %v1193
  %vm1195 = vweird.f32 %v734
  %vm1196 = vweird.f32 %v1190
  %vm1197 = vmor %vm1195, %vm1196
  %v1198 = vsel %vm1197, %v1190, %v1194
  %v1199 = vand.u32 2147483647, %v734
  %vm1200 = vcmp.eq.f32.partialorder %v1199, 8.507059e+37
  %v1201 = vand.u32 %v734, 2147483648
  %v1202 = vor.u32 1.1754944e-38, %v1201
  %v1203 = vsel %vm1200, %v1202, %v1198
  %v1204 = vmul.f32 1.0, %v1203
  %v1205 = vrcp.pop %v735
  %v1206 = vmul.f32 %v735, %v1205
  %v1207 = vsub.f32 1.0, %v1206
  %v1208 = vmul.f32 %v1205, %v1207
  %v1209 = vadd.f32 %v1205, %v1208
  %vm1210 = vweird.f32 %v735
  %vm1211 = vweird.f32 %v1205
  %vm1212 = vmor %vm1210, %vm1211
  %v1213 = vsel %vm1212, %v1205, %v1209
  %v1214 = vand.u32 2147483647, %v735
  %vm1215 = vcmp.eq.f32.partialorder %v1214, 8.507059e+37
  %v1216 = vand.u32 %v735, 2147483648
  %v1217 = vor.u32 1.1754944e-38, %v1216
  %v1218 = vsel %vm1215, %v1217, %v1213
  %v1219 = vmul.f32 1.0, %v1218
  %v1220 = vrcp.pop %v736
  %v1221 = vmul.f32 %v736, %v1220
  %v1222 = vsub.f32 1.0, %v1221
  %v1223 = vmul.f32 %v1220, %v1222
  %v1224 = vadd.f32 %v1220, %v1223
  %vm1225 = vweird.f32 %v736
  %vm1226 = vweird.f32 %v1220
  %vm1227 = vmor %vm1225, %vm1226
  %v1228 = vsel %vm1227, %v1220, %v1224
  %v1229 = vand.u32 2147483647, %v736
  %vm1230 = vcmp.eq.f32.partialorder %v1229, 8.507059e+37
  %v1231 = vand.u32 %v736, 2147483648
  %v1232 = vor.u32 1.1754944e-38, %v1231
  %v1233 = vsel %vm1230, %v1232, %v1228
  %v1234 = vmul.f32 1.0, %v1233
  %v1235 = vrcp.pop %v737
  %v1236 = vmul.f32 %v737, %v1235
  %v1237 = vsub.f32 1.0, %v1236
  %v1238 = vmul.f32 %v1235, %v1237
  %v1239 = vadd.f32 %v1235, %v1238
  %vm1240 = vweird.f32 %v737
  %vm1241 = vweird.f32 %v1235
  %vm1242 = vmor %vm1240, %vm1241
  %v1243 = vsel %vm1242, %v1235, %v1239
  %v1244 = vand.u32 2147483647, %v737
  %vm1245 = vcmp.eq.f32.partialorder %v1244, 8.507059e+37
  %v1246 = vand.u32 %v737, 2147483648
  %v1247 = vor.u32 1.1754944e-38, %v1246
  %v1248 = vsel %vm1245, %v1247, %v1243
  %v1249 = vmul.f32 1.0, %v1248
  %v1250 = vrcp.pop %v738
  %v1251 = vmul.f32 %v738, %v1250
  %v1252 = vsub.f32 1.0, %v1251
  %v1253 = vmul.f32 %v1250, %v1252
  %v1254 = vadd.f32 %v1250, %v1253
  %vm1255 = vweird.f32 %v738
  %vm1256 = vweird.f32 %v1250
  %vm1257 = vmor %vm1255, %vm1256
  %v1258 = vsel %vm1257, %v1250, %v1254
  %v1259 = vand.u32 2147483647, %v738
  %vm1260 = vcmp.eq.f32.partialorder %v1259, 8.507059e+37
  %v1261 = vand.u32 %v738, 2147483648
  %v1262 = vor.u32 1.1754944e-38, %v1261
  %v1263 = vsel %vm1260, %v1262, %v1258
  %v1264 = vmul.f32 1.0, %v1263
  %v1265 = vrcp.pop %v739
  %v1266 = vmul.f32 %v739, %v1265
  %v1267 = vsub.f32 1.0, %v1266
  %v1268 = vmul.f32 %v1265, %v1267
  %v1269 = vadd.f32 %v1265, %v1268
  %vm1270 = vweird.f32 %v739
  %vm1271 = vweird.f32 %v1265
  %vm1272 = vmor %vm1270, %vm1271
  %v1273 = vsel %vm1272, %v1265, %v1269
  %v1274 = vand.u32 2147483647, %v739
  %vm1275 = vcmp.eq.f32.partialorder %v1274, 8.507059e+37
  %v1276 = vand.u32 %v739, 2147483648
  %v1277 = vor.u32 1.1754944e-38, %v1276
  %v1278 = vsel %vm1275, %v1277, %v1273
  %v1279 = vmul.f32 1.0, %v1278
  %v1280 = vrcp.pop %v740
  %v1281 = vmul.f32 %v740, %v1280
  %v1282 = vsub.f32 1.0, %v1281
  %v1283 = vmul.f32 %v1280, %v1282
  %v1284 = vadd.f32 %v1280, %v1283
  %vm1285 = vweird.f32 %v740
  %vm1286 = vweird.f32 %v1280
  %vm1287 = vmor %vm1285, %vm1286
  %v1288 = vsel %vm1287, %v1280, %v1284
  %v1289 = vand.u32 2147483647, %v740
  %vm1290 = vcmp.eq.f32.partialorder %v1289, 8.507059e+37
  %v1291 = vand.u32 %v740, 2147483648
  %v1292 = vor.u32 1.1754944e-38, %v1291
  %v1293 = vsel %vm1290, %v1292, %v1288
  %v1294 = vmul.f32 1.0, %v1293
  %v1295 = vrcp.pop %v741
  %v1296 = vmul.f32 %v741, %v1295
  %v1297 = vsub.f32 1.0, %v1296
  %v1298 = vmul.f32 %v1295, %v1297
  %v1299 = vadd.f32 %v1295, %v1298
  %vm1300 = vweird.f32 %v741
  %vm1301 = vweird.f32 %v1295
  %vm1302 = vmor %vm1300, %vm1301
  %v1303 = vsel %vm1302, %v1295, %v1299
  %v1304 = vand.u32 2147483647, %v741
  %vm1305 = vcmp.eq.f32.partialorder %v1304, 8.507059e+37
  %v1306 = vand.u32 %v741, 2147483648
  %v1307 = vor.u32 1.1754944e-38, %v1306
  %v1308 = vsel %vm1305, %v1307, %v1303
  %v1309 = vmul.f32 1.0, %v1308
  %v1310 = vrcp.pop %v742
  %v1311 = vmul.f32 %v742, %v1310
  %v1312 = vsub.f32 1.0, %v1311
  %v1313 = vmul.f32 %v1310, %v1312
  %v1314 = vadd.f32 %v1310, %v1313
  %vm1315 = vweird.f32 %v742
  %vm1316 = vweird.f32 %v1310
  %vm1317 = vmor %vm1315, %vm1316
  %v1318 = vsel %vm1317, %v1310, %v1314
  %v1319 = vand.u32 2147483647, %v742
  %vm1320 = vcmp.eq.f32.partialorder %v1319, 8.507059e+37
  %v1321 = vand.u32 %v742, 2147483648
  %v1322 = vor.u32 1.1754944e-38, %v1321
  %v1323 = vsel %vm1320, %v1322, %v1318
  %v1324 = vmul.f32 1.0, %v1323
  %v1325 = vrcp.pop %v743
  %v1326 = vmul.f32 %v743, %v1325
  %v1327 = vsub.f32 1.0, %v1326
  %v1328 = vmul.f32 %v1325, %v1327
  %v1329 = vadd.f32 %v1325, %v1328
  %vm1330 = vweird.f32 %v743
  %vm1331 = vweird.f32 %v1325
  %vm1332 = vmor %vm1330, %vm1331
  %v1333 = vsel %vm1332, %v1325, %v1329
  %v1334 = vand.u32 2147483647, %v743
  %vm1335 = vcmp.eq.f32.partialorder %v1334, 8.507059e+37
  %v1336 = vand.u32 %v743, 2147483648
  %v1337 = vor.u32 1.1754944e-38, %v1336
  %v1338 = vsel %vm1335, %v1337, %v1333
  %v1339 = vmul.f32 1.0, %v1338
  %v1340 = vrcp.pop %v744
  %v1341 = vmul.f32 %v744, %v1340
  %v1342 = vsub.f32 1.0, %v1341
  %v1343 = vmul.f32 %v1340, %v1342
  %v1344 = vadd.f32 %v1340, %v1343
  %vm1345 = vweird.f32 %v744
  %vm1346 = vweird.f32 %v1340
  %vm1347 = vmor %vm1345, %vm1346
  %v1348 = vsel %vm1347, %v1340, %v1344
  %v1349 = vand.u32 2147483647, %v744
  %vm1350 = vcmp.eq.f32.partialorder %v1349, 8.507059e+37
  %v1351 = vand.u32 %v744, 2147483648
  %v1352 = vor.u32 1.1754944e-38, %v1351
  %v1353 = vsel %vm1350, %v1352, %v1348
  %v1354 = vmul.f32 1.0, %v1353
  %v1355 = vrcp.pop %v745
  %v1356 = vmul.f32 %v745, %v1355
  %v1357 = vsub.f32 1.0, %v1356
  %v1358 = vmul.f32 %v1355, %v1357
  %v1359 = vadd.f32 %v1355, %v1358
  %vm1360 = vweird.f32 %v745
  %vm1361 = vweird.f32 %v1355
  %vm1362 = vmor %vm1360, %vm1361
  %v1363 = vsel %vm1362, %v1355, %v1359
  %v1364 = vand.u32 2147483647, %v745
  %vm1365 = vcmp.eq.f32.partialorder %v1364, 8.507059e+37
  %v1366 = vand.u32 %v745, 2147483648
  %v1367 = vor.u32 1.1754944e-38, %v1366
  %v1368 = vsel %vm1365, %v1367, %v1363
  %v1369 = vmul.f32 1.0, %v1368
  %v1370 = vrcp.pop %v746
  %v1371 = vmul.f32 %v746, %v1370
  %v1372 = vsub.f32 1.0, %v1371
  %v1373 = vmul.f32 %v1370, %v1372
  %v1374 = vadd.f32 %v1370, %v1373
  %vm1375 = vweird.f32 %v746
  %vm1376 = vweird.f32 %v1370
  %vm1377 = vmor %vm1375, %vm1376
  %v1378 = vsel %vm1377, %v1370, %v1374
  %v1379 = vand.u32 2147483647, %v746
  %vm1380 = vcmp.eq.f32.partialorder %v1379, 8.507059e+37
  %v1381 = vand.u32 %v746, 2147483648
  %v1382 = vor.u32 1.1754944e-38, %v1381
  %v1383 = vsel %vm1380, %v1382, %v1378
  %v1384 = vmul.f32 1.0, %v1383
  %v1385 = vrcp.pop %v747
  %v1386 = vmul.f32 %v747, %v1385
  %v1387 = vsub.f32 1.0, %v1386
  %v1388 = vmul.f32 %v1385, %v1387
  %v1389 = vadd.f32 %v1385, %v1388
  %vm1390 = vweird.f32 %v747
  %vm1391 = vweird.f32 %v1385
  %vm1392 = vmor %vm1390, %vm1391
  %v1393 = vsel %vm1392, %v1385, %v1389
  %v1394 = vand.u32 2147483647, %v747
  %vm1395 = vcmp.eq.f32.partialorder %v1394, 8.507059e+37
  %v1396 = vand.u32 %v747, 2147483648
  %v1397 = vor.u32 1.1754944e-38, %v1396
  %v1398 = vsel %vm1395, %v1397, %v1393
  %v1399 = vmul.f32 1.0, %v1398
  %v1400 = vrcp.pop %v748
  %v1401 = vmul.f32 %v748, %v1400
  %v1402 = vsub.f32 1.0, %v1401
  %v1403 = vmul.f32 %v1400, %v1402
  %v1404 = vadd.f32 %v1400, %v1403
  %vm1405 = vweird.f32 %v748
  %vm1406 = vweird.f32 %v1400
  %vm1407 = vmor %vm1405, %vm1406
  %v1408 = vsel %vm1407, %v1400, %v1404
  %v1409 = vand.u32 2147483647, %v748
  %vm1410 = vcmp.eq.f32.partialorder %v1409, 8.507059e+37
  %v1411 = vand.u32 %v748, 2147483648
  %v1412 = vor.u32 1.1754944e-38, %v1411
  %v1413 = vsel %vm1410, %v1412, %v1408
  %v1414 = vmul.f32 1.0, %v1413
  %v1415 = vrcp.pop %v749
  %v1416 = vmul.f32 %v749, %v1415
  %v1417 = vsub.f32 1.0, %v1416
  %v1418 = vmul.f32 %v1415, %v1417
  %v1419 = vadd.f32 %v1415, %v1418
  %vm1420 = vweird.f32 %v749
  %vm1421 = vweird.f32 %v1415
  %vm1422 = vmor %vm1420, %vm1421
  %v1423 = vsel %vm1422, %v1415, %v1419
  %v1424 = vand.u32 2147483647, %v749
  %vm1425 = vcmp.eq.f32.partialorder %v1424, 8.507059e+37
  %v1426 = vand.u32 %v749, 2147483648
  %v1427 = vor.u32 1.1754944e-38, %v1426
  %v1428 = vsel %vm1425, %v1427, %v1423
  %v1429 = vmul.f32 1.0, %v1428
  %v1430 = vrcp.pop %v750
  %v1431 = vmul.f32 %v750, %v1430
  %v1432 = vsub.f32 1.0, %v1431
  %v1433 = vmul.f32 %v1430, %v1432
  %v1434 = vadd.f32 %v1430, %v1433
  %vm1435 = vweird.f32 %v750
  %vm1436 = vweird.f32 %v1430
  %vm1437 = vmor %vm1435, %vm1436
  %v1438 = vsel %vm1437, %v1430, %v1434
  %v1439 = vand.u32 2147483647, %v750
  %vm1440 = vcmp.eq.f32.partialorder %v1439, 8.507059e+37
  %v1441 = vand.u32 %v750, 2147483648
  %v1442 = vor.u32 1.1754944e-38, %v1441
  %v1443 = vsel %vm1440, %v1442, %v1438
  %v1444 = vmul.f32 1.0, %v1443
  %v1445 = vrcp.pop %v751
  %v1446 = vmul.f32 %v751, %v1445
  %v1447 = vsub.f32 1.0, %v1446
  %v1448 = vmul.f32 %v1445, %v1447
  %v1449 = vadd.f32 %v1445, %v1448
  %vm1450 = vweird.f32 %v751
  %vm1451 = vweird.f32 %v1445
  %vm1452 = vmor %vm1450, %vm1451
  %v1453 = vsel %vm1452, %v1445, %v1449
  %v1454 = vand.u32 2147483647, %v751
  %vm1455 = vcmp.eq.f32.partialorder %v1454, 8.507059e+37
  %v1456 = vand.u32 %v751, 2147483648
  %v1457 = vor.u32 1.1754944e-38, %v1456
  %v1458 = vsel %vm1455, %v1457, %v1453
  %v1459 = vmul.f32 1.0, %v1458
  %v1460 = vrcp.pop %v752
  %v1461 = vmul.f32 %v752, %v1460
  %v1462 = vsub.f32 1.0, %v1461
  %v1463 = vmul.f32 %v1460, %v1462
  %v1464 = vadd.f32 %v1460, %v1463
  %vm1465 = vweird.f32 %v752
  %vm1466 = vweird.f32 %v1460
  %vm1467 = vmor %vm1465, %vm1466
  %v1468 = vsel %vm1467, %v1460, %v1464
  %v1469 = vand.u32 2147483647, %v752
  %vm1470 = vcmp.eq.f32.partialorder %v1469, 8.507059e+37
  %v1471 = vand.u32 %v752, 2147483648
  %v1472 = vor.u32 1.1754944e-38, %v1471
  %v1473 = vsel %vm1470, %v1472, %v1468
  %v1474 = vmul.f32 1.0, %v1473
  %v1475 = vrcp.pop %v753
  %v1476 = vmul.f32 %v753, %v1475
  %v1477 = vsub.f32 1.0, %v1476
  %v1478 = vmul.f32 %v1475, %v1477
  %v1479 = vadd.f32 %v1475, %v1478
  %vm1480 = vweird.f32 %v753
  %vm1481 = vweird.f32 %v1475
  %vm1482 = vmor %vm1480, %vm1481
  %v1483 = vsel %vm1482, %v1475, %v1479
  %v1484 = vand.u32 2147483647, %v753
  %vm1485 = vcmp.eq.f32.partialorder %v1484, 8.507059e+37
  %v1486 = vand.u32 %v753, 2147483648
  %v1487 = vor.u32 1.1754944e-38, %v1486
  %v1488 = vsel %vm1485, %v1487, %v1483
  %v1489 = vmul.f32 1.0, %v1488
  %v1490 = vrcp.pop %v754
  %v1491 = vmul.f32 %v754, %v1490
  %v1492 = vsub.f32 1.0, %v1491
  %v1493 = vmul.f32 %v1490, %v1492
  %v1494 = vadd.f32 %v1490, %v1493
  %vm1495 = vweird.f32 %v754
  %vm1496 = vweird.f32 %v1490
  %vm1497 = vmor %vm1495, %vm1496
  %v1498 = vsel %vm1497, %v1490, %v1494
  %v1499 = vand.u32 2147483647, %v754
  %vm1500 = vcmp.eq.f32.partialorder %v1499, 8.507059e+37
  %v1501 = vand.u32 %v754, 2147483648
  %v1502 = vor.u32 1.1754944e-38, %v1501
  %v1503 = vsel %vm1500, %v1502, %v1498
  %v1504 = vmul.f32 1.0, %v1503
  %v1505 = vrcp.pop %v755
  %v1506 = vmul.f32 %v755, %v1505
  %v1507 = vsub.f32 1.0, %v1506
  %v1508 = vmul.f32 %v1505, %v1507
  %v1509 = vadd.f32 %v1505, %v1508
  %vm1510 = vweird.f32 %v755
  %vm1511 = vweird.f32 %v1505
  %vm1512 = vmor %vm1510, %vm1511
  %v1513 = vsel %vm1512, %v1505, %v1509
  %v1514 = vand.u32 2147483647, %v755
  %vm1515 = vcmp.eq.f32.partialorder %v1514, 8.507059e+37
  %v1516 = vand.u32 %v755, 2147483648
  %v1517 = vor.u32 1.1754944e-38, %v1516
  %v1518 = vsel %vm1515, %v1517, %v1513
  %v1519 = vmul.f32 1.0, %v1518
  %v1520 = vrcp.pop %v756
  %v1521 = vmul.f32 %v756, %v1520
  %v1522 = vsub.f32 1.0, %v1521
  %v1523 = vmul.f32 %v1520, %v1522
  %v1524 = vadd.f32 %v1520, %v1523
  %vm1525 = vweird.f32 %v756
  %vm1526 = vweird.f32 %v1520
  %vm1527 = vmor %vm1525, %vm1526
  %v1528 = vsel %vm1527, %v1520, %v1524
  %v1529 = vand.u32 2147483647, %v756
  %vm1530 = vcmp.eq.f32.partialorder %v1529, 8.507059e+37
  %v1531 = vand.u32 %v756, 2147483648
  %v1532 = vor.u32 1.1754944e-38, %v1531
  %v1533 = vsel %vm1530, %v1532, %v1528
  %v1534 = vmul.f32 1.0, %v1533
  %v1535 = vrcp.pop %v757
  %v1536 = vmul.f32 %v757, %v1535
  %v1537 = vsub.f32 1.0, %v1536
  %v1538 = vmul.f32 %v1535, %v1537
  %v1539 = vadd.f32 %v1535, %v1538
  %vm1540 = vweird.f32 %v757
  %vm1541 = vweird.f32 %v1535
  %vm1542 = vmor %vm1540, %vm1541
  %v1543 = vsel %vm1542, %v1535, %v1539
  %v1544 = vand.u32 2147483647, %v757
  %vm1545 = vcmp.eq.f32.partialorder %v1544, 8.507059e+37
  %v1546 = vand.u32 %v757, 2147483648
  %v1547 = vor.u32 1.1754944e-38, %v1546
  %v1548 = vsel %vm1545, %v1547, %v1543
  %v1549 = vmul.f32 1.0, %v1548
  %v1550 = vrcp.pop %v758
  %v1551 = vmul.f32 %v758, %v1550
  %v1552 = vsub.f32 1.0, %v1551
  %v1553 = vmul.f32 %v1550, %v1552
  %v1554 = vadd.f32 %v1550, %v1553
  %vm1555 = vweird.f32 %v758
  %vm1556 = vweird.f32 %v1550
  %vm1557 = vmor %vm1555, %vm1556
  %v1558 = vsel %vm1557, %v1550, %v1554
  %v1559 = vand.u32 2147483647, %v758
  %vm1560 = vcmp.eq.f32.partialorder %v1559, 8.507059e+37
  %v1561 = vand.u32 %v758, 2147483648
  %v1562 = vor.u32 1.1754944e-38, %v1561
  %v1563 = vsel %vm1560, %v1562, %v1558
  %v1564 = vmul.f32 1.0, %v1563
  %v1565 = vrcp.pop %v759
  %v1566 = vmul.f32 %v759, %v1565
  %v1567 = vsub.f32 1.0, %v1566
  %v1568 = vmul.f32 %v1565, %v1567
  %v1569 = vadd.f32 %v1565, %v1568
  %vm1570 = vweird.f32 %v759
  %vm1571 = vweird.f32 %v1565
  %vm1572 = vmor %vm1570, %vm1571
  %v1573 = vsel %vm1572, %v1565, %v1569
  %v1574 = vand.u32 2147483647, %v759
  %vm1575 = vcmp.eq.f32.partialorder %v1574, 8.507059e+37
  %v1576 = vand.u32 %v759, 2147483648
  %v1577 = vor.u32 1.1754944e-38, %v1576
  %v1578 = vsel %vm1575, %v1577, %v1573
  %v1579 = vmul.f32 1.0, %v1578
  %v1580 = vrcp.pop %v760
  %v1581 = vmul.f32 %v760, %v1580
  %v1582 = vsub.f32 1.0, %v1581
  %v1583 = vmul.f32 %v1580, %v1582
  %v1584 = vadd.f32 %v1580, %v1583
  %vm1585 = vweird.f32 %v760
  %vm1586 = vweird.f32 %v1580
  %vm1587 = vmor %vm1585, %vm1586
  %v1588 = vsel %vm1587, %v1580, %v1584
  %v1589 = vand.u32 2147483647, %v760
  %vm1590 = vcmp.eq.f32.partialorder %v1589, 8.507059e+37
  %v1591 = vand.u32 %v760, 2147483648
  %v1592 = vor.u32 1.1754944e-38, %v1591
  %v1593 = vsel %vm1590, %v1592, %v1588
  %v1594 = vmul.f32 1.0, %v1593
  %v1595 = vrcp.pop %v761
  %v1596 = vmul.f32 %v761, %v1595
  %v1597 = vsub.f32 1.0, %v1596
  %v1598 = vmul.f32 %v1595, %v1597
  %v1599 = vadd.f32 %v1595, %v1598
  %vm1600 = vweird.f32 %v761
  %vm1601 = vweird.f32 %v1595
  %vm1602 = vmor %vm1600, %vm1601
  %v1603 = vsel %vm1602, %v1595, %v1599
  %v1604 = vand.u32 2147483647, %v761
  %vm1605 = vcmp.eq.f32.partialorder %v1604, 8.507059e+37
  %v1606 = vand.u32 %v761, 2147483648
  %v1607 = vor.u32 1.1754944e-38, %v1606
  %v1608 = vsel %vm1605, %v1607, %v1603
  %v1609 = vmul.f32 1.0, %v1608
  %v1610 = vrcp.pop %v762
  %v1611 = vmul.f32 %v762, %v1610
  %v1612 = vsub.f32 1.0, %v1611
  %v1613 = vmul.f32 %v1610, %v1612
  %v1614 = vadd.f32 %v1610, %v1613
  %vm1615 = vweird.f32 %v762
  %vm1616 = vweird.f32 %v1610
  %vm1617 = vmor %vm1615, %vm1616
  %v1618 = vsel %vm1617, %v1610, %v1614
  %v1619 = vand.u32 2147483647, %v762
  %vm1620 = vcmp.eq.f32.partialorder %v1619, 8.507059e+37
  %v1621 = vand.u32 %v762, 2147483648
  %v1622 = vor.u32 1.1754944e-38, %v1621
  %v1623 = vsel %vm1620, %v1622, %v1618
  %v1624 = vmul.f32 1.0, %v1623
  %v1625 = vrcp.pop %v763
  %v1626 = vmul.f32 %v763, %v1625
  %v1627 = vsub.f32 1.0, %v1626
  %v1628 = vmul.f32 %v1625, %v1627
  %v1629 = vadd.f32 %v1625, %v1628
  %vm1630 = vweird.f32 %v763
  %vm1631 = vweird.f32 %v1625
  %vm1632 = vmor %vm1630, %vm1631
  %v1633 = vsel %vm1632, %v1625, %v1629
  %v1634 = vand.u32 2147483647, %v763
  %vm1635 = vcmp.eq.f32.partialorder %v1634, 8.507059e+37
  %v1636 = vand.u32 %v763, 2147483648
  %v1637 = vor.u32 1.1754944e-38, %v1636
  %v1638 = vsel %vm1635, %v1637, %v1633
  %v1639 = vmul.f32 1.0, %v1638
  %v1640 = vrcp.pop %v764
  %v1641 = vmul.f32 %v764, %v1640
  %v1642 = vsub.f32 1.0, %v1641
  %v1643 = vmul.f32 %v1640, %v1642
  %v1644 = vadd.f32 %v1640, %v1643
  %vm1645 = vweird.f32 %v764
  %vm1646 = vweird.f32 %v1640
  %vm1647 = vmor %vm1645, %vm1646
  %v1648 = vsel %vm1647, %v1640, %v1644
  %v1649 = vand.u32 2147483647, %v764
  %vm1650 = vcmp.eq.f32.partialorder %v1649, 8.507059e+37
  %v1651 = vand.u32 %v764, 2147483648
  %v1652 = vor.u32 1.1754944e-38, %v1651
  %v1653 = vsel %vm1650, %v1652, %v1648
  %v1654 = vmul.f32 1.0, %v1653
  %v1655 = vrcp.pop %v765
  %v1656 = vmul.f32 %v765, %v1655
  %v1657 = vsub.f32 1.0, %v1656
  %v1658 = vmul.f32 %v1655, %v1657
  %v1659 = vadd.f32 %v1655, %v1658
  %vm1660 = vweird.f32 %v765
  %vm1661 = vweird.f32 %v1655
  %vm1662 = vmor %vm1660, %vm1661
  %v1663 = vsel %vm1662, %v1655, %v1659
  %v1664 = vand.u32 2147483647, %v765
  %vm1665 = vcmp.eq.f32.partialorder %v1664, 8.507059e+37
  %v1666 = vand.u32 %v765, 2147483648
  %v1667 = vor.u32 1.1754944e-38, %v1666
  %v1668 = vsel %vm1665, %v1667, %v1663
  %v1669 = vmul.f32 1.0, %v1668
  %v1670 = vrcp.pop %v766
  %v1671 = vmul.f32 %v766, %v1670
  %v1672 = vsub.f32 1.0, %v1671
  %v1673 = vmul.f32 %v1670, %v1672
  %v1674 = vadd.f32 %v1670, %v1673
  %vm1675 = vweird.f32 %v766
  %vm1676 = vweird.f32 %v1670
  %vm1677 = vmor %vm1675, %vm1676
  %v1678 = vsel %vm1677, %v1670, %v1674
  %v1679 = vand.u32 2147483647, %v766
  %vm1680 = vcmp.eq.f32.partialorder %v1679, 8.507059e+37
  %v1681 = vand.u32 %v766, 2147483648
  %v1682 = vor.u32 1.1754944e-38, %v1681
  %v1683 = vsel %vm1680, %v1682, %v1678
  %v1684 = vmul.f32 1.0, %v1683
  %v1685 = vrcp.pop %v767
  %v1686 = vmul.f32 %v767, %v1685
  %v1687 = vsub.f32 1.0, %v1686
  %v1688 = vmul.f32 %v1685, %v1687
  %v1689 = vadd.f32 %v1685, %v1688
  %vm1690 = vweird.f32 %v767
  %vm1691 = vweird.f32 %v1685
  %vm1692 = vmor %vm1690, %vm1691
  %v1693 = vsel %vm1692, %v1685, %v1689
  %v1694 = vand.u32 2147483647, %v767
  %vm1695 = vcmp.eq.f32.partialorder %v1694, 8.507059e+37
  %v1696 = vand.u32 %v767, 2147483648
  %v1697 = vor.u32 1.1754944e-38, %v1696
  %v1698 = vsel %vm1695, %v1697, %v1693
  %v1699 = vmul.f32 1.0, %v1698
  %v1700 = vrcp.pop %v768
  %v1701 = vmul.f32 %v768, %v1700
  %v1702 = vsub.f32 1.0, %v1701
  %v1703 = vmul.f32 %v1700, %v1702
  %v1704 = vadd.f32 %v1700, %v1703
  %vm1705 = vweird.f32 %v768
  %vm1706 = vweird.f32 %v1700
  %vm1707 = vmor %vm1705, %vm1706
  %v1708 = vsel %vm1707, %v1700, %v1704
  %v1709 = vand.u32 2147483647, %v768
  %vm1710 = vcmp.eq.f32.partialorder %v1709, 8.507059e+37
  %v1711 = vand.u32 %v768, 2147483648
  %v1712 = vor.u32 1.1754944e-38, %v1711
  %v1713 = vsel %vm1710, %v1712, %v1708
  %v1714 = vmul.f32 1.0, %v1713
  %v1715 = vrcp.pop %v769
  %v1716 = vmul.f32 %v769, %v1715
  %v1717 = vsub.f32 1.0, %v1716
  %v1718 = vmul.f32 %v1715, %v1717
  %v1719 = vadd.f32 %v1715, %v1718
  %vm1720 = vweird.f32 %v769
  %vm1721 = vweird.f32 %v1715
  %vm1722 = vmor %vm1720, %vm1721
  %v1723 = vsel %vm1722, %v1715, %v1719
  %v1724 = vand.u32 2147483647, %v769
  %vm1725 = vcmp.eq.f32.partialorder %v1724, 8.507059e+37
  %v1726 = vand.u32 %v769, 2147483648
  %v1727 = vor.u32 1.1754944e-38, %v1726
  %v1728 = vsel %vm1725, %v1727, %v1723
  %v1729 = vmul.f32 1.0, %v1728
  %v1730 = vmul.f32 %v355, %v784
  %v1731 = vmul.f32 %v357, %v799
  %v1732 = vmul.f32 %v360, %v814
  %v1733 = vmul.f32 %v362, %v829
  %v1734 = vmul.f32 %v365, %v844
  %v1735 = vmul.f32 %v367, %v859
  %v1736 = vmul.f32 %v370, %v874
  %v1737 = vmul.f32 %v372, %v889
  %v1738 = vmul.f32 %v375, %v904
  %v1739 = vmul.f32 %v377, %v919
  %v1740 = vmul.f32 %v380, %v934
  %v1741 = vmul.f32 %v382, %v949
  %v1742 = vmul.f32 %v385, %v964
  %v1743 = vmul.f32 %v387, %v979
  %v1744 = vmul.f32 %v390, %v994
  %v1745 = vmul.f32 %v392, %v1009
  %v1746 = vmul.f32 %v395, %v1024
  %v1747 = vmul.f32 %v397, %v1039
  %v1748 = vmul.f32 %v400, %v1054
  %v1749 = vmul.f32 %v402, %v1069
  %v1750 = vmul.f32 %v405, %v1084
  %v1751 = vmul.f32 %v407, %v1099
  %v1752 = vmul.f32 %v410, %v1114
  %v1753 = vmul.f32 %v412, %v1129
  %v1754 = vmul.f32 %v415, %v1144
  %v1755 = vmul.f32 %v417, %v1159
  %v1756 = vmul.f32 %v420, %v1174
  %v1757 = vmul.f32 %v422, %v1189
  %v1758 = vmul.f32 %v425, %v1204
  %v1759 = vmul.f32 %v427, %v1219
  %v1760 = vmul.f32 %v430, %v1234
  %v1761 = vmul.f32 %v432, %v1249
  %v1762 = vmul.f32 %v435, %v1264
  %v1763 = vmul.f32 %v437, %v1279
  %v1764 = vmul.f32 %v440, %v1294
  %v1765 = vmul.f32 %v442, %v1309
  %v1766 = vmul.f32 %v445, %v1324
  %v1767 = vmul.f32 %v447, %v1339
  %v1768 = vmul.f32 %v450, %v1354
  %v1769 = vmul.f32 %v452, %v1369
  %v1770 = vmul.f32 %v455, %v1384
  %v1771 = vmul.f32 %v457, %v1399
  %v1772 = vmul.f32 %v460, %v1414
  %v1773 = vmul.f32 %v462, %v1429
  %v1774 = vmul.f32 %v465, %v1444
  %v1775 = vmul.f32 %v467, %v1459
  %v1776 = vmul.f32 %v470, %v1474
  %v1777 = vmul.f32 %v472, %v1489
  %v1778 = vmul.f32 %v475, %v1504
  %v1779 = vmul.f32 %v477, %v1519
  %v1780 = vmul.f32 %v480, %v1534
  %v1781 = vmul.f32 %v482, %v1549
  %v1782 = vmul.f32 %v485, %v1564
  %v1783 = vmul.f32 %v487, %v1579
  %v1784 = vmul.f32 %v490, %v1594
  %v1785 = vmul.f32 %v492, %v1609
  %v1786 = vmul.f32 %v495, %v1624
  %v1787 = vmul.f32 %v497, %v1639
  %v1788 = vmul.f32 %v500, %v1654
  %v1789 = vmul.f32 %v502, %v1669
  %v1790 = vmul.f32 %v505, %v1684
  %v1791 = vmul.f32 %v507, %v1699
  %v1792 = vmul.f32 %v510, %v1714
  %v1793 = vmul.f32 %v512, %v1729
  %1794 = vst [vmem:[%s3] sm:$0xff] %v1730
  %1795 = vst [vmem:[%s3 + $0x8] sm:$0xff] %v1731
  %1796 = vst [vmem:[%s3 + $0x10] sm:$0xff] %v1732
  %1797 = vst [vmem:[%s3 + $0x18] sm:$0xff] %v1733
  %1798 = vst [vmem:[%s3 + $0x20] sm:$0xff] %v1734
  %1799 = vst [vmem:[%s3 + $0x28] sm:$0xff] %v1735
  %1800 = vst [vmem:[%s3 + $0x30] sm:$0xff] %v1736
  %1801 = vst [vmem:[%s3 + $0x38] sm:$0xff] %v1737
  %1802 = vst [vmem:[%s3 + $0x40] sm:$0xff] %v1738
  %1803 = vst [vmem:[%s3 + $0x48] sm:$0xff] %v1739
  %1804 = vst [vmem:[%s3 + $0x50] sm:$0xff] %v1740
  %1805 = vst [vmem:[%s3 + $0x58] sm:$0xff] %v1741
  %1806 = vst [vmem:[%s3 + $0x60] sm:$0xff] %v1742
  %1807 = vst [vmem:[%s3 + $0x68] sm:$0xff] %v1743
  %1808 = vst [vmem:[%s3 + $0x70] sm:$0xff] %v1744
  %1809 = vst [vmem:[%s3 + $0x78] sm:$0xff] %v1745
  %1810 = vst [vmem:[%s3 + $0x80] sm:$0xff] %v1746
  %1811 = vst [vmem:[%s3 + $0x88] sm:$0xff] %v1747
  %1812 = vst [vmem:[%s3 + $0x90] sm:$0xff] %v1748
  %1813 = vst [vmem:[%s3 + $0x98] sm:$0xff] %v1749
  %1814 = vst [vmem:[%s3 + $0xa0] sm:$0xff] %v1750
  %1815 = vst [vmem:[%s3 + $0xa8] sm:$0xff] %v1751
  %1816 = vst [vmem:[%s3 + $0xb0] sm:$0xff] %v1752
  %1817 = vst [vmem:[%s3 + $0xb8] sm:$0xff] %v1753
  %1818 = vst [vmem:[%s3 + $0xc0] sm:$0xff] %v1754
  %1819 = vst [vmem:[%s3 + $0xc8] sm:$0xff] %v1755
  %1820 = vst [vmem:[%s3 + $0xd0] sm:$0xff] %v1756
  %1821 = vst [vmem:[%s3 + $0xd8] sm:$0xff] %v1757
  %1822 = vst [vmem:[%s3 + $0xe0] sm:$0xff] %v1758
  %1823 = vst [vmem:[%s3 + $0xe8] sm:$0xff] %v1759
  %1824 = vst [vmem:[%s3 + $0xf0] sm:$0xff] %v1760
  %1825 = vst [vmem:[%s3 + $0xf8] sm:$0xff] %v1761
  %1826 = vst [vmem:[%s3 + $0x100] sm:$0xff] %v1762
  %1827 = vst [vmem:[%s3 + $0x108] sm:$0xff] %v1763
  %1828 = vst [vmem:[%s3 + $0x110] sm:$0xff] %v1764
  %1829 = vst [vmem:[%s3 + $0x118] sm:$0xff] %v1765
  %1830 = vst [vmem:[%s3 + $0x120] sm:$0xff] %v1766
  %1831 = vst [vmem:[%s3 + $0x128] sm:$0xff] %v1767
  %1832 = vst [vmem:[%s3 + $0x130] sm:$0xff] %v1768
  %1833 = vst [vmem:[%s3 + $0x138] sm:$0xff] %v1769
  %1834 = vst [vmem:[%s3 + $0x140] sm:$0xff] %v1770
  %1835 = vst [vmem:[%s3 + $0x148] sm:$0xff] %v1771
  %1836 = vst [vmem:[%s3 + $0x150] sm:$0xff] %v1772
  %1837 = vst [vmem:[%s3 + $0x158] sm:$0xff] %v1773
  %1838 = vst [vmem:[%s3 + $0x160] sm:$0xff] %v1774
  %1839 = vst [vmem:[%s3 + $0x168] sm:$0xff] %v1775
  %1840 = vst [vmem:[%s3 + $0x170] sm:$0xff] %v1776
  %1841 = vst [vmem:[%s3 + $0x178] sm:$0xff] %v1777
  %1842 = vst [vmem:[%s3 + $0x180] sm:$0xff] %v1778
  %1843 = vst [vmem:[%s3 + $0x188] sm:$0xff] %v1779
  %1844 = vst [vmem:[%s3 + $0x190] sm:$0xff] %v1780
  %1845 = vst [vmem:[%s3 + $0x198] sm:$0xff] %v1781
  %1846 = vst [vmem:[%s3 + $0x1a0] sm:$0xff] %v1782
  %1847 = vst [vmem:[%s3 + $0x1a8] sm:$0xff] %v1783
  %1848 = vst [vmem:[%s3 + $0x1b0] sm:$0xff] %v1784
  %1849 = vst [vmem:[%s3 + $0x1b8] sm:$0xff] %v1785
  %1850 = vst [vmem:[%s3 + $0x1c0] sm:$0xff] %v1786
  %1851 = vst [vmem:[%s3 + $0x1c8] sm:$0xff] %v1787
  %1852 = vst [vmem:[%s3 + $0x1d0] sm:$0xff] %v1788
  %1853 = vst [vmem:[%s3 + $0x1d8] sm:$0xff] %v1789
  %1854 = vst [vmem:[%s3 + $0x1e0] sm:$0xff] %v1790
  %1855 = vst [vmem:[%s3 + $0x1e8] sm:$0xff] %v1791
  %1856 = vst [vmem:[%s3 + $0x1f0] sm:$0xff] %v1792
  %1857 = vst [vmem:[%s3 + $0x1f8] sm:$0xff] %v1793
  // Predicated region
  $region14: #{_lambda_.5} parent=0 // pred_check
    _
  $region15: #{_lambda_.5} parent=0 // pred_check_branch
    %1859 = sbr.rel (0) target = $region17
  $region16: #{_lambda_.5} parent=0 // pred_region
    _
  $region17: #{_lambda_.5} parent=0 // pred_fallthru
    _
  // Predicated region
  $region18: #{_lambda_.5} parent=0 // pred_check
    _
  $region19: #{_lambda_.5} parent=0 // pred_check_branch
    %1861 = sbr.rel (0) target = $region21
  $region20: #{_lambda_.5} parent=0 // pred_region
    _
  $region21: #{_lambda_.5} parent=0 // pred_fallthru
    _

// kernel: _lambda_.4
$region0: #{_lambda_.4}
  #allocation0 [shape = 'u32[]', space=smem, size = 0x4, offset = 0x4, fixed_abs, tag = 'smem constant byte address 0x4 - core index']
  #allocation1 [shape = 'u32[72,128]{1,0:T(1,128)}', space=vmem, size = 0x9000, scoped, tag = 'internal scratch']
  %s0 = inlined_call_operand.vmem [shape: bf16[2,28,28,2], index: 0, kind: input, shape index: {}]
  %s1 = inlined_call_operand.vmem [shape: bf16[2,16,16,8], index: 1, kind: output, shape index: {}]
  %s2 = sld [smem:[#allocation0]]
  $region37: #{_lambda_.4} parent=0
    _
  %s4 = ssub.s32 1, %s2
  %s5 = scalar_select 0, %s4, %s2
  loop: start=0, step=1, limit=4
  $region2: #{_lambda_.4} parent=0 // loop_pre_header
    _
  $region3: #{_lambda_.4} parent=0 // loop_header
    %s7 = sphi 0, %s11
    %p8 = scmp.ge.s32.totalorder %s7, 4
    %s17 = sphi 0, %s19
    %s20 = sphi 0, %s17
    %s21 = sphi 0, %s20
    %s37 = sphi 0, %s21
    %s43 = sphi 0, %s45
    %s46 = sphi 0, %s43
    %s47 = sphi 0, %s46
    %s63 = sphi 0, %s47
  $region4: #{_lambda_.4} parent=0 // loop_header_branch
    %10 = sbr.rel (%p8) target = $region8
  $region5: #{_lambda_.4} parent=0 // loop_body
    %s12 = ssub.s32 %s7, 1
    %s13 = ssub.s32 %s7, 2
    %s14 = sadd.s32 %s7, 1
    %s15 = ssub.s32 %s7, %s14
    %p16 = scmp.eq.s32.totalorder %s15, 0
    %s18 = sadd.s32 %s17, 1
    %s19 = scalar_select %p16, %s17, %s18
    %p22 = pneg %p16
    %p23 = scmp.eq.s32.totalorder %s7, 1
    %p24 = por %p22, %p23
    %p25 = scmp.ne.s32.totalorder %s17, %s20
    %p26 = scmp.eq.s32.totalorder %s7, 0
    %p27 = por %p25, %p26
    %p28 = scmp.ne.s32.totalorder %s17, %s20
    %p29 = scmp.eq.s32.totalorder %s12, 1
    %p30 = por %p28, %p29
    %p31 = scmp.ne.s32.totalorder %s20, %s21
    %p32 = scmp.eq.s32.totalorder %s12, 0
    %p33 = por %p31, %p32
    %p34 = scmp.ne.s32.totalorder %s20, %s21
    %p35 = scmp.eq.s32.totalorder %s13, 1
    %p36 = por %p34, %p35
    %p38 = scmp.ne.s32.totalorder %s21, %s37
    %p39 = scmp.eq.s32.totalorder %s13, 0
    %p40 = por %p38, %p39
    %s41 = ssub.s32 %s7, %s14
    %p42 = scmp.eq.s32.totalorder %s41, 0
    %s44 = sadd.s32 %s43, 1
    %s45 = scalar_select %p42, %s43, %s44
    %p48 = pneg %p42
    %p49 = scmp.eq.s32.totalorder %s7, 1
    %p50 = por %p48, %p49
    %p51 = scmp.ne.s32.totalorder %s43, %s46
    %p52 = scmp.eq.s32.totalorder %s7, 0
    %p53 = por %p51, %p52
    %p54 = scmp.ne.s32.totalorder %s43, %s46
    %p55 = scmp.eq.s32.totalorder %s12, 1
    %p56 = por %p54, %p55
    %p57 = scmp.ne.s32.totalorder %s46, %s47
    %p58 = scmp.eq.s32.totalorder %s12, 0
    %p59 = por %p57, %p58
    %p60 = scmp.ne.s32.totalorder %s46, %s47
    %p61 = scmp.eq.s32.totalorder %s13, 1
    %p62 = por %p60, %p61
    %p64 = scmp.ne.s32.totalorder %s47, %s63
    %p65 = scmp.eq.s32.totalorder %s13, 0
    %p66 = por %p64, %p65
    %p67 = scmp.le.s32.totalorder 1, %s7
    %p68 = scmp.lt.s32.totalorder %s7, 3
    %p69 = pnand %p67, %p68
    %p70 = pneg %p69
    // Predicated region
    $region9: #{_lambda_.4} parent=5 // pred_check
      _
    $region10: #{_lambda_.4} parent=5 // pred_check_branch
      %72 = sbr.rel (%p69) target = $region12
    $region11: #{_lambda_.4} parent=5 // pred_region
      %s73 = ssub.s32 %s7, 1
    $region12: #{_lambda_.4} parent=5 // pred_fallthru
      _
    %p74 = scmp.lt.s32.totalorder %s7, 2
    // Predicated region
    $region13: #{_lambda_.4} parent=5 // pred_check
      %p75 = pneg %p74
    $region14: #{_lambda_.4} parent=5 // pred_check_branch
      %77 = sbr.rel (%p75) target = $region16
    $region15: #{_lambda_.4} parent=5 // pred_region
      // Predicated region
      $region17: #{_lambda_.4} parent=15 // pred_check
        %p78 = pneg %p27
      $region18: #{_lambda_.4} parent=15 // pred_check_branch
        %80 = sbr.rel (%p78) target = $region20
      $region19: #{_lambda_.4} parent=15 // pred_region
        %p81 = scmp.lt.s32.totalorder %s7, 1
        %s82 = scalar_select %p81, %s7, 1
        %s83 = smul.addr %s82, 112
        %s84 = smul.addr %s83, 4
        %s85 = scalar_lea.vmem %s0, %s84
      $region20: #{_lambda_.4} parent=15 // pred_fallthru
        _
    $region16: #{_lambda_.4} parent=5 // pred_fallthru
      _
    %p86 = scmp.le.s32.totalorder 1, %s7
    %p87 = scmp.lt.s32.totalorder %s7, 3
    %p88 = pnand %p86, %p87
    %p89 = pneg %p88
    // Predicated region
    $region21: #{_lambda_.4} parent=5 // pred_check
      _
    $region22: #{_lambda_.4} parent=5 // pred_check_branch
      %91 = sbr.rel (%p88) target = $region24
    $region23: #{_lambda_.4} parent=5 // pred_region
      %s92 = ssub.s32 %s7, 1
      %p93 = scmp.lt.s32.totalorder %s12, 1
      %s94 = scalar_select %p93, %s12, 1
      %s95 = smul.addr %s94, 112
      %s96 = smul.addr %s95, 4
      %s97 = scalar_lea.vmem %s0, %s96
      %p98 = pneg %p33
      %p99 = pneg %p30
      %p100 = pneg %p59
      %p101 = pneg %p56
      %p102 = scmp.lt.s32.totalorder %s12, 1
      %s103 = scalar_select %p102, %s12, 1
      %s104 = smul.addr %s103, 32
      %s105 = smul.addr %s104, 4
      %s106 = scalar_lea.vmem %s1, %s105
      %p107 = scmp.lt.s32.totalorder %s12, 1
      %s108 = scalar_select %p107, %s12, 1
      %s109 = smul.addr %s108, 112
      %s110 = smul.addr %s109, 4
      %s111 = scalar_lea.vmem %s0, %s110
      %p112 = scmp.lt.s32.totalorder %s12, 1
      %s113 = scalar_select %p112, %s12, 1
      %s114 = smul.addr %s113, 32
      %s115 = smul.addr %s114, 4
      %s116 = scalar_lea.vmem %s1, %s115
      %v117 = vld [vmem:[%s111] sm:$0xf]
      %v118 = vld [vmem:[%s111 + $0x4] sm:$0xf]
      %v119 = vld [vmem:[%s111 + $0x8] sm:$0xf]
      %v120 = vld [vmem:[%s111 + $0xc] sm:$0x3]
      %v121 = vld [vmem:[%s111 + $0x10] sm:$0xf]
      %v122 = vld [vmem:[%s111 + $0x14] sm:$0xf]
      %v123 = vld [vmem:[%s111 + $0x18] sm:$0xf]
      %v124 = vld [vmem:[%s111 + $0x1c] sm:$0x3]
      %v125 = vld [vmem:[%s111 + $0x20] sm:$0xf]
      %v126 = vld [vmem:[%s111 + $0x24] sm:$0xf]
      %v127 = vld [vmem:[%s111 + $0x28] sm:$0xf]
      %v128 = vld [vmem:[%s111 + $0x2c] sm:$0x3]
      %v129 = vld [vmem:[%s111 + $0x30] sm:$0xf]
      %v130 = vld [vmem:[%s111 + $0x34] sm:$0xf]
      %v131 = vld [vmem:[%s111 + $0x38] sm:$0xf]
      %v132 = vld [vmem:[%s111 + $0x3c] sm:$0x3]
      %v133 = vld [vmem:[%s111 + $0x40] sm:$0xf]
      %v134 = vld [vmem:[%s111 + $0x44] sm:$0xf]
      %v135 = vld [vmem:[%s111 + $0x48] sm:$0xf]
      %v136 = vld [vmem:[%s111 + $0x4c] sm:$0x3]
      %v137 = vld [vmem:[%s111 + $0x50] sm:$0xf]
      %v138 = vld [vmem:[%s111 + $0x54] sm:$0xf]
      %v139 = vld [vmem:[%s111 + $0x58] sm:$0xf]
      %v140 = vld [vmem:[%s111 + $0x5c] sm:$0x3]
      %v141 = vld [vmem:[%s111 + $0x60] sm:$0xf]
      %v142 = vld [vmem:[%s111 + $0x64] sm:$0xf]
      %v143 = vld [vmem:[%s111 + $0x68] sm:$0xf]
      %v144 = vld [vmem:[%s111 + $0x6c] sm:$0x3]
      %v145 = vld [vmem:[%s111 + $0x70] sm:$0xf]
      %v146 = vld [vmem:[%s111 + $0x74] sm:$0xf]
      %v147 = vld [vmem:[%s111 + $0x78] sm:$0xf]
      %v148 = vld [vmem:[%s111 + $0x7c] sm:$0x3]
      %v149 = vld [vmem:[%s111 + $0x80] sm:$0xf]
      %v150 = vld [vmem:[%s111 + $0x84] sm:$0xf]
      %v151 = vld [vmem:[%s111 + $0x88] sm:$0xf]
      %v152 = vld [vmem:[%s111 + $0x8c] sm:$0x3]
      %v153 = vld [vmem:[%s111 + $0x90] sm:$0xf]
      %v154 = vld [vmem:[%s111 + $0x94] sm:$0xf]
      %v155 = vld [vmem:[%s111 + $0x98] sm:$0xf]
      %v156 = vld [vmem:[%s111 + $0x9c] sm:$0x3]
      %v157 = vld [vmem:[%s111 + $0xa0] sm:$0xf]
      %v158 = vld [vmem:[%s111 + $0xa4] sm:$0xf]
      %v159 = vld [vmem:[%s111 + $0xa8] sm:$0xf]
      %v160 = vld [vmem:[%s111 + $0xac] sm:$0x3]
      %v161 = vld [vmem:[%s111 + $0xb0] sm:$0xf]
      %v162 = vld [vmem:[%s111 + $0xb4] sm:$0xf]
      %v163 = vld [vmem:[%s111 + $0xb8] sm:$0xf]
      %v164 = vld [vmem:[%s111 + $0xbc] sm:$0x3]
      %v165 = vld [vmem:[%s111 + $0xc0] sm:$0xf]
      %v166 = vld [vmem:[%s111 + $0xc4] sm:$0xf]
      %v167 = vld [vmem:[%s111 + $0xc8] sm:$0xf]
      %v168 = vld [vmem:[%s111 + $0xcc] sm:$0x3]
      %v169 = vld [vmem:[%s111 + $0xd0] sm:$0xf]
      %v170 = vld [vmem:[%s111 + $0xd4] sm:$0xf]
      %v171 = vld [vmem:[%s111 + $0xd8] sm:$0xf]
      %v172 = vld [vmem:[%s111 + $0xdc] sm:$0x3]
      %v173 = vld [vmem:[%s111 + $0xe0] sm:$0xf]
      %v174 = vld [vmem:[%s111 + $0xe4] sm:$0xf]
      %v175 = vld [vmem:[%s111 + $0xe8] sm:$0xf]
      %v176 = vld [vmem:[%s111 + $0xec] sm:$0x3]
      %v177 = vld [vmem:[%s111 + $0xf0] sm:$0xf]
      %v178 = vld [vmem:[%s111 + $0xf4] sm:$0xf]
      %v179 = vld [vmem:[%s111 + $0xf8] sm:$0xf]
      %v180 = vld [vmem:[%s111 + $0xfc] sm:$0x3]
      %v181 = vld [vmem:[%s111 + $0x100] sm:$0xf]
      %v182 = vld [vmem:[%s111 + $0x104] sm:$0xf]
      %v183 = vld [vmem:[%s111 + $0x108] sm:$0xf]
      %v184 = vld [vmem:[%s111 + $0x10c] sm:$0x3]
      %v185 = vld [vmem:[%s111 + $0x110] sm:$0xf]
      %v186 = vld [vmem:[%s111 + $0x114] sm:$0xf]
      %v187 = vld [vmem:[%s111 + $0x118] sm:$0xf]
      %v188 = vld [vmem:[%s111 + $0x11c] sm:$0x3]
      %v189 = vld [vmem:[%s111 + $0x120] sm:$0xf]
      %v190 = vld [vmem:[%s111 + $0x124] sm:$0xf]
      %v191 = vld [vmem:[%s111 + $0x128] sm:$0xf]
      %v192 = vld [vmem:[%s111 + $0x12c] sm:$0x3]
      %v193 = vld [vmem:[%s111 + $0x130] sm:$0xf]
      %v194 = vld [vmem:[%s111 + $0x134] sm:$0xf]
      %v195 = vld [vmem:[%s111 + $0x138] sm:$0xf]
      %v196 = vld [vmem:[%s111 + $0x13c] sm:$0x3]
      %v197 = vld [vmem:[%s111 + $0x140] sm:$0xf]
      %v198 = vld [vmem:[%s111 + $0x144] sm:$0xf]
      %v199 = vld [vmem:[%s111 + $0x148] sm:$0xf]
      %v200 = vld [vmem:[%s111 + $0x14c] sm:$0x3]
      %v201 = vld [vmem:[%s111 + $0x150] sm:$0xf]
      %v202 = vld [vmem:[%s111 + $0x154] sm:$0xf]
      %v203 = vld [vmem:[%s111 + $0x158] sm:$0xf]
      %v204 = vld [vmem:[%s111 + $0x15c] sm:$0x3]
      %v205 = vld [vmem:[%s111 + $0x160] sm:$0xf]
      %v206 = vld [vmem:[%s111 + $0x164] sm:$0xf]
      %v207 = vld [vmem:[%s111 + $0x168] sm:$0xf]
      %v208 = vld [vmem:[%s111 + $0x16c] sm:$0x3]
      %v209 = vld [vmem:[%s111 + $0x170] sm:$0xf]
      %v210 = vld [vmem:[%s111 + $0x174] sm:$0xf]
      %v211 = vld [vmem:[%s111 + $0x178] sm:$0xf]
      %v212 = vld [vmem:[%s111 + $0x17c] sm:$0x3]
      %v213 = vld [vmem:[%s111 + $0x180] sm:$0xf]
      %v214 = vld [vmem:[%s111 + $0x184] sm:$0xf]
      %v215 = vld [vmem:[%s111 + $0x188] sm:$0xf]
      %v216 = vld [vmem:[%s111 + $0x18c] sm:$0x3]
      %v217 = vld [vmem:[%s111 + $0x190] sm:$0xf]
      %v218 = vld [vmem:[%s111 + $0x194] sm:$0xf]
      %v219 = vld [vmem:[%s111 + $0x198] sm:$0xf]
      %v220 = vld [vmem:[%s111 + $0x19c] sm:$0x3]
      %v221 = vld [vmem:[%s111 + $0x1a0] sm:$0xf]
      %v222 = vld [vmem:[%s111 + $0x1a4] sm:$0xf]
      %v223 = vld [vmem:[%s111 + $0x1a8] sm:$0xf]
      %v224 = vld [vmem:[%s111 + $0x1ac] sm:$0x3]
      %v225 = vld [vmem:[%s111 + $0x1b0] sm:$0xf]
      %v226 = vld [vmem:[%s111 + $0x1b4] sm:$0xf]
      %v227 = vld [vmem:[%s111 + $0x1b8] sm:$0xf]
      %v228 = vld [vmem:[%s111 + $0x1bc] sm:$0x3]
      %v229 = vunpack.c.l.bf16 %v117
      %v230 = vunpack.c.l.bf16 %v118
      %v231 = vunpack.c.l.bf16 %v119
      %v232 = vunpack.c.l.bf16 %v120
      %v233 = vunpack.c.l.bf16 %v121
      %v234 = vunpack.c.l.bf16 %v122
      %v235 = vunpack.c.l.bf16 %v123
      %v236 = vunpack.c.l.bf16 %v124
      %v237 = vunpack.c.l.bf16 %v125
      %v238 = vunpack.c.l.bf16 %v126
      %v239 = vunpack.c.l.bf16 %v127
      %v240 = vunpack.c.l.bf16 %v128
      %v241 = vunpack.c.l.bf16 %v129
      %v242 = vunpack.c.l.bf16 %v130
      %v243 = vunpack.c.l.bf16 %v131
      %v244 = vunpack.c.l.bf16 %v132
      %v245 = vunpack.c.l.bf16 %v133
      %v246 = vunpack.c.l.bf16 %v134
      %v247 = vunpack.c.l.bf16 %v135
      %v248 = vunpack.c.l.bf16 %v136
      %v249 = vunpack.c.l.bf16 %v137
      %v250 = vunpack.c.l.bf16 %v138
      %v251 = vunpack.c.l.bf16 %v139
      %v252 = vunpack.c.l.bf16 %v140
      %v253 = vunpack.c.l.bf16 %v141
      %v254 = vunpack.c.l.bf16 %v142
      %v255 = vunpack.c.l.bf16 %v143
      %v256 = vunpack.c.l.bf16 %v144
      %v257 = vunpack.c.l.bf16 %v145
      %v258 = vunpack.c.l.bf16 %v146
      %v259 = vunpack.c.l.bf16 %v147
      %v260 = vunpack.c.l.bf16 %v148
      %v261 = vunpack.c.l.bf16 %v149
      %v262 = vunpack.c.l.bf16 %v150
      %v263 = vunpack.c.l.bf16 %v151
      %v264 = vunpack.c.l.bf16 %v152
      %v265 = vunpack.c.l.bf16 %v153
      %v266 = vunpack.c.l.bf16 %v154
      %v267 = vunpack.c.l.bf16 %v155
      %v268 = vunpack.c.l.bf16 %v156
      %v269 = vunpack.c.l.bf16 %v157
      %v270 = vunpack.c.l.bf16 %v158
      %v271 = vunpack.c.l.bf16 %v159
      %v272 = vunpack.c.l.bf16 %v160
      %v273 = vunpack.c.l.bf16 %v161
      %v274 = vunpack.c.l.bf16 %v162
      %v275 = vunpack.c.l.bf16 %v163
      %v276 = vunpack.c.l.bf16 %v164
      %v277 = vunpack.c.l.bf16 %v165
      %v278 = vunpack.c.l.bf16 %v166
      %v279 = vunpack.c.l.bf16 %v167
      %v280 = vunpack.c.l.bf16 %v168
      %v281 = vunpack.c.l.bf16 %v169
      %v282 = vunpack.c.l.bf16 %v170
      %v283 = vunpack.c.l.bf16 %v171
      %v284 = vunpack.c.l.bf16 %v172
      %v285 = vunpack.c.l.bf16 %v173
      %v286 = vunpack.c.l.bf16 %v174
      %v287 = vunpack.c.l.bf16 %v175
      %v288 = vunpack.c.l.bf16 %v176
      %v289 = vunpack.c.l.bf16 %v177
      %v290 = vunpack.c.l.bf16 %v178
      %v291 = vunpack.c.l.bf16 %v179
      %v292 = vunpack.c.l.bf16 %v180
      %v293 = vunpack.c.l.bf16 %v181
      %v294 = vunpack.c.l.bf16 %v182
      %v295 = vunpack.c.l.bf16 %v183
      %v296 = vunpack.c.l.bf16 %v184
      %v297 = vunpack.c.l.bf16 %v185
      %v298 = vunpack.c.l.bf16 %v186
      %v299 = vunpack.c.l.bf16 %v187
      %v300 = vunpack.c.l.bf16 %v188
      %v301 = vunpack.c.l.bf16 %v189
      %v302 = vunpack.c.l.bf16 %v190
      %v303 = vunpack.c.l.bf16 %v191
      %v304 = vunpack.c.l.bf16 %v192
      %v305 = vunpack.c.l.bf16 %v193
      %v306 = vunpack.c.l.bf16 %v194
      %v307 = vunpack.c.l.bf16 %v195
      %v308 = vunpack.c.l.bf16 %v196
      %v309 = vunpack.c.l.bf16 %v197
      %v310 = vunpack.c.l.bf16 %v198
      %v311 = vunpack.c.l.bf16 %v199
      %v312 = vunpack.c.l.bf16 %v200
      %v313 = vunpack.c.l.bf16 %v201
      %v314 = vunpack.c.l.bf16 %v202
      %v315 = vunpack.c.l.bf16 %v203
      %v316 = vunpack.c.l.bf16 %v204
      %v317 = vunpack.c.l.bf16 %v205
      %v318 = vunpack.c.l.bf16 %v206
      %v319 = vunpack.c.l.bf16 %v207
      %v320 = vunpack.c.l.bf16 %v208
      %v321 = vunpack.c.l.bf16 %v209
      %v322 = vunpack.c.l.bf16 %v210
      %v323 = vunpack.c.l.bf16 %v211
      %v324 = vunpack.c.l.bf16 %v212
      %v325 = vunpack.c.l.bf16 %v213
      %v326 = vunpack.c.l.bf16 %v214
      %v327 = vunpack.c.l.bf16 %v215
      %v328 = vunpack.c.l.bf16 %v216
      %v329 = vunpack.c.l.bf16 %v217
      %v330 = vunpack.c.l.bf16 %v218
      %v331 = vunpack.c.l.bf16 %v219
      %v332 = vunpack.c.l.bf16 %v220
      %v333 = vunpack.c.l.bf16 %v221
      %v334 = vunpack.c.l.bf16 %v222
      %v335 = vunpack.c.l.bf16 %v223
      %v336 = vunpack.c.l.bf16 %v224
      %v337 = vunpack.c.l.bf16 %v225
      %v338 = vunpack.c.l.bf16 %v226
      %v339 = vunpack.c.l.bf16 %v227
      %v340 = vunpack.c.l.bf16 %v228
      %vm401 = vcmask 1046528
      %v402 = vrot.slane %v245, 1
      %v403 = vrot.slane %v246, 1
      %v404 = vsel %vm401, %v402, %v403
      %v405 = vrot.slane %v247, 1
      %v406 = vsel %vm401, %v403, %v405
      %v407 = vrot.slane %v249, 1
      %v408 = vrot.slane %v250, 1
      %v409 = vsel %vm401, %v407, %v408
      %v410 = vrot.slane %v251, 1
      %v411 = vsel %vm401, %v408, %v410
      %v412 = vrot.slane %v253, 1
      %v413 = vrot.slane %v254, 1
      %v414 = vsel %vm401, %v412, %v413
      %v415 = vrot.slane %v255, 1
      %v416 = vsel %vm401, %v413, %v415
      %v417 = vrot.slane %v257, 1
      %v418 = vrot.slane %v258, 1
      %v419 = vsel %vm401, %v417, %v418
      %v420 = vrot.slane %v259, 1
      %v421 = vsel %vm401, %v418, %v420
      %v422 = vrot.slane %v261, 1
      %v423 = vrot.slane %v262, 1
      %v424 = vsel %vm401, %v422, %v423
      %v425 = vrot.slane %v263, 1
      %v426 = vsel %vm401, %v423, %v425
      %v427 = vrot.slane %v265, 1
      %v428 = vrot.slane %v266, 1
      %v429 = vsel %vm401, %v427, %v428
      %v430 = vrot.slane %v267, 1
      %v431 = vsel %vm401, %v428, %v430
      %v432 = vrot.slane %v269, 1
      %v433 = vrot.slane %v270, 1
      %v434 = vsel %vm401, %v432, %v433
      %v435 = vrot.slane %v271, 1
      %v436 = vsel %vm401, %v433, %v435
      %v437 = vrot.slane %v273, 1
      %v438 = vrot.slane %v274, 1
      %v439 = vsel %vm401, %v437, %v438
      %v440 = vrot.slane %v275, 1
      %v441 = vsel %vm401, %v438, %v440
      %v442 = vrot.slane %v277, 1
      %v443 = vrot.slane %v278, 1
      %v444 = vsel %vm401, %v442, %v443
      %v445 = vrot.slane %v279, 1
      %v446 = vsel %vm401, %v443, %v445
      %v447 = vrot.slane %v281, 1
      %v448 = vrot.slane %v282, 1
      %v449 = vsel %vm401, %v447, %v448
      %v450 = vrot.slane %v283, 1
      %v451 = vsel %vm401, %v448, %v450
      %v452 = vrot.slane %v285, 1
      %v453 = vrot.slane %v286, 1
      %v454 = vsel %vm401, %v452, %v453
      %v455 = vrot.slane %v287, 1
      %v456 = vsel %vm401, %v453, %v455
      %v457 = vrot.slane %v289, 1
      %v458 = vrot.slane %v290, 1
      %v459 = vsel %vm401, %v457, %v458
      %v460 = vrot.slane %v291, 1
      %v461 = vsel %vm401, %v458, %v460
      %v462 = vrot.slane %v293, 1
      %v463 = vrot.slane %v294, 1
      %v464 = vsel %vm401, %v462, %v463
      %v465 = vrot.slane %v295, 1
      %v466 = vsel %vm401, %v463, %v465
      %v467 = vrot.slane %v297, 1
      %v468 = vrot.slane %v298, 1
      %v469 = vsel %vm401, %v467, %v468
      %v470 = vrot.slane %v299, 1
      %v471 = vsel %vm401, %v468, %v470
      %v472 = vrot.slane %v301, 1
      %v473 = vrot.slane %v302, 1
      %v474 = vsel %vm401, %v472, %v473
      %v475 = vrot.slane %v303, 1
      %v476 = vsel %vm401, %v473, %v475
      %v477 = vrot.slane %v305, 1
      %v478 = vrot.slane %v306, 1
      %v479 = vsel %vm401, %v477, %v478
      %v480 = vrot.slane %v307, 1
      %v481 = vsel %vm401, %v478, %v480
      %v482 = vrot.slane %v309, 1
      %v483 = vrot.slane %v310, 1
      %v484 = vsel %vm401, %v482, %v483
      %v485 = vrot.slane %v311, 1
      %v486 = vsel %vm401, %v483, %v485
      %v487 = vrot.slane %v313, 1
      %v488 = vrot.slane %v314, 1
      %v489 = vsel %vm401, %v487, %v488
      %v490 = vrot.slane %v315, 1
      %v491 = vsel %vm401, %v488, %v490
      %v492 = vrot.slane %v317, 1
      %v493 = vrot.slane %v318, 1
      %v494 = vsel %vm401, %v492, %v493
      %v495 = vrot.slane %v319, 1
      %v496 = vsel %vm401, %v493, %v495
      %v497 = vrot.slane %v321, 1
      %v498 = vrot.slane %v322, 1
      %v499 = vsel %vm401, %v497, %v498
      %v500 = vrot.slane %v323, 1
      %v501 = vsel %vm401, %v498, %v500
      %v562 = vmax.f32 %v245, %v404
      %v563 = vmax.f32 %v246, %v406
      %v564 = vmax.f32 %v247, %v405
      %v565 = vmax.f32 %v249, %v409
      %v566 = vmax.f32 %v250, %v411
      %v567 = vmax.f32 %v251, %v410
      %v568 = vmax.f32 %v253, %v414
      %v569 = vmax.f32 %v254, %v416
      %v570 = vmax.f32 %v255, %v415
      %v571 = vmax.f32 %v257, %v419
      %v572 = vmax.f32 %v258, %v421
      %v573 = vmax.f32 %v259, %v420
      %v574 = vmax.f32 %v261, %v424
      %v575 = vmax.f32 %v262, %v426
      %v576 = vmax.f32 %v263, %v425
      %v577 = vmax.f32 %v265, %v429
      %v578 = vmax.f32 %v266, %v431
      %v579 = vmax.f32 %v267, %v430
      %v580 = vmax.f32 %v269, %v434
      %v581 = vmax.f32 %v270, %v436
      %v582 = vmax.f32 %v271, %v435
      %v583 = vmax.f32 %v273, %v439
      %v584 = vmax.f32 %v274, %v441
      %v585 = vmax.f32 %v275, %v440
      %v586 = vmax.f32 %v277, %v444
      %v587 = vmax.f32 %v278, %v446
      %v588 = vmax.f32 %v279, %v445
      %v589 = vmax.f32 %v281, %v449
      %v590 = vmax.f32 %v282, %v451
      %v591 = vmax.f32 %v283, %v450
      %v592 = vmax.f32 %v285, %v454
      %v593 = vmax.f32 %v286, %v456
      %v594 = vmax.f32 %v287, %v455
      %v595 = vmax.f32 %v289, %v459
      %v596 = vmax.f32 %v290, %v461
      %v597 = vmax.f32 %v291, %v460
      %v598 = vmax.f32 %v293, %v464
      %v599 = vmax.f32 %v294, %v466
      %v600 = vmax.f32 %v295, %v465
      %v601 = vmax.f32 %v297, %v469
      %v602 = vmax.f32 %v298, %v471
      %v603 = vmax.f32 %v299, %v470
      %v604 = vmax.f32 %v301, %v474
      %v605 = vmax.f32 %v302, %v476
      %v606 = vmax.f32 %v303, %v475
      %v607 = vmax.f32 %v305, %v479
      %v608 = vmax.f32 %v306, %v481
      %v609 = vmax.f32 %v307, %v480
      %v610 = vmax.f32 %v309, %v484
      %v611 = vmax.f32 %v310, %v486
      %v612 = vmax.f32 %v311, %v485
      %v613 = vmax.f32 %v313, %v489
      %v614 = vmax.f32 %v314, %v491
      %v615 = vmax.f32 %v315, %v490
      %v616 = vmax.f32 %v317, %v494
      %v617 = vmax.f32 %v318, %v496
      %v618 = vmax.f32 %v319, %v495
      %v619 = vmax.f32 %v321, %v499
      %v620 = vmax.f32 %v322, %v501
      %v621 = vmax.f32 %v323, %v500
      %vm622 = vcmask 1045504
      %v623 = vrot.slane %v245, 2
      %v624 = vrot.slane %v246, 2
      %v625 = vsel %vm622, %v623, %v624
      %v626 = vrot.slane %v247, 2
      %v627 = vsel %vm622, %v624, %v626
      %v628 = vrot.slane %v249, 2
      %v629 = vrot.slane %v250, 2
      %v630 = vsel %vm622, %v628, %v629
      %v631 = vrot.slane %v251, 2
      %v632 = vsel %vm622, %v629, %v631
      %v633 = vrot.slane %v253, 2
      %v634 = vrot.slane %v254, 2
      %v635 = vsel %vm622, %v633, %v634
      %v636 = vrot.slane %v255, 2
      %v637 = vsel %vm622, %v634, %v636
      %v638 = vrot.slane %v257, 2
      %v639 = vrot.slane %v258, 2
      %v640 = vsel %vm622, %v638, %v639
      %v641 = vrot.slane %v259, 2
      %v642 = vsel %vm622, %v639, %v641
      %v643 = vrot.slane %v261, 2
      %v644 = vrot.slane %v262, 2
      %v645 = vsel %vm622, %v643, %v644
      %v646 = vrot.slane %v263, 2
      %v647 = vsel %vm622, %v644, %v646
      %v648 = vrot.slane %v265, 2
      %v649 = vrot.slane %v266, 2
      %v650 = vsel %vm622, %v648, %v649
      %v651 = vrot.slane %v267, 2
      %v652 = vsel %vm622, %v649, %v651
      %v653 = vrot.slane %v269, 2
      %v654 = vrot.slane %v270, 2
      %v655 = vsel %vm622, %v653, %v654
      %v656 = vrot.slane %v271, 2
      %v657 = vsel %vm622, %v654, %v656
      %v658 = vrot.slane %v273, 2
      %v659 = vrot.slane %v274, 2
      %v660 = vsel %vm622, %v658, %v659
      %v661 = vrot.slane %v275, 2
      %v662 = vsel %vm622, %v659, %v661
      %v663 = vrot.slane %v277, 2
      %v664 = vrot.slane %v278, 2
      %v665 = vsel %vm622, %v663, %v664
      %v666 = vrot.slane %v279, 2
      %v667 = vsel %vm622, %v664, %v666
      %v668 = vrot.slane %v281, 2
      %v669 = vrot.slane %v282, 2
      %v670 = vsel %vm622, %v668, %v669
      %v671 = vrot.slane %v283, 2
      %v672 = vsel %vm622, %v669, %v671
      %v673 = vrot.slane %v285, 2
      %v674 = vrot.slane %v286, 2
      %v675 = vsel %vm622, %v673, %v674
      %v676 = vrot.slane %v287, 2
      %v677 = vsel %vm622, %v674, %v676
      %v678 = vrot.slane %v289, 2
      %v679 = vrot.slane %v290, 2
      %v680 = vsel %vm622, %v678, %v679
      %v681 = vrot.slane %v291, 2
      %v682 = vsel %vm622, %v679, %v681
      %v683 = vrot.slane %v293, 2
      %v684 = vrot.slane %v294, 2
      %v685 = vsel %vm622, %v683, %v684
      %v686 = vrot.slane %v295, 2
      %v687 = vsel %vm622, %v684, %v686
      %v688 = vrot.slane %v297, 2
      %v689 = vrot.slane %v298, 2
      %v690 = vsel %vm622, %v688, %v689
      %v691 = vrot.slane %v299, 2
      %v692 = vsel %vm622, %v689, %v691
      %v693 = vrot.slane %v301, 2
      %v694 = vrot.slane %v302, 2
      %v695 = vsel %vm622, %v693, %v694
      %v696 = vrot.slane %v303, 2
      %v697 = vsel %vm622, %v694, %v696
      %v698 = vrot.slane %v305, 2
      %v699 = vrot.slane %v306, 2
      %v700 = vsel %vm622, %v698, %v699
      %v701 = vrot.slane %v307, 2
      %v702 = vsel %vm622, %v699, %v701
      %v703 = vrot.slane %v309, 2
      %v704 = vrot.slane %v310, 2
      %v705 = vsel %vm622, %v703, %v704
      %v706 = vrot.slane %v311, 2
      %v707 = vsel %vm622, %v704, %v706
      %v708 = vrot.slane %v313, 2
      %v709 = vrot.slane %v314, 2
      %v710 = vsel %vm622, %v708, %v709
      %v711 = vrot.slane %v315, 2
      %v712 = vsel %vm622, %v709, %v711
      %v713 = vrot.slane %v317, 2
      %v714 = vrot.slane %v318, 2
      %v715 = vsel %vm622, %v713, %v714
      %v716 = vrot.slane %v319, 2
      %v717 = vsel %vm622, %v714, %v716
      %v718 = vrot.slane %v321, 2
      %v719 = vrot.slane %v322, 2
      %v720 = vsel %vm622, %v718, %v719
      %v721 = vrot.slane %v323, 2
      %v722 = vsel %vm622, %v719, %v721
      %v783 = vmax.f32 %v562, %v625
      %v784 = vmax.f32 %v563, %v627
      %v785 = vmax.f32 %v564, %v626
      %v786 = vmax.f32 %v565, %v630
      %v787 = vmax.f32 %v566, %v632
      %v788 = vmax.f32 %v567, %v631
      %v789 = vmax.f32 %v568, %v635
      %v790 = vmax.f32 %v569, %v637
      %v791 = vmax.f32 %v570, %v636
      %v792 = vmax.f32 %v571, %v640
      %v793 = vmax.f32 %v572, %v642
      %v794 = vmax.f32 %v573, %v641
      %v795 = vmax.f32 %v574, %v645
      %v796 = vmax.f32 %v575, %v647
      %v797 = vmax.f32 %v576, %v646
      %v798 = vmax.f32 %v577, %v650
      %v799 = vmax.f32 %v578, %v652
      %v800 = vmax.f32 %v579, %v651
      %v801 = vmax.f32 %v580, %v655
      %v802 = vmax.f32 %v581, %v657
      %v803 = vmax.f32 %v582, %v656
      %v804 = vmax.f32 %v583, %v660
      %v805 = vmax.f32 %v584, %v662
      %v806 = vmax.f32 %v585, %v661
      %v807 = vmax.f32 %v586, %v665
      %v808 = vmax.f32 %v587, %v667
      %v809 = vmax.f32 %v588, %v666
      %v810 = vmax.f32 %v589, %v670
      %v811 = vmax.f32 %v590, %v672
      %v812 = vmax.f32 %v591, %v671
      %v813 = vmax.f32 %v592, %v675
      %v814 = vmax.f32 %v593, %v677
      %v815 = vmax.f32 %v594, %v676
      %v816 = vmax.f32 %v595, %v680
      %v817 = vmax.f32 %v596, %v682
      %v818 = vmax.f32 %v597, %v681
      %v819 = vmax.f32 %v598, %v685
      %v820 = vmax.f32 %v599, %v687
      %v821 = vmax.f32 %v600, %v686
      %v822 = vmax.f32 %v601, %v690
      %v823 = vmax.f32 %v602, %v692
      %v824 = vmax.f32 %v603, %v691
      %v825 = vmax.f32 %v604, %v695
      %v826 = vmax.f32 %v605, %v697
      %v827 = vmax.f32 %v606, %v696
      %v828 = vmax.f32 %v607, %v700
      %v829 = vmax.f32 %v608, %v702
      %v830 = vmax.f32 %v609, %v701
      %v831 = vmax.f32 %v610, %v705
      %v832 = vmax.f32 %v611, %v707
      %v833 = vmax.f32 %v612, %v706
      %v834 = vmax.f32 %v613, %v710
      %v835 = vmax.f32 %v614, %v712
      %v836 = vmax.f32 %v615, %v711
      %v837 = vmax.f32 %v616, %v715
      %v838 = vmax.f32 %v617, %v717
      %v839 = vmax.f32 %v618, %v716
      %v840 = vmax.f32 %v619, %v720
      %v841 = vmax.f32 %v620, %v722
      %v842 = vmax.f32 %v621, %v721
      %vm843 = vcmask 1044480
      %v844 = vrot.slane %v245, 3
      %v845 = vrot.slane %v246, 3
      %v846 = vsel %vm843, %v844, %v845
      %v847 = vrot.slane %v247, 3
      %v848 = vsel %vm843, %v845, %v847
      %v849 = vrot.slane %v249, 3
      %v850 = vrot.slane %v250, 3
      %v851 = vsel %vm843, %v849, %v850
      %v852 = vrot.slane %v251, 3
      %v853 = vsel %vm843, %v850, %v852
      %v854 = vrot.slane %v253, 3
      %v855 = vrot.slane %v254, 3
      %v856 = vsel %vm843, %v854, %v855
      %v857 = vrot.slane %v255, 3
      %v858 = vsel %vm843, %v855, %v857
      %v859 = vrot.slane %v257, 3
      %v860 = vrot.slane %v258, 3
      %v861 = vsel %vm843, %v859, %v860
      %v862 = vrot.slane %v259, 3
      %v863 = vsel %vm843, %v860, %v862
      %v864 = vrot.slane %v261, 3
      %v865 = vrot.slane %v262, 3
      %v866 = vsel %vm843, %v864, %v865
      %v867 = vrot.slane %v263, 3
      %v868 = vsel %vm843, %v865, %v867
      %v869 = vrot.slane %v265, 3
      %v870 = vrot.slane %v266, 3
      %v871 = vsel %vm843, %v869, %v870
      %v872 = vrot.slane %v267, 3
      %v873 = vsel %vm843, %v870, %v872
      %v874 = vrot.slane %v269, 3
      %v875 = vrot.slane %v270, 3
      %v876 = vsel %vm843, %v874, %v875
      %v877 = vrot.slane %v271, 3
      %v878 = vsel %vm843, %v875, %v877
      %v879 = vrot.slane %v273, 3
      %v880 = vrot.slane %v274, 3
      %v881 = vsel %vm843, %v879, %v880
      %v882 = vrot.slane %v275, 3
      %v883 = vsel %vm843, %v880, %v882
      %v884 = vrot.slane %v277, 3
      %v885 = vrot.slane %v278, 3
      %v886 = vsel %vm843, %v884, %v885
      %v887 = vrot.slane %v279, 3
      %v888 = vsel %vm843, %v885, %v887
      %v889 = vrot.slane %v281, 3
      %v890 = vrot.slane %v282, 3
      %v891 = vsel %vm843, %v889, %v890
      %v892 = vrot.slane %v283, 3
      %v893 = vsel %vm843, %v890, %v892
      %v894 = vrot.slane %v285, 3
      %v895 = vrot.slane %v286, 3
      %v896 = vsel %vm843, %v894, %v895
      %v897 = vrot.slane %v287, 3
      %v898 = vsel %vm843, %v895, %v897
      %v899 = vrot.slane %v289, 3
      %v900 = vrot.slane %v290, 3
      %v901 = vsel %vm843, %v899, %v900
      %v902 = vrot.slane %v291, 3
      %v903 = vsel %vm843, %v900, %v902
      %v904 = vrot.slane %v293, 3
      %v905 = vrot.slane %v294, 3
      %v906 = vsel %vm843, %v904, %v905
      %v907 = vrot.slane %v295, 3
      %v908 = vsel %vm843, %v905, %v907
      %v909 = vrot.slane %v297, 3
      %v910 = vrot.slane %v298, 3
      %v911 = vsel %vm843, %v909, %v910
      %v912 = vrot.slane %v299, 3
      %v913 = vsel %vm843, %v910, %v912
      %v914 = vrot.slane %v301, 3
      %v915 = vrot.slane %v302, 3
      %v916 = vsel %vm843, %v914, %v915
      %v917 = vrot.slane %v303, 3
      %v918 = vsel %vm843, %v915, %v917
      %v919 = vrot.slane %v305, 3
      %v920 = vrot.slane %v306, 3
      %v921 = vsel %vm843, %v919, %v920
      %v922 = vrot.slane %v307, 3
      %v923 = vsel %vm843, %v920, %v922
      %v924 = vrot.slane %v309, 3
      %v925 = vrot.slane %v310, 3
      %v926 = vsel %vm843, %v924, %v925
      %v927 = vrot.slane %v311, 3
      %v928 = vsel %vm843, %v925, %v927
      %v929 = vrot.slane %v313, 3
      %v930 = vrot.slane %v314, 3
      %v931 = vsel %vm843, %v929, %v930
      %v932 = vrot.slane %v315, 3
      %v933 = vsel %vm843, %v930, %v932
      %v934 = vrot.slane %v317, 3
      %v935 = vrot.slane %v318, 3
      %v936 = vsel %vm843, %v934, %v935
      %v937 = vrot.slane %v319, 3
      %v938 = vsel %vm843, %v935, %v937
      %v939 = vrot.slane %v321, 3
      %v940 = vrot.slane %v322, 3
      %v941 = vsel %vm843, %v939, %v940
      %v942 = vrot.slane %v323, 3
      %v943 = vsel %vm843, %v940, %v942
      %v1004 = vmax.f32 %v783, %v846
      %v1005 = vmax.f32 %v784, %v848
      %v1006 = vmax.f32 %v785, %v847
      %v1007 = vmax.f32 %v786, %v851
      %v1008 = vmax.f32 %v787, %v853
      %v1009 = vmax.f32 %v788, %v852
      %v1010 = vmax.f32 %v789, %v856
      %v1011 = vmax.f32 %v790, %v858
      %v1012 = vmax.f32 %v791, %v857
      %v1013 = vmax.f32 %v792, %v861
      %v1014 = vmax.f32 %v793, %v863
      %v1015 = vmax.f32 %v794, %v862
      %v1016 = vmax.f32 %v795, %v866
      %v1017 = vmax.f32 %v796, %v868
      %v1018 = vmax.f32 %v797, %v867
      %v1019 = vmax.f32 %v798, %v871
      %v1020 = vmax.f32 %v799, %v873
      %v1021 = vmax.f32 %v800, %v872
      %v1022 = vmax.f32 %v801, %v876
      %v1023 = vmax.f32 %v802, %v878
      %v1024 = vmax.f32 %v803, %v877
      %v1025 = vmax.f32 %v804, %v881
      %v1026 = vmax.f32 %v805, %v883
      %v1027 = vmax.f32 %v806, %v882
      %v1028 = vmax.f32 %v807, %v886
      %v1029 = vmax.f32 %v808, %v888
      %v1030 = vmax.f32 %v809, %v887
      %v1031 = vmax.f32 %v810, %v891
      %v1032 = vmax.f32 %v811, %v893
      %v1033 = vmax.f32 %v812, %v892
      %v1034 = vmax.f32 %v813, %v896
      %v1035 = vmax.f32 %v814, %v898
      %v1036 = vmax.f32 %v815, %v897
      %v1037 = vmax.f32 %v816, %v901
      %v1038 = vmax.f32 %v817, %v903
      %v1039 = vmax.f32 %v818, %v902
      %v1040 = vmax.f32 %v819, %v906
      %v1041 = vmax.f32 %v820, %v908
      %v1042 = vmax.f32 %v821, %v907
      %v1043 = vmax.f32 %v822, %v911
      %v1044 = vmax.f32 %v823, %v913
      %v1045 = vmax.f32 %v824, %v912
      %v1046 = vmax.f32 %v825, %v916
      %v1047 = vmax.f32 %v826, %v918
      %v1048 = vmax.f32 %v827, %v917
      %v1049 = vmax.f32 %v828, %v921
      %v1050 = vmax.f32 %v829, %v923
      %v1051 = vmax.f32 %v830, %v922
      %v1052 = vmax.f32 %v831, %v926
      %v1053 = vmax.f32 %v832, %v928
      %v1054 = vmax.f32 %v833, %v927
      %v1055 = vmax.f32 %v834, %v931
      %v1056 = vmax.f32 %v835, %v933
      %v1057 = vmax.f32 %v836, %v932
      %v1058 = vmax.f32 %v837, %v936
      %v1059 = vmax.f32 %v838, %v938
      %v1060 = vmax.f32 %v839, %v937
      %v1061 = vmax.f32 %v840, %v941
      %v1062 = vmax.f32 %v841, %v943
      %v1063 = vmax.f32 %v842, %v942
      %vm1064 = vcmask 1043456
      %v1065 = vrot.slane %v246, 4
      %v1066 = vrot.slane %v247, 4
      %v1067 = vsel %vm1064, %v1065, %v1066
      %v1068 = vrot.slane %v250, 4
      %v1069 = vrot.slane %v251, 4
      %v1070 = vsel %vm1064, %v1068, %v1069
      %v1071 = vrot.slane %v254, 4
      %v1072 = vrot.slane %v255, 4
      %v1073 = vsel %vm1064, %v1071, %v1072
      %v1074 = vrot.slane %v258, 4
      %v1075 = vrot.slane %v259, 4
      %v1076 = vsel %vm1064, %v1074, %v1075
      %v1077 = vrot.slane %v262, 4
      %v1078 = vrot.slane %v263, 4
      %v1079 = vsel %vm1064, %v1077, %v1078
      %v1080 = vrot.slane %v266, 4
      %v1081 = vrot.slane %v267, 4
      %v1082 = vsel %vm1064, %v1080, %v1081
      %v1083 = vrot.slane %v270, 4
      %v1084 = vrot.slane %v271, 4
      %v1085 = vsel %vm1064, %v1083, %v1084
      %v1086 = vrot.slane %v274, 4
      %v1087 = vrot.slane %v275, 4
      %v1088 = vsel %vm1064, %v1086, %v1087
      %v1089 = vrot.slane %v278, 4
      %v1090 = vrot.slane %v279, 4
      %v1091 = vsel %vm1064, %v1089, %v1090
      %v1092 = vrot.slane %v282, 4
      %v1093 = vrot.slane %v283, 4
      %v1094 = vsel %vm1064, %v1092, %v1093
      %v1095 = vrot.slane %v286, 4
      %v1096 = vrot.slane %v287, 4
      %v1097 = vsel %vm1064, %v1095, %v1096
      %v1098 = vrot.slane %v290, 4
      %v1099 = vrot.slane %v291, 4
      %v1100 = vsel %vm1064, %v1098, %v1099
      %v1101 = vrot.slane %v294, 4
      %v1102 = vrot.slane %v295, 4
      %v1103 = vsel %vm1064, %v1101, %v1102
      %v1104 = vrot.slane %v298, 4
      %v1105 = vrot.slane %v299, 4
      %v1106 = vsel %vm1064, %v1104, %v1105
      %v1107 = vrot.slane %v302, 4
      %v1108 = vrot.slane %v303, 4
      %v1109 = vsel %vm1064, %v1107, %v1108
      %v1110 = vrot.slane %v306, 4
      %v1111 = vrot.slane %v307, 4
      %v1112 = vsel %vm1064, %v1110, %v1111
      %v1113 = vrot.slane %v310, 4
      %v1114 = vrot.slane %v311, 4
      %v1115 = vsel %vm1064, %v1113, %v1114
      %v1116 = vrot.slane %v314, 4
      %v1117 = vrot.slane %v315, 4
      %v1118 = vsel %vm1064, %v1116, %v1117
      %v1119 = vrot.slane %v318, 4
      %v1120 = vrot.slane %v319, 4
      %v1121 = vsel %vm1064, %v1119, %v1120
      %v1122 = vrot.slane %v322, 4
      %v1123 = vrot.slane %v323, 4
      %v1124 = vsel %vm1064, %v1122, %v1123
      %v1185 = vmax.f32 %v1004, %v1065
      %v1186 = vmax.f32 %v1005, %v1067
      %v1187 = vmax.f32 %v1006, %v1066
      %v1188 = vmax.f32 %v1007, %v1068
      %v1189 = vmax.f32 %v1008, %v1070
      %v1190 = vmax.f32 %v1009, %v1069
      %v1191 = vmax.f32 %v1010, %v1071
      %v1192 = vmax.f32 %v1011, %v1073
      %v1193 = vmax.f32 %v1012, %v1072
      %v1194 = vmax.f32 %v1013, %v1074
      %v1195 = vmax.f32 %v1014, %v1076
      %v1196 = vmax.f32 %v1015, %v1075
      %v1197 = vmax.f32 %v1016, %v1077
      %v1198 = vmax.f32 %v1017, %v1079
      %v1199 = vmax.f32 %v1018, %v1078
      %v1200 = vmax.f32 %v1019, %v1080
      %v1201 = vmax.f32 %v1020, %v1082
      %v1202 = vmax.f32 %v1021, %v1081
      %v1203 = vmax.f32 %v1022, %v1083
      %v1204 = vmax.f32 %v1023, %v1085
      %v1205 = vmax.f32 %v1024, %v1084
      %v1206 = vmax.f32 %v1025, %v1086
      %v1207 = vmax.f32 %v1026, %v1088
      %v1208 = vmax.f32 %v1027, %v1087
      %v1209 = vmax.f32 %v1028, %v1089
      %v1210 = vmax.f32 %v1029, %v1091
      %v1211 = vmax.f32 %v1030, %v1090
      %v1212 = vmax.f32 %v1031, %v1092
      %v1213 = vmax.f32 %v1032, %v1094
      %v1214 = vmax.f32 %v1033, %v1093
      %v1215 = vmax.f32 %v1034, %v1095
      %v1216 = vmax.f32 %v1035, %v1097
      %v1217 = vmax.f32 %v1036, %v1096
      %v1218 = vmax.f32 %v1037, %v1098
      %v1219 = vmax.f32 %v1038, %v1100
      %v1220 = vmax.f32 %v1039, %v1099
      %v1221 = vmax.f32 %v1040, %v1101
      %v1222 = vmax.f32 %v1041, %v1103
      %v1223 = vmax.f32 %v1042, %v1102
      %v1224 = vmax.f32 %v1043, %v1104
      %v1225 = vmax.f32 %v1044, %v1106
      %v1226 = vmax.f32 %v1045, %v1105
      %v1227 = vmax.f32 %v1046, %v1107
      %v1228 = vmax.f32 %v1047, %v1109
      %v1229 = vmax.f32 %v1048, %v1108
      %v1230 = vmax.f32 %v1049, %v1110
      %v1231 = vmax.f32 %v1050, %v1112
      %v1232 = vmax.f32 %v1051, %v1111
      %v1233 = vmax.f32 %v1052, %v1113
      %v1234 = vmax.f32 %v1053, %v1115
      %v1235 = vmax.f32 %v1054, %v1114
      %v1236 = vmax.f32 %v1055, %v1116
      %v1237 = vmax.f32 %v1056, %v1118
      %v1238 = vmax.f32 %v1057, %v1117
      %v1239 = vmax.f32 %v1058, %v1119
      %v1240 = vmax.f32 %v1059, %v1121
      %v1241 = vmax.f32 %v1060, %v1120
      %v1242 = vmax.f32 %v1061, %v1122
      %v1243 = vmax.f32 %v1062, %v1124
      %v1244 = vmax.f32 %v1063, %v1123
      %v1245 = vmax.f32 %v1185, %v1188
      %v1246 = vmax.f32 %v1186, %v1189
      %v1247 = vmax.f32 %v1187, %v1190
      %v1248 = vmax.f32 %v1188, %v1191
      %v1249 = vmax.f32 %v1189, %v1192
      %v1250 = vmax.f32 %v1190, %v1193
      %v1251 = vmax.f32 %v1191, %v1194
      %v1252 = vmax.f32 %v1192, %v1195
      %v1253 = vmax.f32 %v1193, %v1196
      %v1254 = vmax.f32 %v1194, %v1197
      %v1255 = vmax.f32 %v1195, %v1198
      %v1256 = vmax.f32 %v1196, %v1199
      %v1257 = vmax.f32 %v1197, %v1200
      %v1258 = vmax.f32 %v1198, %v1201
      %v1259 = vmax.f32 %v1199, %v1202
      %v1260 = vmax.f32 %v1200, %v1203
      %v1261 = vmax.f32 %v1201, %v1204
      %v1262 = vmax.f32 %v1202, %v1205
      %v1263 = vmax.f32 %v1203, %v1206
      %v1264 = vmax.f32 %v1204, %v1207
      %v1265 = vmax.f32 %v1205, %v1208
      %v1266 = vmax.f32 %v1206, %v1209
      %v1267 = vmax.f32 %v1207, %v1210
      %v1268 = vmax.f32 %v1208, %v1211
      %v1269 = vmax.f32 %v1209, %v1212
      %v1270 = vmax.f32 %v1210, %v1213
      %v1271 = vmax.f32 %v1211, %v1214
      %v1272 = vmax.f32 %v1212, %v1215
      %v1273 = vmax.f32 %v1213, %v1216
      %v1274 = vmax.f32 %v1214, %v1217
      %v1275 = vmax.f32 %v1215, %v1218
      %v1276 = vmax.f32 %v1216, %v1219
      %v1277 = vmax.f32 %v1217, %v1220
      %v1278 = vmax.f32 %v1218, %v1221
      %v1279 = vmax.f32 %v1219, %v1222
      %v1280 = vmax.f32 %v1220, %v1223
      %v1281 = vmax.f32 %v1221, %v1224
      %v1282 = vmax.f32 %v1222, %v1225
      %v1283 = vmax.f32 %v1223, %v1226
      %v1284 = vmax.f32 %v1224, %v1227
      %v1285 = vmax.f32 %v1225, %v1228
      %v1286 = vmax.f32 %v1226, %v1229
      %v1287 = vmax.f32 %v1227, %v1230
      %v1288 = vmax.f32 %v1228, %v1231
      %v1289 = vmax.f32 %v1229, %v1232
      %v1290 = vmax.f32 %v1230, %v1233
      %v1291 = vmax.f32 %v1231, %v1234
      %v1292 = vmax.f32 %v1232, %v1235
      %v1293 = vmax.f32 %v1245, %v1191
      %v1294 = vmax.f32 %v1246, %v1192
      %v1295 = vmax.f32 %v1247, %v1193
      %v1296 = vmax.f32 %v1248, %v1194
      %v1297 = vmax.f32 %v1249, %v1195
      %v1298 = vmax.f32 %v1250, %v1196
      %v1299 = vmax.f32 %v1251, %v1197
      %v1300 = vmax.f32 %v1252, %v1198
      %v1301 = vmax.f32 %v1253, %v1199
      %v1302 = vmax.f32 %v1254, %v1200
      %v1303 = vmax.f32 %v1255, %v1201
      %v1304 = vmax.f32 %v1256, %v1202
      %v1305 = vmax.f32 %v1257, %v1203
      %v1306 = vmax.f32 %v1258, %v1204
      %v1307 = vmax.f32 %v1259, %v1205
      %v1308 = vmax.f32 %v1260, %v1206
      %v1309 = vmax.f32 %v1261, %v1207
      %v1310 = vmax.f32 %v1262, %v1208
      %v1311 = vmax.f32 %v1263, %v1209
      %v1312 = vmax.f32 %v1264, %v1210
      %v1313 = vmax.f32 %v1265, %v1211
      %v1314 = vmax.f32 %v1266, %v1212
      %v1315 = vmax.f32 %v1267, %v1213
      %v1316 = vmax.f32 %v1268, %v1214
      %v1317 = vmax.f32 %v1269, %v1215
      %v1318 = vmax.f32 %v1270, %v1216
      %v1319 = vmax.f32 %v1271, %v1217
      %v1320 = vmax.f32 %v1272, %v1218
      %v1321 = vmax.f32 %v1273, %v1219
      %v1322 = vmax.f32 %v1274, %v1220
      %v1323 = vmax.f32 %v1275, %v1221
      %v1324 = vmax.f32 %v1276, %v1222
      %v1325 = vmax.f32 %v1277, %v1223
      %v1326 = vmax.f32 %v1278, %v1224
      %v1327 = vmax.f32 %v1279, %v1225
      %v1328 = vmax.f32 %v1280, %v1226
      %v1329 = vmax.f32 %v1281, %v1227
      %v1330 = vmax.f32 %v1282, %v1228
      %v1331 = vmax.f32 %v1283, %v1229
      %v1332 = vmax.f32 %v1284, %v1230
      %v1333 = vmax.f32 %v1285, %v1231
      %v1334 = vmax.f32 %v1286, %v1232
      %v1335 = vmax.f32 %v1287, %v1233
      %v1336 = vmax.f32 %v1288, %v1234
      %v1337 = vmax.f32 %v1289, %v1235
      %v1338 = vmax.f32 %v1290, %v1236
      %v1339 = vmax.f32 %v1291, %v1237
      %v1340 = vmax.f32 %v1292, %v1238
      %v1341 = vmax.f32 %v1293, %v1194
      %v1342 = vmax.f32 %v1294, %v1195
      %v1343 = vmax.f32 %v1295, %v1196
      %v1344 = vmax.f32 %v1296, %v1197
      %v1345 = vmax.f32 %v1297, %v1198
      %v1346 = vmax.f32 %v1298, %v1199
      %v1347 = vmax.f32 %v1299, %v1200
      %v1348 = vmax.f32 %v1300, %v1201
      %v1349 = vmax.f32 %v1301, %v1202
      %v1350 = vmax.f32 %v1302, %v1203
      %v1351 = vmax.f32 %v1303, %v1204
      %v1352 = vmax.f32 %v1304, %v1205
      %v1353 = vmax.f32 %v1305, %v1206
      %v1354 = vmax.f32 %v1306, %v1207
      %v1355 = vmax.f32 %v1307, %v1208
      %v1356 = vmax.f32 %v1308, %v1209
      %v1357 = vmax.f32 %v1309, %v1210
      %v1358 = vmax.f32 %v1310, %v1211
      %v1359 = vmax.f32 %v1311, %v1212
      %v1360 = vmax.f32 %v1312, %v1213
      %v1361 = vmax.f32 %v1313, %v1214
      %v1362 = vmax.f32 %v1314, %v1215
      %v1363 = vmax.f32 %v1315, %v1216
      %v1364 = vmax.f32 %v1316, %v1217
      %v1365 = vmax.f32 %v1317, %v1218
      %v1366 = vmax.f32 %v1318, %v1219
      %v1367 = vmax.f32 %v1319, %v1220
      %v1368 = vmax.f32 %v1320, %v1221
      %v1369 = vmax.f32 %v1321, %v1222
      %v1370 = vmax.f32 %v1322, %v1223
      %v1371 = vmax.f32 %v1323, %v1224
      %v1372 = vmax.f32 %v1324, %v1225
      %v1373 = vmax.f32 %v1325, %v1226
      %v1374 = vmax.f32 %v1326, %v1227
      %v1375 = vmax.f32 %v1327, %v1228
      %v1376 = vmax.f32 %v1328, %v1229
      %v1377 = vmax.f32 %v1329, %v1230
      %v1378 = vmax.f32 %v1330, %v1231
      %v1379 = vmax.f32 %v1331, %v1232
      %v1380 = vmax.f32 %v1332, %v1233
      %v1381 = vmax.f32 %v1333, %v1234
      %v1382 = vmax.f32 %v1334, %v1235
      %v1383 = vmax.f32 %v1335, %v1236
      %v1384 = vmax.f32 %v1336, %v1237
      %v1385 = vmax.f32 %v1337, %v1238
      %v1386 = vmax.f32 %v1338, %v1239
      %v1387 = vmax.f32 %v1339, %v1240
      %v1388 = vmax.f32 %v1340, %v1241
      %v1389 = vmax.f32 %v1341, %v1197
      %v1390 = vmax.f32 %v1342, %v1198
      %v1391 = vmax.f32 %v1343, %v1199
      %v1392 = vmax.f32 %v1344, %v1200
      %v1393 = vmax.f32 %v1345, %v1201
      %v1394 = vmax.f32 %v1346, %v1202
      %v1395 = vmax.f32 %v1347, %v1203
      %v1396 = vmax.f32 %v1348, %v1204
      %v1397 = vmax.f32 %v1349, %v1205
      %v1398 = vmax.f32 %v1350, %v1206
      %v1399 = vmax.f32 %v1351, %v1207
      %v1400 = vmax.f32 %v1352, %v1208
      %v1401 = vmax.f32 %v1353, %v1209
      %v1402 = vmax.f32 %v1354, %v1210
      %v1403 = vmax.f32 %v1355, %v1211
      %v1404 = vmax.f32 %v1356, %v1212
      %v1405 = vmax.f32 %v1357, %v1213
      %v1406 = vmax.f32 %v1358, %v1214
      %v1407 = vmax.f32 %v1359, %v1215
      %v1408 = vmax.f32 %v1360, %v1216
      %v1409 = vmax.f32 %v1361, %v1217
      %v1410 = vmax.f32 %v1362, %v1218
      %v1411 = vmax.f32 %v1363, %v1219
      %v1412 = vmax.f32 %v1364, %v1220
      %v1413 = vmax.f32 %v1365, %v1221
      %v1414 = vmax.f32 %v1366, %v1222
      %v1415 = vmax.f32 %v1367, %v1223
      %v1416 = vmax.f32 %v1368, %v1224
      %v1417 = vmax.f32 %v1369, %v1225
      %v1418 = vmax.f32 %v1370, %v1226
      %v1419 = vmax.f32 %v1371, %v1227
      %v1420 = vmax.f32 %v1372, %v1228
      %v1421 = vmax.f32 %v1373, %v1229
      %v1422 = vmax.f32 %v1374, %v1230
      %v1423 = vmax.f32 %v1375, %v1231
      %v1424 = vmax.f32 %v1376, %v1232
      %v1425 = vmax.f32 %v1377, %v1233
      %v1426 = vmax.f32 %v1378, %v1234
      %v1427 = vmax.f32 %v1379, %v1235
      %v1428 = vmax.f32 %v1380, %v1236
      %v1429 = vmax.f32 %v1381, %v1237
      %v1430 = vmax.f32 %v1382, %v1238
      %v1431 = vmax.f32 %v1383, %v1239
      %v1432 = vmax.f32 %v1384, %v1240
      %v1433 = vmax.f32 %v1385, %v1241
      %v1434 = vmax.f32 %v1386, %v1242
      %v1435 = vmax.f32 %v1387, %v1243
      %v1436 = vmax.f32 %v1388, %v1244
      %v1449 = vrot.slane %v237, 1
      %v1450 = vrot.slane %v238, 1
      %v1451 = vsel %vm401, %v1449, %v1450
      %v1452 = vrot.slane %v239, 1
      %v1453 = vsel %vm401, %v1450, %v1452
      %v1454 = vrot.slane %v241, 1
      %v1455 = vrot.slane %v242, 1
      %v1456 = vsel %vm401, %v1454, %v1455
      %v1457 = vrot.slane %v243, 1
      %v1458 = vsel %vm401, %v1455, %v1457
      %v1459 = vrot.slane %v325, 1
      %v1460 = vrot.slane %v326, 1
      %v1461 = vsel %vm401, %v1459, %v1460
      %v1462 = vrot.slane %v327, 1
      %v1463 = vsel %vm401, %v1460, %v1462
      %v1464 = vrot.slane %v329, 1
      %v1465 = vrot.slane %v330, 1
      %v1466 = vsel %vm401, %v1464, %v1465
      %v1467 = vrot.slane %v331, 1
      %v1468 = vsel %vm401, %v1465, %v1467
      %v1481 = vmax.f32 %v237, %v1451
      %v1482 = vmax.f32 %v238, %v1453
      %v1483 = vmax.f32 %v239, %v1452
      %v1484 = vmax.f32 %v241, %v1456
      %v1485 = vmax.f32 %v242, %v1458
      %v1486 = vmax.f32 %v243, %v1457
      %v1487 = vmax.f32 %v325, %v1461
      %v1488 = vmax.f32 %v326, %v1463
      %v1489 = vmax.f32 %v327, %v1462
      %v1490 = vmax.f32 %v329, %v1466
      %v1491 = vmax.f32 %v330, %v1468
      %v1492 = vmax.f32 %v331, %v1467
      %v1493 = vrot.slane %v237, 2
      %v1494 = vrot.slane %v238, 2
      %v1495 = vsel %vm622, %v1493, %v1494
      %v1496 = vrot.slane %v239, 2
      %v1497 = vsel %vm622, %v1494, %v1496
      %v1498 = vrot.slane %v241, 2
      %v1499 = vrot.slane %v242, 2
      %v1500 = vsel %vm622, %v1498, %v1499
      %v1501 = vrot.slane %v243, 2
      %v1502 = vsel %vm622, %v1499, %v1501
      %v1503 = vrot.slane %v325, 2
      %v1504 = vrot.slane %v326, 2
      %v1505 = vsel %vm622, %v1503, %v1504
      %v1506 = vrot.slane %v327, 2
      %v1507 = vsel %vm622, %v1504, %v1506
      %v1508 = vrot.slane %v329, 2
      %v1509 = vrot.slane %v330, 2
      %v1510 = vsel %vm622, %v1508, %v1509
      %v1511 = vrot.slane %v331, 2
      %v1512 = vsel %vm622, %v1509, %v1511
      %v1525 = vmax.f32 %v1481, %v1495
      %v1526 = vmax.f32 %v1482, %v1497
      %v1527 = vmax.f32 %v1483, %v1496
      %v1528 = vmax.f32 %v1484, %v1500
      %v1529 = vmax.f32 %v1485, %v1502
      %v1530 = vmax.f32 %v1486, %v1501
      %v1531 = vmax.f32 %v1487, %v1505
      %v1532 = vmax.f32 %v1488, %v1507
      %v1533 = vmax.f32 %v1489, %v1506
      %v1534 = vmax.f32 %v1490, %v1510
      %v1535 = vmax.f32 %v1491, %v1512
      %v1536 = vmax.f32 %v1492, %v1511
      %v1537 = vrot.slane %v237, 3
      %v1538 = vrot.slane %v238, 3
      %v1539 = vsel %vm843, %v1537, %v1538
      %v1540 = vrot.slane %v239, 3
      %v1541 = vsel %vm843, %v1538, %v1540
      %v1542 = vrot.slane %v241, 3
      %v1543 = vrot.slane %v242, 3
      %v1544 = vsel %vm843, %v1542, %v1543
      %v1545 = vrot.slane %v243, 3
      %v1546 = vsel %vm843, %v1543, %v1545
      %v1547 = vrot.slane %v325, 3
      %v1548 = vrot.slane %v326, 3
      %v1549 = vsel %vm843, %v1547, %v1548
      %v1550 = vrot.slane %v327, 3
      %v1551 = vsel %vm843, %v1548, %v1550
      %v1552 = vrot.slane %v329, 3
      %v1553 = vrot.slane %v330, 3
      %v1554 = vsel %vm843, %v1552, %v1553
      %v1555 = vrot.slane %v331, 3
      %v1556 = vsel %vm843, %v1553, %v1555
      %v1569 = vmax.f32 %v1525, %v1539
      %v1570 = vmax.f32 %v1526, %v1541
      %v1571 = vmax.f32 %v1527, %v1540
      %v1572 = vmax.f32 %v1528, %v1544
      %v1573 = vmax.f32 %v1529, %v1546
      %v1574 = vmax.f32 %v1530, %v1545
      %v1575 = vmax.f32 %v1531, %v1549
      %v1576 = vmax.f32 %v1532, %v1551
      %v1577 = vmax.f32 %v1533, %v1550
      %v1578 = vmax.f32 %v1534, %v1554
      %v1579 = vmax.f32 %v1535, %v1556
      %v1580 = vmax.f32 %v1536, %v1555
      %v1581 = vrot.slane %v237, 4
      %v1582 = vrot.slane %v238, 4
      %v1583 = vsel %vm1064, %v1581, %v1582
      %v1584 = vrot.slane %v239, 4
      %v1585 = vsel %vm1064, %v1582, %v1584
      %v1586 = vrot.slane %v241, 4
      %v1587 = vrot.slane %v242, 4
      %v1588 = vsel %vm1064, %v1586, %v1587
      %v1589 = vrot.slane %v243, 4
      %v1590 = vsel %vm1064, %v1587, %v1589
      %v1591 = vrot.slane %v245, 4
      %v1592 = vsel %vm1064, %v1591, %v1065
      %v1593 = vrot.slane %v249, 4
      %v1594 = vsel %vm1064, %v1593, %v1068
      %v1595 = vrot.slane %v253, 4
      %v1596 = vsel %vm1064, %v1595, %v1071
      %v1597 = vrot.slane %v257, 4
      %v1598 = vsel %vm1064, %v1597, %v1074
      %v1599 = vrot.slane %v261, 4
      %v1600 = vsel %vm1064, %v1599, %v1077
      %v1601 = vrot.slane %v265, 4
      %v1602 = vsel %vm1064, %v1601, %v1080
      %v1603 = vrot.slane %v269, 4
      %v1604 = vsel %vm1064, %v1603, %v1083
      %v1605 = vrot.slane %v273, 4
      %v1606 = vsel %vm1064, %v1605, %v1086
      %v1607 = vrot.slane %v277, 4
      %v1608 = vsel %vm1064, %v1607, %v1089
      %v1609 = vrot.slane %v281, 4
      %v1610 = vsel %vm1064, %v1609, %v1092
      %v1611 = vrot.slane %v285, 4
      %v1612 = vsel %vm1064, %v1611, %v1095
      %v1613 = vrot.slane %v289, 4
      %v1614 = vsel %vm1064, %v1613, %v1098
      %v1615 = vrot.slane %v293, 4
      %v1616 = vsel %vm1064, %v1615, %v1101
      %v1617 = vrot.slane %v297, 4
      %v1618 = vsel %vm1064, %v1617, %v1104
      %v1619 = vrot.slane %v301, 4
      %v1620 = vsel %vm1064, %v1619, %v1107
      %v1621 = vrot.slane %v305, 4
      %v1622 = vsel %vm1064, %v1621, %v1110
      %v1623 = vrot.slane %v309, 4
      %v1624 = vsel %vm1064, %v1623, %v1113
      %v1625 = vrot.slane %v313, 4
      %v1626 = vsel %vm1064, %v1625, %v1116
      %v1627 = vrot.slane %v317, 4
      %v1628 = vsel %vm1064, %v1627, %v1119
      %v1629 = vrot.slane %v321, 4
      %v1630 = vsel %vm1064, %v1629, %v1122
      %v1631 = vrot.slane %v325, 4
      %v1632 = vrot.slane %v326, 4
      %v1633 = vsel %vm1064, %v1631, %v1632
      %v1634 = vrot.slane %v327, 4
      %v1635 = vsel %vm1064, %v1632, %v1634
      %v1636 = vrot.slane %v329, 4
      %v1637 = vrot.slane %v330, 4
      %v1638 = vsel %vm1064, %v1636, %v1637
      %v1639 = vrot.slane %v331, 4
      %v1640 = vsel %vm1064, %v1637, %v1639
      %v1673 = vmax.f32 %v1569, %v1583
      %v1674 = vmax.f32 %v1570, %v1585
      %v1675 = vmax.f32 %v1571, %v1584
      %v1676 = vmax.f32 %v1572, %v1588
      %v1677 = vmax.f32 %v1573, %v1590
      %v1678 = vmax.f32 %v1574, %v1589
      %v1679 = vmax.f32 %v1004, %v1592
      %v1680 = vmax.f32 %v1007, %v1594
      %v1681 = vmax.f32 %v1010, %v1596
      %v1682 = vmax.f32 %v1013, %v1598
      %v1683 = vmax.f32 %v1016, %v1600
      %v1684 = vmax.f32 %v1019, %v1602
      %v1685 = vmax.f32 %v1022, %v1604
      %v1686 = vmax.f32 %v1025, %v1606
      %v1687 = vmax.f32 %v1028, %v1608
      %v1688 = vmax.f32 %v1031, %v1610
      %v1689 = vmax.f32 %v1034, %v1612
      %v1690 = vmax.f32 %v1037, %v1614
      %v1691 = vmax.f32 %v1040, %v1616
      %v1692 = vmax.f32 %v1043, %v1618
      %v1693 = vmax.f32 %v1046, %v1620
      %v1694 = vmax.f32 %v1049, %v1622
      %v1695 = vmax.f32 %v1052, %v1624
      %v1696 = vmax.f32 %v1055, %v1626
      %v1697 = vmax.f32 %v1058, %v1628
      %v1698 = vmax.f32 %v1061, %v1630
      %v1699 = vmax.f32 %v1575, %v1633
      %v1700 = vmax.f32 %v1576, %v1635
      %v1701 = vmax.f32 %v1577, %v1634
      %v1702 = vmax.f32 %v1578, %v1638
      %v1703 = vmax.f32 %v1579, %v1640
      %v1704 = vmax.f32 %v1580, %v1639
      %vm1705 = vcmask 1042432
      %v1706 = vrot.slane %v237, 5
      %v1707 = vrot.slane %v238, 5
      %v1708 = vsel %vm1705, %v1706, %v1707
      %v1709 = vrot.slane %v239, 5
      %v1710 = vsel %vm1705, %v1707, %v1709
      %v1711 = vrot.slane %v241, 5
      %v1712 = vrot.slane %v242, 5
      %v1713 = vsel %vm1705, %v1711, %v1712
      %v1714 = vrot.slane %v243, 5
      %v1715 = vsel %vm1705, %v1712, %v1714
      %v1716 = vrot.slane %v245, 5
      %v1717 = vrot.slane %v246, 5
      %v1718 = vsel %vm1705, %v1716, %v1717
      %v1719 = vrot.slane %v247, 5
      %v1720 = vsel %vm1705, %v1717, %v1719
      %v1721 = vrot.slane %v249, 5
      %v1722 = vrot.slane %v250, 5
      %v1723 = vsel %vm1705, %v1721, %v1722
      %v1724 = vrot.slane %v251, 5
      %v1725 = vsel %vm1705, %v1722, %v1724
      %v1726 = vrot.slane %v253, 5
      %v1727 = vrot.slane %v254, 5
      %v1728 = vsel %vm1705, %v1726, %v1727
      %v1729 = vrot.slane %v255, 5
      %v1730 = vsel %vm1705, %v1727, %v1729
      %v1731 = vrot.slane %v257, 5
      %v1732 = vrot.slane %v258, 5
      %v1733 = vsel %vm1705, %v1731, %v1732
      %v1734 = vrot.slane %v259, 5
      %v1735 = vsel %vm1705, %v1732, %v1734
      %v1736 = vrot.slane %v261, 5
      %v1737 = vrot.slane %v262, 5
      %v1738 = vsel %vm1705, %v1736, %v1737
      %v1739 = vrot.slane %v263, 5
      %v1740 = vsel %vm1705, %v1737, %v1739
      %v1741 = vrot.slane %v265, 5
      %v1742 = vrot.slane %v266, 5
      %v1743 = vsel %vm1705, %v1741, %v1742
      %v1744 = vrot.slane %v267, 5
      %v1745 = vsel %vm1705, %v1742, %v1744
      %v1746 = vrot.slane %v269, 5
      %v1747 = vrot.slane %v270, 5
      %v1748 = vsel %vm1705, %v1746, %v1747
      %v1749 = vrot.slane %v271, 5
      %v1750 = vsel %vm1705, %v1747, %v1749
      %v1751 = vrot.slane %v273, 5
      %v1752 = vrot.slane %v274, 5
      %v1753 = vsel %vm1705, %v1751, %v1752
      %v1754 = vrot.slane %v275, 5
      %v1755 = vsel %vm1705, %v1752, %v1754
      %v1756 = vrot.slane %v277, 5
      %v1757 = vrot.slane %v278, 5
      %v1758 = vsel %vm1705, %v1756, %v1757
      %v1759 = vrot.slane %v279, 5
      %v1760 = vsel %vm1705, %v1757, %v1759
      %v1761 = vrot.slane %v281, 5
      %v1762 = vrot.slane %v282, 5
      %v1763 = vsel %vm1705, %v1761, %v1762
      %v1764 = vrot.slane %v283, 5
      %v1765 = vsel %vm1705, %v1762, %v1764
      %v1766 = vrot.slane %v285, 5
      %v1767 = vrot.slane %v286, 5
      %v1768 = vsel %vm1705, %v1766, %v1767
      %v1769 = vrot.slane %v287, 5
      %v1770 = vsel %vm1705, %v1767, %v1769
      %v1771 = vrot.slane %v289, 5
      %v1772 = vrot.slane %v290, 5
      %v1773 = vsel %vm1705, %v1771, %v1772
      %v1774 = vrot.slane %v291, 5
      %v1775 = vsel %vm1705, %v1772, %v1774
      %v1776 = vrot.slane %v293, 5
      %v1777 = vrot.slane %v294, 5
      %v1778 = vsel %vm1705, %v1776, %v1777
      %v1779 = vrot.slane %v295, 5
      %v1780 = vsel %vm1705, %v1777, %v1779
      %v1781 = vrot.slane %v297, 5
      %v1782 = vrot.slane %v298, 5
      %v1783 = vsel %vm1705, %v1781, %v1782
      %v1784 = vrot.slane %v299, 5
      %v1785 = vsel %vm1705, %v1782, %v1784
      %v1786 = vrot.slane %v301, 5
      %v1787 = vrot.slane %v302, 5
      %v1788 = vsel %vm1705, %v1786, %v1787
      %v1789 = vrot.slane %v303, 5
      %v1790 = vsel %vm1705, %v1787, %v1789
      %v1791 = vrot.slane %v305, 5
      %v1792 = vrot.slane %v306, 5
      %v1793 = vsel %vm1705, %v1791, %v1792
      %v1794 = vrot.slane %v307, 5
      %v1795 = vsel %vm1705, %v1792, %v1794
      %v1796 = vrot.slane %v309, 5
      %v1797 = vrot.slane %v310, 5
      %v1798 = vsel %vm1705, %v1796, %v1797
      %v1799 = vrot.slane %v311, 5
      %v1800 = vsel %vm1705, %v1797, %v1799
      %v1801 = vrot.slane %v313, 5
      %v1802 = vrot.slane %v314, 5
      %v1803 = vsel %vm1705, %v1801, %v1802
      %v1804 = vrot.slane %v315, 5
      %v1805 = vsel %vm1705, %v1802, %v1804
      %v1806 = vrot.slane %v317, 5
      %v1807 = vrot.slane %v318, 5
      %v1808 = vsel %vm1705, %v1806, %v1807
      %v1809 = vrot.slane %v319, 5
      %v1810 = vsel %vm1705, %v1807, %v1809
      %v1811 = vrot.slane %v321, 5
      %v1812 = vrot.slane %v322, 5
      %v1813 = vsel %vm1705, %v1811, %v1812
      %v1814 = vrot.slane %v323, 5
      %v1815 = vsel %vm1705, %v1812, %v1814
      %v1816 = vrot.slane %v325, 5
      %v1817 = vrot.slane %v326, 5
      %v1818 = vsel %vm1705, %v1816, %v1817
      %v1819 = vrot.slane %v327, 5
      %v1820 = vsel %vm1705, %v1817, %v1819
      %v1821 = vrot.slane %v329, 5
      %v1822 = vrot.slane %v330, 5
      %v1823 = vsel %vm1705, %v1821, %v1822
      %v1824 = vrot.slane %v331, 5
      %v1825 = vsel %vm1705, %v1822, %v1824
      %v1898 = vmax.f32 %v1673, %v1708
      %v1899 = vmax.f32 %v1674, %v1710
      %v1900 = vmax.f32 %v1675, %v1709
      %v1901 = vmax.f32 %v1676, %v1713
      %v1902 = vmax.f32 %v1677, %v1715
      %v1903 = vmax.f32 %v1678, %v1714
      %v1904 = vmax.f32 %v1679, %v1718
      %v1905 = vmax.f32 %v1186, %v1720
      %v1906 = vmax.f32 %v1187, %v1719
      %v1907 = vmax.f32 %v1680, %v1723
      %v1908 = vmax.f32 %v1189, %v1725
      %v1909 = vmax.f32 %v1190, %v1724
      %v1910 = vmax.f32 %v1681, %v1728
      %v1911 = vmax.f32 %v1192, %v1730
      %v1912 = vmax.f32 %v1193, %v1729
      %v1913 = vmax.f32 %v1682, %v1733
      %v1914 = vmax.f32 %v1195, %v1735
      %v1915 = vmax.f32 %v1196, %v1734
      %v1916 = vmax.f32 %v1683, %v1738
      %v1917 = vmax.f32 %v1198, %v1740
      %v1918 = vmax.f32 %v1199, %v1739
      %v1919 = vmax.f32 %v1684, %v1743
      %v1920 = vmax.f32 %v1201, %v1745
      %v1921 = vmax.f32 %v1202, %v1744
      %v1922 = vmax.f32 %v1685, %v1748
      %v1923 = vmax.f32 %v1204, %v1750
      %v1924 = vmax.f32 %v1205, %v1749
      %v1925 = vmax.f32 %v1686, %v1753
      %v1926 = vmax.f32 %v1207, %v1755
      %v1927 = vmax.f32 %v1208, %v1754
      %v1928 = vmax.f32 %v1687, %v1758
      %v1929 = vmax.f32 %v1210, %v1760
      %v1930 = vmax.f32 %v1211, %v1759
      %v1931 = vmax.f32 %v1688, %v1763
      %v1932 = vmax.f32 %v1213, %v1765
      %v1933 = vmax.f32 %v1214, %v1764
      %v1934 = vmax.f32 %v1689, %v1768
      %v1935 = vmax.f32 %v1216, %v1770
      %v1936 = vmax.f32 %v1217, %v1769
      %v1937 = vmax.f32 %v1690, %v1773
      %v1938 = vmax.f32 %v1219, %v1775
      %v1939 = vmax.f32 %v1220, %v1774
      %v1940 = vmax.f32 %v1691, %v1778
      %v1941 = vmax.f32 %v1222, %v1780
      %v1942 = vmax.f32 %v1223, %v1779
      %v1943 = vmax.f32 %v1692, %v1783
      %v1944 = vmax.f32 %v1225, %v1785
      %v1945 = vmax.f32 %v1226, %v1784
      %v1946 = vmax.f32 %v1693, %v1788
      %v1947 = vmax.f32 %v1228, %v1790
      %v1948 = vmax.f32 %v1229, %v1789
      %v1949 = vmax.f32 %v1694, %v1793
      %v1950 = vmax.f32 %v1231, %v1795
      %v1951 = vmax.f32 %v1232, %v1794
      %v1952 = vmax.f32 %v1695, %v1798
      %v1953 = vmax.f32 %v1234, %v1800
      %v1954 = vmax.f32 %v1235, %v1799
      %v1955 = vmax.f32 %v1696, %v1803
      %v1956 = vmax.f32 %v1237, %v1805
      %v1957 = vmax.f32 %v1238, %v1804
      %v1958 = vmax.f32 %v1697, %v1808
      %v1959 = vmax.f32 %v1240, %v1810
      %v1960 = vmax.f32 %v1241, %v1809
      %v1961 = vmax.f32 %v1698, %v1813
      %v1962 = vmax.f32 %v1243, %v1815
      %v1963 = vmax.f32 %v1244, %v1814
      %v1964 = vmax.f32 %v1699, %v1818
      %v1965 = vmax.f32 %v1700, %v1820
      %v1966 = vmax.f32 %v1701, %v1819
      %v1967 = vmax.f32 %v1702, %v1823
      %v1968 = vmax.f32 %v1703, %v1825
      %v1969 = vmax.f32 %v1704, %v1824
      %vm1970 = vcmask 1041408
      %v1971 = vrot.slane %v238, 6
      %v1972 = vrot.slane %v239, 6
      %v1973 = vsel %vm1970, %v1971, %v1972
      %v1974 = vrot.slane %v242, 6
      %v1975 = vrot.slane %v243, 6
      %v1976 = vsel %vm1970, %v1974, %v1975
      %v1977 = vrot.slane %v246, 6
      %v1978 = vrot.slane %v247, 6
      %v1979 = vsel %vm1970, %v1977, %v1978
      %v1980 = vrot.slane %v250, 6
      %v1981 = vrot.slane %v251, 6
      %v1982 = vsel %vm1970, %v1980, %v1981
      %v1983 = vrot.slane %v254, 6
      %v1984 = vrot.slane %v255, 6
      %v1985 = vsel %vm1970, %v1983, %v1984
      %v1986 = vrot.slane %v258, 6
      %v1987 = vrot.slane %v259, 6
      %v1988 = vsel %vm1970, %v1986, %v1987
      %v1989 = vrot.slane %v262, 6
      %v1990 = vrot.slane %v263, 6
      %v1991 = vsel %vm1970, %v1989, %v1990
      %v1992 = vrot.slane %v266, 6
      %v1993 = vrot.slane %v267, 6
      %v1994 = vsel %vm1970, %v1992, %v1993
      %v1995 = vrot.slane %v270, 6
      %v1996 = vrot.slane %v271, 6
      %v1997 = vsel %vm1970, %v1995, %v1996
      %v1998 = vrot.slane %v274, 6
      %v1999 = vrot.slane %v275, 6
      %v2000 = vsel %vm1970, %v1998, %v1999
      %v2001 = vrot.slane %v278, 6
      %v2002 = vrot.slane %v279, 6
      %v2003 = vsel %vm1970, %v2001, %v2002
      %v2004 = vrot.slane %v282, 6
      %v2005 = vrot.slane %v283, 6
      %v2006 = vsel %vm1970, %v2004, %v2005
      %v2007 = vrot.slane %v286, 6
      %v2008 = vrot.slane %v287, 6
      %v2009 = vsel %vm1970, %v2007, %v2008
      %v2010 = vrot.slane %v290, 6
      %v2011 = vrot.slane %v291, 6
      %v2012 = vsel %vm1970, %v2010, %v2011
      %v2013 = vrot.slane %v294, 6
      %v2014 = vrot.slane %v295, 6
      %v2015 = vsel %vm1970, %v2013, %v2014
      %v2016 = vrot.slane %v298, 6
      %v2017 = vrot.slane %v299, 6
      %v2018 = vsel %vm1970, %v2016, %v2017
      %v2019 = vrot.slane %v302, 6
      %v2020 = vrot.slane %v303, 6
      %v2021 = vsel %vm1970, %v2019, %v2020
      %v2022 = vrot.slane %v306, 6
      %v2023 = vrot.slane %v307, 6
      %v2024 = vsel %vm1970, %v2022, %v2023
      %v2025 = vrot.slane %v310, 6
      %v2026 = vrot.slane %v311, 6
      %v2027 = vsel %vm1970, %v2025, %v2026
      %v2028 = vrot.slane %v314, 6
      %v2029 = vrot.slane %v315, 6
      %v2030 = vsel %vm1970, %v2028, %v2029
      %v2031 = vrot.slane %v318, 6
      %v2032 = vrot.slane %v319, 6
      %v2033 = vsel %vm1970, %v2031, %v2032
      %v2034 = vrot.slane %v322, 6
      %v2035 = vrot.slane %v323, 6
      %v2036 = vsel %vm1970, %v2034, %v2035
      %v2037 = vrot.slane %v326, 6
      %v2038 = vrot.slane %v327, 6
      %v2039 = vsel %vm1970, %v2037, %v2038
      %v2040 = vrot.slane %v330, 6
      %v2041 = vrot.slane %v331, 6
      %v2042 = vsel %vm1970, %v2040, %v2041
      %v2115 = vmax.f32 %v1898, %v1971
      %v2116 = vmax.f32 %v1899, %v1973
      %v2117 = vmax.f32 %v1900, %v1972
      %v2118 = vmax.f32 %v1901, %v1974
      %v2119 = vmax.f32 %v1902, %v1976
      %v2120 = vmax.f32 %v1903, %v1975
      %v2121 = vmax.f32 %v1904, %v1977
      %v2122 = vmax.f32 %v1905, %v1979
      %v2123 = vmax.f32 %v1906, %v1978
      %v2124 = vmax.f32 %v1907, %v1980
      %v2125 = vmax.f32 %v1908, %v1982
      %v2126 = vmax.f32 %v1909, %v1981
      %v2127 = vmax.f32 %v1910, %v1983
      %v2128 = vmax.f32 %v1911, %v1985
      %v2129 = vmax.f32 %v1912, %v1984
      %v2130 = vmax.f32 %v1913, %v1986
      %v2131 = vmax.f32 %v1914, %v1988
      %v2132 = vmax.f32 %v1915, %v1987
      %v2133 = vmax.f32 %v1916, %v1989
      %v2134 = vmax.f32 %v1917, %v1991
      %v2135 = vmax.f32 %v1918, %v1990
      %v2136 = vmax.f32 %v1919, %v1992
      %v2137 = vmax.f32 %v1920, %v1994
      %v2138 = vmax.f32 %v1921, %v1993
      %v2139 = vmax.f32 %v1922, %v1995
      %v2140 = vmax.f32 %v1923, %v1997
      %v2141 = vmax.f32 %v1924, %v1996
      %v2142 = vmax.f32 %v1925, %v1998
      %v2143 = vmax.f32 %v1926, %v2000
      %v2144 = vmax.f32 %v1927, %v1999
      %v2145 = vmax.f32 %v1928, %v2001
      %v2146 = vmax.f32 %v1929, %v2003
      %v2147 = vmax.f32 %v1930, %v2002
      %v2148 = vmax.f32 %v1931, %v2004
      %v2149 = vmax.f32 %v1932, %v2006
      %v2150 = vmax.f32 %v1933, %v2005
      %v2151 = vmax.f32 %v1934, %v2007
      %v2152 = vmax.f32 %v1935, %v2009
      %v2153 = vmax.f32 %v1936, %v2008
      %v2154 = vmax.f32 %v1937, %v2010
      %v2155 = vmax.f32 %v1938, %v2012
      %v2156 = vmax.f32 %v1939, %v2011
      %v2157 = vmax.f32 %v1940, %v2013
      %v2158 = vmax.f32 %v1941, %v2015
      %v2159 = vmax.f32 %v1942, %v2014
      %v2160 = vmax.f32 %v1943, %v2016
      %v2161 = vmax.f32 %v1944, %v2018
      %v2162 = vmax.f32 %v1945, %v2017
      %v2163 = vmax.f32 %v1946, %v2019
      %v2164 = vmax.f32 %v1947, %v2021
      %v2165 = vmax.f32 %v1948, %v2020
      %v2166 = vmax.f32 %v1949, %v2022
      %v2167 = vmax.f32 %v1950, %v2024
      %v2168 = vmax.f32 %v1951, %v2023
      %v2169 = vmax.f32 %v1952, %v2025
      %v2170 = vmax.f32 %v1953, %v2027
      %v2171 = vmax.f32 %v1954, %v2026
      %v2172 = vmax.f32 %v1955, %v2028
      %v2173 = vmax.f32 %v1956, %v2030
      %v2174 = vmax.f32 %v1957, %v2029
      %v2175 = vmax.f32 %v1958, %v2031
      %v2176 = vmax.f32 %v1959, %v2033
      %v2177 = vmax.f32 %v1960, %v2032
      %v2178 = vmax.f32 %v1961, %v2034
      %v2179 = vmax.f32 %v1962, %v2036
      %v2180 = vmax.f32 %v1963, %v2035
      %v2181 = vmax.f32 %v1964, %v2037
      %v2182 = vmax.f32 %v1965, %v2039
      %v2183 = vmax.f32 %v1966, %v2038
      %v2184 = vmax.f32 %v1967, %v2040
      %v2185 = vmax.f32 %v1968, %v2042
      %v2186 = vmax.f32 %v1969, %v2041
      %vm2211 = vcmask 1040384
      %v2212 = vrot.slane %v238, 7
      %v2213 = vrot.slane %v239, 7
      %v2214 = vsel %vm2211, %v2212, %v2213
      %v2215 = vrot.slane %v240, 7
      %v2216 = vsel %vm2211, %v2213, %v2215
      %v2217 = vrot.slane %v242, 7
      %v2218 = vrot.slane %v243, 7
      %v2219 = vsel %vm2211, %v2217, %v2218
      %v2220 = vrot.slane %v244, 7
      %v2221 = vsel %vm2211, %v2218, %v2220
      %v2222 = vrot.slane %v246, 7
      %v2223 = vrot.slane %v247, 7
      %v2224 = vsel %vm2211, %v2222, %v2223
      %v2225 = vrot.slane %v248, 7
      %v2226 = vsel %vm2211, %v2223, %v2225
      %v2227 = vrot.slane %v250, 7
      %v2228 = vrot.slane %v251, 7
      %v2229 = vsel %vm2211, %v2227, %v2228
      %v2230 = vrot.slane %v252, 7
      %v2231 = vsel %vm2211, %v2228, %v2230
      %v2232 = vrot.slane %v254, 7
      %v2233 = vrot.slane %v255, 7
      %v2234 = vsel %vm2211, %v2232, %v2233
      %v2235 = vrot.slane %v256, 7
      %v2236 = vsel %vm2211, %v2233, %v2235
      %v2237 = vrot.slane %v258, 7
      %v2238 = vrot.slane %v259, 7
      %v2239 = vsel %vm2211, %v2237, %v2238
      %v2240 = vrot.slane %v260, 7
      %v2241 = vsel %vm2211, %v2238, %v2240
      %v2242 = vrot.slane %v262, 7
      %v2243 = vrot.slane %v263, 7
      %v2244 = vsel %vm2211, %v2242, %v2243
      %v2245 = vrot.slane %v264, 7
      %v2246 = vsel %vm2211, %v2243, %v2245
      %v2247 = vrot.slane %v266, 7
      %v2248 = vrot.slane %v267, 7
      %v2249 = vsel %vm2211, %v2247, %v2248
      %v2250 = vrot.slane %v268, 7
      %v2251 = vsel %vm2211, %v2248, %v2250
      %v2252 = vrot.slane %v270, 7
      %v2253 = vrot.slane %v271, 7
      %v2254 = vsel %vm2211, %v2252, %v2253
      %v2255 = vrot.slane %v272, 7
      %v2256 = vsel %vm2211, %v2253, %v2255
      %v2257 = vrot.slane %v274, 7
      %v2258 = vrot.slane %v275, 7
      %v2259 = vsel %vm2211, %v2257, %v2258
      %v2260 = vrot.slane %v276, 7
      %v2261 = vsel %vm2211, %v2258, %v2260
      %v2262 = vrot.slane %v278, 7
      %v2263 = vrot.slane %v279, 7
      %v2264 = vsel %vm2211, %v2262, %v2263
      %v2265 = vrot.slane %v280, 7
      %v2266 = vsel %vm2211, %v2263, %v2265
      %v2267 = vrot.slane %v282, 7
      %v2268 = vrot.slane %v283, 7
      %v2269 = vsel %vm2211, %v2267, %v2268
      %v2270 = vrot.slane %v284, 7
      %v2271 = vsel %vm2211, %v2268, %v2270
      %v2272 = vrot.slane %v286, 7
      %v2273 = vrot.slane %v287, 7
      %v2274 = vsel %vm2211, %v2272, %v2273
      %v2275 = vrot.slane %v288, 7
      %v2276 = vsel %vm2211, %v2273, %v2275
      %v2277 = vrot.slane %v290, 7
      %v2278 = vrot.slane %v291, 7
      %v2279 = vsel %vm2211, %v2277, %v2278
      %v2280 = vrot.slane %v292, 7
      %v2281 = vsel %vm2211, %v2278, %v2280
      %v2282 = vrot.slane %v294, 7
      %v2283 = vrot.slane %v295, 7
      %v2284 = vsel %vm2211, %v2282, %v2283
      %v2285 = vrot.slane %v296, 7
      %v2286 = vsel %vm2211, %v2283, %v2285
      %v2287 = vrot.slane %v298, 7
      %v2288 = vrot.slane %v299, 7
      %v2289 = vsel %vm2211, %v2287, %v2288
      %v2290 = vrot.slane %v300, 7
      %v2291 = vsel %vm2211, %v2288, %v2290
      %v2292 = vrot.slane %v302, 7
      %v2293 = vrot.slane %v303, 7
      %v2294 = vsel %vm2211, %v2292, %v2293
      %v2295 = vrot.slane %v304, 7
      %v2296 = vsel %vm2211, %v2293, %v2295
      %v2297 = vrot.slane %v306, 7
      %v2298 = vrot.slane %v307, 7
      %v2299 = vsel %vm2211, %v2297, %v2298
      %v2300 = vrot.slane %v308, 7
      %v2301 = vsel %vm2211, %v2298, %v2300
      %v2302 = vrot.slane %v310, 7
      %v2303 = vrot.slane %v311, 7
      %v2304 = vsel %vm2211, %v2302, %v2303
      %v2305 = vrot.slane %v312, 7
      %v2306 = vsel %vm2211, %v2303, %v2305
      %v2307 = vrot.slane %v314, 7
      %v2308 = vrot.slane %v315, 7
      %v2309 = vsel %vm2211, %v2307, %v2308
      %v2310 = vrot.slane %v316, 7
      %v2311 = vsel %vm2211, %v2308, %v2310
      %v2312 = vrot.slane %v318, 7
      %v2313 = vrot.slane %v319, 7
      %v2314 = vsel %vm2211, %v2312, %v2313
      %v2315 = vrot.slane %v320, 7
      %v2316 = vsel %vm2211, %v2313, %v2315
      %v2317 = vrot.slane %v322, 7
      %v2318 = vrot.slane %v323, 7
      %v2319 = vsel %vm2211, %v2317, %v2318
      %v2320 = vrot.slane %v324, 7
      %v2321 = vsel %vm2211, %v2318, %v2320
      %v2322 = vrot.slane %v326, 7
      %v2323 = vrot.slane %v327, 7
      %v2324 = vsel %vm2211, %v2322, %v2323
      %v2325 = vrot.slane %v328, 7
      %v2326 = vsel %vm2211, %v2323, %v2325
      %v2327 = vrot.slane %v330, 7
      %v2328 = vrot.slane %v331, 7
      %v2329 = vsel %vm2211, %v2327, %v2328
      %v2330 = vrot.slane %v332, 7
      %v2331 = vsel %vm2211, %v2328, %v2330
      %v2404 = vmax.f32 %v2115, %v2212
      %v2405 = vmax.f32 %v2116, %v2214
      %v2406 = vmax.f32 %v2117, %v2216
      %v2407 = vmax.f32 %v2118, %v2217
      %v2408 = vmax.f32 %v2119, %v2219
      %v2409 = vmax.f32 %v2120, %v2221
      %v2410 = vmax.f32 %v2121, %v2222
      %v2411 = vmax.f32 %v2122, %v2224
      %v2412 = vmax.f32 %v2123, %v2226
      %v2413 = vmax.f32 %v2124, %v2227
      %v2414 = vmax.f32 %v2125, %v2229
      %v2415 = vmax.f32 %v2126, %v2231
      %v2416 = vmax.f32 %v2127, %v2232
      %v2417 = vmax.f32 %v2128, %v2234
      %v2418 = vmax.f32 %v2129, %v2236
      %v2419 = vmax.f32 %v2130, %v2237
      %v2420 = vmax.f32 %v2131, %v2239
      %v2421 = vmax.f32 %v2132, %v2241
      %v2422 = vmax.f32 %v2133, %v2242
      %v2423 = vmax.f32 %v2134, %v2244
      %v2424 = vmax.f32 %v2135, %v2246
      %v2425 = vmax.f32 %v2136, %v2247
      %v2426 = vmax.f32 %v2137, %v2249
      %v2427 = vmax.f32 %v2138, %v2251
      %v2428 = vmax.f32 %v2139, %v2252
      %v2429 = vmax.f32 %v2140, %v2254
      %v2430 = vmax.f32 %v2141, %v2256
      %v2431 = vmax.f32 %v2142, %v2257
      %v2432 = vmax.f32 %v2143, %v2259
      %v2433 = vmax.f32 %v2144, %v2261
      %v2434 = vmax.f32 %v2145, %v2262
      %v2435 = vmax.f32 %v2146, %v2264
      %v2436 = vmax.f32 %v2147, %v2266
      %v2437 = vmax.f32 %v2148, %v2267
      %v2438 = vmax.f32 %v2149, %v2269
      %v2439 = vmax.f32 %v2150, %v2271
      %v2440 = vmax.f32 %v2151, %v2272
      %v2441 = vmax.f32 %v2152, %v2274
      %v2442 = vmax.f32 %v2153, %v2276
      %v2443 = vmax.f32 %v2154, %v2277
      %v2444 = vmax.f32 %v2155, %v2279
      %v2445 = vmax.f32 %v2156, %v2281
      %v2446 = vmax.f32 %v2157, %v2282
      %v2447 = vmax.f32 %v2158, %v2284
      %v2448 = vmax.f32 %v2159, %v2286
      %v2449 = vmax.f32 %v2160, %v2287
      %v2450 = vmax.f32 %v2161, %v2289
      %v2451 = vmax.f32 %v2162, %v2291
      %v2452 = vmax.f32 %v2163, %v2292
      %v2453 = vmax.f32 %v2164, %v2294
      %v2454 = vmax.f32 %v2165, %v2296
      %v2455 = vmax.f32 %v2166, %v2297
      %v2456 = vmax.f32 %v2167, %v2299
      %v2457 = vmax.f32 %v2168, %v2301
      %v2458 = vmax.f32 %v2169, %v2302
      %v2459 = vmax.f32 %v2170, %v2304
      %v2460 = vmax.f32 %v2171, %v2306
      %v2461 = vmax.f32 %v2172, %v2307
      %v2462 = vmax.f32 %v2173, %v2309
      %v2463 = vmax.f32 %v2174, %v2311
      %v2464 = vmax.f32 %v2175, %v2312
      %v2465 = vmax.f32 %v2176, %v2314
      %v2466 = vmax.f32 %v2177, %v2316
      %v2467 = vmax.f32 %v2178, %v2317
      %v2468 = vmax.f32 %v2179, %v2319
      %v2469 = vmax.f32 %v2180, %v2321
      %v2470 = vmax.f32 %v2181, %v2322
      %v2471 = vmax.f32 %v2182, %v2324
      %v2472 = vmax.f32 %v2183, %v2326
      %v2473 = vmax.f32 %v2184, %v2327
      %v2474 = vmax.f32 %v2185, %v2329
      %v2475 = vmax.f32 %v2186, %v2331
      %v2476 = vmax.f32 %v2404, %v238
      %v2477 = vmax.f32 %v2405, %v239
      %v2478 = vmax.f32 %v2406, %v240
      %v2479 = vmax.f32 %v2407, %v242
      %v2480 = vmax.f32 %v2408, %v243
      %v2481 = vmax.f32 %v2409, %v244
      %v2482 = vmax.f32 %v2410, %v246
      %v2483 = vmax.f32 %v2411, %v247
      %v2484 = vmax.f32 %v2412, %v248
      %v2485 = vmax.f32 %v2413, %v250
      %v2486 = vmax.f32 %v2414, %v251
      %v2487 = vmax.f32 %v2415, %v252
      %v2488 = vmax.f32 %v2416, %v254
      %v2489 = vmax.f32 %v2417, %v255
      %v2490 = vmax.f32 %v2418, %v256
      %v2491 = vmax.f32 %v2419, %v258
      %v2492 = vmax.f32 %v2420, %v259
      %v2493 = vmax.f32 %v2421, %v260
      %v2494 = vmax.f32 %v2422, %v262
      %v2495 = vmax.f32 %v2423, %v263
      %v2496 = vmax.f32 %v2424, %v264
      %v2497 = vmax.f32 %v2425, %v266
      %v2498 = vmax.f32 %v2426, %v267
      %v2499 = vmax.f32 %v2427, %v268
      %v2500 = vmax.f32 %v2428, %v270
      %v2501 = vmax.f32 %v2429, %v271
      %v2502 = vmax.f32 %v2430, %v272
      %v2503 = vmax.f32 %v2431, %v274
      %v2504 = vmax.f32 %v2432, %v275
      %v2505 = vmax.f32 %v2433, %v276
      %v2506 = vmax.f32 %v2434, %v278
      %v2507 = vmax.f32 %v2435, %v279
      %v2508 = vmax.f32 %v2436, %v280
      %v2509 = vmax.f32 %v2437, %v282
      %v2510 = vmax.f32 %v2438, %v283
      %v2511 = vmax.f32 %v2439, %v284
      %v2512 = vmax.f32 %v2440, %v286
      %v2513 = vmax.f32 %v2441, %v287
      %v2514 = vmax.f32 %v2442, %v288
      %v2515 = vmax.f32 %v2443, %v290
      %v2516 = vmax.f32 %v2444, %v291
      %v2517 = vmax.f32 %v2445, %v292
      %v2518 = vmax.f32 %v2446, %v294
      %v2519 = vmax.f32 %v2447, %v295
      %v2520 = vmax.f32 %v2448, %v296
      %v2521 = vmax.f32 %v2449, %v298
      %v2522 = vmax.f32 %v2450, %v299
      %v2523 = vmax.f32 %v2451, %v300
      %v2524 = vmax.f32 %v2452, %v302
      %v2525 = vmax.f32 %v2453, %v303
      %v2526 = vmax.f32 %v2454, %v304
      %v2527 = vmax.f32 %v2455, %v306
      %v2528 = vmax.f32 %v2456, %v307
      %v2529 = vmax.f32 %v2457, %v308
      %v2530 = vmax.f32 %v2458, %v310
      %v2531 = vmax.f32 %v2459, %v311
      %v2532 = vmax.f32 %v2460, %v312
      %v2533 = vmax.f32 %v2461, %v314
      %v2534 = vmax.f32 %v2462, %v315
      %v2535 = vmax.f32 %v2463, %v316
      %v2536 = vmax.f32 %v2464, %v318
      %v2537 = vmax.f32 %v2465, %v319
      %v2538 = vmax.f32 %v2466, %v320
      %v2539 = vmax.f32 %v2467, %v322
      %v2540 = vmax.f32 %v2468, %v323
      %v2541 = vmax.f32 %v2469, %v324
      %v2542 = vmax.f32 %v2470, %v326
      %v2543 = vmax.f32 %v2471, %v327
      %v2544 = vmax.f32 %v2472, %v328
      %v2545 = vmax.f32 %v2473, %v330
      %v2546 = vmax.f32 %v2474, %v331
      %v2547 = vmax.f32 %v2475, %v332
      %v2548 = vmax.f32 %v2476, %v2479
      %v2549 = vmax.f32 %v2477, %v2480
      %v2550 = vmax.f32 %v2478, %v2481
      %v2551 = vmax.f32 %v2479, %v2482
      %v2552 = vmax.f32 %v2480, %v2483
      %v2553 = vmax.f32 %v2481, %v2484
      %v2554 = vmax.f32 %v2482, %v2485
      %v2555 = vmax.f32 %v2483, %v2486
      %v2556 = vmax.f32 %v2484, %v2487
      %v2557 = vmax.f32 %v2485, %v2488
      %v2558 = vmax.f32 %v2486, %v2489
      %v2559 = vmax.f32 %v2487, %v2490
      %v2560 = vmax.f32 %v2488, %v2491
      %v2561 = vmax.f32 %v2489, %v2492
      %v2562 = vmax.f32 %v2490, %v2493
      %v2563 = vmax.f32 %v2491, %v2494
      %v2564 = vmax.f32 %v2492, %v2495
      %v2565 = vmax.f32 %v2493, %v2496
      %v2566 = vmax.f32 %v2494, %v2497
      %v2567 = vmax.f32 %v2495, %v2498
      %v2568 = vmax.f32 %v2496, %v2499
      %v2569 = vmax.f32 %v2497, %v2500
      %v2570 = vmax.f32 %v2498, %v2501
      %v2571 = vmax.f32 %v2499, %v2502
      %v2572 = vmax.f32 %v2500, %v2503
      %v2573 = vmax.f32 %v2501, %v2504
      %v2574 = vmax.f32 %v2502, %v2505
      %v2575 = vmax.f32 %v2503, %v2506
      %v2576 = vmax.f32 %v2504, %v2507
      %v2577 = vmax.f32 %v2505, %v2508
      %v2578 = vmax.f32 %v2506, %v2509
      %v2579 = vmax.f32 %v2507, %v2510
      %v2580 = vmax.f32 %v2508, %v2511
      %v2581 = vmax.f32 %v2509, %v2512
      %v2582 = vmax.f32 %v2510, %v2513
      %v2583 = vmax.f32 %v2511, %v2514
      %v2584 = vmax.f32 %v2512, %v2515
      %v2585 = vmax.f32 %v2513, %v2516
      %v2586 = vmax.f32 %v2514, %v2517
      %v2587 = vmax.f32 %v2515, %v2518
      %v2588 = vmax.f32 %v2516, %v2519
      %v2589 = vmax.f32 %v2517, %v2520
      %v2590 = vmax.f32 %v2518, %v2521
      %v2591 = vmax.f32 %v2519, %v2522
      %v2592 = vmax.f32 %v2520, %v2523
      %v2593 = vmax.f32 %v2521, %v2524
      %v2594 = vmax.f32 %v2522, %v2525
      %v2595 = vmax.f32 %v2523, %v2526
      %v2596 = vmax.f32 %v2548, %v2482
      %v2597 = vmax.f32 %v2549, %v2483
      %v2598 = vmax.f32 %v2550, %v2484
      %v2599 = vmax.f32 %v2551, %v2485
      %v2600 = vmax.f32 %v2552, %v2486
      %v2601 = vmax.f32 %v2553, %v2487
      %v2602 = vmax.f32 %v2554, %v2488
      %v2603 = vmax.f32 %v2555, %v2489
      %v2604 = vmax.f32 %v2556, %v2490
      %v2605 = vmax.f32 %v2557, %v2491
      %v2606 = vmax.f32 %v2558, %v2492
      %v2607 = vmax.f32 %v2559, %v2493
      %v2608 = vmax.f32 %v2560, %v2494
      %v2609 = vmax.f32 %v2561, %v2495
      %v2610 = vmax.f32 %v2562, %v2496
      %v2611 = vmax.f32 %v2563, %v2497
      %v2612 = vmax.f32 %v2564, %v2498
      %v2613 = vmax.f32 %v2565, %v2499
      %v2614 = vmax.f32 %v2566, %v2500
      %v2615 = vmax.f32 %v2567, %v2501
      %v2616 = vmax.f32 %v2568, %v2502
      %v2617 = vmax.f32 %v2569, %v2503
      %v2618 = vmax.f32 %v2570, %v2504
      %v2619 = vmax.f32 %v2571, %v2505
      %v2620 = vmax.f32 %v2572, %v2506
      %v2621 = vmax.f32 %v2573, %v2507
      %v2622 = vmax.f32 %v2574, %v2508
      %v2623 = vmax.f32 %v2575, %v2509
      %v2624 = vmax.f32 %v2576, %v2510
      %v2625 = vmax.f32 %v2577, %v2511
      %v2626 = vmax.f32 %v2578, %v2512
      %v2627 = vmax.f32 %v2579, %v2513
      %v2628 = vmax.f32 %v2580, %v2514
      %v2629 = vmax.f32 %v2581, %v2515
      %v2630 = vmax.f32 %v2582, %v2516
      %v2631 = vmax.f32 %v2583, %v2517
      %v2632 = vmax.f32 %v2584, %v2518
      %v2633 = vmax.f32 %v2585, %v2519
      %v2634 = vmax.f32 %v2586, %v2520
      %v2635 = vmax.f32 %v2587, %v2521
      %v2636 = vmax.f32 %v2588, %v2522
      %v2637 = vmax.f32 %v2589, %v2523
      %v2638 = vmax.f32 %v2590, %v2524
      %v2639 = vmax.f32 %v2591, %v2525
      %v2640 = vmax.f32 %v2592, %v2526
      %v2641 = vmax.f32 %v2593, %v2527
      %v2642 = vmax.f32 %v2594, %v2528
      %v2643 = vmax.f32 %v2595, %v2529
      %v2644 = vmax.f32 %v2596, %v2485
      %v2645 = vmax.f32 %v2597, %v2486
      %v2646 = vmax.f32 %v2598, %v2487
      %v2647 = vmax.f32 %v2599, %v2488
      %v2648 = vmax.f32 %v2600, %v2489
      %v2649 = vmax.f32 %v2601, %v2490
      %v2650 = vmax.f32 %v2602, %v2491
      %v2651 = vmax.f32 %v2603, %v2492
      %v2652 = vmax.f32 %v2604, %v2493
      %v2653 = vmax.f32 %v2605, %v2494
      %v2654 = vmax.f32 %v2606, %v2495
      %v2655 = vmax.f32 %v2607, %v2496
      %v2656 = vmax.f32 %v2608, %v2497
      %v2657 = vmax.f32 %v2609, %v2498
      %v2658 = vmax.f32 %v2610, %v2499
      %v2659 = vmax.f32 %v2611, %v2500
      %v2660 = vmax.f32 %v2612, %v2501
      %v2661 = vmax.f32 %v2613, %v2502
      %v2662 = vmax.f32 %v2614, %v2503
      %v2663 = vmax.f32 %v2615, %v2504
      %v2664 = vmax.f32 %v2616, %v2505
      %v2665 = vmax.f32 %v2617, %v2506
      %v2666 = vmax.f32 %v2618, %v2507
      %v2667 = vmax.f32 %v2619, %v2508
      %v2668 = vmax.f32 %v2620, %v2509
      %v2669 = vmax.f32 %v2621, %v2510
      %v2670 = vmax.f32 %v2622, %v2511
      %v2671 = vmax.f32 %v2623, %v2512
      %v2672 = vmax.f32 %v2624, %v2513
      %v2673 = vmax.f32 %v2625, %v2514
      %v2674 = vmax.f32 %v2626, %v2515
      %v2675 = vmax.f32 %v2627, %v2516
      %v2676 = vmax.f32 %v2628, %v2517
      %v2677 = vmax.f32 %v2629, %v2518
      %v2678 = vmax.f32 %v2630, %v2519
      %v2679 = vmax.f32 %v2631, %v2520
      %v2680 = vmax.f32 %v2632, %v2521
      %v2681 = vmax.f32 %v2633, %v2522
      %v2682 = vmax.f32 %v2634, %v2523
      %v2683 = vmax.f32 %v2635, %v2524
      %v2684 = vmax.f32 %v2636, %v2525
      %v2685 = vmax.f32 %v2637, %v2526
      %v2686 = vmax.f32 %v2638, %v2527
      %v2687 = vmax.f32 %v2639, %v2528
      %v2688 = vmax.f32 %v2640, %v2529
      %v2689 = vmax.f32 %v2641, %v2530
      %v2690 = vmax.f32 %v2642, %v2531
      %v2691 = vmax.f32 %v2643, %v2532
      %v2692 = vmax.f32 %v2644, %v2488
      %v2693 = vmax.f32 %v2645, %v2489
      %v2694 = vmax.f32 %v2646, %v2490
      %v2695 = vmax.f32 %v2647, %v2491
      %v2696 = vmax.f32 %v2648, %v2492
      %v2697 = vmax.f32 %v2649, %v2493
      %v2698 = vmax.f32 %v2650, %v2494
      %v2699 = vmax.f32 %v2651, %v2495
      %v2700 = vmax.f32 %v2652, %v2496
      %v2701 = vmax.f32 %v2653, %v2497
      %v2702 = vmax.f32 %v2654, %v2498
      %v2703 = vmax.f32 %v2655, %v2499
      %v2704 = vmax.f32 %v2656, %v2500
      %v2705 = vmax.f32 %v2657, %v2501
      %v2706 = vmax.f32 %v2658, %v2502
      %v2707 = vmax.f32 %v2659, %v2503
      %v2708 = vmax.f32 %v2660, %v2504
      %v2709 = vmax.f32 %v2661, %v2505
      %v2710 = vmax.f32 %v2662, %v2506
      %v2711 = vmax.f32 %v2663, %v2507
      %v2712 = vmax.f32 %v2664, %v2508
      %v2713 = vmax.f32 %v2665, %v2509
      %v2714 = vmax.f32 %v2666, %v2510
      %v2715 = vmax.f32 %v2667, %v2511
      %v2716 = vmax.f32 %v2668, %v2512
      %v2717 = vmax.f32 %v2669, %v2513
      %v2718 = vmax.f32 %v2670, %v2514
      %v2719 = vmax.f32 %v2671, %v2515
      %v2720 = vmax.f32 %v2672, %v2516
      %v2721 = vmax.f32 %v2673, %v2517
      %v2722 = vmax.f32 %v2674, %v2518
      %v2723 = vmax.f32 %v2675, %v2519
      %v2724 = vmax.f32 %v2676, %v2520
      %v2725 = vmax.f32 %v2677, %v2521
      %v2726 = vmax.f32 %v2678, %v2522
      %v2727 = vmax.f32 %v2679, %v2523
      %v2728 = vmax.f32 %v2680, %v2524
      %v2729 = vmax.f32 %v2681, %v2525
      %v2730 = vmax.f32 %v2682, %v2526
      %v2731 = vmax.f32 %v2683, %v2527
      %v2732 = vmax.f32 %v2684, %v2528
      %v2733 = vmax.f32 %v2685, %v2529
      %v2734 = vmax.f32 %v2686, %v2530
      %v2735 = vmax.f32 %v2687, %v2531
      %v2736 = vmax.f32 %v2688, %v2532
      %v2737 = vmax.f32 %v2689, %v2533
      %v2738 = vmax.f32 %v2690, %v2534
      %v2739 = vmax.f32 %v2691, %v2535
      %v2740 = vmax.f32 %v2692, %v2491
      %v2741 = vmax.f32 %v2693, %v2492
      %v2742 = vmax.f32 %v2694, %v2493
      %v2743 = vmax.f32 %v2695, %v2494
      %v2744 = vmax.f32 %v2696, %v2495
      %v2745 = vmax.f32 %v2697, %v2496
      %v2746 = vmax.f32 %v2698, %v2497
      %v2747 = vmax.f32 %v2699, %v2498
      %v2748 = vmax.f32 %v2700, %v2499
      %v2749 = vmax.f32 %v2701, %v2500
      %v2750 = vmax.f32 %v2702, %v2501
      %v2751 = vmax.f32 %v2703, %v2502
      %v2752 = vmax.f32 %v2704, %v2503
      %v2753 = vmax.f32 %v2705, %v2504
      %v2754 = vmax.f32 %v2706, %v2505
      %v2755 = vmax.f32 %v2707, %v2506
      %v2756 = vmax.f32 %v2708, %v2507
      %v2757 = vmax.f32 %v2709, %v2508
      %v2758 = vmax.f32 %v2710, %v2509
      %v2759 = vmax.f32 %v2711, %v2510
      %v2760 = vmax.f32 %v2712, %v2511
      %v2761 = vmax.f32 %v2713, %v2512
      %v2762 = vmax.f32 %v2714, %v2513
      %v2763 = vmax.f32 %v2715, %v2514
      %v2764 = vmax.f32 %v2716, %v2515
      %v2765 = vmax.f32 %v2717, %v2516
      %v2766 = vmax.f32 %v2718, %v2517
      %v2767 = vmax.f32 %v2719, %v2518
      %v2768 = vmax.f32 %v2720, %v2519
      %v2769 = vmax.f32 %v2721, %v2520
      %v2770 = vmax.f32 %v2722, %v2521
      %v2771 = vmax.f32 %v2723, %v2522
      %v2772 = vmax.f32 %v2724, %v2523
      %v2773 = vmax.f32 %v2725, %v2524
      %v2774 = vmax.f32 %v2726, %v2525
      %v2775 = vmax.f32 %v2727, %v2526
      %v2776 = vmax.f32 %v2728, %v2527
      %v2777 = vmax.f32 %v2729, %v2528
      %v2778 = vmax.f32 %v2730, %v2529
      %v2779 = vmax.f32 %v2731, %v2530
      %v2780 = vmax.f32 %v2732, %v2531
      %v2781 = vmax.f32 %v2733, %v2532
      %v2782 = vmax.f32 %v2734, %v2533
      %v2783 = vmax.f32 %v2735, %v2534
      %v2784 = vmax.f32 %v2736, %v2535
      %v2785 = vmax.f32 %v2737, %v2536
      %v2786 = vmax.f32 %v2738, %v2537
      %v2787 = vmax.f32 %v2739, %v2538
      %v2788 = vmax.f32 %v2740, %v2494
      %v2789 = vmax.f32 %v2741, %v2495
      %v2790 = vmax.f32 %v2742, %v2496
      %v2791 = vmax.f32 %v2743, %v2497
      %v2792 = vmax.f32 %v2744, %v2498
      %v2793 = vmax.f32 %v2745, %v2499
      %v2794 = vmax.f32 %v2746, %v2500
      %v2795 = vmax.f32 %v2747, %v2501
      %v2796 = vmax.f32 %v2748, %v2502
      %v2797 = vmax.f32 %v2749, %v2503
      %v2798 = vmax.f32 %v2750, %v2504
      %v2799 = vmax.f32 %v2751, %v2505
      %v2800 = vmax.f32 %v2752, %v2506
      %v2801 = vmax.f32 %v2753, %v2507
      %v2802 = vmax.f32 %v2754, %v2508
      %v2803 = vmax.f32 %v2755, %v2509
      %v2804 = vmax.f32 %v2756, %v2510
      %v2805 = vmax.f32 %v2757, %v2511
      %v2806 = vmax.f32 %v2758, %v2512
      %v2807 = vmax.f32 %v2759, %v2513
      %v2808 = vmax.f32 %v2760, %v2514
      %v2809 = vmax.f32 %v2761, %v2515
      %v2810 = vmax.f32 %v2762, %v2516
      %v2811 = vmax.f32 %v2763, %v2517
      %v2812 = vmax.f32 %v2764, %v2518
      %v2813 = vmax.f32 %v2765, %v2519
      %v2814 = vmax.f32 %v2766, %v2520
      %v2815 = vmax.f32 %v2767, %v2521
      %v2816 = vmax.f32 %v2768, %v2522
      %v2817 = vmax.f32 %v2769, %v2523
      %v2818 = vmax.f32 %v2770, %v2524
      %v2819 = vmax.f32 %v2771, %v2525
      %v2820 = vmax.f32 %v2772, %v2526
      %v2821 = vmax.f32 %v2773, %v2527
      %v2822 = vmax.f32 %v2774, %v2528
      %v2823 = vmax.f32 %v2775, %v2529
      %v2824 = vmax.f32 %v2776, %v2530
      %v2825 = vmax.f32 %v2777, %v2531
      %v2826 = vmax.f32 %v2778, %v2532
      %v2827 = vmax.f32 %v2779, %v2533
      %v2828 = vmax.f32 %v2780, %v2534
      %v2829 = vmax.f32 %v2781, %v2535
      %v2830 = vmax.f32 %v2782, %v2536
      %v2831 = vmax.f32 %v2783, %v2537
      %v2832 = vmax.f32 %v2784, %v2538
      %v2833 = vmax.f32 %v2785, %v2539
      %v2834 = vmax.f32 %v2786, %v2540
      %v2835 = vmax.f32 %v2787, %v2541
      %v2836 = vmax.f32 %v2788, %v2497
      %v2837 = vmax.f32 %v2789, %v2498
      %v2838 = vmax.f32 %v2790, %v2499
      %v2839 = vmax.f32 %v2791, %v2500
      %v2840 = vmax.f32 %v2792, %v2501
      %v2841 = vmax.f32 %v2793, %v2502
      %v2842 = vmax.f32 %v2794, %v2503
      %v2843 = vmax.f32 %v2795, %v2504
      %v2844 = vmax.f32 %v2796, %v2505
      %v2845 = vmax.f32 %v2797, %v2506
      %v2846 = vmax.f32 %v2798, %v2507
      %v2847 = vmax.f32 %v2799, %v2508
      %v2848 = vmax.f32 %v2800, %v2509
      %v2849 = vmax.f32 %v2801, %v2510
      %v2850 = vmax.f32 %v2802, %v2511
      %v2851 = vmax.f32 %v2803, %v2512
      %v2852 = vmax.f32 %v2804, %v2513
      %v2853 = vmax.f32 %v2805, %v2514
      %v2854 = vmax.f32 %v2806, %v2515
      %v2855 = vmax.f32 %v2807, %v2516
      %v2856 = vmax.f32 %v2808, %v2517
      %v2857 = vmax.f32 %v2809, %v2518
      %v2858 = vmax.f32 %v2810, %v2519
      %v2859 = vmax.f32 %v2811, %v2520
      %v2860 = vmax.f32 %v2812, %v2521
      %v2861 = vmax.f32 %v2813, %v2522
      %v2862 = vmax.f32 %v2814, %v2523
      %v2863 = vmax.f32 %v2815, %v2524
      %v2864 = vmax.f32 %v2816, %v2525
      %v2865 = vmax.f32 %v2817, %v2526
      %v2866 = vmax.f32 %v2818, %v2527
      %v2867 = vmax.f32 %v2819, %v2528
      %v2868 = vmax.f32 %v2820, %v2529
      %v2869 = vmax.f32 %v2821, %v2530
      %v2870 = vmax.f32 %v2822, %v2531
      %v2871 = vmax.f32 %v2823, %v2532
      %v2872 = vmax.f32 %v2824, %v2533
      %v2873 = vmax.f32 %v2825, %v2534
      %v2874 = vmax.f32 %v2826, %v2535
      %v2875 = vmax.f32 %v2827, %v2536
      %v2876 = vmax.f32 %v2828, %v2537
      %v2877 = vmax.f32 %v2829, %v2538
      %v2878 = vmax.f32 %v2830, %v2539
      %v2879 = vmax.f32 %v2831, %v2540
      %v2880 = vmax.f32 %v2832, %v2541
      %v2881 = vmax.f32 %v2833, %v2542
      %v2882 = vmax.f32 %v2834, %v2543
      %v2883 = vmax.f32 %v2835, %v2544
      %v2884 = vmax.f32 %v2836, %v2500
      %v2885 = vmax.f32 %v2837, %v2501
      %v2886 = vmax.f32 %v2838, %v2502
      %v2887 = vmax.f32 %v2839, %v2503
      %v2888 = vmax.f32 %v2840, %v2504
      %v2889 = vmax.f32 %v2841, %v2505
      %v2890 = vmax.f32 %v2842, %v2506
      %v2891 = vmax.f32 %v2843, %v2507
      %v2892 = vmax.f32 %v2844, %v2508
      %v2893 = vmax.f32 %v2845, %v2509
      %v2894 = vmax.f32 %v2846, %v2510
      %v2895 = vmax.f32 %v2847, %v2511
      %v2896 = vmax.f32 %v2848, %v2512
      %v2897 = vmax.f32 %v2849, %v2513
      %v2898 = vmax.f32 %v2850, %v2514
      %v2899 = vmax.f32 %v2851, %v2515
      %v2900 = vmax.f32 %v2852, %v2516
      %v2901 = vmax.f32 %v2853, %v2517
      %v2902 = vmax.f32 %v2854, %v2518
      %v2903 = vmax.f32 %v2855, %v2519
      %v2904 = vmax.f32 %v2856, %v2520
      %v2905 = vmax.f32 %v2857, %v2521
      %v2906 = vmax.f32 %v2858, %v2522
      %v2907 = vmax.f32 %v2859, %v2523
      %v2908 = vmax.f32 %v2860, %v2524
      %v2909 = vmax.f32 %v2861, %v2525
      %v2910 = vmax.f32 %v2862, %v2526
      %v2911 = vmax.f32 %v2863, %v2527
      %v2912 = vmax.f32 %v2864, %v2528
      %v2913 = vmax.f32 %v2865, %v2529
      %v2914 = vmax.f32 %v2866, %v2530
      %v2915 = vmax.f32 %v2867, %v2531
      %v2916 = vmax.f32 %v2868, %v2532
      %v2917 = vmax.f32 %v2869, %v2533
      %v2918 = vmax.f32 %v2870, %v2534
      %v2919 = vmax.f32 %v2871, %v2535
      %v2920 = vmax.f32 %v2872, %v2536
      %v2921 = vmax.f32 %v2873, %v2537
      %v2922 = vmax.f32 %v2874, %v2538
      %v2923 = vmax.f32 %v2875, %v2539
      %v2924 = vmax.f32 %v2876, %v2540
      %v2925 = vmax.f32 %v2877, %v2541
      %v2926 = vmax.f32 %v2878, %v2542
      %v2927 = vmax.f32 %v2879, %v2543
      %v2928 = vmax.f32 %v2880, %v2544
      %v2929 = vmax.f32 %v2881, %v2545
      %v2930 = vmax.f32 %v2882, %v2546
      %v2931 = vmax.f32 %v2883, %v2547
      %v2944 = vrot.slane %v229, 1
      %v2945 = vrot.slane %v230, 1
      %v2946 = vsel %vm401, %v2944, %v2945
      %v2947 = vrot.slane %v231, 1
      %v2948 = vsel %vm401, %v2945, %v2947
      %v2949 = vrot.slane %v233, 1
      %v2950 = vrot.slane %v234, 1
      %v2951 = vsel %vm401, %v2949, %v2950
      %v2952 = vrot.slane %v235, 1
      %v2953 = vsel %vm401, %v2950, %v2952
      %v2954 = vrot.slane %v333, 1
      %v2955 = vrot.slane %v334, 1
      %v2956 = vsel %vm401, %v2954, %v2955
      %v2957 = vrot.slane %v335, 1
      %v2958 = vsel %vm401, %v2955, %v2957
      %v2959 = vrot.slane %v337, 1
      %v2960 = vrot.slane %v338, 1
      %v2961 = vsel %vm401, %v2959, %v2960
      %v2962 = vrot.slane %v339, 1
      %v2963 = vsel %vm401, %v2960, %v2962
      %v2972 = vmax.f32 %v229, %v2946
      %v2973 = vmax.f32 %v230, %v2948
      %v2974 = vmax.f32 %v233, %v2951
      %v2975 = vmax.f32 %v234, %v2953
      %v2976 = vmax.f32 %v333, %v2956
      %v2977 = vmax.f32 %v334, %v2958
      %v2978 = vmax.f32 %v337, %v2961
      %v2979 = vmax.f32 %v338, %v2963
      %v2980 = vrot.slane %v229, 2
      %v2981 = vrot.slane %v230, 2
      %v2982 = vsel %vm622, %v2980, %v2981
      %v2983 = vrot.slane %v231, 2
      %v2984 = vsel %vm622, %v2981, %v2983
      %v2985 = vrot.slane %v233, 2
      %v2986 = vrot.slane %v234, 2
      %v2987 = vsel %vm622, %v2985, %v2986
      %v2988 = vrot.slane %v235, 2
      %v2989 = vsel %vm622, %v2986, %v2988
      %v2990 = vrot.slane %v333, 2
      %v2991 = vrot.slane %v334, 2
      %v2992 = vsel %vm622, %v2990, %v2991
      %v2993 = vrot.slane %v335, 2
      %v2994 = vsel %vm622, %v2991, %v2993
      %v2995 = vrot.slane %v337, 2
      %v2996 = vrot.slane %v338, 2
      %v2997 = vsel %vm622, %v2995, %v2996
      %v2998 = vrot.slane %v339, 2
      %v2999 = vsel %vm622, %v2996, %v2998
      %v3008 = vmax.f32 %v2972, %v2982
      %v3009 = vmax.f32 %v2973, %v2984
      %v3010 = vmax.f32 %v2974, %v2987
      %v3011 = vmax.f32 %v2975, %v2989
      %v3012 = vmax.f32 %v2976, %v2992
      %v3013 = vmax.f32 %v2977, %v2994
      %v3014 = vmax.f32 %v2978, %v2997
      %v3015 = vmax.f32 %v2979, %v2999
      %v3016 = vrot.slane %v229, 3
      %v3017 = vrot.slane %v230, 3
      %v3018 = vsel %vm843, %v3016, %v3017
      %v3019 = vrot.slane %v231, 3
      %v3020 = vsel %vm843, %v3017, %v3019
      %v3021 = vrot.slane %v233, 3
      %v3022 = vrot.slane %v234, 3
      %v3023 = vsel %vm843, %v3021, %v3022
      %v3024 = vrot.slane %v235, 3
      %v3025 = vsel %vm843, %v3022, %v3024
      %v3026 = vrot.slane %v333, 3
      %v3027 = vrot.slane %v334, 3
      %v3028 = vsel %vm843, %v3026, %v3027
      %v3029 = vrot.slane %v335, 3
      %v3030 = vsel %vm843, %v3027, %v3029
      %v3031 = vrot.slane %v337, 3
      %v3032 = vrot.slane %v338, 3
      %v3033 = vsel %vm843, %v3031, %v3032
      %v3034 = vrot.slane %v339, 3
      %v3035 = vsel %vm843, %v3032, %v3034
      %v3044 = vmax.f32 %v3008, %v3018
      %v3045 = vmax.f32 %v3009, %v3020
      %v3046 = vmax.f32 %v3010, %v3023
      %v3047 = vmax.f32 %v3011, %v3025
      %v3048 = vmax.f32 %v3012, %v3028
      %v3049 = vmax.f32 %v3013, %v3030
      %v3050 = vmax.f32 %v3014, %v3033
      %v3051 = vmax.f32 %v3015, %v3035
      %v3052 = vrot.slane %v229, 4
      %v3053 = vrot.slane %v230, 4
      %v3054 = vsel %vm1064, %v3052, %v3053
      %v3055 = vrot.slane %v231, 4
      %v3056 = vsel %vm1064, %v3053, %v3055
      %v3057 = vrot.slane %v233, 4
      %v3058 = vrot.slane %v234, 4
      %v3059 = vsel %vm1064, %v3057, %v3058
      %v3060 = vrot.slane %v235, 4
      %v3061 = vsel %vm1064, %v3058, %v3060
      %v3062 = vrot.slane %v333, 4
      %v3063 = vrot.slane %v334, 4
      %v3064 = vsel %vm1064, %v3062, %v3063
      %v3065 = vrot.slane %v335, 4
      %v3066 = vsel %vm1064, %v3063, %v3065
      %v3067 = vrot.slane %v337, 4
      %v3068 = vrot.slane %v338, 4
      %v3069 = vsel %vm1064, %v3067, %v3068
      %v3070 = vrot.slane %v339, 4
      %v3071 = vsel %vm1064, %v3068, %v3070
      %v3080 = vmax.f32 %v3044, %v3054
      %v3081 = vmax.f32 %v3045, %v3056
      %v3082 = vmax.f32 %v3046, %v3059
      %v3083 = vmax.f32 %v3047, %v3061
      %v3084 = vmax.f32 %v3048, %v3064
      %v3085 = vmax.f32 %v3049, %v3066
      %v3086 = vmax.f32 %v3050, %v3069
      %v3087 = vmax.f32 %v3051, %v3071
      %v3088 = vrot.slane %v229, 5
      %v3089 = vrot.slane %v230, 5
      %v3090 = vsel %vm1705, %v3088, %v3089
      %v3091 = vrot.slane %v231, 5
      %v3092 = vsel %vm1705, %v3089, %v3091
      %v3093 = vrot.slane %v233, 5
      %v3094 = vrot.slane %v234, 5
      %v3095 = vsel %vm1705, %v3093, %v3094
      %v3096 = vrot.slane %v235, 5
      %v3097 = vsel %vm1705, %v3094, %v3096
      %v3098 = vrot.slane %v333, 5
      %v3099 = vrot.slane %v334, 5
      %v3100 = vsel %vm1705, %v3098, %v3099
      %v3101 = vrot.slane %v335, 5
      %v3102 = vsel %vm1705, %v3099, %v3101
      %v3103 = vrot.slane %v337, 5
      %v3104 = vrot.slane %v338, 5
      %v3105 = vsel %vm1705, %v3103, %v3104
      %v3106 = vrot.slane %v339, 5
      %v3107 = vsel %vm1705, %v3104, %v3106
      %v3116 = vmax.f32 %v3080, %v3090
      %v3117 = vmax.f32 %v3081, %v3092
      %v3118 = vmax.f32 %v3082, %v3095
      %v3119 = vmax.f32 %v3083, %v3097
      %v3120 = vmax.f32 %v3084, %v3100
      %v3121 = vmax.f32 %v3085, %v3102
      %v3122 = vmax.f32 %v3086, %v3105
      %v3123 = vmax.f32 %v3087, %v3107
      %v3124 = vrot.slane %v229, 6
      %v3125 = vrot.slane %v230, 6
      %v3126 = vsel %vm1970, %v3124, %v3125
      %v3127 = vrot.slane %v231, 6
      %v3128 = vsel %vm1970, %v3125, %v3127
      %v3129 = vrot.slane %v233, 6
      %v3130 = vrot.slane %v234, 6
      %v3131 = vsel %vm1970, %v3129, %v3130
      %v3132 = vrot.slane %v235, 6
      %v3133 = vsel %vm1970, %v3130, %v3132
      %v3134 = vrot.slane %v237, 6
      %v3135 = vsel %vm1970, %v3134, %v1971
      %v3136 = vrot.slane %v241, 6
      %v3137 = vsel %vm1970, %v3136, %v1974
      %v3138 = vrot.slane %v245, 6
      %v3139 = vsel %vm1970, %v3138, %v1977
      %v3140 = vrot.slane %v249, 6
      %v3141 = vsel %vm1970, %v3140, %v1980
      %v3142 = vrot.slane %v253, 6
      %v3143 = vsel %vm1970, %v3142, %v1983
      %v3144 = vrot.slane %v257, 6
      %v3145 = vsel %vm1970, %v3144, %v1986
      %v3146 = vrot.slane %v261, 6
      %v3147 = vsel %vm1970, %v3146, %v1989
      %v3148 = vrot.slane %v265, 6
      %v3149 = vsel %vm1970, %v3148, %v1992
      %v3150 = vrot.slane %v269, 6
      %v3151 = vsel %vm1970, %v3150, %v1995
      %v3152 = vrot.slane %v273, 6
      %v3153 = vsel %vm1970, %v3152, %v1998
      %v3154 = vrot.slane %v277, 6
      %v3155 = vsel %vm1970, %v3154, %v2001
      %v3156 = vrot.slane %v281, 6
      %v3157 = vsel %vm1970, %v3156, %v2004
      %v3158 = vrot.slane %v285, 6
      %v3159 = vsel %vm1970, %v3158, %v2007
      %v3160 = vrot.slane %v289, 6
      %v3161 = vsel %vm1970, %v3160, %v2010
      %v3162 = vrot.slane %v293, 6
      %v3163 = vsel %vm1970, %v3162, %v2013
      %v3164 = vrot.slane %v297, 6
      %v3165 = vsel %vm1970, %v3164, %v2016
      %v3166 = vrot.slane %v301, 6
      %v3167 = vsel %vm1970, %v3166, %v2019
      %v3168 = vrot.slane %v305, 6
      %v3169 = vsel %vm1970, %v3168, %v2022
      %v3170 = vrot.slane %v309, 6
      %v3171 = vsel %vm1970, %v3170, %v2025
      %v3172 = vrot.slane %v313, 6
      %v3173 = vsel %vm1970, %v3172, %v2028
      %v3174 = vrot.slane %v317, 6
      %v3175 = vsel %vm1970, %v3174, %v2031
      %v3176 = vrot.slane %v321, 6
      %v3177 = vsel %vm1970, %v3176, %v2034
      %v3178 = vrot.slane %v325, 6
      %v3179 = vsel %vm1970, %v3178, %v2037
      %v3180 = vrot.slane %v329, 6
      %v3181 = vsel %vm1970, %v3180, %v2040
      %v3182 = vrot.slane %v333, 6
      %v3183 = vrot.slane %v334, 6
      %v3184 = vsel %vm1970, %v3182, %v3183
      %v3185 = vrot.slane %v335, 6
      %v3186 = vsel %vm1970, %v3183, %v3185
      %v3187 = vrot.slane %v337, 6
      %v3188 = vrot.slane %v338, 6
      %v3189 = vsel %vm1970, %v3187, %v3188
      %v3190 = vrot.slane %v339, 6
      %v3191 = vsel %vm1970, %v3188, %v3190
      %v3224 = vmax.f32 %v3116, %v3126
      %v3225 = vmax.f32 %v3117, %v3128
      %v3226 = vmax.f32 %v3118, %v3131
      %v3227 = vmax.f32 %v3119, %v3133
      %v3228 = vmax.f32 %v1898, %v3135
      %v3229 = vmax.f32 %v1901, %v3137
      %v3230 = vmax.f32 %v1904, %v3139
      %v3231 = vmax.f32 %v1907, %v3141
      %v3232 = vmax.f32 %v1910, %v3143
      %v3233 = vmax.f32 %v1913, %v3145
      %v3234 = vmax.f32 %v1916, %v3147
      %v3235 = vmax.f32 %v1919, %v3149
      %v3236 = vmax.f32 %v1922, %v3151
      %v3237 = vmax.f32 %v1925, %v3153
      %v3238 = vmax.f32 %v1928, %v3155
      %v3239 = vmax.f32 %v1931, %v3157
      %v3240 = vmax.f32 %v1934, %v3159
      %v3241 = vmax.f32 %v1937, %v3161
      %v3242 = vmax.f32 %v1940, %v3163
      %v3243 = vmax.f32 %v1943, %v3165
      %v3244 = vmax.f32 %v1946, %v3167
      %v3245 = vmax.f32 %v1949, %v3169
      %v3246 = vmax.f32 %v1952, %v3171
      %v3247 = vmax.f32 %v1955, %v3173
      %v3248 = vmax.f32 %v1958, %v3175
      %v3249 = vmax.f32 %v1961, %v3177
      %v3250 = vmax.f32 %v1964, %v3179
      %v3251 = vmax.f32 %v1967, %v3181
      %v3252 = vmax.f32 %v3120, %v3184
      %v3253 = vmax.f32 %v3121, %v3186
      %v3254 = vmax.f32 %v3122, %v3189
      %v3255 = vmax.f32 %v3123, %v3191
      %v3256 = vrot.slane %v229, 7
      %v3257 = vrot.slane %v230, 7
      %v3258 = vsel %vm2211, %v3256, %v3257
      %v3259 = vrot.slane %v231, 7
      %v3260 = vsel %vm2211, %v3257, %v3259
      %v3261 = vrot.slane %v233, 7
      %v3262 = vrot.slane %v234, 7
      %v3263 = vsel %vm2211, %v3261, %v3262
      %v3264 = vrot.slane %v235, 7
      %v3265 = vsel %vm2211, %v3262, %v3264
      %v3266 = vrot.slane %v237, 7
      %v3267 = vsel %vm2211, %v3266, %v2212
      %v3268 = vrot.slane %v241, 7
      %v3269 = vsel %vm2211, %v3268, %v2217
      %v3270 = vrot.slane %v245, 7
      %v3271 = vsel %vm2211, %v3270, %v2222
      %v3272 = vrot.slane %v249, 7
      %v3273 = vsel %vm2211, %v3272, %v2227
      %v3274 = vrot.slane %v253, 7
      %v3275 = vsel %vm2211, %v3274, %v2232
      %v3276 = vrot.slane %v257, 7
      %v3277 = vsel %vm2211, %v3276, %v2237
      %v3278 = vrot.slane %v261, 7
      %v3279 = vsel %vm2211, %v3278, %v2242
      %v3280 = vrot.slane %v265, 7
      %v3281 = vsel %vm2211, %v3280, %v2247
      %v3282 = vrot.slane %v269, 7
      %v3283 = vsel %vm2211, %v3282, %v2252
      %v3284 = vrot.slane %v273, 7
      %v3285 = vsel %vm2211, %v3284, %v2257
      %v3286 = vrot.slane %v277, 7
      %v3287 = vsel %vm2211, %v3286, %v2262
      %v3288 = vrot.slane %v281, 7
      %v3289 = vsel %vm2211, %v3288, %v2267
      %v3290 = vrot.slane %v285, 7
      %v3291 = vsel %vm2211, %v3290, %v2272
      %v3292 = vrot.slane %v289, 7
      %v3293 = vsel %vm2211, %v3292, %v2277
      %v3294 = vrot.slane %v293, 7
      %v3295 = vsel %vm2211, %v3294, %v2282
      %v3296 = vrot.slane %v297, 7
      %v3297 = vsel %vm2211, %v3296, %v2287
      %v3298 = vrot.slane %v301, 7
      %v3299 = vsel %vm2211, %v3298, %v2292
      %v3300 = vrot.slane %v305, 7
      %v3301 = vsel %vm2211, %v3300, %v2297
      %v3302 = vrot.slane %v309, 7
      %v3303 = vsel %vm2211, %v3302, %v2302
      %v3304 = vrot.slane %v313, 7
      %v3305 = vsel %vm2211, %v3304, %v2307
      %v3306 = vrot.slane %v317, 7
      %v3307 = vsel %vm2211, %v3306, %v2312
      %v3308 = vrot.slane %v321, 7
      %v3309 = vsel %vm2211, %v3308, %v2317
      %v3310 = vrot.slane %v325, 7
      %v3311 = vsel %vm2211, %v3310, %v2322
      %v3312 = vrot.slane %v329, 7
      %v3313 = vsel %vm2211, %v3312, %v2327
      %v3314 = vrot.slane %v333, 7
      %v3315 = vrot.slane %v334, 7
      %v3316 = vsel %vm2211, %v3314, %v3315
      %v3317 = vrot.slane %v335, 7
      %v3318 = vsel %vm2211, %v3315, %v3317
      %v3319 = vrot.slane %v337, 7
      %v3320 = vrot.slane %v338, 7
      %v3321 = vsel %vm2211, %v3319, %v3320
      %v3322 = vrot.slane %v339, 7
      %v3323 = vsel %vm2211, %v3320, %v3322
      %v3356 = vmax.f32 %v3224, %v3258
      %v3357 = vmax.f32 %v3225, %v3260
      %v3358 = vmax.f32 %v3226, %v3263
      %v3359 = vmax.f32 %v3227, %v3265
      %v3360 = vmax.f32 %v3228, %v3267
      %v3361 = vmax.f32 %v3229, %v3269
      %v3362 = vmax.f32 %v3230, %v3271
      %v3363 = vmax.f32 %v3231, %v3273
      %v3364 = vmax.f32 %v3232, %v3275
      %v3365 = vmax.f32 %v3233, %v3277
      %v3366 = vmax.f32 %v3234, %v3279
      %v3367 = vmax.f32 %v3235, %v3281
      %v3368 = vmax.f32 %v3236, %v3283
      %v3369 = vmax.f32 %v3237, %v3285
      %v3370 = vmax.f32 %v3238, %v3287
      %v3371 = vmax.f32 %v3239, %v3289
      %v3372 = vmax.f32 %v3240, %v3291
      %v3373 = vmax.f32 %v3241, %v3293
      %v3374 = vmax.f32 %v3242, %v3295
      %v3375 = vmax.f32 %v3243, %v3297
      %v3376 = vmax.f32 %v3244, %v3299
      %v3377 = vmax.f32 %v3245, %v3301
      %v3378 = vmax.f32 %v3246, %v3303
      %v3379 = vmax.f32 %v3247, %v3305
      %v3380 = vmax.f32 %v3248, %v3307
      %v3381 = vmax.f32 %v3249, %v3309
      %v3382 = vmax.f32 %v3250, %v3311
      %v3383 = vmax.f32 %v3251, %v3313
      %v3384 = vmax.f32 %v3252, %v3316
      %v3385 = vmax.f32 %v3253, %v3318
      %v3386 = vmax.f32 %v3254, %v3321
      %v3387 = vmax.f32 %v3255, %v3323
      %v3388 = vmax.f32 %v3356, %v230
      %v3389 = vmax.f32 %v3357, %v231
      %v3390 = vmax.f32 %v3358, %v234
      %v3391 = vmax.f32 %v3359, %v235
      %v3392 = vmax.f32 %v3360, %v238
      %v3393 = vmax.f32 %v3361, %v242
      %v3394 = vmax.f32 %v3362, %v246
      %v3395 = vmax.f32 %v3363, %v250
      %v3396 = vmax.f32 %v3364, %v254
      %v3397 = vmax.f32 %v3365, %v258
      %v3398 = vmax.f32 %v3366, %v262
      %v3399 = vmax.f32 %v3367, %v266
      %v3400 = vmax.f32 %v3368, %v270
      %v3401 = vmax.f32 %v3369, %v274
      %v3402 = vmax.f32 %v3370, %v278
      %v3403 = vmax.f32 %v3371, %v282
      %v3404 = vmax.f32 %v3372, %v286
      %v3405 = vmax.f32 %v3373, %v290
      %v3406 = vmax.f32 %v3374, %v294
      %v3407 = vmax.f32 %v3375, %v298
      %v3408 = vmax.f32 %v3376, %v302
      %v3409 = vmax.f32 %v3377, %v306
      %v3410 = vmax.f32 %v3378, %v310
      %v3411 = vmax.f32 %v3379, %v314
      %v3412 = vmax.f32 %v3380, %v318
      %v3413 = vmax.f32 %v3381, %v322
      %v3414 = vmax.f32 %v3382, %v326
      %v3415 = vmax.f32 %v3383, %v330
      %v3416 = vmax.f32 %v3384, %v334
      %v3417 = vmax.f32 %v3385, %v335
      %v3418 = vmax.f32 %v3386, %v338
      %v3419 = vmax.f32 %v3387, %v339
      %v3424 = vrot.slane %v232, 1
      %v3425 = vsel %vm401, %v2947, %v3424
      %v3426 = vrot.slane %v236, 1
      %v3427 = vsel %vm401, %v2952, %v3426
      %v3428 = vrot.slane %v240, 1
      %v3429 = vsel %vm401, %v1452, %v3428
      %v3430 = vrot.slane %v244, 1
      %v3431 = vsel %vm401, %v1457, %v3430
      %v3432 = vrot.slane %v248, 1
      %v3433 = vsel %vm401, %v405, %v3432
      %v3434 = vrot.slane %v252, 1
      %v3435 = vsel %vm401, %v410, %v3434
      %v3436 = vrot.slane %v256, 1
      %v3437 = vsel %vm401, %v415, %v3436
      %v3438 = vrot.slane %v260, 1
      %v3439 = vsel %vm401, %v420, %v3438
      %v3440 = vrot.slane %v264, 1
      %v3441 = vsel %vm401, %v425, %v3440
      %v3442 = vrot.slane %v268, 1
      %v3443 = vsel %vm401, %v430, %v3442
      %v3444 = vrot.slane %v272, 1
      %v3445 = vsel %vm401, %v435, %v3444
      %v3446 = vrot.slane %v276, 1
      %v3447 = vsel %vm401, %v440, %v3446
      %v3448 = vrot.slane %v280, 1
      %v3449 = vsel %vm401, %v445, %v3448
      %v3450 = vrot.slane %v284, 1
      %v3451 = vsel %vm401, %v450, %v3450
      %v3452 = vrot.slane %v288, 1
      %v3453 = vsel %vm401, %v455, %v3452
      %v3454 = vrot.slane %v292, 1
      %v3455 = vsel %vm401, %v460, %v3454
      %v3456 = vrot.slane %v296, 1
      %v3457 = vsel %vm401, %v465, %v3456
      %v3458 = vrot.slane %v300, 1
      %v3459 = vsel %vm401, %v470, %v3458
      %v3460 = vrot.slane %v304, 1
      %v3461 = vsel %vm401, %v475, %v3460
      %v3462 = vrot.slane %v308, 1
      %v3463 = vsel %vm401, %v480, %v3462
      %v3464 = vrot.slane %v312, 1
      %v3465 = vsel %vm401, %v485, %v3464
      %v3466 = vrot.slane %v316, 1
      %v3467 = vsel %vm401, %v490, %v3466
      %v3468 = vrot.slane %v320, 1
      %v3469 = vsel %vm401, %v495, %v3468
      %v3470 = vrot.slane %v324, 1
      %v3471 = vsel %vm401, %v500, %v3470
      %v3472 = vrot.slane %v328, 1
      %v3473 = vsel %vm401, %v1462, %v3472
      %v3474 = vrot.slane %v332, 1
      %v3475 = vsel %vm401, %v1467, %v3474
      %v3476 = vrot.slane %v336, 1
      %v3477 = vsel %vm401, %v2957, %v3476
      %v3478 = vrot.slane %v340, 1
      %v3479 = vsel %vm401, %v2962, %v3478
      %v3508 = vmax.f32 %v3388, %v2948
      %v3509 = vmax.f32 %v3389, %v3425
      %v3510 = vmax.f32 %v3390, %v2953
      %v3511 = vmax.f32 %v3391, %v3427
      %v3512 = vmax.f32 %v3392, %v1453
      %v3513 = vmax.f32 %v2477, %v3429
      %v3514 = vmax.f32 %v3393, %v1458
      %v3515 = vmax.f32 %v2480, %v3431
      %v3516 = vmax.f32 %v3394, %v406
      %v3517 = vmax.f32 %v2483, %v3433
      %v3518 = vmax.f32 %v3395, %v411
      %v3519 = vmax.f32 %v2486, %v3435
      %v3520 = vmax.f32 %v3396, %v416
      %v3521 = vmax.f32 %v2489, %v3437
      %v3522 = vmax.f32 %v3397, %v421
      %v3523 = vmax.f32 %v2492, %v3439
      %v3524 = vmax.f32 %v3398, %v426
      %v3525 = vmax.f32 %v2495, %v3441
      %v3526 = vmax.f32 %v3399, %v431
      %v3527 = vmax.f32 %v2498, %v3443
      %v3528 = vmax.f32 %v3400, %v436
      %v3529 = vmax.f32 %v2501, %v3445
      %v3530 = vmax.f32 %v3401, %v441
      %v3531 = vmax.f32 %v2504, %v3447
      %v3532 = vmax.f32 %v3402, %v446
      %v3533 = vmax.f32 %v2507, %v3449
      %v3534 = vmax.f32 %v3403, %v451
      %v3535 = vmax.f32 %v2510, %v3451
      %v3536 = vmax.f32 %v3404, %v456
      %v3537 = vmax.f32 %v2513, %v3453
      %v3538 = vmax.f32 %v3405, %v461
      %v3539 = vmax.f32 %v2516, %v3455
      %v3540 = vmax.f32 %v3406, %v466
      %v3541 = vmax.f32 %v2519, %v3457
      %v3542 = vmax.f32 %v3407, %v471
      %v3543 = vmax.f32 %v2522, %v3459
      %v3544 = vmax.f32 %v3408, %v476
      %v3545 = vmax.f32 %v2525, %v3461
      %v3546 = vmax.f32 %v3409, %v481
      %v3547 = vmax.f32 %v2528, %v3463
      %v3548 = vmax.f32 %v3410, %v486
      %v3549 = vmax.f32 %v2531, %v3465
      %v3550 = vmax.f32 %v3411, %v491
      %v3551 = vmax.f32 %v2534, %v3467
      %v3552 = vmax.f32 %v3412, %v496
      %v3553 = vmax.f32 %v2537, %v3469
      %v3554 = vmax.f32 %v3413, %v501
      %v3555 = vmax.f32 %v2540, %v3471
      %v3556 = vmax.f32 %v3414, %v1463
      %v3557 = vmax.f32 %v2543, %v3473
      %v3558 = vmax.f32 %v3415, %v1468
      %v3559 = vmax.f32 %v2546, %v3475
      %v3560 = vmax.f32 %v3416, %v2958
      %v3561 = vmax.f32 %v3417, %v3477
      %v3562 = vmax.f32 %v3418, %v2963
      %v3563 = vmax.f32 %v3419, %v3479
      %v3564 = vrot.slane %v232, 2
      %v3565 = vsel %vm622, %v2983, %v3564
      %v3566 = vrot.slane %v236, 2
      %v3567 = vsel %vm622, %v2988, %v3566
      %v3568 = vrot.slane %v240, 2
      %v3569 = vsel %vm622, %v1496, %v3568
      %v3570 = vrot.slane %v244, 2
      %v3571 = vsel %vm622, %v1501, %v3570
      %v3572 = vrot.slane %v248, 2
      %v3573 = vsel %vm622, %v626, %v3572
      %v3574 = vrot.slane %v252, 2
      %v3575 = vsel %vm622, %v631, %v3574
      %v3576 = vrot.slane %v256, 2
      %v3577 = vsel %vm622, %v636, %v3576
      %v3578 = vrot.slane %v260, 2
      %v3579 = vsel %vm622, %v641, %v3578
      %v3580 = vrot.slane %v264, 2
      %v3581 = vsel %vm622, %v646, %v3580
      %v3582 = vrot.slane %v268, 2
      %v3583 = vsel %vm622, %v651, %v3582
      %v3584 = vrot.slane %v272, 2
      %v3585 = vsel %vm622, %v656, %v3584
      %v3586 = vrot.slane %v276, 2
      %v3587 = vsel %vm622, %v661, %v3586
      %v3588 = vrot.slane %v280, 2
      %v3589 = vsel %vm622, %v666, %v3588
      %v3590 = vrot.slane %v284, 2
      %v3591 = vsel %vm622, %v671, %v3590
      %v3592 = vrot.slane %v288, 2
      %v3593 = vsel %vm622, %v676, %v3592
      %v3594 = vrot.slane %v292, 2
      %v3595 = vsel %vm622, %v681, %v3594
      %v3596 = vrot.slane %v296, 2
      %v3597 = vsel %vm622, %v686, %v3596
      %v3598 = vrot.slane %v300, 2
      %v3599 = vsel %vm622, %v691, %v3598
      %v3600 = vrot.slane %v304, 2
      %v3601 = vsel %vm622, %v696, %v3600
      %v3602 = vrot.slane %v308, 2
      %v3603 = vsel %vm622, %v701, %v3602
      %v3604 = vrot.slane %v312, 2
      %v3605 = vsel %vm622, %v706, %v3604
      %v3606 = vrot.slane %v316, 2
      %v3607 = vsel %vm622, %v711, %v3606
      %v3608 = vrot.slane %v320, 2
      %v3609 = vsel %vm622, %v716, %v3608
      %v3610 = vrot.slane %v324, 2
      %v3611 = vsel %vm622, %v721, %v3610
      %v3612 = vrot.slane %v328, 2
      %v3613 = vsel %vm622, %v1506, %v3612
      %v3614 = vrot.slane %v332, 2
      %v3615 = vsel %vm622, %v1511, %v3614
      %v3616 = vrot.slane %v336, 2
      %v3617 = vsel %vm622, %v2993, %v3616
      %v3618 = vrot.slane %v340, 2
      %v3619 = vsel %vm622, %v2998, %v3618
      %v3648 = vmax.f32 %v3508, %v2984
      %v3649 = vmax.f32 %v3509, %v3565
      %v3650 = vmax.f32 %v3510, %v2989
      %v3651 = vmax.f32 %v3511, %v3567
      %v3652 = vmax.f32 %v3512, %v1497
      %v3653 = vmax.f32 %v3513, %v3569
      %v3654 = vmax.f32 %v3514, %v1502
      %v3655 = vmax.f32 %v3515, %v3571
      %v3656 = vmax.f32 %v3516, %v627
      %v3657 = vmax.f32 %v3517, %v3573
      %v3658 = vmax.f32 %v3518, %v632
      %v3659 = vmax.f32 %v3519, %v3575
      %v3660 = vmax.f32 %v3520, %v637
      %v3661 = vmax.f32 %v3521, %v3577
      %v3662 = vmax.f32 %v3522, %v642
      %v3663 = vmax.f32 %v3523, %v3579
      %v3664 = vmax.f32 %v3524, %v647
      %v3665 = vmax.f32 %v3525, %v3581
      %v3666 = vmax.f32 %v3526, %v652
      %v3667 = vmax.f32 %v3527, %v3583
      %v3668 = vmax.f32 %v3528, %v657
      %v3669 = vmax.f32 %v3529, %v3585
      %v3670 = vmax.f32 %v3530, %v662
      %v3671 = vmax.f32 %v3531, %v3587
      %v3672 = vmax.f32 %v3532, %v667
      %v3673 = vmax.f32 %v3533, %v3589
      %v3674 = vmax.f32 %v3534, %v672
      %v3675 = vmax.f32 %v3535, %v3591
      %v3676 = vmax.f32 %v3536, %v677
      %v3677 = vmax.f32 %v3537, %v3593
      %v3678 = vmax.f32 %v3538, %v682
      %v3679 = vmax.f32 %v3539, %v3595
      %v3680 = vmax.f32 %v3540, %v687
      %v3681 = vmax.f32 %v3541, %v3597
      %v3682 = vmax.f32 %v3542, %v692
      %v3683 = vmax.f32 %v3543, %v3599
      %v3684 = vmax.f32 %v3544, %v697
      %v3685 = vmax.f32 %v3545, %v3601
      %v3686 = vmax.f32 %v3546, %v702
      %v3687 = vmax.f32 %v3547, %v3603
      %v3688 = vmax.f32 %v3548, %v707
      %v3689 = vmax.f32 %v3549, %v3605
      %v3690 = vmax.f32 %v3550, %v712
      %v3691 = vmax.f32 %v3551, %v3607
      %v3692 = vmax.f32 %v3552, %v717
      %v3693 = vmax.f32 %v3553, %v3609
      %v3694 = vmax.f32 %v3554, %v722
      %v3695 = vmax.f32 %v3555, %v3611
      %v3696 = vmax.f32 %v3556, %v1507
      %v3697 = vmax.f32 %v3557, %v3613
      %v3698 = vmax.f32 %v3558, %v1512
      %v3699 = vmax.f32 %v3559, %v3615
      %v3700 = vmax.f32 %v3560, %v2994
      %v3701 = vmax.f32 %v3561, %v3617
      %v3702 = vmax.f32 %v3562, %v2999
      %v3703 = vmax.f32 %v3563, %v3619
      %v3704 = vrot.slane %v232, 3
      %v3705 = vsel %vm843, %v3019, %v3704
      %v3706 = vrot.slane %v236, 3
      %v3707 = vsel %vm843, %v3024, %v3706
      %v3708 = vrot.slane %v240, 3
      %v3709 = vsel %vm843, %v1540, %v3708
      %v3710 = vrot.slane %v244, 3
      %v3711 = vsel %vm843, %v1545, %v3710
      %v3712 = vrot.slane %v248, 3
      %v3713 = vsel %vm843, %v847, %v3712
      %v3714 = vrot.slane %v252, 3
      %v3715 = vsel %vm843, %v852, %v3714
      %v3716 = vrot.slane %v256, 3
      %v3717 = vsel %vm843, %v857, %v3716
      %v3718 = vrot.slane %v260, 3
      %v3719 = vsel %vm843, %v862, %v3718
      %v3720 = vrot.slane %v264, 3
      %v3721 = vsel %vm843, %v867, %v3720
      %v3722 = vrot.slane %v268, 3
      %v3723 = vsel %vm843, %v872, %v3722
      %v3724 = vrot.slane %v272, 3
      %v3725 = vsel %vm843, %v877, %v3724
      %v3726 = vrot.slane %v276, 3
      %v3727 = vsel %vm843, %v882, %v3726
      %v3728 = vrot.slane %v280, 3
      %v3729 = vsel %vm843, %v887, %v3728
      %v3730 = vrot.slane %v284, 3
      %v3731 = vsel %vm843, %v892, %v3730
      %v3732 = vrot.slane %v288, 3
      %v3733 = vsel %vm843, %v897, %v3732
      %v3734 = vrot.slane %v292, 3
      %v3735 = vsel %vm843, %v902, %v3734
      %v3736 = vrot.slane %v296, 3
      %v3737 = vsel %vm843, %v907, %v3736
      %v3738 = vrot.slane %v300, 3
      %v3739 = vsel %vm843, %v912, %v3738
      %v3740 = vrot.slane %v304, 3
      %v3741 = vsel %vm843, %v917, %v3740
      %v3742 = vrot.slane %v308, 3
      %v3743 = vsel %vm843, %v922, %v3742
      %v3744 = vrot.slane %v312, 3
      %v3745 = vsel %vm843, %v927, %v3744
      %v3746 = vrot.slane %v316, 3
      %v3747 = vsel %vm843, %v932, %v3746
      %v3748 = vrot.slane %v320, 3
      %v3749 = vsel %vm843, %v937, %v3748
      %v3750 = vrot.slane %v324, 3
      %v3751 = vsel %vm843, %v942, %v3750
      %v3752 = vrot.slane %v328, 3
      %v3753 = vsel %vm843, %v1550, %v3752
      %v3754 = vrot.slane %v332, 3
      %v3755 = vsel %vm843, %v1555, %v3754
      %v3756 = vrot.slane %v336, 3
      %v3757 = vsel %vm843, %v3029, %v3756
      %v3758 = vrot.slane %v340, 3
      %v3759 = vsel %vm843, %v3034, %v3758
      %v3788 = vmax.f32 %v3648, %v3020
      %v3789 = vmax.f32 %v3649, %v3705
      %v3790 = vmax.f32 %v3650, %v3025
      %v3791 = vmax.f32 %v3651, %v3707
      %v3792 = vmax.f32 %v3652, %v1541
      %v3793 = vmax.f32 %v3653, %v3709
      %v3794 = vmax.f32 %v3654, %v1546
      %v3795 = vmax.f32 %v3655, %v3711
      %v3796 = vmax.f32 %v3656, %v848
      %v3797 = vmax.f32 %v3657, %v3713
      %v3798 = vmax.f32 %v3658, %v853
      %v3799 = vmax.f32 %v3659, %v3715
      %v3800 = vmax.f32 %v3660, %v858
      %v3801 = vmax.f32 %v3661, %v3717
      %v3802 = vmax.f32 %v3662, %v863
      %v3803 = vmax.f32 %v3663, %v3719
      %v3804 = vmax.f32 %v3664, %v868
      %v3805 = vmax.f32 %v3665, %v3721
      %v3806 = vmax.f32 %v3666, %v873
      %v3807 = vmax.f32 %v3667, %v3723
      %v3808 = vmax.f32 %v3668, %v878
      %v3809 = vmax.f32 %v3669, %v3725
      %v3810 = vmax.f32 %v3670, %v883
      %v3811 = vmax.f32 %v3671, %v3727
      %v3812 = vmax.f32 %v3672, %v888
      %v3813 = vmax.f32 %v3673, %v3729
      %v3814 = vmax.f32 %v3674, %v893
      %v3815 = vmax.f32 %v3675, %v3731
      %v3816 = vmax.f32 %v3676, %v898
      %v3817 = vmax.f32 %v3677, %v3733
      %v3818 = vmax.f32 %v3678, %v903
      %v3819 = vmax.f32 %v3679, %v3735
      %v3820 = vmax.f32 %v3680, %v908
      %v3821 = vmax.f32 %v3681, %v3737
      %v3822 = vmax.f32 %v3682, %v913
      %v3823 = vmax.f32 %v3683, %v3739
      %v3824 = vmax.f32 %v3684, %v918
      %v3825 = vmax.f32 %v3685, %v3741
      %v3826 = vmax.f32 %v3686, %v923
      %v3827 = vmax.f32 %v3687, %v3743
      %v3828 = vmax.f32 %v3688, %v928
      %v3829 = vmax.f32 %v3689, %v3745
      %v3830 = vmax.f32 %v3690, %v933
      %v3831 = vmax.f32 %v3691, %v3747
      %v3832 = vmax.f32 %v3692, %v938
      %v3833 = vmax.f32 %v3693, %v3749
      %v3834 = vmax.f32 %v3694, %v943
      %v3835 = vmax.f32 %v3695, %v3751
      %v3836 = vmax.f32 %v3696, %v1551
      %v3837 = vmax.f32 %v3697, %v3753
      %v3838 = vmax.f32 %v3698, %v1556
      %v3839 = vmax.f32 %v3699, %v3755
      %v3840 = vmax.f32 %v3700, %v3030
      %v3841 = vmax.f32 %v3701, %v3757
      %v3842 = vmax.f32 %v3702, %v3035
      %v3843 = vmax.f32 %v3703, %v3759
      %v3844 = vrot.slane %v232, 4
      %v3845 = vsel %vm1064, %v3055, %v3844
      %v3846 = vrot.slane %v236, 4
      %v3847 = vsel %vm1064, %v3060, %v3846
      %v3848 = vrot.slane %v240, 4
      %v3849 = vsel %vm1064, %v1584, %v3848
      %v3850 = vrot.slane %v244, 4
      %v3851 = vsel %vm1064, %v1589, %v3850
      %v3852 = vrot.slane %v248, 4
      %v3853 = vsel %vm1064, %v1066, %v3852
      %v3854 = vrot.slane %v252, 4
      %v3855 = vsel %vm1064, %v1069, %v3854
      %v3856 = vrot.slane %v256, 4
      %v3857 = vsel %vm1064, %v1072, %v3856
      %v3858 = vrot.slane %v260, 4
      %v3859 = vsel %vm1064, %v1075, %v3858
      %v3860 = vrot.slane %v264, 4
      %v3861 = vsel %vm1064, %v1078, %v3860
      %v3862 = vrot.slane %v268, 4
      %v3863 = vsel %vm1064, %v1081, %v3862
      %v3864 = vrot.slane %v272, 4
      %v3865 = vsel %vm1064, %v1084, %v3864
      %v3866 = vrot.slane %v276, 4
      %v3867 = vsel %vm1064, %v1087, %v3866
      %v3868 = vrot.slane %v280, 4
      %v3869 = vsel %vm1064, %v1090, %v3868
      %v3870 = vrot.slane %v284, 4
      %v3871 = vsel %vm1064, %v1093, %v3870
      %v3872 = vrot.slane %v288, 4
      %v3873 = vsel %vm1064, %v1096, %v3872
      %v3874 = vrot.slane %v292, 4
      %v3875 = vsel %vm1064, %v1099, %v3874
      %v3876 = vrot.slane %v296, 4
      %v3877 = vsel %vm1064, %v1102, %v3876
      %v3878 = vrot.slane %v300, 4
      %v3879 = vsel %vm1064, %v1105, %v3878
      %v3880 = vrot.slane %v304, 4
      %v3881 = vsel %vm1064, %v1108, %v3880
      %v3882 = vrot.slane %v308, 4
      %v3883 = vsel %vm1064, %v1111, %v3882
      %v3884 = vrot.slane %v312, 4
      %v3885 = vsel %vm1064, %v1114, %v3884
      %v3886 = vrot.slane %v316, 4
      %v3887 = vsel %vm1064, %v1117, %v3886
      %v3888 = vrot.slane %v320, 4
      %v3889 = vsel %vm1064, %v1120, %v3888
      %v3890 = vrot.slane %v324, 4
      %v3891 = vsel %vm1064, %v1123, %v3890
      %v3892 = vrot.slane %v328, 4
      %v3893 = vsel %vm1064, %v1634, %v3892
      %v3894 = vrot.slane %v332, 4
      %v3895 = vsel %vm1064, %v1639, %v3894
      %v3896 = vrot.slane %v336, 4
      %v3897 = vsel %vm1064, %v3065, %v3896
      %v3898 = vrot.slane %v340, 4
      %v3899 = vsel %vm1064, %v3070, %v3898
      %v3928 = vmax.f32 %v3788, %v3056
      %v3929 = vmax.f32 %v3789, %v3845
      %v3930 = vmax.f32 %v3790, %v3061
      %v3931 = vmax.f32 %v3791, %v3847
      %v3932 = vmax.f32 %v3792, %v1585
      %v3933 = vmax.f32 %v3793, %v3849
      %v3934 = vmax.f32 %v3794, %v1590
      %v3935 = vmax.f32 %v3795, %v3851
      %v3936 = vmax.f32 %v3796, %v1067
      %v3937 = vmax.f32 %v3797, %v3853
      %v3938 = vmax.f32 %v3798, %v1070
      %v3939 = vmax.f32 %v3799, %v3855
      %v3940 = vmax.f32 %v3800, %v1073
      %v3941 = vmax.f32 %v3801, %v3857
      %v3942 = vmax.f32 %v3802, %v1076
      %v3943 = vmax.f32 %v3803, %v3859
      %v3944 = vmax.f32 %v3804, %v1079
      %v3945 = vmax.f32 %v3805, %v3861
      %v3946 = vmax.f32 %v3806, %v1082
      %v3947 = vmax.f32 %v3807, %v3863
      %v3948 = vmax.f32 %v3808, %v1085
      %v3949 = vmax.f32 %v3809, %v3865
      %v3950 = vmax.f32 %v3810, %v1088
      %v3951 = vmax.f32 %v3811, %v3867
      %v3952 = vmax.f32 %v3812, %v1091
      %v3953 = vmax.f32 %v3813, %v3869
      %v3954 = vmax.f32 %v3814, %v1094
      %v3955 = vmax.f32 %v3815, %v3871
      %v3956 = vmax.f32 %v3816, %v1097
      %v3957 = vmax.f32 %v3817, %v3873
      %v3958 = vmax.f32 %v3818, %v1100
      %v3959 = vmax.f32 %v3819, %v3875
      %v3960 = vmax.f32 %v3820, %v1103
      %v3961 = vmax.f32 %v3821, %v3877
      %v3962 = vmax.f32 %v3822, %v1106
      %v3963 = vmax.f32 %v3823, %v3879
      %v3964 = vmax.f32 %v3824, %v1109
      %v3965 = vmax.f32 %v3825, %v3881
      %v3966 = vmax.f32 %v3826, %v1112
      %v3967 = vmax.f32 %v3827, %v3883
      %v3968 = vmax.f32 %v3828, %v1115
      %v3969 = vmax.f32 %v3829, %v3885
      %v3970 = vmax.f32 %v3830, %v1118
      %v3971 = vmax.f32 %v3831, %v3887
      %v3972 = vmax.f32 %v3832, %v1121
      %v3973 = vmax.f32 %v3833, %v3889
      %v3974 = vmax.f32 %v3834, %v1124
      %v3975 = vmax.f32 %v3835, %v3891
      %v3976 = vmax.f32 %v3836, %v1635
      %v3977 = vmax.f32 %v3837, %v3893
      %v3978 = vmax.f32 %v3838, %v1640
      %v3979 = vmax.f32 %v3839, %v3895
      %v3980 = vmax.f32 %v3840, %v3066
      %v3981 = vmax.f32 %v3841, %v3897
      %v3982 = vmax.f32 %v3842, %v3071
      %v3983 = vmax.f32 %v3843, %v3899
      %v3984 = vmax.f32 %v3928, %v3930
      %v3985 = vmax.f32 %v3929, %v3931
      %v3986 = vmax.f32 %v3930, %v3932
      %v3987 = vmax.f32 %v3931, %v3933
      %v3988 = vmax.f32 %v3932, %v3934
      %v3989 = vmax.f32 %v3933, %v3935
      %v3990 = vmax.f32 %v3934, %v3936
      %v3991 = vmax.f32 %v3935, %v3937
      %v3992 = vmax.f32 %v3936, %v3938
      %v3993 = vmax.f32 %v3937, %v3939
      %v3994 = vmax.f32 %v3938, %v3940
      %v3995 = vmax.f32 %v3939, %v3941
      %v3996 = vmax.f32 %v3940, %v3942
      %v3997 = vmax.f32 %v3941, %v3943
      %v3998 = vmax.f32 %v3942, %v3944
      %v3999 = vmax.f32 %v3943, %v3945
      %v4000 = vmax.f32 %v3944, %v3946
      %v4001 = vmax.f32 %v3945, %v3947
      %v4002 = vmax.f32 %v3946, %v3948
      %v4003 = vmax.f32 %v3947, %v3949
      %v4004 = vmax.f32 %v3948, %v3950
      %v4005 = vmax.f32 %v3949, %v3951
      %v4006 = vmax.f32 %v3950, %v3952
      %v4007 = vmax.f32 %v3951, %v3953
      %v4008 = vmax.f32 %v3952, %v3954
      %v4009 = vmax.f32 %v3953, %v3955
      %v4010 = vmax.f32 %v3954, %v3956
      %v4011 = vmax.f32 %v3955, %v3957
      %v4012 = vmax.f32 %v3956, %v3958
      %v4013 = vmax.f32 %v3957, %v3959
      %v4014 = vmax.f32 %v3958, %v3960
      %v4015 = vmax.f32 %v3959, %v3961
      %v4016 = vmax.f32 %v3984, %v3932
      %v4017 = vmax.f32 %v3985, %v3933
      %v4018 = vmax.f32 %v3986, %v3934
      %v4019 = vmax.f32 %v3987, %v3935
      %v4020 = vmax.f32 %v3988, %v3936
      %v4021 = vmax.f32 %v3989, %v3937
      %v4022 = vmax.f32 %v3990, %v3938
      %v4023 = vmax.f32 %v3991, %v3939
      %v4024 = vmax.f32 %v3992, %v3940
      %v4025 = vmax.f32 %v3993, %v3941
      %v4026 = vmax.f32 %v3994, %v3942
      %v4027 = vmax.f32 %v3995, %v3943
      %v4028 = vmax.f32 %v3996, %v3944
      %v4029 = vmax.f32 %v3997, %v3945
      %v4030 = vmax.f32 %v3998, %v3946
      %v4031 = vmax.f32 %v3999, %v3947
      %v4032 = vmax.f32 %v4000, %v3948
      %v4033 = vmax.f32 %v4001, %v3949
      %v4034 = vmax.f32 %v4002, %v3950
      %v4035 = vmax.f32 %v4003, %v3951
      %v4036 = vmax.f32 %v4004, %v3952
      %v4037 = vmax.f32 %v4005, %v3953
      %v4038 = vmax.f32 %v4006, %v3954
      %v4039 = vmax.f32 %v4007, %v3955
      %v4040 = vmax.f32 %v4008, %v3956
      %v4041 = vmax.f32 %v4009, %v3957
      %v4042 = vmax.f32 %v4010, %v3958
      %v4043 = vmax.f32 %v4011, %v3959
      %v4044 = vmax.f32 %v4012, %v3960
      %v4045 = vmax.f32 %v4013, %v3961
      %v4046 = vmax.f32 %v4014, %v3962
      %v4047 = vmax.f32 %v4015, %v3963
      %v4048 = vmax.f32 %v4016, %v3934
      %v4049 = vmax.f32 %v4017, %v3935
      %v4050 = vmax.f32 %v4018, %v3936
      %v4051 = vmax.f32 %v4019, %v3937
      %v4052 = vmax.f32 %v4020, %v3938
      %v4053 = vmax.f32 %v4021, %v3939
      %v4054 = vmax.f32 %v4022, %v3940
      %v4055 = vmax.f32 %v4023, %v3941
      %v4056 = vmax.f32 %v4024, %v3942
      %v4057 = vmax.f32 %v4025, %v3943
      %v4058 = vmax.f32 %v4026, %v3944
      %v4059 = vmax.f32 %v4027, %v3945
      %v4060 = vmax.f32 %v4028, %v3946
      %v4061 = vmax.f32 %v4029, %v3947
      %v4062 = vmax.f32 %v4030, %v3948
      %v4063 = vmax.f32 %v4031, %v3949
      %v4064 = vmax.f32 %v4032, %v3950
      %v4065 = vmax.f32 %v4033, %v3951
      %v4066 = vmax.f32 %v4034, %v3952
      %v4067 = vmax.f32 %v4035, %v3953
      %v4068 = vmax.f32 %v4036, %v3954
      %v4069 = vmax.f32 %v4037, %v3955
      %v4070 = vmax.f32 %v4038, %v3956
      %v4071 = vmax.f32 %v4039, %v3957
      %v4072 = vmax.f32 %v4040, %v3958
      %v4073 = vmax.f32 %v4041, %v3959
      %v4074 = vmax.f32 %v4042, %v3960
      %v4075 = vmax.f32 %v4043, %v3961
      %v4076 = vmax.f32 %v4044, %v3962
      %v4077 = vmax.f32 %v4045, %v3963
      %v4078 = vmax.f32 %v4046, %v3964
      %v4079 = vmax.f32 %v4047, %v3965
      %v4080 = vmax.f32 %v4048, %v3936
      %v4081 = vmax.f32 %v4049, %v3937
      %v4082 = vmax.f32 %v4050, %v3938
      %v4083 = vmax.f32 %v4051, %v3939
      %v4084 = vmax.f32 %v4052, %v3940
      %v4085 = vmax.f32 %v4053, %v3941
      %v4086 = vmax.f32 %v4054, %v3942
      %v4087 = vmax.f32 %v4055, %v3943
      %v4088 = vmax.f32 %v4056, %v3944
      %v4089 = vmax.f32 %v4057, %v3945
      %v4090 = vmax.f32 %v4058, %v3946
      %v4091 = vmax.f32 %v4059, %v3947
      %v4092 = vmax.f32 %v4060, %v3948
      %v4093 = vmax.f32 %v4061, %v3949
      %v4094 = vmax.f32 %v4062, %v3950
      %v4095 = vmax.f32 %v4063, %v3951
      %v4096 = vmax.f32 %v4064, %v3952
      %v4097 = vmax.f32 %v4065, %v3953
      %v4098 = vmax.f32 %v4066, %v3954
      %v4099 = vmax.f32 %v4067, %v3955
      %v4100 = vmax.f32 %v4068, %v3956
      %v4101 = vmax.f32 %v4069, %v3957
      %v4102 = vmax.f32 %v4070, %v3958
      %v4103 = vmax.f32 %v4071, %v3959
      %v4104 = vmax.f32 %v4072, %v3960
      %v4105 = vmax.f32 %v4073, %v3961
      %v4106 = vmax.f32 %v4074, %v3962
      %v4107 = vmax.f32 %v4075, %v3963
      %v4108 = vmax.f32 %v4076, %v3964
      %v4109 = vmax.f32 %v4077, %v3965
      %v4110 = vmax.f32 %v4078, %v3966
      %v4111 = vmax.f32 %v4079, %v3967
      %v4112 = vmax.f32 %v4080, %v3938
      %v4113 = vmax.f32 %v4081, %v3939
      %v4114 = vmax.f32 %v4082, %v3940
      %v4115 = vmax.f32 %v4083, %v3941
      %v4116 = vmax.f32 %v4084, %v3942
      %v4117 = vmax.f32 %v4085, %v3943
      %v4118 = vmax.f32 %v4086, %v3944
      %v4119 = vmax.f32 %v4087, %v3945
      %v4120 = vmax.f32 %v4088, %v3946
      %v4121 = vmax.f32 %v4089, %v3947
      %v4122 = vmax.f32 %v4090, %v3948
      %v4123 = vmax.f32 %v4091, %v3949
      %v4124 = vmax.f32 %v4092, %v3950
      %v4125 = vmax.f32 %v4093, %v3951
      %v4126 = vmax.f32 %v4094, %v3952
      %v4127 = vmax.f32 %v4095, %v3953
      %v4128 = vmax.f32 %v4096, %v3954
      %v4129 = vmax.f32 %v4097, %v3955
      %v4130 = vmax.f32 %v4098, %v3956
      %v4131 = vmax.f32 %v4099, %v3957
      %v4132 = vmax.f32 %v4100, %v3958
      %v4133 = vmax.f32 %v4101, %v3959
      %v4134 = vmax.f32 %v4102, %v3960
      %v4135 = vmax.f32 %v4103, %v3961
      %v4136 = vmax.f32 %v4104, %v3962
      %v4137 = vmax.f32 %v4105, %v3963
      %v4138 = vmax.f32 %v4106, %v3964
      %v4139 = vmax.f32 %v4107, %v3965
      %v4140 = vmax.f32 %v4108, %v3966
      %v4141 = vmax.f32 %v4109, %v3967
      %v4142 = vmax.f32 %v4110, %v3968
      %v4143 = vmax.f32 %v4111, %v3969
      %v4144 = vmax.f32 %v4112, %v3940
      %v4145 = vmax.f32 %v4113, %v3941
      %v4146 = vmax.f32 %v4114, %v3942
      %v4147 = vmax.f32 %v4115, %v3943
      %v4148 = vmax.f32 %v4116, %v3944
      %v4149 = vmax.f32 %v4117, %v3945
      %v4150 = vmax.f32 %v4118, %v3946
      %v4151 = vmax.f32 %v4119, %v3947
      %v4152 = vmax.f32 %v4120, %v3948
      %v4153 = vmax.f32 %v4121, %v3949
      %v4154 = vmax.f32 %v4122, %v3950
      %v4155 = vmax.f32 %v4123, %v3951
      %v4156 = vmax.f32 %v4124, %v3952
      %v4157 = vmax.f32 %v4125, %v3953
      %v4158 = vmax.f32 %v4126, %v3954
      %v4159 = vmax.f32 %v4127, %v3955
      %v4160 = vmax.f32 %v4128, %v3956
      %v4161 = vmax.f32 %v4129, %v3957
      %v4162 = vmax.f32 %v4130, %v3958
      %v4163 = vmax.f32 %v4131, %v3959
      %v4164 = vmax.f32 %v4132, %v3960
      %v4165 = vmax.f32 %v4133, %v3961
      %v4166 = vmax.f32 %v4134, %v3962
      %v4167 = vmax.f32 %v4135, %v3963
      %v4168 = vmax.f32 %v4136, %v3964
      %v4169 = vmax.f32 %v4137, %v3965
      %v4170 = vmax.f32 %v4138, %v3966
      %v4171 = vmax.f32 %v4139, %v3967
      %v4172 = vmax.f32 %v4140, %v3968
      %v4173 = vmax.f32 %v4141, %v3969
      %v4174 = vmax.f32 %v4142, %v3970
      %v4175 = vmax.f32 %v4143, %v3971
      %v4176 = vmax.f32 %v4144, %v3942
      %v4177 = vmax.f32 %v4145, %v3943
      %v4178 = vmax.f32 %v4146, %v3944
      %v4179 = vmax.f32 %v4147, %v3945
      %v4180 = vmax.f32 %v4148, %v3946
      %v4181 = vmax.f32 %v4149, %v3947
      %v4182 = vmax.f32 %v4150, %v3948
      %v4183 = vmax.f32 %v4151, %v3949
      %v4184 = vmax.f32 %v4152, %v3950
      %v4185 = vmax.f32 %v4153, %v3951
      %v4186 = vmax.f32 %v4154, %v3952
      %v4187 = vmax.f32 %v4155, %v3953
      %v4188 = vmax.f32 %v4156, %v3954
      %v4189 = vmax.f32 %v4157, %v3955
      %v4190 = vmax.f32 %v4158, %v3956
      %v4191 = vmax.f32 %v4159, %v3957
      %v4192 = vmax.f32 %v4160, %v3958
      %v4193 = vmax.f32 %v4161, %v3959
      %v4194 = vmax.f32 %v4162, %v3960
      %v4195 = vmax.f32 %v4163, %v3961
      %v4196 = vmax.f32 %v4164, %v3962
      %v4197 = vmax.f32 %v4165, %v3963
      %v4198 = vmax.f32 %v4166, %v3964
      %v4199 = vmax.f32 %v4167, %v3965
      %v4200 = vmax.f32 %v4168, %v3966
      %v4201 = vmax.f32 %v4169, %v3967
      %v4202 = vmax.f32 %v4170, %v3968
      %v4203 = vmax.f32 %v4171, %v3969
      %v4204 = vmax.f32 %v4172, %v3970
      %v4205 = vmax.f32 %v4173, %v3971
      %v4206 = vmax.f32 %v4174, %v3972
      %v4207 = vmax.f32 %v4175, %v3973
      %v4208 = vmax.f32 %v4176, %v3944
      %v4209 = vmax.f32 %v4177, %v3945
      %v4210 = vmax.f32 %v4178, %v3946
      %v4211 = vmax.f32 %v4179, %v3947
      %v4212 = vmax.f32 %v4180, %v3948
      %v4213 = vmax.f32 %v4181, %v3949
      %v4214 = vmax.f32 %v4182, %v3950
      %v4215 = vmax.f32 %v4183, %v3951
      %v4216 = vmax.f32 %v4184, %v3952
      %v4217 = vmax.f32 %v4185, %v3953
      %v4218 = vmax.f32 %v4186, %v3954
      %v4219 = vmax.f32 %v4187, %v3955
      %v4220 = vmax.f32 %v4188, %v3956
      %v4221 = vmax.f32 %v4189, %v3957
      %v4222 = vmax.f32 %v4190, %v3958
      %v4223 = vmax.f32 %v4191, %v3959
      %v4224 = vmax.f32 %v4192, %v3960
      %v4225 = vmax.f32 %v4193, %v3961
      %v4226 = vmax.f32 %v4194, %v3962
      %v4227 = vmax.f32 %v4195, %v3963
      %v4228 = vmax.f32 %v4196, %v3964
      %v4229 = vmax.f32 %v4197, %v3965
      %v4230 = vmax.f32 %v4198, %v3966
      %v4231 = vmax.f32 %v4199, %v3967
      %v4232 = vmax.f32 %v4200, %v3968
      %v4233 = vmax.f32 %v4201, %v3969
      %v4234 = vmax.f32 %v4202, %v3970
      %v4235 = vmax.f32 %v4203, %v3971
      %v4236 = vmax.f32 %v4204, %v3972
      %v4237 = vmax.f32 %v4205, %v3973
      %v4238 = vmax.f32 %v4206, %v3974
      %v4239 = vmax.f32 %v4207, %v3975
      %v4240 = vmax.f32 %v4208, %v3946
      %v4241 = vmax.f32 %v4209, %v3947
      %v4242 = vmax.f32 %v4210, %v3948
      %v4243 = vmax.f32 %v4211, %v3949
      %v4244 = vmax.f32 %v4212, %v3950
      %v4245 = vmax.f32 %v4213, %v3951
      %v4246 = vmax.f32 %v4214, %v3952
      %v4247 = vmax.f32 %v4215, %v3953
      %v4248 = vmax.f32 %v4216, %v3954
      %v4249 = vmax.f32 %v4217, %v3955
      %v4250 = vmax.f32 %v4218, %v3956
      %v4251 = vmax.f32 %v4219, %v3957
      %v4252 = vmax.f32 %v4220, %v3958
      %v4253 = vmax.f32 %v4221, %v3959
      %v4254 = vmax.f32 %v4222, %v3960
      %v4255 = vmax.f32 %v4223, %v3961
      %v4256 = vmax.f32 %v4224, %v3962
      %v4257 = vmax.f32 %v4225, %v3963
      %v4258 = vmax.f32 %v4226, %v3964
      %v4259 = vmax.f32 %v4227, %v3965
      %v4260 = vmax.f32 %v4228, %v3966
      %v4261 = vmax.f32 %v4229, %v3967
      %v4262 = vmax.f32 %v4230, %v3968
      %v4263 = vmax.f32 %v4231, %v3969
      %v4264 = vmax.f32 %v4232, %v3970
      %v4265 = vmax.f32 %v4233, %v3971
      %v4266 = vmax.f32 %v4234, %v3972
      %v4267 = vmax.f32 %v4235, %v3973
      %v4268 = vmax.f32 %v4236, %v3974
      %v4269 = vmax.f32 %v4237, %v3975
      %v4270 = vmax.f32 %v4238, %v3976
      %v4271 = vmax.f32 %v4239, %v3977
      %v4272 = vmax.f32 %v4240, %v3948
      %v4273 = vmax.f32 %v4241, %v3949
      %v4274 = vmax.f32 %v4242, %v3950
      %v4275 = vmax.f32 %v4243, %v3951
      %v4276 = vmax.f32 %v4244, %v3952
      %v4277 = vmax.f32 %v4245, %v3953
      %v4278 = vmax.f32 %v4246, %v3954
      %v4279 = vmax.f32 %v4247, %v3955
      %v4280 = vmax.f32 %v4248, %v3956
      %v4281 = vmax.f32 %v4249, %v3957
      %v4282 = vmax.f32 %v4250, %v3958
      %v4283 = vmax.f32 %v4251, %v3959
      %v4284 = vmax.f32 %v4252, %v3960
      %v4285 = vmax.f32 %v4253, %v3961
      %v4286 = vmax.f32 %v4254, %v3962
      %v4287 = vmax.f32 %v4255, %v3963
      %v4288 = vmax.f32 %v4256, %v3964
      %v4289 = vmax.f32 %v4257, %v3965
      %v4290 = vmax.f32 %v4258, %v3966
      %v4291 = vmax.f32 %v4259, %v3967
      %v4292 = vmax.f32 %v4260, %v3968
      %v4293 = vmax.f32 %v4261, %v3969
      %v4294 = vmax.f32 %v4262, %v3970
      %v4295 = vmax.f32 %v4263, %v3971
      %v4296 = vmax.f32 %v4264, %v3972
      %v4297 = vmax.f32 %v4265, %v3973
      %v4298 = vmax.f32 %v4266, %v3974
      %v4299 = vmax.f32 %v4267, %v3975
      %v4300 = vmax.f32 %v4268, %v3976
      %v4301 = vmax.f32 %v4269, %v3977
      %v4302 = vmax.f32 %v4270, %v3978
      %v4303 = vmax.f32 %v4271, %v3979
      %v4304 = vmax.f32 %v4272, %v3950
      %v4305 = vmax.f32 %v4273, %v3951
      %v4306 = vmax.f32 %v4274, %v3952
      %v4307 = vmax.f32 %v4275, %v3953
      %v4308 = vmax.f32 %v4276, %v3954
      %v4309 = vmax.f32 %v4277, %v3955
      %v4310 = vmax.f32 %v4278, %v3956
      %v4311 = vmax.f32 %v4279, %v3957
      %v4312 = vmax.f32 %v4280, %v3958
      %v4313 = vmax.f32 %v4281, %v3959
      %v4314 = vmax.f32 %v4282, %v3960
      %v4315 = vmax.f32 %v4283, %v3961
      %v4316 = vmax.f32 %v4284, %v3962
      %v4317 = vmax.f32 %v4285, %v3963
      %v4318 = vmax.f32 %v4286, %v3964
      %v4319 = vmax.f32 %v4287, %v3965
      %v4320 = vmax.f32 %v4288, %v3966
      %v4321 = vmax.f32 %v4289, %v3967
      %v4322 = vmax.f32 %v4290, %v3968
      %v4323 = vmax.f32 %v4291, %v3969
      %v4324 = vmax.f32 %v4292, %v3970
      %v4325 = vmax.f32 %v4293, %v3971
      %v4326 = vmax.f32 %v4294, %v3972
      %v4327 = vmax.f32 %v4295, %v3973
      %v4328 = vmax.f32 %v4296, %v3974
      %v4329 = vmax.f32 %v4297, %v3975
      %v4330 = vmax.f32 %v4298, %v3976
      %v4331 = vmax.f32 %v4299, %v3977
      %v4332 = vmax.f32 %v4300, %v3978
      %v4333 = vmax.f32 %v4301, %v3979
      %v4334 = vmax.f32 %v4302, %v3980
      %v4335 = vmax.f32 %v4303, %v3981
      %v4336 = vmax.f32 %v4304, %v3952
      %v4337 = vmax.f32 %v4305, %v3953
      %v4338 = vmax.f32 %v4306, %v3954
      %v4339 = vmax.f32 %v4307, %v3955
      %v4340 = vmax.f32 %v4308, %v3956
      %v4341 = vmax.f32 %v4309, %v3957
      %v4342 = vmax.f32 %v4310, %v3958
      %v4343 = vmax.f32 %v4311, %v3959
      %v4344 = vmax.f32 %v4312, %v3960
      %v4345 = vmax.f32 %v4313, %v3961
      %v4346 = vmax.f32 %v4314, %v3962
      %v4347 = vmax.f32 %v4315, %v3963
      %v4348 = vmax.f32 %v4316, %v3964
      %v4349 = vmax.f32 %v4317, %v3965
      %v4350 = vmax.f32 %v4318, %v3966
      %v4351 = vmax.f32 %v4319, %v3967
      %v4352 = vmax.f32 %v4320, %v3968
      %v4353 = vmax.f32 %v4321, %v3969
      %v4354 = vmax.f32 %v4322, %v3970
      %v4355 = vmax.f32 %v4323, %v3971
      %v4356 = vmax.f32 %v4324, %v3972
      %v4357 = vmax.f32 %v4325, %v3973
      %v4358 = vmax.f32 %v4326, %v3974
      %v4359 = vmax.f32 %v4327, %v3975
      %v4360 = vmax.f32 %v4328, %v3976
      %v4361 = vmax.f32 %v4329, %v3977
      %v4362 = vmax.f32 %v4330, %v3978
      %v4363 = vmax.f32 %v4331, %v3979
      %v4364 = vmax.f32 %v4332, %v3980
      %v4365 = vmax.f32 %v4333, %v3981
      %v4366 = vmax.f32 %v4334, %v3982
      %v4367 = vmax.f32 %v4335, %v3983
      %v4416 = vrot.slane %v1389, 6
      %v4417 = vrot.slane %v1390, 6
      %v4418 = vsel %vm1970, %v4416, %v4417
      %v4419 = vrot.slane %v1391, 6
      %v4420 = vsel %vm1970, %v4417, %v4419
      %v4421 = vrot.slane %v1392, 6
      %v4422 = vrot.slane %v1393, 6
      %v4423 = vsel %vm1970, %v4421, %v4422
      %v4424 = vrot.slane %v1394, 6
      %v4425 = vsel %vm1970, %v4422, %v4424
      %v4426 = vrot.slane %v1395, 6
      %v4427 = vrot.slane %v1396, 6
      %v4428 = vsel %vm1970, %v4426, %v4427
      %v4429 = vrot.slane %v1397, 6
      %v4430 = vsel %vm1970, %v4427, %v4429
      %v4431 = vrot.slane %v1398, 6
      %v4432 = vrot.slane %v1399, 6
      %v4433 = vsel %vm1970, %v4431, %v4432
      %v4434 = vrot.slane %v1400, 6
      %v4435 = vsel %vm1970, %v4432, %v4434
      %v4436 = vrot.slane %v1401, 6
      %v4437 = vrot.slane %v1402, 6
      %v4438 = vsel %vm1970, %v4436, %v4437
      %v4439 = vrot.slane %v1403, 6
      %v4440 = vsel %vm1970, %v4437, %v4439
      %v4441 = vrot.slane %v1404, 6
      %v4442 = vrot.slane %v1405, 6
      %v4443 = vsel %vm1970, %v4441, %v4442
      %v4444 = vrot.slane %v1406, 6
      %v4445 = vsel %vm1970, %v4442, %v4444
      %v4446 = vrot.slane %v1407, 6
      %v4447 = vrot.slane %v1408, 6
      %v4448 = vsel %vm1970, %v4446, %v4447
      %v4449 = vrot.slane %v1409, 6
      %v4450 = vsel %vm1970, %v4447, %v4449
      %v4451 = vrot.slane %v1410, 6
      %v4452 = vrot.slane %v1411, 6
      %v4453 = vsel %vm1970, %v4451, %v4452
      %v4454 = vrot.slane %v1412, 6
      %v4455 = vsel %vm1970, %v4452, %v4454
      %v4456 = vrot.slane %v1413, 6
      %v4457 = vrot.slane %v1414, 6
      %v4458 = vsel %vm1970, %v4456, %v4457
      %v4459 = vrot.slane %v1415, 6
      %v4460 = vsel %vm1970, %v4457, %v4459
      %v4461 = vrot.slane %v1416, 6
      %v4462 = vrot.slane %v1417, 6
      %v4463 = vsel %vm1970, %v4461, %v4462
      %v4464 = vrot.slane %v1418, 6
      %v4465 = vsel %vm1970, %v4462, %v4464
      %v4466 = vrot.slane %v1419, 6
      %v4467 = vrot.slane %v1420, 6
      %v4468 = vsel %vm1970, %v4466, %v4467
      %v4469 = vrot.slane %v1421, 6
      %v4470 = vsel %vm1970, %v4467, %v4469
      %v4471 = vrot.slane %v1422, 6
      %v4472 = vrot.slane %v1423, 6
      %v4473 = vsel %vm1970, %v4471, %v4472
      %v4474 = vrot.slane %v1424, 6
      %v4475 = vsel %vm1970, %v4472, %v4474
      %v4476 = vrot.slane %v1425, 6
      %v4477 = vrot.slane %v1426, 6
      %v4478 = vsel %vm1970, %v4476, %v4477
      %v4479 = vrot.slane %v1427, 6
      %v4480 = vsel %vm1970, %v4477, %v4479
      %v4481 = vrot.slane %v1428, 6
      %v4482 = vrot.slane %v1429, 6
      %v4483 = vsel %vm1970, %v4481, %v4482
      %v4484 = vrot.slane %v1430, 6
      %v4485 = vsel %vm1970, %v4482, %v4484
      %v4486 = vrot.slane %v1431, 6
      %v4487 = vrot.slane %v1432, 6
      %v4488 = vsel %vm1970, %v4486, %v4487
      %v4489 = vrot.slane %v1433, 6
      %v4490 = vsel %vm1970, %v4487, %v4489
      %v4491 = vrot.slane %v1434, 6
      %v4492 = vrot.slane %v1435, 6
      %v4493 = vsel %vm1970, %v4491, %v4492
      %v4494 = vrot.slane %v1436, 6
      %v4495 = vsel %vm1970, %v4492, %v4494
      %4496 = vrot.lane.b32.xlu0 %v4416, 2
      %v4497 = vpop.permute.xlu0 %4496
      %4498 = vrot.lane.b32.xlu0 %v4418, 2
      %v4499 = vpop.permute.xlu0 %4498
      %4500 = vrot.lane.b32.xlu0 %v4420, 2
      %v4501 = vpop.permute.xlu0 %4500
      %4502 = vrot.lane.b32.xlu0 %v4421, 2
      %v4503 = vpop.permute.xlu0 %4502
      %4504 = vrot.lane.b32.xlu0 %v4423, 2
      %v4505 = vpop.permute.xlu0 %4504
      %4506 = vrot.lane.b32.xlu0 %v4425, 2
      %v4507 = vpop.permute.xlu0 %4506
      %4508 = vrot.lane.b32.xlu0 %v4426, 2
      %v4509 = vpop.permute.xlu0 %4508
      %4510 = vrot.lane.b32.xlu0 %v4428, 2
      %v4511 = vpop.permute.xlu0 %4510
      %4512 = vrot.lane.b32.xlu0 %v4430, 2
      %v4513 = vpop.permute.xlu0 %4512
      %4514 = vrot.lane.b32.xlu0 %v4431, 2
      %v4515 = vpop.permute.xlu0 %4514
      %4516 = vrot.lane.b32.xlu0 %v4433, 2
      %v4517 = vpop.permute.xlu0 %4516
      %4518 = vrot.lane.b32.xlu0 %v4435, 2
      %v4519 = vpop.permute.xlu0 %4518
      %4520 = vrot.lane.b32.xlu0 %v4436, 2
      %v4521 = vpop.permute.xlu0 %4520
      %4522 = vrot.lane.b32.xlu0 %v4438, 2
      %v4523 = vpop.permute.xlu0 %4522
      %4524 = vrot.lane.b32.xlu0 %v4440, 2
      %v4525 = vpop.permute.xlu0 %4524
      %4526 = vrot.lane.b32.xlu0 %v4441, 2
      %v4527 = vpop.permute.xlu0 %4526
      %4528 = vrot.lane.b32.xlu0 %v4443, 2
      %v4529 = vpop.permute.xlu0 %4528
      %4530 = vrot.lane.b32.xlu0 %v4445, 2
      %v4531 = vpop.permute.xlu0 %4530
      %4532 = vrot.lane.b32.xlu0 %v4446, 2
      %v4533 = vpop.permute.xlu0 %4532
      %4534 = vrot.lane.b32.xlu0 %v4448, 2
      %v4535 = vpop.permute.xlu0 %4534
      %4536 = vrot.lane.b32.xlu0 %v4450, 2
      %v4537 = vpop.permute.xlu0 %4536
      %4538 = vrot.lane.b32.xlu0 %v4451, 2
      %v4539 = vpop.permute.xlu0 %4538
      %4540 = vrot.lane.b32.xlu0 %v4453, 2
      %v4541 = vpop.permute.xlu0 %4540
      %4542 = vrot.lane.b32.xlu0 %v4455, 2
      %v4543 = vpop.permute.xlu0 %4542
      %4544 = vrot.lane.b32.xlu0 %v4456, 2
      %v4545 = vpop.permute.xlu0 %4544
      %4546 = vrot.lane.b32.xlu0 %v4458, 2
      %v4547 = vpop.permute.xlu0 %4546
      %4548 = vrot.lane.b32.xlu0 %v4460, 2
      %v4549 = vpop.permute.xlu0 %4548
      %4550 = vrot.lane.b32.xlu0 %v4461, 2
      %v4551 = vpop.permute.xlu0 %4550
      %4552 = vrot.lane.b32.xlu0 %v4463, 2
      %v4553 = vpop.permute.xlu0 %4552
      %4554 = vrot.lane.b32.xlu0 %v4465, 2
      %v4555 = vpop.permute.xlu0 %4554
      %4556 = vrot.lane.b32.xlu0 %v4466, 2
      %v4557 = vpop.permute.xlu0 %4556
      %4558 = vrot.lane.b32.xlu0 %v4468, 2
      %v4559 = vpop.permute.xlu0 %4558
      %4560 = vrot.lane.b32.xlu0 %v4470, 2
      %v4561 = vpop.permute.xlu0 %4560
      %4562 = vrot.lane.b32.xlu0 %v4471, 2
      %v4563 = vpop.permute.xlu0 %4562
      %4564 = vrot.lane.b32.xlu0 %v4473, 2
      %v4565 = vpop.permute.xlu0 %4564
      %4566 = vrot.lane.b32.xlu0 %v4475, 2
      %v4567 = vpop.permute.xlu0 %4566
      %4568 = vrot.lane.b32.xlu0 %v4476, 2
      %v4569 = vpop.permute.xlu0 %4568
      %4570 = vrot.lane.b32.xlu0 %v4478, 2
      %v4571 = vpop.permute.xlu0 %4570
      %4572 = vrot.lane.b32.xlu0 %v4480, 2
      %v4573 = vpop.permute.xlu0 %4572
      %4574 = vrot.lane.b32.xlu0 %v4481, 2
      %v4575 = vpop.permute.xlu0 %4574
      %4576 = vrot.lane.b32.xlu0 %v4483, 2
      %v4577 = vpop.permute.xlu0 %4576
      %4578 = vrot.lane.b32.xlu0 %v4485, 2
      %v4579 = vpop.permute.xlu0 %4578
      %4580 = vrot.lane.b32.xlu0 %v4486, 2
      %v4581 = vpop.permute.xlu0 %4580
      %4582 = vrot.lane.b32.xlu0 %v4488, 2
      %v4583 = vpop.permute.xlu0 %4582
      %4584 = vrot.lane.b32.xlu0 %v4490, 2
      %v4585 = vpop.permute.xlu0 %4584
      %4586 = vrot.lane.b32.xlu0 %v4491, 2
      %v4587 = vpop.permute.xlu0 %4586
      %4588 = vrot.lane.b32.xlu0 %v4493, 2
      %v4589 = vpop.permute.xlu0 %4588
      %4590 = vrot.lane.b32.xlu0 %v4495, 2
      %v4591 = vpop.permute.xlu0 %4590
      %v4688 = vrot.slane %v2884, 4
      %v4689 = vrot.slane %v2885, 4
      %v4690 = vsel %vm1064, %v4688, %v4689
      %v4691 = vrot.slane %v2886, 4
      %v4692 = vsel %vm1064, %v4689, %v4691
      %v4693 = vrot.slane %v2887, 4
      %v4694 = vrot.slane %v2888, 4
      %v4695 = vsel %vm1064, %v4693, %v4694
      %v4696 = vrot.slane %v2889, 4
      %v4697 = vsel %vm1064, %v4694, %v4696
      %v4698 = vrot.slane %v2890, 4
      %v4699 = vrot.slane %v2891, 4
      %v4700 = vsel %vm1064, %v4698, %v4699
      %v4701 = vrot.slane %v2892, 4
      %v4702 = vsel %vm1064, %v4699, %v4701
      %v4703 = vrot.slane %v2893, 4
      %v4704 = vrot.slane %v2894, 4
      %v4705 = vsel %vm1064, %v4703, %v4704
      %v4706 = vrot.slane %v2895, 4
      %v4707 = vsel %vm1064, %v4704, %v4706
      %v4708 = vrot.slane %v2896, 4
      %v4709 = vrot.slane %v2897, 4
      %v4710 = vsel %vm1064, %v4708, %v4709
      %v4711 = vrot.slane %v2898, 4
      %v4712 = vsel %vm1064, %v4709, %v4711
      %v4713 = vrot.slane %v2899, 4
      %v4714 = vrot.slane %v2900, 4
      %v4715 = vsel %vm1064, %v4713, %v4714
      %v4716 = vrot.slane %v2901, 4
      %v4717 = vsel %vm1064, %v4714, %v4716
      %v4718 = vrot.slane %v2902, 4
      %v4719 = vrot.slane %v2903, 4
      %v4720 = vsel %vm1064, %v4718, %v4719
      %v4721 = vrot.slane %v2904, 4
      %v4722 = vsel %vm1064, %v4719, %v4721
      %v4723 = vrot.slane %v2905, 4
      %v4724 = vrot.slane %v2906, 4
      %v4725 = vsel %vm1064, %v4723, %v4724
      %v4726 = vrot.slane %v2907, 4
      %v4727 = vsel %vm1064, %v4724, %v4726
      %v4728 = vrot.slane %v2908, 4
      %v4729 = vrot.slane %v2909, 4
      %v4730 = vsel %vm1064, %v4728, %v4729
      %v4731 = vrot.slane %v2910, 4
      %v4732 = vsel %vm1064, %v4729, %v4731
      %v4733 = vrot.slane %v2911, 4
      %v4734 = vrot.slane %v2912, 4
      %v4735 = vsel %vm1064, %v4733, %v4734
      %v4736 = vrot.slane %v2913, 4
      %v4737 = vsel %vm1064, %v4734, %v4736
      %v4738 = vrot.slane %v2914, 4
      %v4739 = vrot.slane %v2915, 4
      %v4740 = vsel %vm1064, %v4738, %v4739
      %v4741 = vrot.slane %v2916, 4
      %v4742 = vsel %vm1064, %v4739, %v4741
      %v4743 = vrot.slane %v2917, 4
      %v4744 = vrot.slane %v2918, 4
      %v4745 = vsel %vm1064, %v4743, %v4744
      %v4746 = vrot.slane %v2919, 4
      %v4747 = vsel %vm1064, %v4744, %v4746
      %v4748 = vrot.slane %v2920, 4
      %v4749 = vrot.slane %v2921, 4
      %v4750 = vsel %vm1064, %v4748, %v4749
      %v4751 = vrot.slane %v2922, 4
      %v4752 = vsel %vm1064, %v4749, %v4751
      %v4753 = vrot.slane %v2923, 4
      %v4754 = vrot.slane %v2924, 4
      %v4755 = vsel %vm1064, %v4753, %v4754
      %v4756 = vrot.slane %v2925, 4
      %v4757 = vsel %vm1064, %v4754, %v4756
      %v4758 = vrot.slane %v2926, 4
      %v4759 = vrot.slane %v2927, 4
      %v4760 = vsel %vm1064, %v4758, %v4759
      %v4761 = vrot.slane %v2928, 4
      %v4762 = vsel %vm1064, %v4759, %v4761
      %v4763 = vrot.slane %v2929, 4
      %v4764 = vrot.slane %v2930, 4
      %v4765 = vsel %vm1064, %v4763, %v4764
      %v4766 = vrot.slane %v2931, 4
      %v4767 = vsel %vm1064, %v4764, %v4766
      %4768 = vrot.lane.b32.xlu0 %v4688, 4
      %v4769 = vpop.permute.xlu0 %4768
      %4770 = vrot.lane.b32.xlu0 %v4690, 4
      %v4771 = vpop.permute.xlu0 %4770
      %4772 = vrot.lane.b32.xlu0 %v4692, 4
      %v4773 = vpop.permute.xlu0 %4772
      %4774 = vrot.lane.b32.xlu0 %v4693, 4
      %v4775 = vpop.permute.xlu0 %4774
      %4776 = vrot.lane.b32.xlu0 %v4695, 4
      %v4777 = vpop.permute.xlu0 %4776
      %4778 = vrot.lane.b32.xlu0 %v4697, 4
      %v4779 = vpop.permute.xlu0 %4778
      %4780 = vrot.lane.b32.xlu0 %v4698, 4
      %v4781 = vpop.permute.xlu0 %4780
      %4782 = vrot.lane.b32.xlu0 %v4700, 4
      %v4783 = vpop.permute.xlu0 %4782
      %4784 = vrot.lane.b32.xlu0 %v4702, 4
      %v4785 = vpop.permute.xlu0 %4784
      %4786 = vrot.lane.b32.xlu0 %v4703, 4
      %v4787 = vpop.permute.xlu0 %4786
      %4788 = vrot.lane.b32.xlu0 %v4705, 4
      %v4789 = vpop.permute.xlu0 %4788
      %4790 = vrot.lane.b32.xlu0 %v4707, 4
      %v4791 = vpop.permute.xlu0 %4790
      %4792 = vrot.lane.b32.xlu0 %v4708, 4
      %v4793 = vpop.permute.xlu0 %4792
      %4794 = vrot.lane.b32.xlu0 %v4710, 4
      %v4795 = vpop.permute.xlu0 %4794
      %4796 = vrot.lane.b32.xlu0 %v4712, 4
      %v4797 = vpop.permute.xlu0 %4796
      %4798 = vrot.lane.b32.xlu0 %v4713, 4
      %v4799 = vpop.permute.xlu0 %4798
      %4800 = vrot.lane.b32.xlu0 %v4715, 4
      %v4801 = vpop.permute.xlu0 %4800
      %4802 = vrot.lane.b32.xlu0 %v4717, 4
      %v4803 = vpop.permute.xlu0 %4802
      %4804 = vrot.lane.b32.xlu0 %v4718, 4
      %v4805 = vpop.permute.xlu0 %4804
      %4806 = vrot.lane.b32.xlu0 %v4720, 4
      %v4807 = vpop.permute.xlu0 %4806
      %4808 = vrot.lane.b32.xlu0 %v4722, 4
      %v4809 = vpop.permute.xlu0 %4808
      %4810 = vrot.lane.b32.xlu0 %v4723, 4
      %v4811 = vpop.permute.xlu0 %4810
      %4812 = vrot.lane.b32.xlu0 %v4725, 4
      %v4813 = vpop.permute.xlu0 %4812
      %4814 = vrot.lane.b32.xlu0 %v4727, 4
      %v4815 = vpop.permute.xlu0 %4814
      %4816 = vrot.lane.b32.xlu0 %v4728, 4
      %v4817 = vpop.permute.xlu0 %4816
      %4818 = vrot.lane.b32.xlu0 %v4730, 4
      %v4819 = vpop.permute.xlu0 %4818
      %4820 = vrot.lane.b32.xlu0 %v4732, 4
      %v4821 = vpop.permute.xlu0 %4820
      %4822 = vrot.lane.b32.xlu0 %v4733, 4
      %v4823 = vpop.permute.xlu0 %4822
      %4824 = vrot.lane.b32.xlu0 %v4735, 4
      %v4825 = vpop.permute.xlu0 %4824
      %4826 = vrot.lane.b32.xlu0 %v4737, 4
      %v4827 = vpop.permute.xlu0 %4826
      %4828 = vrot.lane.b32.xlu0 %v4738, 4
      %v4829 = vpop.permute.xlu0 %4828
      %4830 = vrot.lane.b32.xlu0 %v4740, 4
      %v4831 = vpop.permute.xlu0 %4830
      %4832 = vrot.lane.b32.xlu0 %v4742, 4
      %v4833 = vpop.permute.xlu0 %4832
      %4834 = vrot.lane.b32.xlu0 %v4743, 4
      %v4835 = vpop.permute.xlu0 %4834
      %4836 = vrot.lane.b32.xlu0 %v4745, 4
      %v4837 = vpop.permute.xlu0 %4836
      %4838 = vrot.lane.b32.xlu0 %v4747, 4
      %v4839 = vpop.permute.xlu0 %4838
      %4840 = vrot.lane.b32.xlu0 %v4748, 4
      %v4841 = vpop.permute.xlu0 %4840
      %4842 = vrot.lane.b32.xlu0 %v4750, 4
      %v4843 = vpop.permute.xlu0 %4842
      %4844 = vrot.lane.b32.xlu0 %v4752, 4
      %v4845 = vpop.permute.xlu0 %4844
      %4846 = vrot.lane.b32.xlu0 %v4753, 4
      %v4847 = vpop.permute.xlu0 %4846
      %4848 = vrot.lane.b32.xlu0 %v4755, 4
      %v4849 = vpop.permute.xlu0 %4848
      %4850 = vrot.lane.b32.xlu0 %v4757, 4
      %v4851 = vpop.permute.xlu0 %4850
      %4852 = vrot.lane.b32.xlu0 %v4758, 4
      %v4853 = vpop.permute.xlu0 %4852
      %4854 = vrot.lane.b32.xlu0 %v4760, 4
      %v4855 = vpop.permute.xlu0 %4854
      %4856 = vrot.lane.b32.xlu0 %v4762, 4
      %v4857 = vpop.permute.xlu0 %4856
      %4858 = vrot.lane.b32.xlu0 %v4763, 4
      %v4859 = vpop.permute.xlu0 %4858
      %4860 = vrot.lane.b32.xlu0 %v4765, 4
      %v4861 = vpop.permute.xlu0 %4860
      %4862 = vrot.lane.b32.xlu0 %v4767, 4
      %v4863 = vpop.permute.xlu0 %4862
      %v4944 = vrot.slane %v4336, 2
      %v4945 = vrot.slane %v4337, 2
      %v4946 = vsel %vm622, %v4944, %v4945
      %v4947 = vrot.slane %v4338, 2
      %v4948 = vrot.slane %v4339, 2
      %v4949 = vsel %vm622, %v4947, %v4948
      %v4950 = vrot.slane %v4340, 2
      %v4951 = vrot.slane %v4341, 2
      %v4952 = vsel %vm622, %v4950, %v4951
      %v4953 = vrot.slane %v4342, 2
      %v4954 = vrot.slane %v4343, 2
      %v4955 = vsel %vm622, %v4953, %v4954
      %v4956 = vrot.slane %v4344, 2
      %v4957 = vrot.slane %v4345, 2
      %v4958 = vsel %vm622, %v4956, %v4957
      %v4959 = vrot.slane %v4346, 2
      %v4960 = vrot.slane %v4347, 2
      %v4961 = vsel %vm622, %v4959, %v4960
      %v4962 = vrot.slane %v4348, 2
      %v4963 = vrot.slane %v4349, 2
      %v4964 = vsel %vm622, %v4962, %v4963
      %v4965 = vrot.slane %v4350, 2
      %v4966 = vrot.slane %v4351, 2
      %v4967 = vsel %vm622, %v4965, %v4966
      %v4968 = vrot.slane %v4352, 2
      %v4969 = vrot.slane %v4353, 2
      %v4970 = vsel %vm622, %v4968, %v4969
      %v4971 = vrot.slane %v4354, 2
      %v4972 = vrot.slane %v4355, 2
      %v4973 = vsel %vm622, %v4971, %v4972
      %v4974 = vrot.slane %v4356, 2
      %v4975 = vrot.slane %v4357, 2
      %v4976 = vsel %vm622, %v4974, %v4975
      %v4977 = vrot.slane %v4358, 2
      %v4978 = vrot.slane %v4359, 2
      %v4979 = vsel %vm622, %v4977, %v4978
      %v4980 = vrot.slane %v4360, 2
      %v4981 = vrot.slane %v4361, 2
      %v4982 = vsel %vm622, %v4980, %v4981
      %v4983 = vrot.slane %v4362, 2
      %v4984 = vrot.slane %v4363, 2
      %v4985 = vsel %vm622, %v4983, %v4984
      %v4986 = vrot.slane %v4364, 2
      %v4987 = vrot.slane %v4365, 2
      %v4988 = vsel %vm622, %v4986, %v4987
      %v4989 = vrot.slane %v4366, 2
      %v4990 = vrot.slane %v4367, 2
      %v4991 = vsel %vm622, %v4989, %v4990
      %4992 = vrot.lane.b32.xlu0 %v4944, 6
      %v4993 = vpop.permute.xlu0 %4992
      %4994 = vrot.lane.b32.xlu0 %v4946, 6
      %v4995 = vpop.permute.xlu0 %4994
      %4996 = vrot.lane.b32.xlu0 %v4945, 6
      %v4997 = vpop.permute.xlu0 %4996
      %4998 = vrot.lane.b32.xlu0 %v4947, 6
      %v4999 = vpop.permute.xlu0 %4998
      %5000 = vrot.lane.b32.xlu0 %v4949, 6
      %v5001 = vpop.permute.xlu0 %5000
      %5002 = vrot.lane.b32.xlu0 %v4948, 6
      %v5003 = vpop.permute.xlu0 %5002
      %5004 = vrot.lane.b32.xlu0 %v4950, 6
      %v5005 = vpop.permute.xlu0 %5004
      %5006 = vrot.lane.b32.xlu0 %v4952, 6
      %v5007 = vpop.permute.xlu0 %5006
      %5008 = vrot.lane.b32.xlu0 %v4951, 6
      %v5009 = vpop.permute.xlu0 %5008
      %5010 = vrot.lane.b32.xlu0 %v4953, 6
      %v5011 = vpop.permute.xlu0 %5010
      %5012 = vrot.lane.b32.xlu0 %v4955, 6
      %v5013 = vpop.permute.xlu0 %5012
      %5014 = vrot.lane.b32.xlu0 %v4954, 6
      %v5015 = vpop.permute.xlu0 %5014
      %5016 = vrot.lane.b32.xlu0 %v4956, 6
      %v5017 = vpop.permute.xlu0 %5016
      %5018 = vrot.lane.b32.xlu0 %v4958, 6
      %v5019 = vpop.permute.xlu0 %5018
      %5020 = vrot.lane.b32.xlu0 %v4957, 6
      %v5021 = vpop.permute.xlu0 %5020
      %5022 = vrot.lane.b32.xlu0 %v4959, 6
      %v5023 = vpop.permute.xlu0 %5022
      %5024 = vrot.lane.b32.xlu0 %v4961, 6
      %v5025 = vpop.permute.xlu0 %5024
      %5026 = vrot.lane.b32.xlu0 %v4960, 6
      %v5027 = vpop.permute.xlu0 %5026
      %5028 = vrot.lane.b32.xlu0 %v4962, 6
      %v5029 = vpop.permute.xlu0 %5028
      %5030 = vrot.lane.b32.xlu0 %v4964, 6
      %v5031 = vpop.permute.xlu0 %5030
      %5032 = vrot.lane.b32.xlu0 %v4963, 6
      %v5033 = vpop.permute.xlu0 %5032
      %5034 = vrot.lane.b32.xlu0 %v4965, 6
      %v5035 = vpop.permute.xlu0 %5034
      %5036 = vrot.lane.b32.xlu0 %v4967, 6
      %v5037 = vpop.permute.xlu0 %5036
      %5038 = vrot.lane.b32.xlu0 %v4966, 6
      %v5039 = vpop.permute.xlu0 %5038
      %5040 = vrot.lane.b32.xlu0 %v4968, 6
      %v5041 = vpop.permute.xlu0 %5040
      %5042 = vrot.lane.b32.xlu0 %v4970, 6
      %v5043 = vpop.permute.xlu0 %5042
      %5044 = vrot.lane.b32.xlu0 %v4969, 6
      %v5045 = vpop.permute.xlu0 %5044
      %5046 = vrot.lane.b32.xlu0 %v4971, 6
      %v5047 = vpop.permute.xlu0 %5046
      %5048 = vrot.lane.b32.xlu0 %v4973, 6
      %v5049 = vpop.permute.xlu0 %5048
      %5050 = vrot.lane.b32.xlu0 %v4972, 6
      %v5051 = vpop.permute.xlu0 %5050
      %5052 = vrot.lane.b32.xlu0 %v4974, 6
      %v5053 = vpop.permute.xlu0 %5052
      %5054 = vrot.lane.b32.xlu0 %v4976, 6
      %v5055 = vpop.permute.xlu0 %5054
      %5056 = vrot.lane.b32.xlu0 %v4975, 6
      %v5057 = vpop.permute.xlu0 %5056
      %5058 = vrot.lane.b32.xlu0 %v4977, 6
      %v5059 = vpop.permute.xlu0 %5058
      %5060 = vrot.lane.b32.xlu0 %v4979, 6
      %v5061 = vpop.permute.xlu0 %5060
      %5062 = vrot.lane.b32.xlu0 %v4978, 6
      %v5063 = vpop.permute.xlu0 %5062
      %5064 = vrot.lane.b32.xlu0 %v4980, 6
      %v5065 = vpop.permute.xlu0 %5064
      %5066 = vrot.lane.b32.xlu0 %v4982, 6
      %v5067 = vpop.permute.xlu0 %5066
      %5068 = vrot.lane.b32.xlu0 %v4981, 6
      %v5069 = vpop.permute.xlu0 %5068
      %5070 = vrot.lane.b32.xlu0 %v4983, 6
      %v5071 = vpop.permute.xlu0 %5070
      %5072 = vrot.lane.b32.xlu0 %v4985, 6
      %v5073 = vpop.permute.xlu0 %5072
      %5074 = vrot.lane.b32.xlu0 %v4984, 6
      %v5075 = vpop.permute.xlu0 %5074
      %5076 = vrot.lane.b32.xlu0 %v4986, 6
      %v5077 = vpop.permute.xlu0 %5076
      %5078 = vrot.lane.b32.xlu0 %v4988, 6
      %v5079 = vpop.permute.xlu0 %5078
      %5080 = vrot.lane.b32.xlu0 %v4987, 6
      %v5081 = vpop.permute.xlu0 %5080
      %5082 = vrot.lane.b32.xlu0 %v4989, 6
      %v5083 = vpop.permute.xlu0 %5082
      %5084 = vrot.lane.b32.xlu0 %v4991, 6
      %v5085 = vpop.permute.xlu0 %5084
      %5086 = vrot.lane.b32.xlu0 %v4990, 6
      %v5087 = vpop.permute.xlu0 %5086
      %vm5136 = vcmask 15360
      %v5137 = vsel %vm5136, %v253, %v4497
      %v5138 = vsel %vm5136, %v254, %v4499
      %v5139 = vsel %vm5136, %v255, %v4501
      %v5140 = vsel %vm5136, %v257, %v4503
      %v5141 = vsel %vm5136, %v258, %v4505
      %v5142 = vsel %vm5136, %v259, %v4507
      %v5143 = vsel %vm5136, %v261, %v4509
      %v5144 = vsel %vm5136, %v262, %v4511
      %v5145 = vsel %vm5136, %v263, %v4513
      %v5146 = vsel %vm5136, %v265, %v4515
      %v5147 = vsel %vm5136, %v266, %v4517
      %v5148 = vsel %vm5136, %v267, %v4519
      %v5149 = vsel %vm5136, %v269, %v4521
      %v5150 = vsel %vm5136, %v270, %v4523
      %v5151 = vsel %vm5136, %v271, %v4525
      %v5152 = vsel %vm5136, %v273, %v4527
      %v5153 = vsel %vm5136, %v274, %v4529
      %v5154 = vsel %vm5136, %v275, %v4531
      %v5155 = vsel %vm5136, %v277, %v4533
      %v5156 = vsel %vm5136, %v278, %v4535
      %v5157 = vsel %vm5136, %v279, %v4537
      %v5158 = vsel %vm5136, %v281, %v4539
      %v5159 = vsel %vm5136, %v282, %v4541
      %v5160 = vsel %vm5136, %v283, %v4543
      %v5161 = vsel %vm5136, %v285, %v4545
      %v5162 = vsel %vm5136, %v286, %v4547
      %v5163 = vsel %vm5136, %v287, %v4549
      %v5164 = vsel %vm5136, %v289, %v4551
      %v5165 = vsel %vm5136, %v290, %v4553
      %v5166 = vsel %vm5136, %v291, %v4555
      %v5167 = vsel %vm5136, %v293, %v4557
      %v5168 = vsel %vm5136, %v294, %v4559
      %v5169 = vsel %vm5136, %v295, %v4561
      %v5170 = vsel %vm5136, %v297, %v4563
      %v5171 = vsel %vm5136, %v298, %v4565
      %v5172 = vsel %vm5136, %v299, %v4567
      %v5173 = vsel %vm5136, %v301, %v4569
      %v5174 = vsel %vm5136, %v302, %v4571
      %v5175 = vsel %vm5136, %v303, %v4573
      %v5176 = vsel %vm5136, %v305, %v4575
      %v5177 = vsel %vm5136, %v306, %v4577
      %v5178 = vsel %vm5136, %v307, %v4579
      %v5179 = vsel %vm5136, %v309, %v4581
      %v5180 = vsel %vm5136, %v310, %v4583
      %v5181 = vsel %vm5136, %v311, %v4585
      %v5182 = vsel %vm5136, %v313, %v4587
      %v5183 = vsel %vm5136, %v314, %v4589
      %v5184 = vsel %vm5136, %v315, %v4591
      %vm5185 = vcmask 31744
      %v5186 = vsel %vm5185, %v5137, %v4769
      %v5187 = vsel %vm5185, %v5138, %v4771
      %v5188 = vsel %vm5185, %v5139, %v4773
      %v5189 = vsel %vm5185, %v5140, %v4775
      %v5190 = vsel %vm5185, %v5141, %v4777
      %v5191 = vsel %vm5185, %v5142, %v4779
      %v5192 = vsel %vm5185, %v5143, %v4781
      %v5193 = vsel %vm5185, %v5144, %v4783
      %v5194 = vsel %vm5185, %v5145, %v4785
      %v5195 = vsel %vm5185, %v5146, %v4787
      %v5196 = vsel %vm5185, %v5147, %v4789
      %v5197 = vsel %vm5185, %v5148, %v4791
      %v5198 = vsel %vm5185, %v5149, %v4793
      %v5199 = vsel %vm5185, %v5150, %v4795
      %v5200 = vsel %vm5185, %v5151, %v4797
      %v5201 = vsel %vm5185, %v5152, %v4799
      %v5202 = vsel %vm5185, %v5153, %v4801
      %v5203 = vsel %vm5185, %v5154, %v4803
      %v5204 = vsel %vm5185, %v5155, %v4805
      %v5205 = vsel %vm5185, %v5156, %v4807
      %v5206 = vsel %vm5185, %v5157, %v4809
      %v5207 = vsel %vm5185, %v5158, %v4811
      %v5208 = vsel %vm5185, %v5159, %v4813
      %v5209 = vsel %vm5185, %v5160, %v4815
      %v5210 = vsel %vm5185, %v5161, %v4817
      %v5211 = vsel %vm5185, %v5162, %v4819
      %v5212 = vsel %vm5185, %v5163, %v4821
      %v5213 = vsel %vm5185, %v5164, %v4823
      %v5214 = vsel %vm5185, %v5165, %v4825
      %v5215 = vsel %vm5185, %v5166, %v4827
      %v5216 = vsel %vm5185, %v5167, %v4829
      %v5217 = vsel %vm5185, %v5168, %v4831
      %v5218 = vsel %vm5185, %v5169, %v4833
      %v5219 = vsel %vm5185, %v5170, %v4835
      %v5220 = vsel %vm5185, %v5171, %v4837
      %v5221 = vsel %vm5185, %v5172, %v4839
      %v5222 = vsel %vm5185, %v5173, %v4841
      %v5223 = vsel %vm5185, %v5174, %v4843
      %v5224 = vsel %vm5185, %v5175, %v4845
      %v5225 = vsel %vm5185, %v5176, %v4847
      %v5226 = vsel %vm5185, %v5177, %v4849
      %v5227 = vsel %vm5185, %v5178, %v4851
      %v5228 = vsel %vm5185, %v5179, %v4853
      %v5229 = vsel %vm5185, %v5180, %v4855
      %v5230 = vsel %vm5185, %v5181, %v4857
      %v5231 = vsel %vm5185, %v5182, %v4859
      %v5232 = vsel %vm5185, %v5183, %v4861
      %v5233 = vsel %vm5185, %v5184, %v4863
      %vm5234 = vcmask 48128
      %v5235 = vsel %vm5234, %v5186, %v4993
      %v5236 = vsel %vm5234, %v5187, %v4995
      %v5237 = vsel %vm5234, %v5188, %v4997
      %v5238 = vsel %vm5234, %v5189, %v4999
      %v5239 = vsel %vm5234, %v5190, %v5001
      %v5240 = vsel %vm5234, %v5191, %v5003
      %v5241 = vsel %vm5234, %v5192, %v5005
      %v5242 = vsel %vm5234, %v5193, %v5007
      %v5243 = vsel %vm5234, %v5194, %v5009
      %v5244 = vsel %vm5234, %v5195, %v5011
      %v5245 = vsel %vm5234, %v5196, %v5013
      %v5246 = vsel %vm5234, %v5197, %v5015
      %v5247 = vsel %vm5234, %v5198, %v5017
      %v5248 = vsel %vm5234, %v5199, %v5019
      %v5249 = vsel %vm5234, %v5200, %v5021
      %v5250 = vsel %vm5234, %v5201, %v5023
      %v5251 = vsel %vm5234, %v5202, %v5025
      %v5252 = vsel %vm5234, %v5203, %v5027
      %v5253 = vsel %vm5234, %v5204, %v5029
      %v5254 = vsel %vm5234, %v5205, %v5031
      %v5255 = vsel %vm5234, %v5206, %v5033
      %v5256 = vsel %vm5234, %v5207, %v5035
      %v5257 = vsel %vm5234, %v5208, %v5037
      %v5258 = vsel %vm5234, %v5209, %v5039
      %v5259 = vsel %vm5234, %v5210, %v5041
      %v5260 = vsel %vm5234, %v5211, %v5043
      %v5261 = vsel %vm5234, %v5212, %v5045
      %v5262 = vsel %vm5234, %v5213, %v5047
      %v5263 = vsel %vm5234, %v5214, %v5049
      %v5264 = vsel %vm5234, %v5215, %v5051
      %v5265 = vsel %vm5234, %v5216, %v5053
      %v5266 = vsel %vm5234, %v5217, %v5055
      %v5267 = vsel %vm5234, %v5218, %v5057
      %v5268 = vsel %vm5234, %v5219, %v5059
      %v5269 = vsel %vm5234, %v5220, %v5061
      %v5270 = vsel %vm5234, %v5221, %v5063
      %v5271 = vsel %vm5234, %v5222, %v5065
      %v5272 = vsel %vm5234, %v5223, %v5067
      %v5273 = vsel %vm5234, %v5224, %v5069
      %v5274 = vsel %vm5234, %v5225, %v5071
      %v5275 = vsel %vm5234, %v5226, %v5073
      %v5276 = vsel %vm5234, %v5227, %v5075
      %v5277 = vsel %vm5234, %v5228, %v5077
      %v5278 = vsel %vm5234, %v5229, %v5079
      %v5279 = vsel %vm5234, %v5230, %v5081
      %v5280 = vsel %vm5234, %v5231, %v5083
      %v5281 = vsel %vm5234, %v5232, %v5085
      %v5282 = vsel %vm5234, %v5233, %v5087
      %v5283 = vpack.c.bf16 %v5235, %v5235
      %v5284 = vpack.c.bf16 %v5236, %v5236
      %v5285 = vpack.c.bf16 %v5237, %v5237
      %v5286 = vpack.c.bf16 %v5238, %v5238
      %v5287 = vpack.c.bf16 %v5239, %v5239
      %v5288 = vpack.c.bf16 %v5240, %v5240
      %v5289 = vpack.c.bf16 %v5241, %v5241
      %v5290 = vpack.c.bf16 %v5242, %v5242
      %v5291 = vpack.c.bf16 %v5243, %v5243
      %v5292 = vpack.c.bf16 %v5244, %v5244
      %v5293 = vpack.c.bf16 %v5245, %v5245
      %v5294 = vpack.c.bf16 %v5246, %v5246
      %v5295 = vpack.c.bf16 %v5247, %v5247
      %v5296 = vpack.c.bf16 %v5248, %v5248
      %v5297 = vpack.c.bf16 %v5249, %v5249
      %v5298 = vpack.c.bf16 %v5250, %v5250
      %v5299 = vpack.c.bf16 %v5251, %v5251
      %v5300 = vpack.c.bf16 %v5252, %v5252
      %v5301 = vpack.c.bf16 %v5253, %v5253
      %v5302 = vpack.c.bf16 %v5254, %v5254
      %v5303 = vpack.c.bf16 %v5255, %v5255
      %v5304 = vpack.c.bf16 %v5256, %v5256
      %v5305 = vpack.c.bf16 %v5257, %v5257
      %v5306 = vpack.c.bf16 %v5258, %v5258
      %v5307 = vpack.c.bf16 %v5259, %v5259
      %v5308 = vpack.c.bf16 %v5260, %v5260
      %v5309 = vpack.c.bf16 %v5261, %v5261
      %v5310 = vpack.c.bf16 %v5262, %v5262
      %v5311 = vpack.c.bf16 %v5263, %v5263
      %v5312 = vpack.c.bf16 %v5264, %v5264
      %v5313 = vpack.c.bf16 %v5265, %v5265
      %v5314 = vpack.c.bf16 %v5266, %v5266
      %v5315 = vpack.c.bf16 %v5267, %v5267
      %v5316 = vpack.c.bf16 %v5268, %v5268
      %v5317 = vpack.c.bf16 %v5269, %v5269
      %v5318 = vpack.c.bf16 %v5270, %v5270
      %v5319 = vpack.c.bf16 %v5271, %v5271
      %v5320 = vpack.c.bf16 %v5272, %v5272
      %v5321 = vpack.c.bf16 %v5273, %v5273
      %v5322 = vpack.c.bf16 %v5274, %v5274
      %v5323 = vpack.c.bf16 %v5275, %v5275
      %v5324 = vpack.c.bf16 %v5276, %v5276
      %v5325 = vpack.c.bf16 %v5277, %v5277
      %v5326 = vpack.c.bf16 %v5278, %v5278
      %v5327 = vpack.c.bf16 %v5279, %v5279
      %v5328 = vpack.c.bf16 %v5280, %v5280
      %v5329 = vpack.c.bf16 %v5281, %v5281
      %v5330 = vpack.c.bf16 %v5282, %v5282
      %vm5379 = vcmask 1040384
      %vm5380 = vcmask 1044484
      %vm5381 = vmor %vm5379, %vm5380
      %v5382 = vrot.slane %v5283, 7
      %v5383 = vrot.slane %v5382, 4
      %v5384 = vrot.slane %v5284, 7
      %v5385 = vsel %vm5381, %v5383, %v5384
      %v5386 = vrot.slane %v5384, 4
      %v5387 = vrot.slane %v5285, 7
      %v5388 = vsel %vm5381, %v5386, %v5387
      %v5389 = vrot.slane %v5286, 7
      %v5390 = vrot.slane %v5389, 4
      %v5391 = vrot.slane %v5287, 7
      %v5392 = vsel %vm5381, %v5390, %v5391
      %v5393 = vrot.slane %v5391, 4
      %v5394 = vrot.slane %v5288, 7
      %v5395 = vsel %vm5381, %v5393, %v5394
      %v5396 = vrot.slane %v5289, 7
      %v5397 = vrot.slane %v5396, 4
      %v5398 = vrot.slane %v5290, 7
      %v5399 = vsel %vm5381, %v5397, %v5398
      %v5400 = vrot.slane %v5398, 4
      %v5401 = vrot.slane %v5291, 7
      %v5402 = vsel %vm5381, %v5400, %v5401
      %v5403 = vrot.slane %v5292, 7
      %v5404 = vrot.slane %v5403, 4
      %v5405 = vrot.slane %v5293, 7
      %v5406 = vsel %vm5381, %v5404, %v5405
      %v5407 = vrot.slane %v5405, 4
      %v5408 = vrot.slane %v5294, 7
      %v5409 = vsel %vm5381, %v5407, %v5408
      %v5410 = vrot.slane %v5295, 7
      %v5411 = vrot.slane %v5410, 4
      %v5412 = vrot.slane %v5296, 7
      %v5413 = vsel %vm5381, %v5411, %v5412
      %v5414 = vrot.slane %v5412, 4
      %v5415 = vrot.slane %v5297, 7
      %v5416 = vsel %vm5381, %v5414, %v5415
      %v5417 = vrot.slane %v5298, 7
      %v5418 = vrot.slane %v5417, 4
      %v5419 = vrot.slane %v5299, 7
      %v5420 = vsel %vm5381, %v5418, %v5419
      %v5421 = vrot.slane %v5419, 4
      %v5422 = vrot.slane %v5300, 7
      %v5423 = vsel %vm5381, %v5421, %v5422
      %v5424 = vrot.slane %v5301, 7
      %v5425 = vrot.slane %v5424, 4
      %v5426 = vrot.slane %v5302, 7
      %v5427 = vsel %vm5381, %v5425, %v5426
      %v5428 = vrot.slane %v5426, 4
      %v5429 = vrot.slane %v5303, 7
      %v5430 = vsel %vm5381, %v5428, %v5429
      %v5431 = vrot.slane %v5304, 7
      %v5432 = vrot.slane %v5431, 4
      %v5433 = vrot.slane %v5305, 7
      %v5434 = vsel %vm5381, %v5432, %v5433
      %v5435 = vrot.slane %v5433, 4
      %v5436 = vrot.slane %v5306, 7
      %v5437 = vsel %vm5381, %v5435, %v5436
      %v5438 = vrot.slane %v5307, 7
      %v5439 = vrot.slane %v5438, 4
      %v5440 = vrot.slane %v5308, 7
      %v5441 = vsel %vm5381, %v5439, %v5440
      %v5442 = vrot.slane %v5440, 4
      %v5443 = vrot.slane %v5309, 7
      %v5444 = vsel %vm5381, %v5442, %v5443
      %v5445 = vrot.slane %v5310, 7
      %v5446 = vrot.slane %v5445, 4
      %v5447 = vrot.slane %v5311, 7
      %v5448 = vsel %vm5381, %v5446, %v5447
      %v5449 = vrot.slane %v5447, 4
      %v5450 = vrot.slane %v5312, 7
      %v5451 = vsel %vm5381, %v5449, %v5450
      %v5452 = vrot.slane %v5313, 7
      %v5453 = vrot.slane %v5452, 4
      %v5454 = vrot.slane %v5314, 7
      %v5455 = vsel %vm5381, %v5453, %v5454
      %v5456 = vrot.slane %v5454, 4
      %v5457 = vrot.slane %v5315, 7
      %v5458 = vsel %vm5381, %v5456, %v5457
      %v5459 = vrot.slane %v5316, 7
      %v5460 = vrot.slane %v5459, 4
      %v5461 = vrot.slane %v5317, 7
      %v5462 = vsel %vm5381, %v5460, %v5461
      %v5463 = vrot.slane %v5461, 4
      %v5464 = vrot.slane %v5318, 7
      %v5465 = vsel %vm5381, %v5463, %v5464
      %v5466 = vrot.slane %v5319, 7
      %v5467 = vrot.slane %v5466, 4
      %v5468 = vrot.slane %v5320, 7
      %v5469 = vsel %vm5381, %v5467, %v5468
      %v5470 = vrot.slane %v5468, 4
      %v5471 = vrot.slane %v5321, 7
      %v5472 = vsel %vm5381, %v5470, %v5471
      %v5473 = vrot.slane %v5322, 7
      %v5474 = vrot.slane %v5473, 4
      %v5475 = vrot.slane %v5323, 7
      %v5476 = vsel %vm5381, %v5474, %v5475
      %v5477 = vrot.slane %v5475, 4
      %v5478 = vrot.slane %v5324, 7
      %v5479 = vsel %vm5381, %v5477, %v5478
      %v5480 = vrot.slane %v5325, 7
      %v5481 = vrot.slane %v5480, 4
      %v5482 = vrot.slane %v5326, 7
      %v5483 = vsel %vm5381, %v5481, %v5482
      %v5484 = vrot.slane %v5482, 4
      %v5485 = vrot.slane %v5327, 7
      %v5486 = vsel %vm5381, %v5484, %v5485
      %v5487 = vrot.slane %v5328, 7
      %v5488 = vrot.slane %v5487, 4
      %v5489 = vrot.slane %v5329, 7
      %v5490 = vsel %vm5381, %v5488, %v5489
      %v5491 = vrot.slane %v5489, 4
      %v5492 = vrot.slane %v5330, 7
      %v5493 = vsel %vm5381, %v5491, %v5492
      %vm5526 = vcmask 60416
      %5527 = vst.msk [vmem:[%s116] sm:$0xf] %vm5526, %v5385
      %5528 = vst.msk [vmem:[%s116 + $0x4] sm:$0xf] %vm5526, %v5388
      %5529 = vst.msk [vmem:[%s116 + $0x8] sm:$0xf] %vm5526, %v5392
      %5530 = vst.msk [vmem:[%s116 + $0xc] sm:$0xf] %vm5526, %v5395
      %5531 = vst.msk [vmem:[%s116 + $0x10] sm:$0xf] %vm5526, %v5399
      %5532 = vst.msk [vmem:[%s116 + $0x14] sm:$0xf] %vm5526, %v5402
      %5533 = vst.msk [vmem:[%s116 + $0x18] sm:$0xf] %vm5526, %v5406
      %5534 = vst.msk [vmem:[%s116 + $0x1c] sm:$0xf] %vm5526, %v5409
      %5535 = vst.msk [vmem:[%s116 + $0x20] sm:$0xf] %vm5526, %v5413
      %5536 = vst.msk [vmem:[%s116 + $0x24] sm:$0xf] %vm5526, %v5416
      %5537 = vst.msk [vmem:[%s116 + $0x28] sm:$0xf] %vm5526, %v5420
      %5538 = vst.msk [vmem:[%s116 + $0x2c] sm:$0xf] %vm5526, %v5423
      %5539 = vst.msk [vmem:[%s116 + $0x30] sm:$0xf] %vm5526, %v5427
      %5540 = vst.msk [vmem:[%s116 + $0x34] sm:$0xf] %vm5526, %v5430
      %5541 = vst.msk [vmem:[%s116 + $0x38] sm:$0xf] %vm5526, %v5434
      %5542 = vst.msk [vmem:[%s116 + $0x3c] sm:$0xf] %vm5526, %v5437
      %5543 = vst.msk [vmem:[%s116 + $0x40] sm:$0xf] %vm5526, %v5441
      %5544 = vst.msk [vmem:[%s116 + $0x44] sm:$0xf] %vm5526, %v5444
      %5545 = vst.msk [vmem:[%s116 + $0x48] sm:$0xf] %vm5526, %v5448
      %5546 = vst.msk [vmem:[%s116 + $0x4c] sm:$0xf] %vm5526, %v5451
      %5547 = vst.msk [vmem:[%s116 + $0x50] sm:$0xf] %vm5526, %v5455
      %5548 = vst.msk [vmem:[%s116 + $0x54] sm:$0xf] %vm5526, %v5458
      %5549 = vst.msk [vmem:[%s116 + $0x58] sm:$0xf] %vm5526, %v5462
      %5550 = vst.msk [vmem:[%s116 + $0x5c] sm:$0xf] %vm5526, %v5465
      %5551 = vst.msk [vmem:[%s116 + $0x60] sm:$0xf] %vm5526, %v5469
      %5552 = vst.msk [vmem:[%s116 + $0x64] sm:$0xf] %vm5526, %v5472
      %5553 = vst.msk [vmem:[%s116 + $0x68] sm:$0xf] %vm5526, %v5476
      %5554 = vst.msk [vmem:[%s116 + $0x6c] sm:$0xf] %vm5526, %v5479
      %5555 = vst.msk [vmem:[%s116 + $0x70] sm:$0xf] %vm5526, %v5483
      %5556 = vst.msk [vmem:[%s116 + $0x74] sm:$0xf] %vm5526, %v5486
      %5557 = vst.msk [vmem:[%s116 + $0x78] sm:$0xf] %vm5526, %v5490
      %5558 = vst.msk [vmem:[%s116 + $0x7c] sm:$0xf] %vm5526, %v5493
      %p5559 = scmp.lt.s32.totalorder %s12, 1
      %s5560 = scalar_select %p5559, %s12, 1
      %s5561 = smul.addr %s5560, 32
      %s5562 = smul.addr %s5561, 4
      %s5563 = scalar_lea.vmem %s1, %s5562
      // Predicated region
      $region25: #{_lambda_.4} parent=23 // pred_check
        %p5564 = pneg %p56
      $region26: #{_lambda_.4} parent=23 // pred_check_branch
        %5566 = sbr.rel (%p5564) target = $region28
      $region27: #{_lambda_.4} parent=23 // pred_region
        _
      $region28: #{_lambda_.4} parent=23 // pred_fallthru
        _
    $region24: #{_lambda_.4} parent=5 // pred_fallthru
      _
    %p5567 = scmp.le.s32.totalorder 2, %s7
    // Predicated region
    $region29: #{_lambda_.4} parent=5 // pred_check
      %p5568 = pneg %p5567
    $region30: #{_lambda_.4} parent=5 // pred_check_branch
      %5570 = sbr.rel (%p5568) target = $region32
    $region31: #{_lambda_.4} parent=5 // pred_region
      %s5571 = ssub.s32 %s7, 2
      // Predicated region
      $region33: #{_lambda_.4} parent=31 // pred_check
        %p5572 = pneg %p62
      $region34: #{_lambda_.4} parent=31 // pred_check_branch
        %5574 = sbr.rel (%p5572) target = $region36
      $region35: #{_lambda_.4} parent=31 // pred_region
        %p5575 = scmp.lt.s32.totalorder %s13, 1
        %s5576 = scalar_select %p5575, %s13, 1
        %s5577 = smul.addr %s5576, 32
        %s5578 = smul.addr %s5577, 4
        %s5579 = scalar_lea.vmem %s1, %s5578
      $region36: #{_lambda_.4} parent=31 // pred_fallthru
        _
    $region32: #{_lambda_.4} parent=5 // pred_fallthru
      _
  $region6: #{_lambda_.4} parent=0 // loop_footer
    %s11 = sadd.s32 1, %s7
  $region7: #{_lambda_.4} parent=0 // loop_footer_branch
    %6 = sbr.rel target = $region3
  $region8: #{_lambda_.4} parent=0 // loop_exit
    _

</llo_original>
